<compile_context>
chip_gen: v7x
topology: tpu7x:2x2x1
jax: 0.10.0
libtpu: 0.0.40
codegen_flags: <defaults>
</compile_context>

<pallas_src>
import jax
import jax.numpy as jnp
import numpy as np
from jax.experimental import pallas as pl
from jax.experimental.pallas import tpu as pltpu

EPS = 1e-5    # nn.BatchNorm2d default eps
LANES = 128   # TPU lane width; channels are zero-padded to a multiple of this


# ---------------------------------------------------------------------------
# Fused kernel: conv3x3 + BN + PReLU + conv3x3 + BN + residual add
# ---------------------------------------------------------------------------
def residual_block_kernel(xpad_ref, w1_ref, b1_ref, g1_ref, be1_ref,
                          w2_ref, b2_ref, g2_ref, be2_ref, alpha_ref,
                          o_ref, y1pad_ref):
    """
    xpad_ref : (N, H+2, W+2, Cp) zero-padded (spatial halo + channel pad) input, VMEM
    w*_ref   : (3, 3, Cp, Cp)    HWIO conv weights, channel-padded,             VMEM
    b*/g*/be*: (1, Cp)           conv bias / BN gamma / BN beta,                VMEM
    alpha_ref: (1, 1)            PReLU single alpha,                            SMEM
    o_ref    : (N, H, W, Cp)     block output,                                  VMEM
    y1pad_ref: (N, H+2, W+2, Cp) scratch for the intermediate activation,       VMEM
    """
    N, Hp, Wp, Cp = xpad_ref.shape
    H, W = Hp - 2, Wp - 2
    M = N * H * W
    inv_cnt = 1.0 / float(M)

    def conv3x3(src_ref, w_ref, b_ref):
        # 3x3 cross-correlation as 9 MXU matmuls on a lane-dense (M, Cp) slab.
        src = src_ref[...]                                       # (N, Hp, Wp, Cp)
        # Column-shifted views, built once per conv, reused for all 3 row taps.
        cols = [src[:, :, kx:kx + W, :] for kx in range(3)]      # (N, Hp, W, Cp)
        acc = jnp.zeros((M, Cp), jnp.float32)
        for ky in range(3):
            for kx in range(3):
                patch = cols[kx][:, ky:ky + H, :, :].reshape(M, Cp)
                acc = acc + jnp.dot(patch, w_ref[ky, kx, :, :],
                                    preferred_element_type=jnp.float32)
        return acc + b_ref[...]                                  # bias added once

    def batchnorm(y, g_ref, be_ref):
        # Train-mode BatchNorm2d, single-pass stats, fused scale+shift epilogue.
        s = jnp.sum(y, axis=0, keepdims=True)                    # (1, Cp)
        ss = jnp.sum(y * y, axis=0, keepdims=True)               # (1, Cp)
        mean = s * inv_cnt
        var = ss * inv_cnt - mean * mean                         # biased variance
        scale = g_ref[...] * jax.lax.rsqrt(var + EPS)
        shift = be_ref[...] - mean * scale
        return y * scale + shift

    # ---- stage 1: conv1 + bn1 + PReLU -------------------------------------
    y = conv3x3(xpad_ref, w1_ref, b1_ref)
    y = batchnorm(y, g1_ref, be1_ref)
    a = alpha_ref[0, 0]
    y = jnp.where(y > 0, y, y * a)                               # PReLU (single alpha)

    # Keep y1 resident in VMEM (halo written in-kernel); no HBM round-trip.
    y1pad_ref[...] = jnp.zeros(y1pad_ref.shape, jnp.float32)
    y1pad_ref[:, 1:H + 1, 1:W + 1, :] = y.reshape(N, H, W, Cp)

    # ---- stage 2: conv2 + bn2 + residual add ------------------------------
    r = conv3x3(y1pad_ref, w2_ref, b2_ref)
    r = batchnorm(r, g2_ref, be2_ref)
    x_int = xpad_ref[:, 1:H + 1, 1:W + 1, :].reshape(M, Cp)
    o_ref[...] = (x_int + r).reshape(N, H, W, Cp)


# ---------------------------------------------------------------------------
# Wrapper (plain-JAX glue: layout transposes, channel/halo padding)
# ---------------------------------------------------------------------------
def residual_block(x_nchw, params):
    x = jnp.transpose(x_nchw, (0, 2, 3, 1)).astype(jnp.float32)  # NCHW -> NHWC
    N, H, W, C = x.shape
    Cp = ((C + LANES - 1) // LANES) * LANES                      # lane-dense channels

    # spatial halo + channel pad (one-time glue on the block input)
    xpad = jnp.pad(x, ((0, 0), (1, 1), (1, 1), (0, Cp - C)))

    def prep_w(w_oihw):                                          # OIHW -> HWIO, padded
        w = jnp.transpose(w_oihw.astype(jnp.float32), (2, 3, 1, 0))
        return jnp.pad(w, ((0, 0), (0, 0), (0, Cp - C), (0, Cp - C)))

    def prep_v(v):                                               # (C,) -> (1, Cp)
        return jnp.pad(v.astype(jnp.float32), (0, Cp - C)).reshape(1, Cp)

    w1, w2 = prep_w(params["w1"]), prep_w(params["w2"])
    b1, g1, be1 = prep_v(params["b1"]), prep_v(params["gamma1"]), prep_v(params["beta1"])
    b2, g2, be2 = prep_v(params["b2"]), prep_v(params["gamma2"]), prep_v(params["beta2"])
    alpha = params["alpha"].astype(jnp.float32).reshape(1, 1)

    vmem = pl.BlockSpec(memory_space=pltpu.MemorySpace.VMEM)
    smem = pl.BlockSpec(memory_space=pltpu.MemorySpace.SMEM)

    out = pl.pallas_call(
        residual_block_kernel,
        out_shape=jax.ShapeDtypeStruct((N, H, W, Cp), jnp.float32),
        in_specs=[vmem] * 9 + [smem],
        out_specs=vmem,
        scratch_shapes=[pltpu.VMEM((N, H + 2, W + 2, Cp), jnp.float32)],
    )(xpad, w1, b1, g1, be1, w2, b2, g2, be2, alpha)

    out = out[:, :, :, :C]                                       # drop channel pad
    return jnp.transpose(out, (0, 3, 1, 2))                      # NHWC -> NCHW


# ---------------------------------------------------------------------------
# Pure-JAX reference (for correctness check)
# ---------------------------------------------------------------------------
def residual_block_ref(x_nchw, params):
    x = jnp.transpose(x_nchw, (0, 2, 3, 1)).astype(jnp.float32)

    def conv(inp, w, b):
        w_hwio = jnp.transpose(w, (2, 3, 1, 0))
        y = jax.lax.conv_general_dilated(
            inp, w_hwio, (1, 1), "SAME",
            dimension_numbers=("NHWC", "HWIO", "NHWC"),
            precision=jax.lax.Precision.HIGHEST)
        return y + b.reshape(1, 1, 1, -1)

    def bn(y, g, be):
        mean = jnp.mean(y, axis=(0, 1, 2), keepdims=True)
        var = jnp.mean((y - mean) ** 2, axis=(0, 1, 2), keepdims=True)
        return (y - mean) / jnp.sqrt(var + EPS) * g.reshape(1, 1, 1, -1) + be.reshape(1, 1, 1, -1)

    r = conv(x, params["w1"], params["b1"])
    r = bn(r, params["gamma1"], params["beta1"])
    a = params["alpha"][0]
    r = jnp.where(r > 0, r, a * r)
    r = conv(r, params["w2"], params["b2"])
    r = bn(r, params["gamma2"], params["beta2"])
    return jnp.transpose(x + r, (0, 3, 1, 2))


# ---------------------------------------------------------------------------
if __name__ == "__main__":
    key = jax.random.PRNGKey(0)
    N, C, H, W = 2, 4, 16, 16
    ks = jax.random.split(key, 5)

    x = jax.random.normal(ks[0], (N, C, H, W), jnp.float32)

    # Deterministic parameter init (shapes from ResidualBlock.__init__ with channels=C)
    fan_in = C * 3 * 3
    bound = 1.0 / (fan_in ** 0.5)
    params = dict(
        w1=jax.random.uniform(ks[1], (C, C, 3, 3), jnp.float32, -bound, bound),
        b1=jax.random.uniform(ks[2], (C,), jnp.float32, -bound, bound),
        gamma1=jnp.ones((C,), jnp.float32),
        beta1=jnp.zeros((C,), jnp.float32),
        alpha=jnp.full((1,), 0.25, jnp.float32),                 # nn.PReLU default
        w2=jax.random.uniform(ks[3], (C, C, 3, 3), jnp.float32, -bound, bound),
        b2=jax.random.uniform(ks[4], (C,), jnp.float32, -bound, bound),
        gamma2=jnp.ones((C,), jnp.float32),
        beta2=jnp.zeros((C,), jnp.float32),
    )

    out = residual_block(x, params)
    out = jax.block_until_ready(out)

    ref = residual_block_ref(x, params)
    assert out.shape == (N, C, H, W)
    # Tolerance absorbs MXU multi-pass f32 vs XLA-conv accumulation differences.
    np.testing.assert_allclose(np.asarray(out), np.asarray(ref), rtol=5e-4, atol=5e-4)

    print("KERNEL_OK")
</pallas_src>

<mosaic_0001>
module attributes {stable_mosaic.version = 11 : i64} {
  func.func @residual_block_kernel(%arg0: memref<2x18x18x128xf32, #tpu.memory_space<vmem>>, %arg1: memref<3x3x128x128xf32, #tpu.memory_space<vmem>>, %arg2: memref<1x128xf32, #tpu.memory_space<vmem>>, %arg3: memref<1x128xf32, #tpu.memory_space<vmem>>, %arg4: memref<1x128xf32, #tpu.memory_space<vmem>>, %arg5: memref<3x3x128x128xf32, #tpu.memory_space<vmem>>, %arg6: memref<1x128xf32, #tpu.memory_space<vmem>>, %arg7: memref<1x128xf32, #tpu.memory_space<vmem>>, %arg8: memref<1x128xf32, #tpu.memory_space<vmem>>, %arg9: memref<1x1xf32, #tpu.memory_space<smem>>, %arg10: memref<2x16x16x128xf32, #tpu.memory_space<vmem>>, %arg11: memref<2x18x18x128xf32, #tpu.memory_space<vmem>>) attributes {dimension_semantics = [], scalar_prefetch = 0 : i64, scratch_operands = 1 : i64, tpu.core_type = #tpu.core_type<tc>} {
    %c0 = arith.constant 0 : index
    %c0_0 = arith.constant 0 : index
    %c0_1 = arith.constant 0 : index
    %c0_2 = arith.constant 0 : index
    %0 = vector.load %arg0[%c0, %c0_0, %c0_1, %c0_2] : memref<2x18x18x128xf32, #tpu.memory_space<vmem>>, vector<2x18x18x128xf32>
    %1 = vector.extract_strided_slice %0 {offsets = [0, 0, 0, 0], sizes = [2, 18, 16, 128], strides = [1, 1, 1, 1]} : vector<2x18x18x128xf32> to vector<2x18x16x128xf32>
    %2 = vector.extract_strided_slice %0 {offsets = [0, 0, 1, 0], sizes = [2, 18, 16, 128], strides = [1, 1, 1, 1]} : vector<2x18x18x128xf32> to vector<2x18x16x128xf32>
    %3 = vector.extract_strided_slice %0 {offsets = [0, 0, 2, 0], sizes = [2, 18, 16, 128], strides = [1, 1, 1, 1]} : vector<2x18x18x128xf32> to vector<2x18x16x128xf32>
    %cst = arith.constant 0.000000e+00 : f32
    %4 = vector.broadcast %cst : f32 to vector<512x128xf32>
    %5 = vector.extract_strided_slice %1 {offsets = [0, 0, 0, 0], sizes = [2, 16, 16, 128], strides = [1, 1, 1, 1]} : vector<2x18x16x128xf32> to vector<2x16x16x128xf32>
    %6 = vector.shape_cast %5 : vector<2x16x16x128xf32> to vector<512x128xf32>
    %c0_3 = arith.constant 0 : index
    %c0_4 = arith.constant 0 : index
    %c0_5 = arith.constant 0 : index
    %c0_6 = arith.constant 0 : index
    %7 = vector.load %arg1[%c0_3, %c0_4, %c0_5, %c0_6] : memref<3x3x128x128xf32, #tpu.memory_space<vmem>>, vector<1x1x128x128xf32>
    %8 = vector.shape_cast %7 : vector<1x1x128x128xf32> to vector<128x128xf32>
    %cst_7 = arith.constant dense<0.000000e+00> : vector<512x128xf32>
    %9 = tpu.matmul %6, %8, %cst_7 {dimension_numbers = #tpu.dot_dimension_numbers<[1], [0], [0], [1], [0, 0, 1, 1], [], []>} : vector<512x128xf32>, vector<128x128xf32>, vector<512x128xf32> -> vector<512x128xf32>
    %10 = arith.addf %4, %9 : vector<512x128xf32>
    %11 = vector.extract_strided_slice %2 {offsets = [0, 0, 0, 0], sizes = [2, 16, 16, 128], strides = [1, 1, 1, 1]} : vector<2x18x16x128xf32> to vector<2x16x16x128xf32>
    %12 = vector.shape_cast %11 : vector<2x16x16x128xf32> to vector<512x128xf32>
    %c0_8 = arith.constant 0 : index
    %c1 = arith.constant 1 : index
    %c0_9 = arith.constant 0 : index
    %c0_10 = arith.constant 0 : index
    %13 = vector.load %arg1[%c0_8, %c1, %c0_9, %c0_10] : memref<3x3x128x128xf32, #tpu.memory_space<vmem>>, vector<1x1x128x128xf32>
    %14 = vector.shape_cast %13 : vector<1x1x128x128xf32> to vector<128x128xf32>
    %cst_11 = arith.constant dense<0.000000e+00> : vector<512x128xf32>
    %15 = tpu.matmul %12, %14, %cst_11 {dimension_numbers = #tpu.dot_dimension_numbers<[1], [0], [0], [1], [0, 0, 1, 1], [], []>} : vector<512x128xf32>, vector<128x128xf32>, vector<512x128xf32> -> vector<512x128xf32>
    %16 = arith.addf %10, %15 : vector<512x128xf32>
    %17 = vector.extract_strided_slice %3 {offsets = [0, 0, 0, 0], sizes = [2, 16, 16, 128], strides = [1, 1, 1, 1]} : vector<2x18x16x128xf32> to vector<2x16x16x128xf32>
    %18 = vector.shape_cast %17 : vector<2x16x16x128xf32> to vector<512x128xf32>
    %c0_12 = arith.constant 0 : index
    %c2 = arith.constant 2 : index
    %c0_13 = arith.constant 0 : index
    %c0_14 = arith.constant 0 : index
    %19 = vector.load %arg1[%c0_12, %c2, %c0_13, %c0_14] : memref<3x3x128x128xf32, #tpu.memory_space<vmem>>, vector<1x1x128x128xf32>
    %20 = vector.shape_cast %19 : vector<1x1x128x128xf32> to vector<128x128xf32>
    %cst_15 = arith.constant dense<0.000000e+00> : vector<512x128xf32>
    %21 = tpu.matmul %18, %20, %cst_15 {dimension_numbers = #tpu.dot_dimension_numbers<[1], [0], [0], [1], [0, 0, 1, 1], [], []>} : vector<512x128xf32>, vector<128x128xf32>, vector<512x128xf32> -> vector<512x128xf32>
    %22 = arith.addf %16, %21 : vector<512x128xf32>
    %23 = vector.extract_strided_slice %1 {offsets = [0, 1, 0, 0], sizes = [2, 16, 16, 128], strides = [1, 1, 1, 1]} : vector<2x18x16x128xf32> to vector<2x16x16x128xf32>
    %24 = vector.shape_cast %23 : vector<2x16x16x128xf32> to vector<512x128xf32>
    %c1_16 = arith.constant 1 : index
    %c0_17 = arith.constant 0 : index
    %c0_18 = arith.constant 0 : index
    %c0_19 = arith.constant 0 : index
    %25 = vector.load %arg1[%c1_16, %c0_17, %c0_18, %c0_19] : memref<3x3x128x128xf32, #tpu.memory_space<vmem>>, vector<1x1x128x128xf32>
    %26 = vector.shape_cast %25 : vector<1x1x128x128xf32> to vector<128x128xf32>
    %cst_20 = arith.constant dense<0.000000e+00> : vector<512x128xf32>
    %27 = tpu.matmul %24, %26, %cst_20 {dimension_numbers = #tpu.dot_dimension_numbers<[1], [0], [0], [1], [0, 0, 1, 1], [], []>} : vector<512x128xf32>, vector<128x128xf32>, vector<512x128xf32> -> vector<512x128xf32>
    %28 = arith.addf %22, %27 : vector<512x128xf32>
    %29 = vector.extract_strided_slice %2 {offsets = [0, 1, 0, 0], sizes = [2, 16, 16, 128], strides = [1, 1, 1, 1]} : vector<2x18x16x128xf32> to vector<2x16x16x128xf32>
    %30 = vector.shape_cast %29 : vector<2x16x16x128xf32> to vector<512x128xf32>
    %c1_21 = arith.constant 1 : index
    %c1_22 = arith.constant 1 : index
    %c0_23 = arith.constant 0 : index
    %c0_24 = arith.constant 0 : index
    %31 = vector.load %arg1[%c1_21, %c1_22, %c0_23, %c0_24] : memref<3x3x128x128xf32, #tpu.memory_space<vmem>>, vector<1x1x128x128xf32>
    %32 = vector.shape_cast %31 : vector<1x1x128x128xf32> to vector<128x128xf32>
    %cst_25 = arith.constant dense<0.000000e+00> : vector<512x128xf32>
    %33 = tpu.matmul %30, %32, %cst_25 {dimension_numbers = #tpu.dot_dimension_numbers<[1], [0], [0], [1], [0, 0, 1, 1], [], []>} : vector<512x128xf32>, vector<128x128xf32>, vector<512x128xf32> -> vector<512x128xf32>
    %34 = arith.addf %28, %33 : vector<512x128xf32>
    %35 = vector.extract_strided_slice %3 {offsets = [0, 1, 0, 0], sizes = [2, 16, 16, 128], strides = [1, 1, 1, 1]} : vector<2x18x16x128xf32> to vector<2x16x16x128xf32>
    %36 = vector.shape_cast %35 : vector<2x16x16x128xf32> to vector<512x128xf32>
    %c1_26 = arith.constant 1 : index
    %c2_27 = arith.constant 2 : index
    %c0_28 = arith.constant 0 : index
    %c0_29 = arith.constant 0 : index
    %37 = vector.load %arg1[%c1_26, %c2_27, %c0_28, %c0_29] : memref<3x3x128x128xf32, #tpu.memory_space<vmem>>, vector<1x1x128x128xf32>
    %38 = vector.shape_cast %37 : vector<1x1x128x128xf32> to vector<128x128xf32>
    %cst_30 = arith.constant dense<0.000000e+00> : vector<512x128xf32>
    %39 = tpu.matmul %36, %38, %cst_30 {dimension_numbers = #tpu.dot_dimension_numbers<[1], [0], [0], [1], [0, 0, 1, 1], [], []>} : vector<512x128xf32>, vector<128x128xf32>, vector<512x128xf32> -> vector<512x128xf32>
    %40 = arith.addf %34, %39 : vector<512x128xf32>
    %41 = vector.extract_strided_slice %1 {offsets = [0, 2, 0, 0], sizes = [2, 16, 16, 128], strides = [1, 1, 1, 1]} : vector<2x18x16x128xf32> to vector<2x16x16x128xf32>
    %42 = vector.shape_cast %41 : vector<2x16x16x128xf32> to vector<512x128xf32>
    %c2_31 = arith.constant 2 : index
    %c0_32 = arith.constant 0 : index
    %c0_33 = arith.constant 0 : index
    %c0_34 = arith.constant 0 : index
    %43 = vector.load %arg1[%c2_31, %c0_32, %c0_33, %c0_34] : memref<3x3x128x128xf32, #tpu.memory_space<vmem>>, vector<1x1x128x128xf32>
    %44 = vector.shape_cast %43 : vector<1x1x128x128xf32> to vector<128x128xf32>
    %cst_35 = arith.constant dense<0.000000e+00> : vector<512x128xf32>
    %45 = tpu.matmul %42, %44, %cst_35 {dimension_numbers = #tpu.dot_dimension_numbers<[1], [0], [0], [1], [0, 0, 1, 1], [], []>} : vector<512x128xf32>, vector<128x128xf32>, vector<512x128xf32> -> vector<512x128xf32>
    %46 = arith.addf %40, %45 : vector<512x128xf32>
    %47 = vector.extract_strided_slice %2 {offsets = [0, 2, 0, 0], sizes = [2, 16, 16, 128], strides = [1, 1, 1, 1]} : vector<2x18x16x128xf32> to vector<2x16x16x128xf32>
    %48 = vector.shape_cast %47 : vector<2x16x16x128xf32> to vector<512x128xf32>
    %c2_36 = arith.constant 2 : index
    %c1_37 = arith.constant 1 : index
    %c0_38 = arith.constant 0 : index
    %c0_39 = arith.constant 0 : index
    %49 = vector.load %arg1[%c2_36, %c1_37, %c0_38, %c0_39] : memref<3x3x128x128xf32, #tpu.memory_space<vmem>>, vector<1x1x128x128xf32>
    %50 = vector.shape_cast %49 : vector<1x1x128x128xf32> to vector<128x128xf32>
    %cst_40 = arith.constant dense<0.000000e+00> : vector<512x128xf32>
    %51 = tpu.matmul %48, %50, %cst_40 {dimension_numbers = #tpu.dot_dimension_numbers<[1], [0], [0], [1], [0, 0, 1, 1], [], []>} : vector<512x128xf32>, vector<128x128xf32>, vector<512x128xf32> -> vector<512x128xf32>
    %52 = arith.addf %46, %51 : vector<512x128xf32>
    %53 = vector.extract_strided_slice %3 {offsets = [0, 2, 0, 0], sizes = [2, 16, 16, 128], strides = [1, 1, 1, 1]} : vector<2x18x16x128xf32> to vector<2x16x16x128xf32>
    %54 = vector.shape_cast %53 : vector<2x16x16x128xf32> to vector<512x128xf32>
    %c2_41 = arith.constant 2 : index
    %c2_42 = arith.constant 2 : index
    %c0_43 = arith.constant 0 : index
    %c0_44 = arith.constant 0 : index
    %55 = vector.load %arg1[%c2_41, %c2_42, %c0_43, %c0_44] : memref<3x3x128x128xf32, #tpu.memory_space<vmem>>, vector<1x1x128x128xf32>
    %56 = vector.shape_cast %55 : vector<1x1x128x128xf32> to vector<128x128xf32>
    %cst_45 = arith.constant dense<0.000000e+00> : vector<512x128xf32>
    %57 = tpu.matmul %54, %56, %cst_45 {dimension_numbers = #tpu.dot_dimension_numbers<[1], [0], [0], [1], [0, 0, 1, 1], [], []>} : vector<512x128xf32>, vector<128x128xf32>, vector<512x128xf32> -> vector<512x128xf32>
    %58 = arith.addf %52, %57 : vector<512x128xf32>
    %c0_46 = arith.constant 0 : index
    %c0_47 = arith.constant 0 : index
    %59 = vector.load %arg2[%c0_46, %c0_47] : memref<1x128xf32, #tpu.memory_space<vmem>>, vector<1x128xf32>
    %60 = vector.broadcast %59 : vector<1x128xf32> to vector<512x128xf32>
    %61 = arith.addf %58, %60 : vector<512x128xf32>
    %cst_48 = arith.constant dense<0.000000e+00> : vector<128xf32>
    %62 = vector.multi_reduction <add>, %61, %cst_48 [0] : vector<512x128xf32> to vector<128xf32>
    %63 = vector.shape_cast %62 : vector<128xf32> to vector<1x128xf32>
    %64 = arith.mulf %61, %61 : vector<512x128xf32>
    %cst_49 = arith.constant dense<0.000000e+00> : vector<128xf32>
    %65 = vector.multi_reduction <add>, %64, %cst_49 [0] : vector<512x128xf32> to vector<128xf32>
    %66 = vector.shape_cast %65 : vector<128xf32> to vector<1x128xf32>
    %cst_50 = arith.constant 0.001953125 : f32
    %67 = vector.broadcast %cst_50 : f32 to vector<1x128xf32>
    %68 = arith.mulf %63, %67 : vector<1x128xf32>
    %cst_51 = arith.constant 0.001953125 : f32
    %69 = vector.broadcast %cst_51 : f32 to vector<1x128xf32>
    %70 = arith.mulf %66, %69 : vector<1x128xf32>
    %71 = arith.mulf %68, %68 : vector<1x128xf32>
    %72 = arith.subf %70, %71 : vector<1x128xf32>
    %c0_52 = arith.constant 0 : index
    %c0_53 = arith.constant 0 : index
    %73 = vector.load %arg3[%c0_52, %c0_53] : memref<1x128xf32, #tpu.memory_space<vmem>>, vector<1x128xf32>
    %cst_54 = arith.constant 9.99999974E-6 : f32
    %74 = vector.broadcast %cst_54 : f32 to vector<1x128xf32>
    %75 = arith.addf %72, %74 : vector<1x128xf32>
    %76 = math.rsqrt %75 : vector<1x128xf32>
    %77 = arith.mulf %73, %76 : vector<1x128xf32>
    %c0_55 = arith.constant 0 : index
    %c0_56 = arith.constant 0 : index
    %78 = vector.load %arg4[%c0_55, %c0_56] : memref<1x128xf32, #tpu.memory_space<vmem>>, vector<1x128xf32>
    %79 = arith.mulf %68, %77 : vector<1x128xf32>
    %80 = arith.subf %78, %79 : vector<1x128xf32>
    %81 = vector.broadcast %77 : vector<1x128xf32> to vector<512x128xf32>
    %82 = arith.mulf %61, %81 : vector<512x128xf32>
    %83 = vector.broadcast %80 : vector<1x128xf32> to vector<512x128xf32>
    %84 = arith.addf %82, %83 : vector<512x128xf32>
    %c0_57 = arith.constant 0 : index
    %c0_58 = arith.constant 0 : index
    %85 = memref.load %arg9[%c0_57, %c0_58] : memref<1x1xf32, #tpu.memory_space<smem>>
    %cst_59 = arith.constant 0.000000e+00 : f32
    %86 = vector.broadcast %cst_59 : f32 to vector<512x128xf32>
    %87 = arith.cmpf ogt, %84, %86 : vector<512x128xf32>
    %88 = vector.broadcast %85 : f32 to vector<512x128xf32>
    %89 = arith.mulf %84, %88 : vector<512x128xf32>
    %90 = arith.select %87, %84, %89 : vector<512x128xi1>, vector<512x128xf32>
    %cst_60 = arith.constant 0.000000e+00 : f32
    %91 = vector.broadcast %cst_60 : f32 to vector<2x18x18x128xf32>
    %c0_61 = arith.constant 0 : index
    %c0_62 = arith.constant 0 : index
    %c0_63 = arith.constant 0 : index
    %c0_64 = arith.constant 0 : index
    %92 = vector.load %arg11[%c0_61, %c0_62, %c0_63, %c0_64] : memref<2x18x18x128xf32, #tpu.memory_space<vmem>>, vector<2x18x18x128xf32>
    tpu.vector_store %arg11[%c0_61, %c0_62, %c0_63, %c0_64], %91 {strides = array<i32>} : memref<2x18x18x128xf32, #tpu.memory_space<vmem>>, vector<2x18x18x128xf32>,
    %93 = vector.shape_cast %90 : vector<512x128xf32> to vector<2x16x16x128xf32>
    %c0_65 = arith.constant 0 : index
    %c1_66 = arith.constant 1 : index
    %c1_67 = arith.constant 1 : index
    %c0_68 = arith.constant 0 : index
    %94 = vector.load %arg11[%c0_65, %c1_66, %c1_67, %c0_68] : memref<2x18x18x128xf32, #tpu.memory_space<vmem>>, vector<2x16x16x128xf32>
    tpu.vector_store %arg11[%c0_65, %c1_66, %c1_67, %c0_68], %93 {strides = array<i32>} : memref<2x18x18x128xf32, #tpu.memory_space<vmem>>, vector<2x16x16x128xf32>,
    %c0_69 = arith.constant 0 : index
    %c0_70 = arith.constant 0 : index
    %c0_71 = arith.constant 0 : index
    %c0_72 = arith.constant 0 : index
    %95 = vector.load %arg11[%c0_69, %c0_70, %c0_71, %c0_72] : memref<2x18x18x128xf32, #tpu.memory_space<vmem>>, vector<2x18x18x128xf32>
    %96 = vector.extract_strided_slice %95 {offsets = [0, 0, 0, 0], sizes = [2, 18, 16, 128], strides = [1, 1, 1, 1]} : vector<2x18x18x128xf32> to vector<2x18x16x128xf32>
    %97 = vector.extract_strided_slice %95 {offsets = [0, 0, 1, 0], sizes = [2, 18, 16, 128], strides = [1, 1, 1, 1]} : vector<2x18x18x128xf32> to vector<2x18x16x128xf32>
    %98 = vector.extract_strided_slice %95 {offsets = [0, 0, 2, 0], sizes = [2, 18, 16, 128], strides = [1, 1, 1, 1]} : vector<2x18x18x128xf32> to vector<2x18x16x128xf32>
    %cst_73 = arith.constant 0.000000e+00 : f32
    %99 = vector.broadcast %cst_73 : f32 to vector<512x128xf32>
    %100 = vector.extract_strided_slice %96 {offsets = [0, 0, 0, 0], sizes = [2, 16, 16, 128], strides = [1, 1, 1, 1]} : vector<2x18x16x128xf32> to vector<2x16x16x128xf32>
    %101 = vector.shape_cast %100 : vector<2x16x16x128xf32> to vector<512x128xf32>
    %c0_74 = arith.constant 0 : index
    %c0_75 = arith.constant 0 : index
    %c0_76 = arith.constant 0 : index
    %c0_77 = arith.constant 0 : index
    %102 = vector.load %arg5[%c0_74, %c0_75, %c0_76, %c0_77] : memref<3x3x128x128xf32, #tpu.memory_space<vmem>>, vector<1x1x128x128xf32>
    %103 = vector.shape_cast %102 : vector<1x1x128x128xf32> to vector<128x128xf32>
    %cst_78 = arith.constant dense<0.000000e+00> : vector<512x128xf32>
    %104 = tpu.matmul %101, %103, %cst_78 {dimension_numbers = #tpu.dot_dimension_numbers<[1], [0], [0], [1], [0, 0, 1, 1], [], []>} : vector<512x128xf32>, vector<128x128xf32>, vector<512x128xf32> -> vector<512x128xf32>
    %105 = arith.addf %99, %104 : vector<512x128xf32>
    %106 = vector.extract_strided_slice %97 {offsets = [0, 0, 0, 0], sizes = [2, 16, 16, 128], strides = [1, 1, 1, 1]} : vector<2x18x16x128xf32> to vector<2x16x16x128xf32>
    %107 = vector.shape_cast %106 : vector<2x16x16x128xf32> to vector<512x128xf32>
    %c0_79 = arith.constant 0 : index
    %c1_80 = arith.constant 1 : index
    %c0_81 = arith.constant 0 : index
    %c0_82 = arith.constant 0 : index
    %108 = vector.load %arg5[%c0_79, %c1_80, %c0_81, %c0_82] : memref<3x3x128x128xf32, #tpu.memory_space<vmem>>, vector<1x1x128x128xf32>
    %109 = vector.shape_cast %108 : vector<1x1x128x128xf32> to vector<128x128xf32>
    %cst_83 = arith.constant dense<0.000000e+00> : vector<512x128xf32>
    %110 = tpu.matmul %107, %109, %cst_83 {dimension_numbers = #tpu.dot_dimension_numbers<[1], [0], [0], [1], [0, 0, 1, 1], [], []>} : vector<512x128xf32>, vector<128x128xf32>, vector<512x128xf32> -> vector<512x128xf32>
    %111 = arith.addf %105, %110 : vector<512x128xf32>
    %112 = vector.extract_strided_slice %98 {offsets = [0, 0, 0, 0], sizes = [2, 16, 16, 128], strides = [1, 1, 1, 1]} : vector<2x18x16x128xf32> to vector<2x16x16x128xf32>
    %113 = vector.shape_cast %112 : vector<2x16x16x128xf32> to vector<512x128xf32>
    %c0_84 = arith.constant 0 : index
    %c2_85 = arith.constant 2 : index
    %c0_86 = arith.constant 0 : index
    %c0_87 = arith.constant 0 : index
    %114 = vector.load %arg5[%c0_84, %c2_85, %c0_86, %c0_87] : memref<3x3x128x128xf32, #tpu.memory_space<vmem>>, vector<1x1x128x128xf32>
    %115 = vector.shape_cast %114 : vector<1x1x128x128xf32> to vector<128x128xf32>
    %cst_88 = arith.constant dense<0.000000e+00> : vector<512x128xf32>
    %116 = tpu.matmul %113, %115, %cst_88 {dimension_numbers = #tpu.dot_dimension_numbers<[1], [0], [0], [1], [0, 0, 1, 1], [], []>} : vector<512x128xf32>, vector<128x128xf32>, vector<512x128xf32> -> vector<512x128xf32>
    %117 = arith.addf %111, %116 : vector<512x128xf32>
    %118 = vector.extract_strided_slice %96 {offsets = [0, 1, 0, 0], sizes = [2, 16, 16, 128], strides = [1, 1, 1, 1]} : vector<2x18x16x128xf32> to vector<2x16x16x128xf32>
    %119 = vector.shape_cast %118 : vector<2x16x16x128xf32> to vector<512x128xf32>
    %c1_89 = arith.constant 1 : index
    %c0_90 = arith.constant 0 : index
    %c0_91 = arith.constant 0 : index
    %c0_92 = arith.constant 0 : index
    %120 = vector.load %arg5[%c1_89, %c0_90, %c0_91, %c0_92] : memref<3x3x128x128xf32, #tpu.memory_space<vmem>>, vector<1x1x128x128xf32>
    %121 = vector.shape_cast %120 : vector<1x1x128x128xf32> to vector<128x128xf32>
    %cst_93 = arith.constant dense<0.000000e+00> : vector<512x128xf32>
    %122 = tpu.matmul %119, %121, %cst_93 {dimension_numbers = #tpu.dot_dimension_numbers<[1], [0], [0], [1], [0, 0, 1, 1], [], []>} : vector<512x128xf32>, vector<128x128xf32>, vector<512x128xf32> -> vector<512x128xf32>
    %123 = arith.addf %117, %122 : vector<512x128xf32>
    %124 = vector.extract_strided_slice %97 {offsets = [0, 1, 0, 0], sizes = [2, 16, 16, 128], strides = [1, 1, 1, 1]} : vector<2x18x16x128xf32> to vector<2x16x16x128xf32>
    %125 = vector.shape_cast %124 : vector<2x16x16x128xf32> to vector<512x128xf32>
    %c1_94 = arith.constant 1 : index
    %c1_95 = arith.constant 1 : index
    %c0_96 = arith.constant 0 : index
    %c0_97 = arith.constant 0 : index
    %126 = vector.load %arg5[%c1_94, %c1_95, %c0_96, %c0_97] : memref<3x3x128x128xf32, #tpu.memory_space<vmem>>, vector<1x1x128x128xf32>
    %127 = vector.shape_cast %126 : vector<1x1x128x128xf32> to vector<128x128xf32>
    %cst_98 = arith.constant dense<0.000000e+00> : vector<512x128xf32>
    %128 = tpu.matmul %125, %127, %cst_98 {dimension_numbers = #tpu.dot_dimension_numbers<[1], [0], [0], [1], [0, 0, 1, 1], [], []>} : vector<512x128xf32>, vector<128x128xf32>, vector<512x128xf32> -> vector<512x128xf32>
    %129 = arith.addf %123, %128 : vector<512x128xf32>
    %130 = vector.extract_strided_slice %98 {offsets = [0, 1, 0, 0], sizes = [2, 16, 16, 128], strides = [1, 1, 1, 1]} : vector<2x18x16x128xf32> to vector<2x16x16x128xf32>
    %131 = vector.shape_cast %130 : vector<2x16x16x128xf32> to vector<512x128xf32>
    %c1_99 = arith.constant 1 : index
    %c2_100 = arith.constant 2 : index
    %c0_101 = arith.constant 0 : index
    %c0_102 = arith.constant 0 : index
    %132 = vector.load %arg5[%c1_99, %c2_100, %c0_101, %c0_102] : memref<3x3x128x128xf32, #tpu.memory_space<vmem>>, vector<1x1x128x128xf32>
    %133 = vector.shape_cast %132 : vector<1x1x128x128xf32> to vector<128x128xf32>
    %cst_103 = arith.constant dense<0.000000e+00> : vector<512x128xf32>
    %134 = tpu.matmul %131, %133, %cst_103 {dimension_numbers = #tpu.dot_dimension_numbers<[1], [0], [0], [1], [0, 0, 1, 1], [], []>} : vector<512x128xf32>, vector<128x128xf32>, vector<512x128xf32> -> vector<512x128xf32>
    %135 = arith.addf %129, %134 : vector<512x128xf32>
    %136 = vector.extract_strided_slice %96 {offsets = [0, 2, 0, 0], sizes = [2, 16, 16, 128], strides = [1, 1, 1, 1]} : vector<2x18x16x128xf32> to vector<2x16x16x128xf32>
    %137 = vector.shape_cast %136 : vector<2x16x16x128xf32> to vector<512x128xf32>
    %c2_104 = arith.constant 2 : index
    %c0_105 = arith.constant 0 : index
    %c0_106 = arith.constant 0 : index
    %c0_107 = arith.constant 0 : index
    %138 = vector.load %arg5[%c2_104, %c0_105, %c0_106, %c0_107] : memref<3x3x128x128xf32, #tpu.memory_space<vmem>>, vector<1x1x128x128xf32>
    %139 = vector.shape_cast %138 : vector<1x1x128x128xf32> to vector<128x128xf32>
    %cst_108 = arith.constant dense<0.000000e+00> : vector<512x128xf32>
    %140 = tpu.matmul %137, %139, %cst_108 {dimension_numbers = #tpu.dot_dimension_numbers<[1], [0], [0], [1], [0, 0, 1, 1], [], []>} : vector<512x128xf32>, vector<128x128xf32>, vector<512x128xf32> -> vector<512x128xf32>
    %141 = arith.addf %135, %140 : vector<512x128xf32>
    %142 = vector.extract_strided_slice %97 {offsets = [0, 2, 0, 0], sizes = [2, 16, 16, 128], strides = [1, 1, 1, 1]} : vector<2x18x16x128xf32> to vector<2x16x16x128xf32>
    %143 = vector.shape_cast %142 : vector<2x16x16x128xf32> to vector<512x128xf32>
    %c2_109 = arith.constant 2 : index
    %c1_110 = arith.constant 1 : index
    %c0_111 = arith.constant 0 : index
    %c0_112 = arith.constant 0 : index
    %144 = vector.load %arg5[%c2_109, %c1_110, %c0_111, %c0_112] : memref<3x3x128x128xf32, #tpu.memory_space<vmem>>, vector<1x1x128x128xf32>
    %145 = vector.shape_cast %144 : vector<1x1x128x128xf32> to vector<128x128xf32>
    %cst_113 = arith.constant dense<0.000000e+00> : vector<512x128xf32>
    %146 = tpu.matmul %143, %145, %cst_113 {dimension_numbers = #tpu.dot_dimension_numbers<[1], [0], [0], [1], [0, 0, 1, 1], [], []>} : vector<512x128xf32>, vector<128x128xf32>, vector<512x128xf32> -> vector<512x128xf32>
    %147 = arith.addf %141, %146 : vector<512x128xf32>
    %148 = vector.extract_strided_slice %98 {offsets = [0, 2, 0, 0], sizes = [2, 16, 16, 128], strides = [1, 1, 1, 1]} : vector<2x18x16x128xf32> to vector<2x16x16x128xf32>
    %149 = vector.shape_cast %148 : vector<2x16x16x128xf32> to vector<512x128xf32>
    %c2_114 = arith.constant 2 : index
    %c2_115 = arith.constant 2 : index
    %c0_116 = arith.constant 0 : index
    %c0_117 = arith.constant 0 : index
    %150 = vector.load %arg5[%c2_114, %c2_115, %c0_116, %c0_117] : memref<3x3x128x128xf32, #tpu.memory_space<vmem>>, vector<1x1x128x128xf32>
    %151 = vector.shape_cast %150 : vector<1x1x128x128xf32> to vector<128x128xf32>
    %cst_118 = arith.constant dense<0.000000e+00> : vector<512x128xf32>
    %152 = tpu.matmul %149, %151, %cst_118 {dimension_numbers = #tpu.dot_dimension_numbers<[1], [0], [0], [1], [0, 0, 1, 1], [], []>} : vector<512x128xf32>, vector<128x128xf32>, vector<512x128xf32> -> vector<512x128xf32>
    %153 = arith.addf %147, %152 : vector<512x128xf32>
    %c0_119 = arith.constant 0 : index
    %c0_120 = arith.constant 0 : index
    %154 = vector.load %arg6[%c0_119, %c0_120] : memref<1x128xf32, #tpu.memory_space<vmem>>, vector<1x128xf32>
    %155 = vector.broadcast %154 : vector<1x128xf32> to vector<512x128xf32>
    %156 = arith.addf %153, %155 : vector<512x128xf32>
    %cst_121 = arith.constant dense<0.000000e+00> : vector<128xf32>
    %157 = vector.multi_reduction <add>, %156, %cst_121 [0] : vector<512x128xf32> to vector<128xf32>
    %158 = vector.shape_cast %157 : vector<128xf32> to vector<1x128xf32>
    %159 = arith.mulf %156, %156 : vector<512x128xf32>
    %cst_122 = arith.constant dense<0.000000e+00> : vector<128xf32>
    %160 = vector.multi_reduction <add>, %159, %cst_122 [0] : vector<512x128xf32> to vector<128xf32>
    %161 = vector.shape_cast %160 : vector<128xf32> to vector<1x128xf32>
    %cst_123 = arith.constant 0.001953125 : f32
    %162 = vector.broadcast %cst_123 : f32 to vector<1x128xf32>
    %163 = arith.mulf %158, %162 : vector<1x128xf32>
    %cst_124 = arith.constant 0.001953125 : f32
    %164 = vector.broadcast %cst_124 : f32 to vector<1x128xf32>
    %165 = arith.mulf %161, %164 : vector<1x128xf32>
    %166 = arith.mulf %163, %163 : vector<1x128xf32>
    %167 = arith.subf %165, %166 : vector<1x128xf32>
    %c0_125 = arith.constant 0 : index
    %c0_126 = arith.constant 0 : index
    %168 = vector.load %arg7[%c0_125, %c0_126] : memref<1x128xf32, #tpu.memory_space<vmem>>, vector<1x128xf32>
    %cst_127 = arith.constant 9.99999974E-6 : f32
    %169 = vector.broadcast %cst_127 : f32 to vector<1x128xf32>
    %170 = arith.addf %167, %169 : vector<1x128xf32>
    %171 = math.rsqrt %170 : vector<1x128xf32>
    %172 = arith.mulf %168, %171 : vector<1x128xf32>
    %c0_128 = arith.constant 0 : index
    %c0_129 = arith.constant 0 : index
    %173 = vector.load %arg8[%c0_128, %c0_129] : memref<1x128xf32, #tpu.memory_space<vmem>>, vector<1x128xf32>
    %174 = arith.mulf %163, %172 : vector<1x128xf32>
    %175 = arith.subf %173, %174 : vector<1x128xf32>
    %176 = vector.broadcast %172 : vector<1x128xf32> to vector<512x128xf32>
    %177 = arith.mulf %156, %176 : vector<512x128xf32>
    %178 = vector.broadcast %175 : vector<1x128xf32> to vector<512x128xf32>
    %179 = arith.addf %177, %178 : vector<512x128xf32>
    %c0_130 = arith.constant 0 : index
    %c1_131 = arith.constant 1 : index
    %c1_132 = arith.constant 1 : index
    %c0_133 = arith.constant 0 : index
    %180 = vector.load %arg0[%c0_130, %c1_131, %c1_132, %c0_133] : memref<2x18x18x128xf32, #tpu.memory_space<vmem>>, vector<2x16x16x128xf32>
    %181 = vector.shape_cast %180 : vector<2x16x16x128xf32> to vector<512x128xf32>
    %182 = arith.addf %181, %179 : vector<512x128xf32>
    %183 = vector.shape_cast %182 : vector<512x128xf32> to vector<2x16x16x128xf32>
    %c0_134 = arith.constant 0 : index
    %c0_135 = arith.constant 0 : index
    %c0_136 = arith.constant 0 : index
    %c0_137 = arith.constant 0 : index
    %184 = vector.load %arg10[%c0_134, %c0_135, %c0_136, %c0_137] : memref<2x16x16x128xf32, #tpu.memory_space<vmem>>, vector<2x16x16x128xf32>
    tpu.vector_store %arg10[%c0_134, %c0_135, %c0_136, %c0_137], %183 {strides = array<i32>} : memref<2x16x16x128xf32, #tpu.memory_space<vmem>>, vector<2x16x16x128xf32>,
    return
  }
}

</mosaic_0001>

<llo_original>
// kernel: tpu_custom_call.1
$region0: #{tpu_custom_call.1}
  #allocation0 [shape = 'u32[]', space=smem, size = 0x4, offset = 0x4, fixed_abs, tag = 'smem constant byte address 0x4 - core index']
  #allocation1 [shape = 'u32[144,128]{1,0:T(1,128)}', space=vmem, size = 0x12000, scoped, tag = 'internal scratch']
  #allocation2 [shape = 'f32[2,18,18,128]{3,2,1,0:T(8,128)}', space=vmem, size = 0x6c000, scoped, tag = 'scratch operand']
  #allocation3 [shape = 'f32[1,1]{1,0:T(1,128)S(6)}', space=smem, size = 0x200, scoped, tag = 'scoped memory for tpu_custom_call.1']
  %s0 = inlined_call_operand.vmem [shape: f32[2,18,18,128], index: 0, kind: input, shape index: {}]
  %s1 = inlined_call_operand.vmem [shape: f32[3,3,128,128], index: 1, kind: input, shape index: {}]
  %s2 = inlined_call_operand.vmem [shape: f32[1,128], index: 2, kind: input, shape index: {}]
  %s3 = inlined_call_operand.vmem [shape: f32[1,128], index: 3, kind: input, shape index: {}]
  %s4 = inlined_call_operand.vmem [shape: f32[1,128], index: 4, kind: input, shape index: {}]
  %s5 = inlined_call_operand.hbm [shape: f32[3,3,128,128], index: 5, kind: input, shape index: {}]
  %s6 = inlined_call_operand.vmem [shape: f32[1,128], index: 6, kind: input, shape index: {}]
  %s7 = inlined_call_operand.vmem [shape: f32[1,128], index: 7, kind: input, shape index: {}]
  %s8 = inlined_call_operand.vmem [shape: f32[1,128], index: 8, kind: input, shape index: {}]
  %s9 = inlined_call_operand.<no memory space> [shape: f32[1,1], index: 9, kind: input, shape index: {}]
  %s10 = inlined_call_operand.hbm [shape: f32[2,16,16,128], index: 10, kind: output, shape index: {}]
  %s11 = sld [smem:[#allocation0]]
  $region54: #{tpu_custom_call.1} parent=0
    _
  %s13 = ssub.s32 1, %s11
  %s14 = scalar_select 0, %s13, %s11
  %15 = sst [smem:[#allocation3]] %s9
  $region1: #{tpu_custom_call.1} parent=0
    #allocation4 [shape = 'u8[589824]{0}', space=vmem, size = 0x90000, scoped, tag = 'input window, operand 5, single buffered']
    #allocation5 [shape = 's32[1]{0}', space=sflag, size = 0x4, scoped, tag = 'scoped memory for tpu_custom_call.1']
    #allocation6 [shape = 's32[1]{0}', space=sflag, size = 0x4, scoped, tag = 'scoped memory for tpu_custom_call.1']
    #allocation7 [shape = 'u8[262144]{0}', space=vmem, size = 0x40000, scoped, tag = 'output window, operand 0, single buffered']
    %16 = vsyncpa [#allocation5], 0
    %17 = vsyncpa [#allocation6], 0
    // Predicated region
    $region2: #{tpu_custom_call.1} parent=1 // pred_check
      _
    $region3: #{tpu_custom_call.1} parent=1 // pred_check_branch
      %19 = sbr.rel (0) target = $region5
    $region4: #{tpu_custom_call.1} parent=1 // pred_region
      _
    $region5: #{tpu_custom_call.1} parent=1 // pred_fallthru
      _
    // Predicated region
    $region6: #{tpu_custom_call.1} parent=1 // pred_check
      _
    $region7: #{tpu_custom_call.1} parent=1 // pred_check_branch
      %21 = sbr.rel (0) target = $region9
    $region8: #{tpu_custom_call.1} parent=1 // pred_region
      _
    $region9: #{tpu_custom_call.1} parent=1 // pred_fallthru
      _
    // Predicated region
    $region10: #{tpu_custom_call.1} parent=1 // pred_check
      _
    $region11: #{tpu_custom_call.1} parent=1 // pred_check_branch
      %23 = sbr.rel (0) target = $region13
    $region12: #{tpu_custom_call.1} parent=1 // pred_region
      _
    $region13: #{tpu_custom_call.1} parent=1 // pred_fallthru
      _
    // Predicated region
    $region14: #{tpu_custom_call.1} parent=1 // pred_check
      _
    $region15: #{tpu_custom_call.1} parent=1 // pred_check_branch
      %25 = sbr.rel (0) target = $region17
    $region16: #{tpu_custom_call.1} parent=1 // pred_region
      _
    $region17: #{tpu_custom_call.1} parent=1 // pred_fallthru
      _
    // Predicated region
    $region18: #{tpu_custom_call.1} parent=1 // pred_check
      _
    $region19: #{tpu_custom_call.1} parent=1 // pred_check_branch
      %27 = sbr.rel (0) target = $region21
    $region20: #{tpu_custom_call.1} parent=1 // pred_region
      _
    $region21: #{tpu_custom_call.1} parent=1 // pred_fallthru
      _
    // Predicated region
    $region22: #{tpu_custom_call.1} parent=1 // pred_check
      _
    $region23: #{tpu_custom_call.1} parent=1 // pred_check_branch
      %29 = sbr.rel (0) target = $region25
    $region24: #{tpu_custom_call.1} parent=1 // pred_region
      %s31 = ssub.s32 18432, 18432
      %32 = vsyncadd [#allocation5], %s31
      %s33 = sshll.u32 [#allocation4], 4
      %s34 = int_to_ptr.vmem [resolvable:$true] %s33
      %39 = dma.hbm_to_vmem [thread:$0]  %s5, 18432, %s34, [#allocation5], 128, 128, 8
    $region25: #{tpu_custom_call.1} parent=1 // pred_fallthru
      _
    // Predicated region
    $region26: #{tpu_custom_call.1} parent=1 // pred_check
      _
    $region27: #{tpu_custom_call.1} parent=1 // pred_check_branch
      %41 = sbr.rel (0) target = $region29
    $region28: #{tpu_custom_call.1} parent=1 // pred_region
      _
    $region29: #{tpu_custom_call.1} parent=1 // pred_fallthru
      _
    // Predicated region
    $region30: #{tpu_custom_call.1} parent=1 // pred_check
      _
    $region31: #{tpu_custom_call.1} parent=1 // pred_check_branch
      %43 = sbr.rel (0) target = $region33
    $region32: #{tpu_custom_call.1} parent=1 // pred_region
      _
    $region33: #{tpu_custom_call.1} parent=1 // pred_fallthru
      _
    // Predicated region
    $region34: #{tpu_custom_call.1} parent=1 // pred_check
      _
    $region35: #{tpu_custom_call.1} parent=1 // pred_check_branch
      %45 = sbr.rel (0) target = $region37
    $region36: #{tpu_custom_call.1} parent=1 // pred_region
      _
    $region37: #{tpu_custom_call.1} parent=1 // pred_fallthru
      _
    // Predicated region
    $region38: #{tpu_custom_call.1} parent=1 // pred_check
      _
    $region39: #{tpu_custom_call.1} parent=1 // pred_check_branch
      %47 = sbr.rel (0) target = $region41
    $region40: #{tpu_custom_call.1} parent=1 // pred_region
      _
    $region41: #{tpu_custom_call.1} parent=1 // pred_fallthru
      _
    // Predicated region
    $region42: #{tpu_custom_call.1} parent=1 // pred_check
      _
    $region43: #{tpu_custom_call.1} parent=1 // pred_check_branch
      %49 = sbr.rel (0) target = $region45
    $region44: #{tpu_custom_call.1} parent=1 // pred_region
      %50 = dma.done [#allocation5], 18432
    $region45: #{tpu_custom_call.1} parent=1 // pred_fallthru
      _
    %v51 = vld [vmem:[%s0] sm:$0xff]
    %v52 = vld [vmem:[%s0 + $0x8] sm:$0xff]
    %v53 = vld [vmem:[%s0 + $0x10] sm:$0x3]
    %v54 = vld [vmem:[%s0 + $0x18] sm:$0xff]
    %v55 = vld [vmem:[%s0 + $0x20] sm:$0xff]
    %v56 = vld [vmem:[%s0 + $0x28] sm:$0x3]
    %v57 = vld [vmem:[%s0 + $0x30] sm:$0xff]
    %v58 = vld [vmem:[%s0 + $0x38] sm:$0xff]
    %v59 = vld [vmem:[%s0 + $0x40] sm:$0x3]
    %v60 = vld [vmem:[%s0 + $0x48] sm:$0xff]
    %v61 = vld [vmem:[%s0 + $0x50] sm:$0xff]
    %v62 = vld [vmem:[%s0 + $0x58] sm:$0x3]
    %v63 = vld [vmem:[%s0 + $0x60] sm:$0xff]
    %v64 = vld [vmem:[%s0 + $0x68] sm:$0xff]
    %v65 = vld [vmem:[%s0 + $0x70] sm:$0x3]
    %v66 = vld [vmem:[%s0 + $0x78] sm:$0xff]
    %v67 = vld [vmem:[%s0 + $0x80] sm:$0xff]
    %v68 = vld [vmem:[%s0 + $0x88] sm:$0x3]
    %v69 = vld [vmem:[%s0 + $0x90] sm:$0xff]
    %v70 = vld [vmem:[%s0 + $0x98] sm:$0xff]
    %v71 = vld [vmem:[%s0 + $0xa0] sm:$0x3]
    %v72 = vld [vmem:[%s0 + $0xa8] sm:$0xff]
    %v73 = vld [vmem:[%s0 + $0xb0] sm:$0xff]
    %v74 = vld [vmem:[%s0 + $0xb8] sm:$0x3]
    %v75 = vld [vmem:[%s0 + $0xc0] sm:$0xff]
    %v76 = vld [vmem:[%s0 + $0xc8] sm:$0xff]
    %v77 = vld [vmem:[%s0 + $0xd0] sm:$0x3]
    %v78 = vld [vmem:[%s0 + $0xd8] sm:$0xff]
    %v79 = vld [vmem:[%s0 + $0xe0] sm:$0xff]
    %v80 = vld [vmem:[%s0 + $0xe8] sm:$0x3]
    %v81 = vld [vmem:[%s0 + $0xf0] sm:$0xff]
    %v82 = vld [vmem:[%s0 + $0xf8] sm:$0xff]
    %v83 = vld [vmem:[%s0 + $0x100] sm:$0x3]
    %v84 = vld [vmem:[%s0 + $0x108] sm:$0xff]
    %v85 = vld [vmem:[%s0 + $0x110] sm:$0xff]
    %v86 = vld [vmem:[%s0 + $0x118] sm:$0x3]
    %v87 = vld [vmem:[%s0 + $0x120] sm:$0xff]
    %v88 = vld [vmem:[%s0 + $0x128] sm:$0xff]
    %v89 = vld [vmem:[%s0 + $0x130] sm:$0x3]
    %v90 = vld [vmem:[%s0 + $0x138] sm:$0xff]
    %v91 = vld [vmem:[%s0 + $0x140] sm:$0xff]
    %v92 = vld [vmem:[%s0 + $0x148] sm:$0x3]
    %v93 = vld [vmem:[%s0 + $0x150] sm:$0xff]
    %v94 = vld [vmem:[%s0 + $0x158] sm:$0xff]
    %v95 = vld [vmem:[%s0 + $0x160] sm:$0x3]
    %v96 = vld [vmem:[%s0 + $0x168] sm:$0xff]
    %v97 = vld [vmem:[%s0 + $0x170] sm:$0xff]
    %v98 = vld [vmem:[%s0 + $0x178] sm:$0x3]
    %v99 = vld [vmem:[%s0 + $0x180] sm:$0xff]
    %v100 = vld [vmem:[%s0 + $0x188] sm:$0xff]
    %v101 = vld [vmem:[%s0 + $0x190] sm:$0x3]
    %v102 = vld [vmem:[%s0 + $0x198] sm:$0xff]
    %v103 = vld [vmem:[%s0 + $0x1a0] sm:$0xff]
    %v104 = vld [vmem:[%s0 + $0x1a8] sm:$0x3]
    %v105 = vld [vmem:[%s0 + $0x1b0] sm:$0xff]
    %v106 = vld [vmem:[%s0 + $0x1b8] sm:$0xff]
    %v107 = vld [vmem:[%s0 + $0x1c0] sm:$0x3]
    %v108 = vld [vmem:[%s0 + $0x1c8] sm:$0xff]
    %v109 = vld [vmem:[%s0 + $0x1d0] sm:$0xff]
    %v110 = vld [vmem:[%s0 + $0x1d8] sm:$0x3]
    %v111 = vld [vmem:[%s0 + $0x1e0] sm:$0xff]
    %v112 = vld [vmem:[%s0 + $0x1e8] sm:$0xff]
    %v113 = vld [vmem:[%s0 + $0x1f0] sm:$0x3]
    %v114 = vld [vmem:[%s0 + $0x1f8] sm:$0xff]
    %v115 = vld [vmem:[%s0 + $0x200] sm:$0xff]
    %v116 = vld [vmem:[%s0 + $0x208] sm:$0x3]
    %v117 = vld [vmem:[%s0 + $0x210] sm:$0xff]
    %v118 = vld [vmem:[%s0 + $0x218] sm:$0xff]
    %v119 = vld [vmem:[%s0 + $0x220] sm:$0x3]
    %v120 = vld [vmem:[%s0 + $0x228] sm:$0xff]
    %v121 = vld [vmem:[%s0 + $0x230] sm:$0xff]
    %v122 = vld [vmem:[%s0 + $0x238] sm:$0x3]
    %v123 = vld [vmem:[%s0 + $0x240] sm:$0xff]
    %v124 = vld [vmem:[%s0 + $0x248] sm:$0xff]
    %v125 = vld [vmem:[%s0 + $0x250] sm:$0x3]
    %v126 = vld [vmem:[%s0 + $0x258] sm:$0xff]
    %v127 = vld [vmem:[%s0 + $0x260] sm:$0xff]
    %v128 = vld [vmem:[%s0 + $0x268] sm:$0x3]
    %v129 = vld [vmem:[%s0 + $0x270] sm:$0xff]
    %v130 = vld [vmem:[%s0 + $0x278] sm:$0xff]
    %v131 = vld [vmem:[%s0 + $0x280] sm:$0x3]
    %v132 = vld [vmem:[%s0 + $0x288] sm:$0xff]
    %v133 = vld [vmem:[%s0 + $0x290] sm:$0xff]
    %v134 = vld [vmem:[%s0 + $0x298] sm:$0x3]
    %v135 = vld [vmem:[%s0 + $0x2a0] sm:$0xff]
    %v136 = vld [vmem:[%s0 + $0x2a8] sm:$0xff]
    %v137 = vld [vmem:[%s0 + $0x2b0] sm:$0x3]
    %v138 = vld [vmem:[%s0 + $0x2b8] sm:$0xff]
    %v139 = vld [vmem:[%s0 + $0x2c0] sm:$0xff]
    %v140 = vld [vmem:[%s0 + $0x2c8] sm:$0x3]
    %v141 = vld [vmem:[%s0 + $0x2d0] sm:$0xff]
    %v142 = vld [vmem:[%s0 + $0x2d8] sm:$0xff]
    %v143 = vld [vmem:[%s0 + $0x2e0] sm:$0x3]
    %v144 = vld [vmem:[%s0 + $0x2e8] sm:$0xff]
    %v145 = vld [vmem:[%s0 + $0x2f0] sm:$0xff]
    %v146 = vld [vmem:[%s0 + $0x2f8] sm:$0x3]
    %v147 = vld [vmem:[%s0 + $0x300] sm:$0xff]
    %v148 = vld [vmem:[%s0 + $0x308] sm:$0xff]
    %v149 = vld [vmem:[%s0 + $0x310] sm:$0x3]
    %v150 = vld [vmem:[%s0 + $0x318] sm:$0xff]
    %v151 = vld [vmem:[%s0 + $0x320] sm:$0xff]
    %v152 = vld [vmem:[%s0 + $0x328] sm:$0x3]
    %v153 = vld [vmem:[%s0 + $0x330] sm:$0xff]
    %v154 = vld [vmem:[%s0 + $0x338] sm:$0xff]
    %v155 = vld [vmem:[%s0 + $0x340] sm:$0x3]
    %v156 = vld [vmem:[%s0 + $0x348] sm:$0xff]
    %v157 = vld [vmem:[%s0 + $0x350] sm:$0xff]
    %v158 = vld [vmem:[%s0 + $0x358] sm:$0x3]
    %v159 = vld [vmem:[%s1] sm:$0xff]
    %v160 = vld [vmem:[%s1 + $0x8] sm:$0xff]
    %v161 = vld [vmem:[%s1 + $0x10] sm:$0xff]
    %v162 = vld [vmem:[%s1 + $0x18] sm:$0xff]
    %v163 = vld [vmem:[%s1 + $0x20] sm:$0xff]
    %v164 = vld [vmem:[%s1 + $0x28] sm:$0xff]
    %v165 = vld [vmem:[%s1 + $0x30] sm:$0xff]
    %v166 = vld [vmem:[%s1 + $0x38] sm:$0xff]
    %v167 = vld [vmem:[%s1 + $0x40] sm:$0xff]
    %v168 = vld [vmem:[%s1 + $0x48] sm:$0xff]
    %v169 = vld [vmem:[%s1 + $0x50] sm:$0xff]
    %v170 = vld [vmem:[%s1 + $0x58] sm:$0xff]
    %v171 = vld [vmem:[%s1 + $0x60] sm:$0xff]
    %v172 = vld [vmem:[%s1 + $0x68] sm:$0xff]
    %v173 = vld [vmem:[%s1 + $0x70] sm:$0xff]
    %v174 = vld [vmem:[%s1 + $0x78] sm:$0xff]
    %vm271 = vcmask 1046528
    %v272 = vrot.slane %v51, 1
    %v273 = vrot.slane %v52, 1
    %v274 = vsel %vm271, %v272, %v273
    %v275 = vrot.slane %v53, 1
    %v276 = vsel %vm271, %v273, %v275
    %v277 = vrot.slane %v54, 1
    %v278 = vrot.slane %v55, 1
    %v279 = vsel %vm271, %v277, %v278
    %v280 = vrot.slane %v56, 1
    %v281 = vsel %vm271, %v278, %v280
    %v282 = vrot.slane %v57, 1
    %v283 = vrot.slane %v58, 1
    %v284 = vsel %vm271, %v282, %v283
    %v285 = vrot.slane %v59, 1
    %v286 = vsel %vm271, %v283, %v285
    %v287 = vrot.slane %v60, 1
    %v288 = vrot.slane %v61, 1
    %v289 = vsel %vm271, %v287, %v288
    %v290 = vrot.slane %v62, 1
    %v291 = vsel %vm271, %v288, %v290
    %v292 = vrot.slane %v63, 1
    %v293 = vrot.slane %v64, 1
    %v294 = vsel %vm271, %v292, %v293
    %v295 = vrot.slane %v65, 1
    %v296 = vsel %vm271, %v293, %v295
    %v297 = vrot.slane %v66, 1
    %v298 = vrot.slane %v67, 1
    %v299 = vsel %vm271, %v297, %v298
    %v300 = vrot.slane %v68, 1
    %v301 = vsel %vm271, %v298, %v300
    %v302 = vrot.slane %v69, 1
    %v303 = vrot.slane %v70, 1
    %v304 = vsel %vm271, %v302, %v303
    %v305 = vrot.slane %v71, 1
    %v306 = vsel %vm271, %v303, %v305
    %v307 = vrot.slane %v72, 1
    %v308 = vrot.slane %v73, 1
    %v309 = vsel %vm271, %v307, %v308
    %v310 = vrot.slane %v74, 1
    %v311 = vsel %vm271, %v308, %v310
    %v312 = vrot.slane %v75, 1
    %v313 = vrot.slane %v76, 1
    %v314 = vsel %vm271, %v312, %v313
    %v315 = vrot.slane %v77, 1
    %v316 = vsel %vm271, %v313, %v315
    %v317 = vrot.slane %v78, 1
    %v318 = vrot.slane %v79, 1
    %v319 = vsel %vm271, %v317, %v318
    %v320 = vrot.slane %v80, 1
    %v321 = vsel %vm271, %v318, %v320
    %v322 = vrot.slane %v81, 1
    %v323 = vrot.slane %v82, 1
    %v324 = vsel %vm271, %v322, %v323
    %v325 = vrot.slane %v83, 1
    %v326 = vsel %vm271, %v323, %v325
    %v327 = vrot.slane %v84, 1
    %v328 = vrot.slane %v85, 1
    %v329 = vsel %vm271, %v327, %v328
    %v330 = vrot.slane %v86, 1
    %v331 = vsel %vm271, %v328, %v330
    %v332 = vrot.slane %v87, 1
    %v333 = vrot.slane %v88, 1
    %v334 = vsel %vm271, %v332, %v333
    %v335 = vrot.slane %v89, 1
    %v336 = vsel %vm271, %v333, %v335
    %v337 = vrot.slane %v90, 1
    %v338 = vrot.slane %v91, 1
    %v339 = vsel %vm271, %v337, %v338
    %v340 = vrot.slane %v92, 1
    %v341 = vsel %vm271, %v338, %v340
    %v342 = vrot.slane %v93, 1
    %v343 = vrot.slane %v94, 1
    %v344 = vsel %vm271, %v342, %v343
    %v345 = vrot.slane %v95, 1
    %v346 = vsel %vm271, %v343, %v345
    %v347 = vrot.slane %v96, 1
    %v348 = vrot.slane %v97, 1
    %v349 = vsel %vm271, %v347, %v348
    %v350 = vrot.slane %v98, 1
    %v351 = vsel %vm271, %v348, %v350
    %v352 = vrot.slane %v105, 1
    %v353 = vrot.slane %v106, 1
    %v354 = vsel %vm271, %v352, %v353
    %v355 = vrot.slane %v107, 1
    %v356 = vsel %vm271, %v353, %v355
    %v357 = vrot.slane %v108, 1
    %v358 = vrot.slane %v109, 1
    %v359 = vsel %vm271, %v357, %v358
    %v360 = vrot.slane %v110, 1
    %v361 = vsel %vm271, %v358, %v360
    %v362 = vrot.slane %v111, 1
    %v363 = vrot.slane %v112, 1
    %v364 = vsel %vm271, %v362, %v363
    %v365 = vrot.slane %v113, 1
    %v366 = vsel %vm271, %v363, %v365
    %v367 = vrot.slane %v114, 1
    %v368 = vrot.slane %v115, 1
    %v369 = vsel %vm271, %v367, %v368
    %v370 = vrot.slane %v116, 1
    %v371 = vsel %vm271, %v368, %v370
    %v372 = vrot.slane %v117, 1
    %v373 = vrot.slane %v118, 1
    %v374 = vsel %vm271, %v372, %v373
    %v375 = vrot.slane %v119, 1
    %v376 = vsel %vm271, %v373, %v375
    %v377 = vrot.slane %v120, 1
    %v378 = vrot.slane %v121, 1
    %v379 = vsel %vm271, %v377, %v378
    %v380 = vrot.slane %v122, 1
    %v381 = vsel %vm271, %v378, %v380
    %v382 = vrot.slane %v123, 1
    %v383 = vrot.slane %v124, 1
    %v384 = vsel %vm271, %v382, %v383
    %v385 = vrot.slane %v125, 1
    %v386 = vsel %vm271, %v383, %v385
    %v387 = vrot.slane %v126, 1
    %v388 = vrot.slane %v127, 1
    %v389 = vsel %vm271, %v387, %v388
    %v390 = vrot.slane %v128, 1
    %v391 = vsel %vm271, %v388, %v390
    %v392 = vrot.slane %v129, 1
    %v393 = vrot.slane %v130, 1
    %v394 = vsel %vm271, %v392, %v393
    %v395 = vrot.slane %v131, 1
    %v396 = vsel %vm271, %v393, %v395
    %v397 = vrot.slane %v132, 1
    %v398 = vrot.slane %v133, 1
    %v399 = vsel %vm271, %v397, %v398
    %v400 = vrot.slane %v134, 1
    %v401 = vsel %vm271, %v398, %v400
    %v402 = vrot.slane %v135, 1
    %v403 = vrot.slane %v136, 1
    %v404 = vsel %vm271, %v402, %v403
    %v405 = vrot.slane %v137, 1
    %v406 = vsel %vm271, %v403, %v405
    %v407 = vrot.slane %v138, 1
    %v408 = vrot.slane %v139, 1
    %v409 = vsel %vm271, %v407, %v408
    %v410 = vrot.slane %v140, 1
    %v411 = vsel %vm271, %v408, %v410
    %v412 = vrot.slane %v141, 1
    %v413 = vrot.slane %v142, 1
    %v414 = vsel %vm271, %v412, %v413
    %v415 = vrot.slane %v143, 1
    %v416 = vsel %vm271, %v413, %v415
    %v417 = vrot.slane %v144, 1
    %v418 = vrot.slane %v145, 1
    %v419 = vsel %vm271, %v417, %v418
    %v420 = vrot.slane %v146, 1
    %v421 = vsel %vm271, %v418, %v420
    %v422 = vrot.slane %v147, 1
    %v423 = vrot.slane %v148, 1
    %v424 = vsel %vm271, %v422, %v423
    %v425 = vrot.slane %v149, 1
    %v426 = vsel %vm271, %v423, %v425
    %v427 = vrot.slane %v150, 1
    %v428 = vrot.slane %v151, 1
    %v429 = vsel %vm271, %v427, %v428
    %v430 = vrot.slane %v152, 1
    %v431 = vsel %vm271, %v428, %v430
    %s496 = scalar_lea.vmem %s1, 128
    %v497 = vld [vmem:[%s496] sm:$0xff]
    %v498 = vld [vmem:[%s496 + $0x8] sm:$0xff]
    %v499 = vld [vmem:[%s496 + $0x10] sm:$0xff]
    %v500 = vld [vmem:[%s496 + $0x18] sm:$0xff]
    %v501 = vld [vmem:[%s496 + $0x20] sm:$0xff]
    %v502 = vld [vmem:[%s496 + $0x28] sm:$0xff]
    %v503 = vld [vmem:[%s496 + $0x30] sm:$0xff]
    %v504 = vld [vmem:[%s496 + $0x38] sm:$0xff]
    %v505 = vld [vmem:[%s496 + $0x40] sm:$0xff]
    %v506 = vld [vmem:[%s496 + $0x48] sm:$0xff]
    %v507 = vld [vmem:[%s496 + $0x50] sm:$0xff]
    %v508 = vld [vmem:[%s496 + $0x58] sm:$0xff]
    %v509 = vld [vmem:[%s496 + $0x60] sm:$0xff]
    %v510 = vld [vmem:[%s496 + $0x68] sm:$0xff]
    %v511 = vld [vmem:[%s496 + $0x70] sm:$0xff]
    %v512 = vld [vmem:[%s496 + $0x78] sm:$0xff]
    %513 = vmatprep.subr.mxu0 0.0
    %514 = vmatpush1.msra.mxu0 %v497
    %515 = vmatprep.subr.mxu0 0.0
    %516 = vmatpush1.msra.mxu0 %v498
    %517 = vmatprep.subr.mxu0 0.0
    %518 = vmatpush1.msra.mxu0 %v499
    %519 = vmatprep.subr.mxu0 0.0
    %520 = vmatpush1.msra.mxu0 %v500
    %521 = vmatprep.subr.mxu0 0.0
    %522 = vmatpush1.msra.mxu0 %v501
    %523 = vmatprep.subr.mxu0 0.0
    %524 = vmatpush1.msra.mxu0 %v502
    %525 = vmatprep.subr.mxu0 0.0
    %526 = vmatpush1.msra.mxu0 %v503
    %527 = vmatprep.subr.mxu0 0.0
    %528 = vmatpush1.msra.mxu0 %v504
    %529 = vmatprep.subr.mxu0 0.0
    %530 = vmatpush1.msra.mxu0 %v505
    %531 = vmatprep.subr.mxu0 0.0
    %532 = vmatpush1.msra.mxu0 %v506
    %533 = vmatprep.subr.mxu0 0.0
    %534 = vmatpush1.msra.mxu0 %v507
    %535 = vmatprep.subr.mxu0 0.0
    %536 = vmatpush1.msra.mxu0 %v508
    %537 = vmatprep.subr.mxu0 0.0
    %538 = vmatpush1.msra.mxu0 %v509
    %539 = vmatprep.subr.mxu0 0.0
    %540 = vmatpush1.msra.mxu0 %v510
    %541 = vmatprep.subr.mxu0 0.0
    %542 = vmatpush1.msra.mxu0 %v511
    %543 = vmatprep.subr.mxu0 0.0
    %544 = vmatpush1.msra.mxu0 %v512
    %545 = vmatprep.subr.mxu0 0.0
    %546 = vmatpush1.msra.mxu0 0.0
    %547 = vmatprep.subr.mxu0 0.0
    %548 = vmatpush1.msra.mxu0 0.0
    %549 = vmatprep.subr.mxu0 0.0
    %550 = vmatpush1.msra.mxu0 0.0
    %551 = vmatprep.subr.mxu0 0.0
    %552 = vmatpush1.msra.mxu0 0.0
    %553 = vmatprep.subr.mxu0 0.0
    %554 = vmatpush1.msra.mxu0 0.0
    %555 = vmatprep.subr.mxu0 0.0
    %556 = vmatpush1.msra.mxu0 0.0
    %557 = vmatprep.subr.mxu0 0.0
    %558 = vmatpush1.msra.mxu0 0.0
    %559 = vmatprep.subr.mxu0 0.0
    %560 = vmatpush1.msra.mxu0 0.0
    %561 = vmatprep.subr.mxu0 0.0
    %562 = vmatpush1.msra.mxu0 0.0
    %563 = vmatprep.subr.mxu0 0.0
    %564 = vmatpush1.msra.mxu0 0.0
    %565 = vmatprep.subr.mxu0 0.0
    %566 = vmatpush1.msra.mxu0 0.0
    %567 = vmatprep.subr.mxu0 0.0
    %568 = vmatpush1.msra.mxu0 0.0
    %569 = vmatprep.subr.mxu0 0.0
    %570 = vmatpush1.msra.mxu0 0.0
    %571 = vmatprep.subr.mxu0 0.0
    %572 = vmatpush1.msra.mxu0 0.0
    %573 = vmatprep.subr.mxu0 0.0
    %574 = vmatpush1.msra.mxu0 0.0
    %575 = vmatprep.subr.mxu0 0.0
    %576 = vmatpush1.msra.mxu0 0.0
    %577 = vmatprep.mubr.f32.mxu0 0.0
    %578 = vmatmul.mubr.f32.gmra.mrb[0].mxu0 %v274
    %v579 = vpop.f32.mrb[0].mxu0
    %v580 = vadd.f32 0.0, %v579
    %v581 = vpop.f32.mrb[0].mxu0
    %582 = vmatprep.mubr.f32.mxu0 0.0
    %583 = vmatmul.mubr.f32.gmra.mrb[0].mxu0 %v276
    %v584 = vpop.f32.mrb[0].mxu0
    %v585 = vadd.f32 0.0, %v584
    %v586 = vpop.f32.mrb[0].mxu0
    %587 = vmatprep.mubr.f32.mxu0 0.0
    %588 = vmatmul.mubr.f32.gmra.mrb[0].mxu0 %v279
    %v589 = vpop.f32.mrb[0].mxu0
    %v590 = vadd.f32 0.0, %v589
    %v591 = vpop.f32.mrb[0].mxu0
    %592 = vmatprep.mubr.f32.mxu0 0.0
    %593 = vmatmul.mubr.f32.gmra.mrb[0].mxu0 %v281
    %v594 = vpop.f32.mrb[0].mxu0
    %v595 = vadd.f32 0.0, %v594
    %v596 = vpop.f32.mrb[0].mxu0
    %597 = vmatprep.mubr.f32.mxu0 0.0
    %598 = vmatmul.mubr.f32.gmra.mrb[0].mxu0 %v284
    %v599 = vpop.f32.mrb[0].mxu0
    %v600 = vadd.f32 0.0, %v599
    %v601 = vpop.f32.mrb[0].mxu0
    %602 = vmatprep.mubr.f32.mxu0 0.0
    %603 = vmatmul.mubr.f32.gmra.mrb[0].mxu0 %v286
    %v604 = vpop.f32.mrb[0].mxu0
    %v605 = vadd.f32 0.0, %v604
    %v606 = vpop.f32.mrb[0].mxu0
    %607 = vmatprep.mubr.f32.mxu0 0.0
    %608 = vmatmul.mubr.f32.gmra.mrb[0].mxu0 %v289
    %v609 = vpop.f32.mrb[0].mxu0
    %v610 = vadd.f32 0.0, %v609
    %v611 = vpop.f32.mrb[0].mxu0
    %612 = vmatprep.mubr.f32.mxu0 0.0
    %613 = vmatmul.mubr.f32.gmra.mrb[0].mxu0 %v291
    %v614 = vpop.f32.mrb[0].mxu0
    %v615 = vadd.f32 0.0, %v614
    %v616 = vpop.f32.mrb[0].mxu0
    %617 = vmatprep.mubr.f32.mxu0 0.0
    %618 = vmatmul.mubr.f32.gmra.mrb[0].mxu0 %v294
    %v619 = vpop.f32.mrb[0].mxu0
    %v620 = vadd.f32 0.0, %v619
    %v621 = vpop.f32.mrb[0].mxu0
    %622 = vmatprep.mubr.f32.mxu0 0.0
    %623 = vmatmul.mubr.f32.gmra.mrb[0].mxu0 %v296
    %v624 = vpop.f32.mrb[0].mxu0
    %v625 = vadd.f32 0.0, %v624
    %v626 = vpop.f32.mrb[0].mxu0
    %627 = vmatprep.mubr.f32.mxu0 0.0
    %628 = vmatmul.mubr.f32.gmra.mrb[0].mxu0 %v299
    %v629 = vpop.f32.mrb[0].mxu0
    %v630 = vadd.f32 0.0, %v629
    %v631 = vpop.f32.mrb[0].mxu0
    %632 = vmatprep.mubr.f32.mxu0 0.0
    %633 = vmatmul.mubr.f32.gmra.mrb[0].mxu0 %v301
    %v634 = vpop.f32.mrb[0].mxu0
    %v635 = vadd.f32 0.0, %v634
    %v636 = vpop.f32.mrb[0].mxu0
    %637 = vmatprep.mubr.f32.mxu0 0.0
    %638 = vmatmul.mubr.f32.gmra.mrb[0].mxu0 %v304
    %v639 = vpop.f32.mrb[0].mxu0
    %v640 = vadd.f32 0.0, %v639
    %v641 = vpop.f32.mrb[0].mxu0
    %642 = vmatprep.mubr.f32.mxu0 0.0
    %643 = vmatmul.mubr.f32.gmra.mrb[0].mxu0 %v306
    %v644 = vpop.f32.mrb[0].mxu0
    %v645 = vadd.f32 0.0, %v644
    %v646 = vpop.f32.mrb[0].mxu0
    %647 = vmatprep.mubr.f32.mxu0 0.0
    %648 = vmatmul.mubr.f32.gmra.mrb[0].mxu0 %v309
    %v649 = vpop.f32.mrb[0].mxu0
    %v650 = vadd.f32 0.0, %v649
    %v651 = vpop.f32.mrb[0].mxu0
    %652 = vmatprep.mubr.f32.mxu0 0.0
    %653 = vmatmul.mubr.f32.gmra.mrb[0].mxu0 %v311
    %v654 = vpop.f32.mrb[0].mxu0
    %v655 = vadd.f32 0.0, %v654
    %v656 = vpop.f32.mrb[0].mxu0
    %657 = vmatprep.mubr.f32.mxu0 0.0
    %658 = vmatmul.mubr.f32.gmra.mrb[0].mxu0 %v314
    %v659 = vpop.f32.mrb[0].mxu0
    %v660 = vadd.f32 0.0, %v659
    %v661 = vpop.f32.mrb[0].mxu0
    %662 = vmatprep.mubr.f32.mxu0 0.0
    %663 = vmatmul.mubr.f32.gmra.mrb[0].mxu0 %v316
    %v664 = vpop.f32.mrb[0].mxu0
    %v665 = vadd.f32 0.0, %v664
    %v666 = vpop.f32.mrb[0].mxu0
    %667 = vmatprep.mubr.f32.mxu0 0.0
    %668 = vmatmul.mubr.f32.gmra.mrb[0].mxu0 %v319
    %v669 = vpop.f32.mrb[0].mxu0
    %v670 = vadd.f32 0.0, %v669
    %v671 = vpop.f32.mrb[0].mxu0
    %672 = vmatprep.mubr.f32.mxu0 0.0
    %673 = vmatmul.mubr.f32.gmra.mrb[0].mxu0 %v321
    %v674 = vpop.f32.mrb[0].mxu0
    %v675 = vadd.f32 0.0, %v674
    %v676 = vpop.f32.mrb[0].mxu0
    %677 = vmatprep.mubr.f32.mxu0 0.0
    %678 = vmatmul.mubr.f32.gmra.mrb[0].mxu0 %v324
    %v679 = vpop.f32.mrb[0].mxu0
    %v680 = vadd.f32 0.0, %v679
    %v681 = vpop.f32.mrb[0].mxu0
    %682 = vmatprep.mubr.f32.mxu0 0.0
    %683 = vmatmul.mubr.f32.gmra.mrb[0].mxu0 %v326
    %v684 = vpop.f32.mrb[0].mxu0
    %v685 = vadd.f32 0.0, %v684
    %v686 = vpop.f32.mrb[0].mxu0
    %687 = vmatprep.mubr.f32.mxu0 0.0
    %688 = vmatmul.mubr.f32.gmra.mrb[0].mxu0 %v329
    %v689 = vpop.f32.mrb[0].mxu0
    %v690 = vadd.f32 0.0, %v689
    %v691 = vpop.f32.mrb[0].mxu0
    %692 = vmatprep.mubr.f32.mxu0 0.0
    %693 = vmatmul.mubr.f32.gmra.mrb[0].mxu0 %v331
    %v694 = vpop.f32.mrb[0].mxu0
    %v695 = vadd.f32 0.0, %v694
    %v696 = vpop.f32.mrb[0].mxu0
    %697 = vmatprep.mubr.f32.mxu0 0.0
    %698 = vmatmul.mubr.f32.gmra.mrb[0].mxu0 %v334
    %v699 = vpop.f32.mrb[0].mxu0
    %v700 = vadd.f32 0.0, %v699
    %v701 = vpop.f32.mrb[0].mxu0
    %702 = vmatprep.mubr.f32.mxu0 0.0
    %703 = vmatmul.mubr.f32.gmra.mrb[0].mxu0 %v336
    %v704 = vpop.f32.mrb[0].mxu0
    %v705 = vadd.f32 0.0, %v704
    %v706 = vpop.f32.mrb[0].mxu0
    %707 = vmatprep.mubr.f32.mxu0 0.0
    %708 = vmatmul.mubr.f32.gmra.mrb[0].mxu0 %v339
    %v709 = vpop.f32.mrb[0].mxu0
    %v710 = vadd.f32 0.0, %v709
    %v711 = vpop.f32.mrb[0].mxu0
    %712 = vmatprep.mubr.f32.mxu0 0.0
    %713 = vmatmul.mubr.f32.gmra.mrb[0].mxu0 %v341
    %v714 = vpop.f32.mrb[0].mxu0
    %v715 = vadd.f32 0.0, %v714
    %v716 = vpop.f32.mrb[0].mxu0
    %717 = vmatprep.mubr.f32.mxu0 0.0
    %718 = vmatmul.mubr.f32.gmra.mrb[0].mxu0 %v344
    %v719 = vpop.f32.mrb[0].mxu0
    %v720 = vadd.f32 0.0, %v719
    %v721 = vpop.f32.mrb[0].mxu0
    %722 = vmatprep.mubr.f32.mxu0 0.0
    %723 = vmatmul.mubr.f32.gmra.mrb[0].mxu0 %v346
    %v724 = vpop.f32.mrb[0].mxu0
    %v725 = vadd.f32 0.0, %v724
    %v726 = vpop.f32.mrb[0].mxu0
    %727 = vmatprep.mubr.f32.mxu0 0.0
    %728 = vmatmul.mubr.f32.gmra.mrb[0].mxu0 %v349
    %v729 = vpop.f32.mrb[0].mxu0
    %v730 = vadd.f32 0.0, %v729
    %v731 = vpop.f32.mrb[0].mxu0
    %732 = vmatprep.mubr.f32.mxu0 0.0
    %733 = vmatmul.mubr.f32.gmra.mrb[0].mxu0 %v351
    %v734 = vpop.f32.mrb[0].mxu0
    %v735 = vadd.f32 0.0, %v734
    %v736 = vpop.f32.mrb[0].mxu0
    %737 = vmatprep.mubr.f32.mxu0 0.0
    %738 = vmatmul.mubr.f32.gmra.mrb[0].mxu0 %v354
    %v739 = vpop.f32.mrb[0].mxu0
    %v740 = vadd.f32 0.0, %v739
    %v741 = vpop.f32.mrb[0].mxu0
    %742 = vmatprep.mubr.f32.mxu0 0.0
    %743 = vmatmul.mubr.f32.gmra.mrb[0].mxu0 %v356
    %v744 = vpop.f32.mrb[0].mxu0
    %v745 = vadd.f32 0.0, %v744
    %v746 = vpop.f32.mrb[0].mxu0
    %747 = vmatprep.mubr.f32.mxu0 0.0
    %748 = vmatmul.mubr.f32.gmra.mrb[0].mxu0 %v359
    %v749 = vpop.f32.mrb[0].mxu0
    %v750 = vadd.f32 0.0, %v749
    %v751 = vpop.f32.mrb[0].mxu0
    %752 = vmatprep.mubr.f32.mxu0 0.0
    %753 = vmatmul.mubr.f32.gmra.mrb[0].mxu0 %v361
    %v754 = vpop.f32.mrb[0].mxu0
    %v755 = vadd.f32 0.0, %v754
    %v756 = vpop.f32.mrb[0].mxu0
    %757 = vmatprep.mubr.f32.mxu0 0.0
    %758 = vmatmul.mubr.f32.gmra.mrb[0].mxu0 %v364
    %v759 = vpop.f32.mrb[0].mxu0
    %v760 = vadd.f32 0.0, %v759
    %v761 = vpop.f32.mrb[0].mxu0
    %762 = vmatprep.mubr.f32.mxu0 0.0
    %763 = vmatmul.mubr.f32.gmra.mrb[0].mxu0 %v366
    %v764 = vpop.f32.mrb[0].mxu0
    %v765 = vadd.f32 0.0, %v764
    %v766 = vpop.f32.mrb[0].mxu0
    %767 = vmatprep.mubr.f32.mxu0 0.0
    %768 = vmatmul.mubr.f32.gmra.mrb[0].mxu0 %v369
    %v769 = vpop.f32.mrb[0].mxu0
    %v770 = vadd.f32 0.0, %v769
    %v771 = vpop.f32.mrb[0].mxu0
    %772 = vmatprep.mubr.f32.mxu0 0.0
    %773 = vmatmul.mubr.f32.gmra.mrb[0].mxu0 %v371
    %v774 = vpop.f32.mrb[0].mxu0
    %v775 = vadd.f32 0.0, %v774
    %v776 = vpop.f32.mrb[0].mxu0
    %777 = vmatprep.mubr.f32.mxu0 0.0
    %778 = vmatmul.mubr.f32.gmra.mrb[0].mxu0 %v374
    %v779 = vpop.f32.mrb[0].mxu0
    %v780 = vadd.f32 0.0, %v779
    %v781 = vpop.f32.mrb[0].mxu0
    %782 = vmatprep.mubr.f32.mxu0 0.0
    %783 = vmatmul.mubr.f32.gmra.mrb[0].mxu0 %v376
    %v784 = vpop.f32.mrb[0].mxu0
    %v785 = vadd.f32 0.0, %v784
    %v786 = vpop.f32.mrb[0].mxu0
    %787 = vmatprep.mubr.f32.mxu0 0.0
    %788 = vmatmul.mubr.f32.gmra.mrb[0].mxu0 %v379
    %v789 = vpop.f32.mrb[0].mxu0
    %v790 = vadd.f32 0.0, %v789
    %v791 = vpop.f32.mrb[0].mxu0
    %792 = vmatprep.mubr.f32.mxu0 0.0
    %793 = vmatmul.mubr.f32.gmra.mrb[0].mxu0 %v381
    %v794 = vpop.f32.mrb[0].mxu0
    %v795 = vadd.f32 0.0, %v794
    %v796 = vpop.f32.mrb[0].mxu0
    %797 = vmatprep.mubr.f32.mxu0 0.0
    %798 = vmatmul.mubr.f32.gmra.mrb[0].mxu0 %v384
    %v799 = vpop.f32.mrb[0].mxu0
    %v800 = vadd.f32 0.0, %v799
    %v801 = vpop.f32.mrb[0].mxu0
    %802 = vmatprep.mubr.f32.mxu0 0.0
    %803 = vmatmul.mubr.f32.gmra.mrb[0].mxu0 %v386
    %v804 = vpop.f32.mrb[0].mxu0
    %v805 = vadd.f32 0.0, %v804
    %v806 = vpop.f32.mrb[0].mxu0
    %807 = vmatprep.mubr.f32.mxu0 0.0
    %808 = vmatmul.mubr.f32.gmra.mrb[0].mxu0 %v389
    %v809 = vpop.f32.mrb[0].mxu0
    %v810 = vadd.f32 0.0, %v809
    %v811 = vpop.f32.mrb[0].mxu0
    %812 = vmatprep.mubr.f32.mxu0 0.0
    %813 = vmatmul.mubr.f32.gmra.mrb[0].mxu0 %v391
    %v814 = vpop.f32.mrb[0].mxu0
    %v815 = vadd.f32 0.0, %v814
    %v816 = vpop.f32.mrb[0].mxu0
    %817 = vmatprep.mubr.f32.mxu0 0.0
    %818 = vmatmul.mubr.f32.gmra.mrb[0].mxu0 %v394
    %v819 = vpop.f32.mrb[0].mxu0
    %v820 = vadd.f32 0.0, %v819
    %v821 = vpop.f32.mrb[0].mxu0
    %822 = vmatprep.mubr.f32.mxu0 0.0
    %823 = vmatmul.mubr.f32.gmra.mrb[0].mxu0 %v396
    %v824 = vpop.f32.mrb[0].mxu0
    %v825 = vadd.f32 0.0, %v824
    %v826 = vpop.f32.mrb[0].mxu0
    %827 = vmatprep.mubr.f32.mxu0 0.0
    %828 = vmatmul.mubr.f32.gmra.mrb[0].mxu0 %v399
    %v829 = vpop.f32.mrb[0].mxu0
    %v830 = vadd.f32 0.0, %v829
    %v831 = vpop.f32.mrb[0].mxu0
    %832 = vmatprep.mubr.f32.mxu0 0.0
    %833 = vmatmul.mubr.f32.gmra.mrb[0].mxu0 %v401
    %v834 = vpop.f32.mrb[0].mxu0
    %v835 = vadd.f32 0.0, %v834
    %v836 = vpop.f32.mrb[0].mxu0
    %837 = vmatprep.mubr.f32.mxu0 0.0
    %838 = vmatmul.mubr.f32.gmra.mrb[0].mxu0 %v404
    %v839 = vpop.f32.mrb[0].mxu0
    %v840 = vadd.f32 0.0, %v839
    %v841 = vpop.f32.mrb[0].mxu0
    %842 = vmatprep.mubr.f32.mxu0 0.0
    %843 = vmatmul.mubr.f32.gmra.mrb[0].mxu0 %v406
    %v844 = vpop.f32.mrb[0].mxu0
    %v845 = vadd.f32 0.0, %v844
    %v846 = vpop.f32.mrb[0].mxu0
    %847 = vmatprep.mubr.f32.mxu0 0.0
    %848 = vmatmul.mubr.f32.gmra.mrb[0].mxu0 %v409
    %v849 = vpop.f32.mrb[0].mxu0
    %v850 = vadd.f32 0.0, %v849
    %v851 = vpop.f32.mrb[0].mxu0
    %852 = vmatprep.mubr.f32.mxu0 0.0
    %853 = vmatmul.mubr.f32.gmra.mrb[0].mxu0 %v411
    %v854 = vpop.f32.mrb[0].mxu0
    %v855 = vadd.f32 0.0, %v854
    %v856 = vpop.f32.mrb[0].mxu0
    %857 = vmatprep.mubr.f32.mxu0 0.0
    %858 = vmatmul.mubr.f32.gmra.mrb[0].mxu0 %v414
    %v859 = vpop.f32.mrb[0].mxu0
    %v860 = vadd.f32 0.0, %v859
    %v861 = vpop.f32.mrb[0].mxu0
    %862 = vmatprep.mubr.f32.mxu0 0.0
    %863 = vmatmul.mubr.f32.gmra.mrb[0].mxu0 %v416
    %v864 = vpop.f32.mrb[0].mxu0
    %v865 = vadd.f32 0.0, %v864
    %v866 = vpop.f32.mrb[0].mxu0
    %867 = vmatprep.mubr.f32.mxu0 0.0
    %868 = vmatmul.mubr.f32.gmra.mrb[0].mxu0 %v419
    %v869 = vpop.f32.mrb[0].mxu0
    %v870 = vadd.f32 0.0, %v869
    %v871 = vpop.f32.mrb[0].mxu0
    %872 = vmatprep.mubr.f32.mxu0 0.0
    %873 = vmatmul.mubr.f32.gmra.mrb[0].mxu0 %v421
    %v874 = vpop.f32.mrb[0].mxu0
    %v875 = vadd.f32 0.0, %v874
    %v876 = vpop.f32.mrb[0].mxu0
    %877 = vmatprep.mubr.f32.mxu0 0.0
    %878 = vmatmul.mubr.f32.gmra.mrb[0].mxu0 %v424
    %v879 = vpop.f32.mrb[0].mxu0
    %v880 = vadd.f32 0.0, %v879
    %v881 = vpop.f32.mrb[0].mxu0
    %882 = vmatprep.mubr.f32.mxu0 0.0
    %883 = vmatmul.mubr.f32.gmra.mrb[0].mxu0 %v426
    %v884 = vpop.f32.mrb[0].mxu0
    %v885 = vadd.f32 0.0, %v884
    %v886 = vpop.f32.mrb[0].mxu0
    %887 = vmatprep.mubr.f32.mxu0 0.0
    %888 = vmatmul.mubr.f32.gmra.mrb[0].mxu0 %v429
    %v889 = vpop.f32.mrb[0].mxu0
    %v890 = vadd.f32 0.0, %v889
    %v891 = vpop.f32.mrb[0].mxu0
    %892 = vmatprep.mubr.f32.mxu0 0.0
    %893 = vmatmul.mubr.f32.gmra.mrb[0].mxu0 %v431
    %v894 = vpop.f32.mrb[0].mxu0
    %v895 = vadd.f32 0.0, %v894
    %v896 = vpop.f32.mrb[0].mxu0
    %897 = vdwg.mxu0
    %898 = vmatprep.subr.mxu0 0.0
    %899 = vmatpush1.msra.mxu0 %v159
    %900 = vmatprep.subr.mxu0 0.0
    %901 = vmatpush1.msra.mxu0 %v160
    %902 = vmatprep.subr.mxu0 0.0
    %903 = vmatpush1.msra.mxu0 %v161
    %904 = vmatprep.subr.mxu0 0.0
    %905 = vmatpush1.msra.mxu0 %v162
    %906 = vmatprep.subr.mxu0 0.0
    %907 = vmatpush1.msra.mxu0 %v163
    %908 = vmatprep.subr.mxu0 0.0
    %909 = vmatpush1.msra.mxu0 %v164
    %910 = vmatprep.subr.mxu0 0.0
    %911 = vmatpush1.msra.mxu0 %v165
    %912 = vmatprep.subr.mxu0 0.0
    %913 = vmatpush1.msra.mxu0 %v166
    %914 = vmatprep.subr.mxu0 0.0
    %915 = vmatpush1.msra.mxu0 %v167
    %916 = vmatprep.subr.mxu0 0.0
    %917 = vmatpush1.msra.mxu0 %v168
    %918 = vmatprep.subr.mxu0 0.0
    %919 = vmatpush1.msra.mxu0 %v169
    %920 = vmatprep.subr.mxu0 0.0
    %921 = vmatpush1.msra.mxu0 %v170
    %922 = vmatprep.subr.mxu0 0.0
    %923 = vmatpush1.msra.mxu0 %v171
    %924 = vmatprep.subr.mxu0 0.0
    %925 = vmatpush1.msra.mxu0 %v172
    %926 = vmatprep.subr.mxu0 0.0
    %927 = vmatpush1.msra.mxu0 %v173
    %928 = vmatprep.subr.mxu0 0.0
    %929 = vmatpush1.msra.mxu0 %v174
    %930 = vmatprep.subr.mxu0 0.0
    %931 = vmatpush1.msra.mxu0 0.0
    %932 = vmatprep.subr.mxu0 0.0
    %933 = vmatpush1.msra.mxu0 0.0
    %934 = vmatprep.subr.mxu0 0.0
    %935 = vmatpush1.msra.mxu0 0.0
    %936 = vmatprep.subr.mxu0 0.0
    %937 = vmatpush1.msra.mxu0 0.0
    %938 = vmatprep.subr.mxu0 0.0
    %939 = vmatpush1.msra.mxu0 0.0
    %940 = vmatprep.subr.mxu0 0.0
    %941 = vmatpush1.msra.mxu0 0.0
    %942 = vmatprep.subr.mxu0 0.0
    %943 = vmatpush1.msra.mxu0 0.0
    %944 = vmatprep.subr.mxu0 0.0
    %945 = vmatpush1.msra.mxu0 0.0
    %946 = vmatprep.subr.mxu0 0.0
    %947 = vmatpush1.msra.mxu0 0.0
    %948 = vmatprep.subr.mxu0 0.0
    %949 = vmatpush1.msra.mxu0 0.0
    %950 = vmatprep.subr.mxu0 0.0
    %951 = vmatpush1.msra.mxu0 0.0
    %952 = vmatprep.subr.mxu0 0.0
    %953 = vmatpush1.msra.mxu0 0.0
    %954 = vmatprep.subr.mxu0 0.0
    %955 = vmatpush1.msra.mxu0 0.0
    %956 = vmatprep.subr.mxu0 0.0
    %957 = vmatpush1.msra.mxu0 0.0
    %958 = vmatprep.subr.mxu0 0.0
    %959 = vmatpush1.msra.mxu0 0.0
    %960 = vmatprep.subr.mxu0 0.0
    %961 = vmatpush1.msra.mxu0 0.0
    %962 = vmatprep.mubr.f32.mxu0 0.0
    %963 = vmatmul.mubr.f32.gmra.mrb[0].mxu0 %v51
    %v964 = vpop.f32.mrb[0].mxu0
    %v965 = vadd.f32 %v580, %v964
    %v966 = vpop.f32.mrb[0].mxu0
    %967 = vmatprep.mubr.f32.mxu0 0.0
    %968 = vmatmul.mubr.f32.gmra.mrb[0].mxu0 %v52
    %v969 = vpop.f32.mrb[0].mxu0
    %v970 = vadd.f32 %v585, %v969
    %v971 = vpop.f32.mrb[0].mxu0
    %972 = vmatprep.mubr.f32.mxu0 0.0
    %973 = vmatmul.mubr.f32.gmra.mrb[0].mxu0 %v54
    %v974 = vpop.f32.mrb[0].mxu0
    %v975 = vadd.f32 %v590, %v974
    %v976 = vpop.f32.mrb[0].mxu0
    %977 = vmatprep.mubr.f32.mxu0 0.0
    %978 = vmatmul.mubr.f32.gmra.mrb[0].mxu0 %v55
    %v979 = vpop.f32.mrb[0].mxu0
    %v980 = vadd.f32 %v595, %v979
    %v981 = vpop.f32.mrb[0].mxu0
    %982 = vmatprep.mubr.f32.mxu0 0.0
    %983 = vmatmul.mubr.f32.gmra.mrb[0].mxu0 %v57
    %v984 = vpop.f32.mrb[0].mxu0
    %v985 = vadd.f32 %v600, %v984
    %v986 = vpop.f32.mrb[0].mxu0
    %987 = vmatprep.mubr.f32.mxu0 0.0
    %988 = vmatmul.mubr.f32.gmra.mrb[0].mxu0 %v58
    %v989 = vpop.f32.mrb[0].mxu0
    %v990 = vadd.f32 %v605, %v989
    %v991 = vpop.f32.mrb[0].mxu0
    %992 = vmatprep.mubr.f32.mxu0 0.0
    %993 = vmatmul.mubr.f32.gmra.mrb[0].mxu0 %v60
    %v994 = vpop.f32.mrb[0].mxu0
    %v995 = vadd.f32 %v610, %v994
    %v996 = vpop.f32.mrb[0].mxu0
    %997 = vmatprep.mubr.f32.mxu0 0.0
    %998 = vmatmul.mubr.f32.gmra.mrb[0].mxu0 %v61
    %v999 = vpop.f32.mrb[0].mxu0
    %v1000 = vadd.f32 %v615, %v999
    %v1001 = vpop.f32.mrb[0].mxu0
    %1002 = vmatprep.mubr.f32.mxu0 0.0
    %1003 = vmatmul.mubr.f32.gmra.mrb[0].mxu0 %v63
    %v1004 = vpop.f32.mrb[0].mxu0
    %v1005 = vadd.f32 %v620, %v1004
    %v1006 = vpop.f32.mrb[0].mxu0
    %1007 = vmatprep.mubr.f32.mxu0 0.0
    %1008 = vmatmul.mubr.f32.gmra.mrb[0].mxu0 %v64
    %v1009 = vpop.f32.mrb[0].mxu0
    %v1010 = vadd.f32 %v625, %v1009
    %v1011 = vpop.f32.mrb[0].mxu0
    %1012 = vmatprep.mubr.f32.mxu0 0.0
    %1013 = vmatmul.mubr.f32.gmra.mrb[0].mxu0 %v66
    %v1014 = vpop.f32.mrb[0].mxu0
    %v1015 = vadd.f32 %v630, %v1014
    %v1016 = vpop.f32.mrb[0].mxu0
    %1017 = vmatprep.mubr.f32.mxu0 0.0
    %1018 = vmatmul.mubr.f32.gmra.mrb[0].mxu0 %v67
    %v1019 = vpop.f32.mrb[0].mxu0
    %v1020 = vadd.f32 %v635, %v1019
    %v1021 = vpop.f32.mrb[0].mxu0
    %1022 = vmatprep.mubr.f32.mxu0 0.0
    %1023 = vmatmul.mubr.f32.gmra.mrb[0].mxu0 %v69
    %v1024 = vpop.f32.mrb[0].mxu0
    %v1025 = vadd.f32 %v640, %v1024
    %v1026 = vpop.f32.mrb[0].mxu0
    %1027 = vmatprep.mubr.f32.mxu0 0.0
    %1028 = vmatmul.mubr.f32.gmra.mrb[0].mxu0 %v70
    %v1029 = vpop.f32.mrb[0].mxu0
    %v1030 = vadd.f32 %v645, %v1029
    %v1031 = vpop.f32.mrb[0].mxu0
    %1032 = vmatprep.mubr.f32.mxu0 0.0
    %1033 = vmatmul.mubr.f32.gmra.mrb[0].mxu0 %v72
    %v1034 = vpop.f32.mrb[0].mxu0
    %v1035 = vadd.f32 %v650, %v1034
    %v1036 = vpop.f32.mrb[0].mxu0
    %1037 = vmatprep.mubr.f32.mxu0 0.0
    %1038 = vmatmul.mubr.f32.gmra.mrb[0].mxu0 %v73
    %v1039 = vpop.f32.mrb[0].mxu0
    %v1040 = vadd.f32 %v655, %v1039
    %v1041 = vpop.f32.mrb[0].mxu0
    %1042 = vmatprep.mubr.f32.mxu0 0.0
    %1043 = vmatmul.mubr.f32.gmra.mrb[0].mxu0 %v75
    %v1044 = vpop.f32.mrb[0].mxu0
    %v1045 = vadd.f32 %v660, %v1044
    %v1046 = vpop.f32.mrb[0].mxu0
    %1047 = vmatprep.mubr.f32.mxu0 0.0
    %1048 = vmatmul.mubr.f32.gmra.mrb[0].mxu0 %v76
    %v1049 = vpop.f32.mrb[0].mxu0
    %v1050 = vadd.f32 %v665, %v1049
    %v1051 = vpop.f32.mrb[0].mxu0
    %1052 = vmatprep.mubr.f32.mxu0 0.0
    %1053 = vmatmul.mubr.f32.gmra.mrb[0].mxu0 %v78
    %v1054 = vpop.f32.mrb[0].mxu0
    %v1055 = vadd.f32 %v670, %v1054
    %v1056 = vpop.f32.mrb[0].mxu0
    %1057 = vmatprep.mubr.f32.mxu0 0.0
    %1058 = vmatmul.mubr.f32.gmra.mrb[0].mxu0 %v79
    %v1059 = vpop.f32.mrb[0].mxu0
    %v1060 = vadd.f32 %v675, %v1059
    %v1061 = vpop.f32.mrb[0].mxu0
    %1062 = vmatprep.mubr.f32.mxu0 0.0
    %1063 = vmatmul.mubr.f32.gmra.mrb[0].mxu0 %v81
    %v1064 = vpop.f32.mrb[0].mxu0
    %v1065 = vadd.f32 %v680, %v1064
    %v1066 = vpop.f32.mrb[0].mxu0
    %1067 = vmatprep.mubr.f32.mxu0 0.0
    %1068 = vmatmul.mubr.f32.gmra.mrb[0].mxu0 %v82
    %v1069 = vpop.f32.mrb[0].mxu0
    %v1070 = vadd.f32 %v685, %v1069
    %v1071 = vpop.f32.mrb[0].mxu0
    %1072 = vmatprep.mubr.f32.mxu0 0.0
    %1073 = vmatmul.mubr.f32.gmra.mrb[0].mxu0 %v84
    %v1074 = vpop.f32.mrb[0].mxu0
    %v1075 = vadd.f32 %v690, %v1074
    %v1076 = vpop.f32.mrb[0].mxu0
    %1077 = vmatprep.mubr.f32.mxu0 0.0
    %1078 = vmatmul.mubr.f32.gmra.mrb[0].mxu0 %v85
    %v1079 = vpop.f32.mrb[0].mxu0
    %v1080 = vadd.f32 %v695, %v1079
    %v1081 = vpop.f32.mrb[0].mxu0
    %1082 = vmatprep.mubr.f32.mxu0 0.0
    %1083 = vmatmul.mubr.f32.gmra.mrb[0].mxu0 %v87
    %v1084 = vpop.f32.mrb[0].mxu0
    %v1085 = vadd.f32 %v700, %v1084
    %v1086 = vpop.f32.mrb[0].mxu0
    %1087 = vmatprep.mubr.f32.mxu0 0.0
    %1088 = vmatmul.mubr.f32.gmra.mrb[0].mxu0 %v88
    %v1089 = vpop.f32.mrb[0].mxu0
    %v1090 = vadd.f32 %v705, %v1089
    %v1091 = vpop.f32.mrb[0].mxu0
    %1092 = vmatprep.mubr.f32.mxu0 0.0
    %1093 = vmatmul.mubr.f32.gmra.mrb[0].mxu0 %v90
    %v1094 = vpop.f32.mrb[0].mxu0
    %v1095 = vadd.f32 %v710, %v1094
    %v1096 = vpop.f32.mrb[0].mxu0
    %1097 = vmatprep.mubr.f32.mxu0 0.0
    %1098 = vmatmul.mubr.f32.gmra.mrb[0].mxu0 %v91
    %v1099 = vpop.f32.mrb[0].mxu0
    %v1100 = vadd.f32 %v715, %v1099
    %v1101 = vpop.f32.mrb[0].mxu0
    %1102 = vmatprep.mubr.f32.mxu0 0.0
    %1103 = vmatmul.mubr.f32.gmra.mrb[0].mxu0 %v93
    %v1104 = vpop.f32.mrb[0].mxu0
    %v1105 = vadd.f32 %v720, %v1104
    %v1106 = vpop.f32.mrb[0].mxu0
    %1107 = vmatprep.mubr.f32.mxu0 0.0
    %1108 = vmatmul.mubr.f32.gmra.mrb[0].mxu0 %v94
    %v1109 = vpop.f32.mrb[0].mxu0
    %v1110 = vadd.f32 %v725, %v1109
    %v1111 = vpop.f32.mrb[0].mxu0
    %1112 = vmatprep.mubr.f32.mxu0 0.0
    %1113 = vmatmul.mubr.f32.gmra.mrb[0].mxu0 %v96
    %v1114 = vpop.f32.mrb[0].mxu0
    %v1115 = vadd.f32 %v730, %v1114
    %v1116 = vpop.f32.mrb[0].mxu0
    %1117 = vmatprep.mubr.f32.mxu0 0.0
    %1118 = vmatmul.mubr.f32.gmra.mrb[0].mxu0 %v97
    %v1119 = vpop.f32.mrb[0].mxu0
    %v1120 = vadd.f32 %v735, %v1119
    %v1121 = vpop.f32.mrb[0].mxu0
    %1122 = vmatprep.mubr.f32.mxu0 0.0
    %1123 = vmatmul.mubr.f32.gmra.mrb[0].mxu0 %v105
    %v1124 = vpop.f32.mrb[0].mxu0
    %v1125 = vadd.f32 %v740, %v1124
    %v1126 = vpop.f32.mrb[0].mxu0
    %1127 = vmatprep.mubr.f32.mxu0 0.0
    %1128 = vmatmul.mubr.f32.gmra.mrb[0].mxu0 %v106
    %v1129 = vpop.f32.mrb[0].mxu0
    %v1130 = vadd.f32 %v745, %v1129
    %v1131 = vpop.f32.mrb[0].mxu0
    %1132 = vmatprep.mubr.f32.mxu0 0.0
    %1133 = vmatmul.mubr.f32.gmra.mrb[0].mxu0 %v108
    %v1134 = vpop.f32.mrb[0].mxu0
    %v1135 = vadd.f32 %v750, %v1134
    %v1136 = vpop.f32.mrb[0].mxu0
    %1137 = vmatprep.mubr.f32.mxu0 0.0
    %1138 = vmatmul.mubr.f32.gmra.mrb[0].mxu0 %v109
    %v1139 = vpop.f32.mrb[0].mxu0
    %v1140 = vadd.f32 %v755, %v1139
    %v1141 = vpop.f32.mrb[0].mxu0
    %1142 = vmatprep.mubr.f32.mxu0 0.0
    %1143 = vmatmul.mubr.f32.gmra.mrb[0].mxu0 %v111
    %v1144 = vpop.f32.mrb[0].mxu0
    %v1145 = vadd.f32 %v760, %v1144
    %v1146 = vpop.f32.mrb[0].mxu0
    %1147 = vmatprep.mubr.f32.mxu0 0.0
    %1148 = vmatmul.mubr.f32.gmra.mrb[0].mxu0 %v112
    %v1149 = vpop.f32.mrb[0].mxu0
    %v1150 = vadd.f32 %v765, %v1149
    %v1151 = vpop.f32.mrb[0].mxu0
    %1152 = vmatprep.mubr.f32.mxu0 0.0
    %1153 = vmatmul.mubr.f32.gmra.mrb[0].mxu0 %v114
    %v1154 = vpop.f32.mrb[0].mxu0
    %v1155 = vadd.f32 %v770, %v1154
    %v1156 = vpop.f32.mrb[0].mxu0
    %1157 = vmatprep.mubr.f32.mxu0 0.0
    %1158 = vmatmul.mubr.f32.gmra.mrb[0].mxu0 %v115
    %v1159 = vpop.f32.mrb[0].mxu0
    %v1160 = vadd.f32 %v775, %v1159
    %v1161 = vpop.f32.mrb[0].mxu0
    %1162 = vmatprep.mubr.f32.mxu0 0.0
    %1163 = vmatmul.mubr.f32.gmra.mrb[0].mxu0 %v117
    %v1164 = vpop.f32.mrb[0].mxu0
    %v1165 = vadd.f32 %v780, %v1164
    %v1166 = vpop.f32.mrb[0].mxu0
    %1167 = vmatprep.mubr.f32.mxu0 0.0
    %1168 = vmatmul.mubr.f32.gmra.mrb[0].mxu0 %v118
    %v1169 = vpop.f32.mrb[0].mxu0
    %v1170 = vadd.f32 %v785, %v1169
    %v1171 = vpop.f32.mrb[0].mxu0
    %1172 = vmatprep.mubr.f32.mxu0 0.0
    %1173 = vmatmul.mubr.f32.gmra.mrb[0].mxu0 %v120
    %v1174 = vpop.f32.mrb[0].mxu0
    %v1175 = vadd.f32 %v790, %v1174
    %v1176 = vpop.f32.mrb[0].mxu0
    %1177 = vmatprep.mubr.f32.mxu0 0.0
    %1178 = vmatmul.mubr.f32.gmra.mrb[0].mxu0 %v121
    %v1179 = vpop.f32.mrb[0].mxu0
    %v1180 = vadd.f32 %v795, %v1179
    %v1181 = vpop.f32.mrb[0].mxu0
    %1182 = vmatprep.mubr.f32.mxu0 0.0
    %1183 = vmatmul.mubr.f32.gmra.mrb[0].mxu0 %v123
    %v1184 = vpop.f32.mrb[0].mxu0
    %v1185 = vadd.f32 %v800, %v1184
    %v1186 = vpop.f32.mrb[0].mxu0
    %1187 = vmatprep.mubr.f32.mxu0 0.0
    %1188 = vmatmul.mubr.f32.gmra.mrb[0].mxu0 %v124
    %v1189 = vpop.f32.mrb[0].mxu0
    %v1190 = vadd.f32 %v805, %v1189
    %v1191 = vpop.f32.mrb[0].mxu0
    %1192 = vmatprep.mubr.f32.mxu0 0.0
    %1193 = vmatmul.mubr.f32.gmra.mrb[0].mxu0 %v126
    %v1194 = vpop.f32.mrb[0].mxu0
    %v1195 = vadd.f32 %v810, %v1194
    %v1196 = vpop.f32.mrb[0].mxu0
    %1197 = vmatprep.mubr.f32.mxu0 0.0
    %1198 = vmatmul.mubr.f32.gmra.mrb[0].mxu0 %v127
    %v1199 = vpop.f32.mrb[0].mxu0
    %v1200 = vadd.f32 %v815, %v1199
    %v1201 = vpop.f32.mrb[0].mxu0
    %1202 = vmatprep.mubr.f32.mxu0 0.0
    %1203 = vmatmul.mubr.f32.gmra.mrb[0].mxu0 %v129
    %v1204 = vpop.f32.mrb[0].mxu0
    %v1205 = vadd.f32 %v820, %v1204
    %v1206 = vpop.f32.mrb[0].mxu0
    %1207 = vmatprep.mubr.f32.mxu0 0.0
    %1208 = vmatmul.mubr.f32.gmra.mrb[0].mxu0 %v130
    %v1209 = vpop.f32.mrb[0].mxu0
    %v1210 = vadd.f32 %v825, %v1209
    %v1211 = vpop.f32.mrb[0].mxu0
    %1212 = vmatprep.mubr.f32.mxu0 0.0
    %1213 = vmatmul.mubr.f32.gmra.mrb[0].mxu0 %v132
    %v1214 = vpop.f32.mrb[0].mxu0
    %v1215 = vadd.f32 %v830, %v1214
    %v1216 = vpop.f32.mrb[0].mxu0
    %1217 = vmatprep.mubr.f32.mxu0 0.0
    %1218 = vmatmul.mubr.f32.gmra.mrb[0].mxu0 %v133
    %v1219 = vpop.f32.mrb[0].mxu0
    %v1220 = vadd.f32 %v835, %v1219
    %v1221 = vpop.f32.mrb[0].mxu0
    %1222 = vmatprep.mubr.f32.mxu0 0.0
    %1223 = vmatmul.mubr.f32.gmra.mrb[0].mxu0 %v135
    %v1224 = vpop.f32.mrb[0].mxu0
    %v1225 = vadd.f32 %v840, %v1224
    %v1226 = vpop.f32.mrb[0].mxu0
    %1227 = vmatprep.mubr.f32.mxu0 0.0
    %1228 = vmatmul.mubr.f32.gmra.mrb[0].mxu0 %v136
    %v1229 = vpop.f32.mrb[0].mxu0
    %v1230 = vadd.f32 %v845, %v1229
    %v1231 = vpop.f32.mrb[0].mxu0
    %1232 = vmatprep.mubr.f32.mxu0 0.0
    %1233 = vmatmul.mubr.f32.gmra.mrb[0].mxu0 %v138
    %v1234 = vpop.f32.mrb[0].mxu0
    %v1235 = vadd.f32 %v850, %v1234
    %v1236 = vpop.f32.mrb[0].mxu0
    %1237 = vmatprep.mubr.f32.mxu0 0.0
    %1238 = vmatmul.mubr.f32.gmra.mrb[0].mxu0 %v139
    %v1239 = vpop.f32.mrb[0].mxu0
    %v1240 = vadd.f32 %v855, %v1239
    %v1241 = vpop.f32.mrb[0].mxu0
    %1242 = vmatprep.mubr.f32.mxu0 0.0
    %1243 = vmatmul.mubr.f32.gmra.mrb[0].mxu0 %v141
    %v1244 = vpop.f32.mrb[0].mxu0
    %v1245 = vadd.f32 %v860, %v1244
    %v1246 = vpop.f32.mrb[0].mxu0
    %1247 = vmatprep.mubr.f32.mxu0 0.0
    %1248 = vmatmul.mubr.f32.gmra.mrb[0].mxu0 %v142
    %v1249 = vpop.f32.mrb[0].mxu0
    %v1250 = vadd.f32 %v865, %v1249
    %v1251 = vpop.f32.mrb[0].mxu0
    %1252 = vmatprep.mubr.f32.mxu0 0.0
    %1253 = vmatmul.mubr.f32.gmra.mrb[0].mxu0 %v144
    %v1254 = vpop.f32.mrb[0].mxu0
    %v1255 = vadd.f32 %v870, %v1254
    %v1256 = vpop.f32.mrb[0].mxu0
    %1257 = vmatprep.mubr.f32.mxu0 0.0
    %1258 = vmatmul.mubr.f32.gmra.mrb[0].mxu0 %v145
    %v1259 = vpop.f32.mrb[0].mxu0
    %v1260 = vadd.f32 %v875, %v1259
    %v1261 = vpop.f32.mrb[0].mxu0
    %1262 = vmatprep.mubr.f32.mxu0 0.0
    %1263 = vmatmul.mubr.f32.gmra.mrb[0].mxu0 %v147
    %v1264 = vpop.f32.mrb[0].mxu0
    %v1265 = vadd.f32 %v880, %v1264
    %v1266 = vpop.f32.mrb[0].mxu0
    %1267 = vmatprep.mubr.f32.mxu0 0.0
    %1268 = vmatmul.mubr.f32.gmra.mrb[0].mxu0 %v148
    %v1269 = vpop.f32.mrb[0].mxu0
    %v1270 = vadd.f32 %v885, %v1269
    %v1271 = vpop.f32.mrb[0].mxu0
    %1272 = vmatprep.mubr.f32.mxu0 0.0
    %1273 = vmatmul.mubr.f32.gmra.mrb[0].mxu0 %v150
    %v1274 = vpop.f32.mrb[0].mxu0
    %v1275 = vadd.f32 %v890, %v1274
    %v1276 = vpop.f32.mrb[0].mxu0
    %1277 = vmatprep.mubr.f32.mxu0 0.0
    %1278 = vmatmul.mubr.f32.gmra.mrb[0].mxu0 %v151
    %v1279 = vpop.f32.mrb[0].mxu0
    %v1280 = vadd.f32 %v895, %v1279
    %v1281 = vpop.f32.mrb[0].mxu0
    %1282 = vdwg.mxu0
    %vm1283 = vcmask 1045504
    %v1284 = vrot.slane %v51, 2
    %v1285 = vrot.slane %v52, 2
    %v1286 = vsel %vm1283, %v1284, %v1285
    %v1287 = vrot.slane %v53, 2
    %v1288 = vsel %vm1283, %v1285, %v1287
    %v1289 = vrot.slane %v54, 2
    %v1290 = vrot.slane %v55, 2
    %v1291 = vsel %vm1283, %v1289, %v1290
    %v1292 = vrot.slane %v56, 2
    %v1293 = vsel %vm1283, %v1290, %v1292
    %v1294 = vrot.slane %v57, 2
    %v1295 = vrot.slane %v58, 2
    %v1296 = vsel %vm1283, %v1294, %v1295
    %v1297 = vrot.slane %v59, 2
    %v1298 = vsel %vm1283, %v1295, %v1297
    %v1299 = vrot.slane %v60, 2
    %v1300 = vrot.slane %v61, 2
    %v1301 = vsel %vm1283, %v1299, %v1300
    %v1302 = vrot.slane %v62, 2
    %v1303 = vsel %vm1283, %v1300, %v1302
    %v1304 = vrot.slane %v63, 2
    %v1305 = vrot.slane %v64, 2
    %v1306 = vsel %vm1283, %v1304, %v1305
    %v1307 = vrot.slane %v65, 2
    %v1308 = vsel %vm1283, %v1305, %v1307
    %v1309 = vrot.slane %v66, 2
    %v1310 = vrot.slane %v67, 2
    %v1311 = vsel %vm1283, %v1309, %v1310
    %v1312 = vrot.slane %v68, 2
    %v1313 = vsel %vm1283, %v1310, %v1312
    %v1314 = vrot.slane %v69, 2
    %v1315 = vrot.slane %v70, 2
    %v1316 = vsel %vm1283, %v1314, %v1315
    %v1317 = vrot.slane %v71, 2
    %v1318 = vsel %vm1283, %v1315, %v1317
    %v1319 = vrot.slane %v72, 2
    %v1320 = vrot.slane %v73, 2
    %v1321 = vsel %vm1283, %v1319, %v1320
    %v1322 = vrot.slane %v74, 2
    %v1323 = vsel %vm1283, %v1320, %v1322
    %v1324 = vrot.slane %v75, 2
    %v1325 = vrot.slane %v76, 2
    %v1326 = vsel %vm1283, %v1324, %v1325
    %v1327 = vrot.slane %v77, 2
    %v1328 = vsel %vm1283, %v1325, %v1327
    %v1329 = vrot.slane %v78, 2
    %v1330 = vrot.slane %v79, 2
    %v1331 = vsel %vm1283, %v1329, %v1330
    %v1332 = vrot.slane %v80, 2
    %v1333 = vsel %vm1283, %v1330, %v1332
    %v1334 = vrot.slane %v81, 2
    %v1335 = vrot.slane %v82, 2
    %v1336 = vsel %vm1283, %v1334, %v1335
    %v1337 = vrot.slane %v83, 2
    %v1338 = vsel %vm1283, %v1335, %v1337
    %v1339 = vrot.slane %v84, 2
    %v1340 = vrot.slane %v85, 2
    %v1341 = vsel %vm1283, %v1339, %v1340
    %v1342 = vrot.slane %v86, 2
    %v1343 = vsel %vm1283, %v1340, %v1342
    %v1344 = vrot.slane %v87, 2
    %v1345 = vrot.slane %v88, 2
    %v1346 = vsel %vm1283, %v1344, %v1345
    %v1347 = vrot.slane %v89, 2
    %v1348 = vsel %vm1283, %v1345, %v1347
    %v1349 = vrot.slane %v90, 2
    %v1350 = vrot.slane %v91, 2
    %v1351 = vsel %vm1283, %v1349, %v1350
    %v1352 = vrot.slane %v92, 2
    %v1353 = vsel %vm1283, %v1350, %v1352
    %v1354 = vrot.slane %v93, 2
    %v1355 = vrot.slane %v94, 2
    %v1356 = vsel %vm1283, %v1354, %v1355
    %v1357 = vrot.slane %v95, 2
    %v1358 = vsel %vm1283, %v1355, %v1357
    %v1359 = vrot.slane %v96, 2
    %v1360 = vrot.slane %v97, 2
    %v1361 = vsel %vm1283, %v1359, %v1360
    %v1362 = vrot.slane %v98, 2
    %v1363 = vsel %vm1283, %v1360, %v1362
    %v1364 = vrot.slane %v105, 2
    %v1365 = vrot.slane %v106, 2
    %v1366 = vsel %vm1283, %v1364, %v1365
    %v1367 = vrot.slane %v107, 2
    %v1368 = vsel %vm1283, %v1365, %v1367
    %v1369 = vrot.slane %v108, 2
    %v1370 = vrot.slane %v109, 2
    %v1371 = vsel %vm1283, %v1369, %v1370
    %v1372 = vrot.slane %v110, 2
    %v1373 = vsel %vm1283, %v1370, %v1372
    %v1374 = vrot.slane %v111, 2
    %v1375 = vrot.slane %v112, 2
    %v1376 = vsel %vm1283, %v1374, %v1375
    %v1377 = vrot.slane %v113, 2
    %v1378 = vsel %vm1283, %v1375, %v1377
    %v1379 = vrot.slane %v114, 2
    %v1380 = vrot.slane %v115, 2
    %v1381 = vsel %vm1283, %v1379, %v1380
    %v1382 = vrot.slane %v116, 2
    %v1383 = vsel %vm1283, %v1380, %v1382
    %v1384 = vrot.slane %v117, 2
    %v1385 = vrot.slane %v118, 2
    %v1386 = vsel %vm1283, %v1384, %v1385
    %v1387 = vrot.slane %v119, 2
    %v1388 = vsel %vm1283, %v1385, %v1387
    %v1389 = vrot.slane %v120, 2
    %v1390 = vrot.slane %v121, 2
    %v1391 = vsel %vm1283, %v1389, %v1390
    %v1392 = vrot.slane %v122, 2
    %v1393 = vsel %vm1283, %v1390, %v1392
    %v1394 = vrot.slane %v123, 2
    %v1395 = vrot.slane %v124, 2
    %v1396 = vsel %vm1283, %v1394, %v1395
    %v1397 = vrot.slane %v125, 2
    %v1398 = vsel %vm1283, %v1395, %v1397
    %v1399 = vrot.slane %v126, 2
    %v1400 = vrot.slane %v127, 2
    %v1401 = vsel %vm1283, %v1399, %v1400
    %v1402 = vrot.slane %v128, 2
    %v1403 = vsel %vm1283, %v1400, %v1402
    %v1404 = vrot.slane %v129, 2
    %v1405 = vrot.slane %v130, 2
    %v1406 = vsel %vm1283, %v1404, %v1405
    %v1407 = vrot.slane %v131, 2
    %v1408 = vsel %vm1283, %v1405, %v1407
    %v1409 = vrot.slane %v132, 2
    %v1410 = vrot.slane %v133, 2
    %v1411 = vsel %vm1283, %v1409, %v1410
    %v1412 = vrot.slane %v134, 2
    %v1413 = vsel %vm1283, %v1410, %v1412
    %v1414 = vrot.slane %v135, 2
    %v1415 = vrot.slane %v136, 2
    %v1416 = vsel %vm1283, %v1414, %v1415
    %v1417 = vrot.slane %v137, 2
    %v1418 = vsel %vm1283, %v1415, %v1417
    %v1419 = vrot.slane %v138, 2
    %v1420 = vrot.slane %v139, 2
    %v1421 = vsel %vm1283, %v1419, %v1420
    %v1422 = vrot.slane %v140, 2
    %v1423 = vsel %vm1283, %v1420, %v1422
    %v1424 = vrot.slane %v141, 2
    %v1425 = vrot.slane %v142, 2
    %v1426 = vsel %vm1283, %v1424, %v1425
    %v1427 = vrot.slane %v143, 2
    %v1428 = vsel %vm1283, %v1425, %v1427
    %v1429 = vrot.slane %v144, 2
    %v1430 = vrot.slane %v145, 2
    %v1431 = vsel %vm1283, %v1429, %v1430
    %v1432 = vrot.slane %v146, 2
    %v1433 = vsel %vm1283, %v1430, %v1432
    %v1434 = vrot.slane %v147, 2
    %v1435 = vrot.slane %v148, 2
    %v1436 = vsel %vm1283, %v1434, %v1435
    %v1437 = vrot.slane %v149, 2
    %v1438 = vsel %vm1283, %v1435, %v1437
    %v1439 = vrot.slane %v150, 2
    %v1440 = vrot.slane %v151, 2
    %v1441 = vsel %vm1283, %v1439, %v1440
    %v1442 = vrot.slane %v152, 2
    %v1443 = vsel %vm1283, %v1440, %v1442
    %s1508 = scalar_lea.vmem %s1, 256
    %v1509 = vld [vmem:[%s1508] sm:$0xff]
    %v1510 = vld [vmem:[%s1508 + $0x8] sm:$0xff]
    %v1511 = vld [vmem:[%s1508 + $0x10] sm:$0xff]
    %v1512 = vld [vmem:[%s1508 + $0x18] sm:$0xff]
    %v1513 = vld [vmem:[%s1508 + $0x20] sm:$0xff]
    %v1514 = vld [vmem:[%s1508 + $0x28] sm:$0xff]
    %v1515 = vld [vmem:[%s1508 + $0x30] sm:$0xff]
    %v1516 = vld [vmem:[%s1508 + $0x38] sm:$0xff]
    %v1517 = vld [vmem:[%s1508 + $0x40] sm:$0xff]
    %v1518 = vld [vmem:[%s1508 + $0x48] sm:$0xff]
    %v1519 = vld [vmem:[%s1508 + $0x50] sm:$0xff]
    %v1520 = vld [vmem:[%s1508 + $0x58] sm:$0xff]
    %v1521 = vld [vmem:[%s1508 + $0x60] sm:$0xff]
    %v1522 = vld [vmem:[%s1508 + $0x68] sm:$0xff]
    %v1523 = vld [vmem:[%s1508 + $0x70] sm:$0xff]
    %v1524 = vld [vmem:[%s1508 + $0x78] sm:$0xff]
    %1525 = vmatprep.subr.mxu0 0.0
    %1526 = vmatpush1.msra.mxu0 %v1509
    %1527 = vmatprep.subr.mxu0 0.0
    %1528 = vmatpush1.msra.mxu0 %v1510
    %1529 = vmatprep.subr.mxu0 0.0
    %1530 = vmatpush1.msra.mxu0 %v1511
    %1531 = vmatprep.subr.mxu0 0.0
    %1532 = vmatpush1.msra.mxu0 %v1512
    %1533 = vmatprep.subr.mxu0 0.0
    %1534 = vmatpush1.msra.mxu0 %v1513
    %1535 = vmatprep.subr.mxu0 0.0
    %1536 = vmatpush1.msra.mxu0 %v1514
    %1537 = vmatprep.subr.mxu0 0.0
    %1538 = vmatpush1.msra.mxu0 %v1515
    %1539 = vmatprep.subr.mxu0 0.0
    %1540 = vmatpush1.msra.mxu0 %v1516
    %1541 = vmatprep.subr.mxu0 0.0
    %1542 = vmatpush1.msra.mxu0 %v1517
    %1543 = vmatprep.subr.mxu0 0.0
    %1544 = vmatpush1.msra.mxu0 %v1518
    %1545 = vmatprep.subr.mxu0 0.0
    %1546 = vmatpush1.msra.mxu0 %v1519
    %1547 = vmatprep.subr.mxu0 0.0
    %1548 = vmatpush1.msra.mxu0 %v1520
    %1549 = vmatprep.subr.mxu0 0.0
    %1550 = vmatpush1.msra.mxu0 %v1521
    %1551 = vmatprep.subr.mxu0 0.0
    %1552 = vmatpush1.msra.mxu0 %v1522
    %1553 = vmatprep.subr.mxu0 0.0
    %1554 = vmatpush1.msra.mxu0 %v1523
    %1555 = vmatprep.subr.mxu0 0.0
    %1556 = vmatpush1.msra.mxu0 %v1524
    %1557 = vmatprep.subr.mxu0 0.0
    %1558 = vmatpush1.msra.mxu0 0.0
    %1559 = vmatprep.subr.mxu0 0.0
    %1560 = vmatpush1.msra.mxu0 0.0
    %1561 = vmatprep.subr.mxu0 0.0
    %1562 = vmatpush1.msra.mxu0 0.0
    %1563 = vmatprep.subr.mxu0 0.0
    %1564 = vmatpush1.msra.mxu0 0.0
    %1565 = vmatprep.subr.mxu0 0.0
    %1566 = vmatpush1.msra.mxu0 0.0
    %1567 = vmatprep.subr.mxu0 0.0
    %1568 = vmatpush1.msra.mxu0 0.0
    %1569 = vmatprep.subr.mxu0 0.0
    %1570 = vmatpush1.msra.mxu0 0.0
    %1571 = vmatprep.subr.mxu0 0.0
    %1572 = vmatpush1.msra.mxu0 0.0
    %1573 = vmatprep.subr.mxu0 0.0
    %1574 = vmatpush1.msra.mxu0 0.0
    %1575 = vmatprep.subr.mxu0 0.0
    %1576 = vmatpush1.msra.mxu0 0.0
    %1577 = vmatprep.subr.mxu0 0.0
    %1578 = vmatpush1.msra.mxu0 0.0
    %1579 = vmatprep.subr.mxu0 0.0
    %1580 = vmatpush1.msra.mxu0 0.0
    %1581 = vmatprep.subr.mxu0 0.0
    %1582 = vmatpush1.msra.mxu0 0.0
    %1583 = vmatprep.subr.mxu0 0.0
    %1584 = vmatpush1.msra.mxu0 0.0
    %1585 = vmatprep.subr.mxu0 0.0
    %1586 = vmatpush1.msra.mxu0 0.0
    %1587 = vmatprep.subr.mxu0 0.0
    %1588 = vmatpush1.msra.mxu0 0.0
    %1589 = vmatprep.mubr.f32.mxu0 0.0
    %1590 = vmatmul.mubr.f32.gmra.mrb[0].mxu0 %v1286
    %v1591 = vpop.f32.mrb[0].mxu0
    %v1592 = vadd.f32 0.0, %v1591
    %v1593 = vpop.f32.mrb[0].mxu0
    %1594 = vmatprep.mubr.f32.mxu0 0.0
    %1595 = vmatmul.mubr.f32.gmra.mrb[0].mxu0 %v1288
    %v1596 = vpop.f32.mrb[0].mxu0
    %v1597 = vadd.f32 0.0, %v1596
    %v1598 = vpop.f32.mrb[0].mxu0
    %1599 = vmatprep.mubr.f32.mxu0 0.0
    %1600 = vmatmul.mubr.f32.gmra.mrb[0].mxu0 %v1291
    %v1601 = vpop.f32.mrb[0].mxu0
    %v1602 = vadd.f32 0.0, %v1601
    %v1603 = vpop.f32.mrb[0].mxu0
    %1604 = vmatprep.mubr.f32.mxu0 0.0
    %1605 = vmatmul.mubr.f32.gmra.mrb[0].mxu0 %v1293
    %v1606 = vpop.f32.mrb[0].mxu0
    %v1607 = vadd.f32 0.0, %v1606
    %v1608 = vpop.f32.mrb[0].mxu0
    %1609 = vmatprep.mubr.f32.mxu0 0.0
    %1610 = vmatmul.mubr.f32.gmra.mrb[0].mxu0 %v1296
    %v1611 = vpop.f32.mrb[0].mxu0
    %v1612 = vadd.f32 0.0, %v1611
    %v1613 = vpop.f32.mrb[0].mxu0
    %1614 = vmatprep.mubr.f32.mxu0 0.0
    %1615 = vmatmul.mubr.f32.gmra.mrb[0].mxu0 %v1298
    %v1616 = vpop.f32.mrb[0].mxu0
    %v1617 = vadd.f32 0.0, %v1616
    %v1618 = vpop.f32.mrb[0].mxu0
    %1619 = vmatprep.mubr.f32.mxu0 0.0
    %1620 = vmatmul.mubr.f32.gmra.mrb[0].mxu0 %v1301
    %v1621 = vpop.f32.mrb[0].mxu0
    %v1622 = vadd.f32 0.0, %v1621
    %v1623 = vpop.f32.mrb[0].mxu0
    %1624 = vmatprep.mubr.f32.mxu0 0.0
    %1625 = vmatmul.mubr.f32.gmra.mrb[0].mxu0 %v1303
    %v1626 = vpop.f32.mrb[0].mxu0
    %v1627 = vadd.f32 0.0, %v1626
    %v1628 = vpop.f32.mrb[0].mxu0
    %1629 = vmatprep.mubr.f32.mxu0 0.0
    %1630 = vmatmul.mubr.f32.gmra.mrb[0].mxu0 %v1306
    %v1631 = vpop.f32.mrb[0].mxu0
    %v1632 = vadd.f32 0.0, %v1631
    %v1633 = vpop.f32.mrb[0].mxu0
    %1634 = vmatprep.mubr.f32.mxu0 0.0
    %1635 = vmatmul.mubr.f32.gmra.mrb[0].mxu0 %v1308
    %v1636 = vpop.f32.mrb[0].mxu0
    %v1637 = vadd.f32 0.0, %v1636
    %v1638 = vpop.f32.mrb[0].mxu0
    %1639 = vmatprep.mubr.f32.mxu0 0.0
    %1640 = vmatmul.mubr.f32.gmra.mrb[0].mxu0 %v1311
    %v1641 = vpop.f32.mrb[0].mxu0
    %v1642 = vadd.f32 0.0, %v1641
    %v1643 = vpop.f32.mrb[0].mxu0
    %1644 = vmatprep.mubr.f32.mxu0 0.0
    %1645 = vmatmul.mubr.f32.gmra.mrb[0].mxu0 %v1313
    %v1646 = vpop.f32.mrb[0].mxu0
    %v1647 = vadd.f32 0.0, %v1646
    %v1648 = vpop.f32.mrb[0].mxu0
    %1649 = vmatprep.mubr.f32.mxu0 0.0
    %1650 = vmatmul.mubr.f32.gmra.mrb[0].mxu0 %v1316
    %v1651 = vpop.f32.mrb[0].mxu0
    %v1652 = vadd.f32 0.0, %v1651
    %v1653 = vpop.f32.mrb[0].mxu0
    %1654 = vmatprep.mubr.f32.mxu0 0.0
    %1655 = vmatmul.mubr.f32.gmra.mrb[0].mxu0 %v1318
    %v1656 = vpop.f32.mrb[0].mxu0
    %v1657 = vadd.f32 0.0, %v1656
    %v1658 = vpop.f32.mrb[0].mxu0
    %1659 = vmatprep.mubr.f32.mxu0 0.0
    %1660 = vmatmul.mubr.f32.gmra.mrb[0].mxu0 %v1321
    %v1661 = vpop.f32.mrb[0].mxu0
    %v1662 = vadd.f32 0.0, %v1661
    %v1663 = vpop.f32.mrb[0].mxu0
    %1664 = vmatprep.mubr.f32.mxu0 0.0
    %1665 = vmatmul.mubr.f32.gmra.mrb[0].mxu0 %v1323
    %v1666 = vpop.f32.mrb[0].mxu0
    %v1667 = vadd.f32 0.0, %v1666
    %v1668 = vpop.f32.mrb[0].mxu0
    %1669 = vmatprep.mubr.f32.mxu0 0.0
    %1670 = vmatmul.mubr.f32.gmra.mrb[0].mxu0 %v1326
    %v1671 = vpop.f32.mrb[0].mxu0
    %v1672 = vadd.f32 0.0, %v1671
    %v1673 = vpop.f32.mrb[0].mxu0
    %1674 = vmatprep.mubr.f32.mxu0 0.0
    %1675 = vmatmul.mubr.f32.gmra.mrb[0].mxu0 %v1328
    %v1676 = vpop.f32.mrb[0].mxu0
    %v1677 = vadd.f32 0.0, %v1676
    %v1678 = vpop.f32.mrb[0].mxu0
    %1679 = vmatprep.mubr.f32.mxu0 0.0
    %1680 = vmatmul.mubr.f32.gmra.mrb[0].mxu0 %v1331
    %v1681 = vpop.f32.mrb[0].mxu0
    %v1682 = vadd.f32 0.0, %v1681
    %v1683 = vpop.f32.mrb[0].mxu0
    %1684 = vmatprep.mubr.f32.mxu0 0.0
    %1685 = vmatmul.mubr.f32.gmra.mrb[0].mxu0 %v1333
    %v1686 = vpop.f32.mrb[0].mxu0
    %v1687 = vadd.f32 0.0, %v1686
    %v1688 = vpop.f32.mrb[0].mxu0
    %1689 = vmatprep.mubr.f32.mxu0 0.0
    %1690 = vmatmul.mubr.f32.gmra.mrb[0].mxu0 %v1336
    %v1691 = vpop.f32.mrb[0].mxu0
    %v1692 = vadd.f32 0.0, %v1691
    %v1693 = vpop.f32.mrb[0].mxu0
    %1694 = vmatprep.mubr.f32.mxu0 0.0
    %1695 = vmatmul.mubr.f32.gmra.mrb[0].mxu0 %v1338
    %v1696 = vpop.f32.mrb[0].mxu0
    %v1697 = vadd.f32 0.0, %v1696
    %v1698 = vpop.f32.mrb[0].mxu0
    %1699 = vmatprep.mubr.f32.mxu0 0.0
    %1700 = vmatmul.mubr.f32.gmra.mrb[0].mxu0 %v1341
    %v1701 = vpop.f32.mrb[0].mxu0
    %v1702 = vadd.f32 0.0, %v1701
    %v1703 = vpop.f32.mrb[0].mxu0
    %1704 = vmatprep.mubr.f32.mxu0 0.0
    %1705 = vmatmul.mubr.f32.gmra.mrb[0].mxu0 %v1343
    %v1706 = vpop.f32.mrb[0].mxu0
    %v1707 = vadd.f32 0.0, %v1706
    %v1708 = vpop.f32.mrb[0].mxu0
    %1709 = vmatprep.mubr.f32.mxu0 0.0
    %1710 = vmatmul.mubr.f32.gmra.mrb[0].mxu0 %v1346
    %v1711 = vpop.f32.mrb[0].mxu0
    %v1712 = vadd.f32 0.0, %v1711
    %v1713 = vpop.f32.mrb[0].mxu0
    %1714 = vmatprep.mubr.f32.mxu0 0.0
    %1715 = vmatmul.mubr.f32.gmra.mrb[0].mxu0 %v1348
    %v1716 = vpop.f32.mrb[0].mxu0
    %v1717 = vadd.f32 0.0, %v1716
    %v1718 = vpop.f32.mrb[0].mxu0
    %1719 = vmatprep.mubr.f32.mxu0 0.0
    %1720 = vmatmul.mubr.f32.gmra.mrb[0].mxu0 %v1351
    %v1721 = vpop.f32.mrb[0].mxu0
    %v1722 = vadd.f32 0.0, %v1721
    %v1723 = vpop.f32.mrb[0].mxu0
    %1724 = vmatprep.mubr.f32.mxu0 0.0
    %1725 = vmatmul.mubr.f32.gmra.mrb[0].mxu0 %v1353
    %v1726 = vpop.f32.mrb[0].mxu0
    %v1727 = vadd.f32 0.0, %v1726
    %v1728 = vpop.f32.mrb[0].mxu0
    %1729 = vmatprep.mubr.f32.mxu0 0.0
    %1730 = vmatmul.mubr.f32.gmra.mrb[0].mxu0 %v1356
    %v1731 = vpop.f32.mrb[0].mxu0
    %v1732 = vadd.f32 0.0, %v1731
    %v1733 = vpop.f32.mrb[0].mxu0
    %1734 = vmatprep.mubr.f32.mxu0 0.0
    %1735 = vmatmul.mubr.f32.gmra.mrb[0].mxu0 %v1358
    %v1736 = vpop.f32.mrb[0].mxu0
    %v1737 = vadd.f32 0.0, %v1736
    %v1738 = vpop.f32.mrb[0].mxu0
    %1739 = vmatprep.mubr.f32.mxu0 0.0
    %1740 = vmatmul.mubr.f32.gmra.mrb[0].mxu0 %v1361
    %v1741 = vpop.f32.mrb[0].mxu0
    %v1742 = vadd.f32 0.0, %v1741
    %v1743 = vpop.f32.mrb[0].mxu0
    %1744 = vmatprep.mubr.f32.mxu0 0.0
    %1745 = vmatmul.mubr.f32.gmra.mrb[0].mxu0 %v1363
    %v1746 = vpop.f32.mrb[0].mxu0
    %v1747 = vadd.f32 0.0, %v1746
    %v1748 = vpop.f32.mrb[0].mxu0
    %1749 = vmatprep.mubr.f32.mxu0 0.0
    %1750 = vmatmul.mubr.f32.gmra.mrb[0].mxu0 %v1366
    %v1751 = vpop.f32.mrb[0].mxu0
    %v1752 = vadd.f32 0.0, %v1751
    %v1753 = vpop.f32.mrb[0].mxu0
    %1754 = vmatprep.mubr.f32.mxu0 0.0
    %1755 = vmatmul.mubr.f32.gmra.mrb[0].mxu0 %v1368
    %v1756 = vpop.f32.mrb[0].mxu0
    %v1757 = vadd.f32 0.0, %v1756
    %v1758 = vpop.f32.mrb[0].mxu0
    %1759 = vmatprep.mubr.f32.mxu0 0.0
    %1760 = vmatmul.mubr.f32.gmra.mrb[0].mxu0 %v1371
    %v1761 = vpop.f32.mrb[0].mxu0
    %v1762 = vadd.f32 0.0, %v1761
    %v1763 = vpop.f32.mrb[0].mxu0
    %1764 = vmatprep.mubr.f32.mxu0 0.0
    %1765 = vmatmul.mubr.f32.gmra.mrb[0].mxu0 %v1373
    %v1766 = vpop.f32.mrb[0].mxu0
    %v1767 = vadd.f32 0.0, %v1766
    %v1768 = vpop.f32.mrb[0].mxu0
    %1769 = vmatprep.mubr.f32.mxu0 0.0
    %1770 = vmatmul.mubr.f32.gmra.mrb[0].mxu0 %v1376
    %v1771 = vpop.f32.mrb[0].mxu0
    %v1772 = vadd.f32 0.0, %v1771
    %v1773 = vpop.f32.mrb[0].mxu0
    %1774 = vmatprep.mubr.f32.mxu0 0.0
    %1775 = vmatmul.mubr.f32.gmra.mrb[0].mxu0 %v1378
    %v1776 = vpop.f32.mrb[0].mxu0
    %v1777 = vadd.f32 0.0, %v1776
    %v1778 = vpop.f32.mrb[0].mxu0
    %1779 = vmatprep.mubr.f32.mxu0 0.0
    %1780 = vmatmul.mubr.f32.gmra.mrb[0].mxu0 %v1381
    %v1781 = vpop.f32.mrb[0].mxu0
    %v1782 = vadd.f32 0.0, %v1781
    %v1783 = vpop.f32.mrb[0].mxu0
    %1784 = vmatprep.mubr.f32.mxu0 0.0
    %1785 = vmatmul.mubr.f32.gmra.mrb[0].mxu0 %v1383
    %v1786 = vpop.f32.mrb[0].mxu0
    %v1787 = vadd.f32 0.0, %v1786
    %v1788 = vpop.f32.mrb[0].mxu0
    %1789 = vmatprep.mubr.f32.mxu0 0.0
    %1790 = vmatmul.mubr.f32.gmra.mrb[0].mxu0 %v1386
    %v1791 = vpop.f32.mrb[0].mxu0
    %v1792 = vadd.f32 0.0, %v1791
    %v1793 = vpop.f32.mrb[0].mxu0
    %1794 = vmatprep.mubr.f32.mxu0 0.0
    %1795 = vmatmul.mubr.f32.gmra.mrb[0].mxu0 %v1388
    %v1796 = vpop.f32.mrb[0].mxu0
    %v1797 = vadd.f32 0.0, %v1796
    %v1798 = vpop.f32.mrb[0].mxu0
    %1799 = vmatprep.mubr.f32.mxu0 0.0
    %1800 = vmatmul.mubr.f32.gmra.mrb[0].mxu0 %v1391
    %v1801 = vpop.f32.mrb[0].mxu0
    %v1802 = vadd.f32 0.0, %v1801
    %v1803 = vpop.f32.mrb[0].mxu0
    %1804 = vmatprep.mubr.f32.mxu0 0.0
    %1805 = vmatmul.mubr.f32.gmra.mrb[0].mxu0 %v1393
    %v1806 = vpop.f32.mrb[0].mxu0
    %v1807 = vadd.f32 0.0, %v1806
    %v1808 = vpop.f32.mrb[0].mxu0
    %1809 = vmatprep.mubr.f32.mxu0 0.0
    %1810 = vmatmul.mubr.f32.gmra.mrb[0].mxu0 %v1396
    %v1811 = vpop.f32.mrb[0].mxu0
    %v1812 = vadd.f32 0.0, %v1811
    %v1813 = vpop.f32.mrb[0].mxu0
    %1814 = vmatprep.mubr.f32.mxu0 0.0
    %1815 = vmatmul.mubr.f32.gmra.mrb[0].mxu0 %v1398
    %v1816 = vpop.f32.mrb[0].mxu0
    %v1817 = vadd.f32 0.0, %v1816
    %v1818 = vpop.f32.mrb[0].mxu0
    %1819 = vmatprep.mubr.f32.mxu0 0.0
    %1820 = vmatmul.mubr.f32.gmra.mrb[0].mxu0 %v1401
    %v1821 = vpop.f32.mrb[0].mxu0
    %v1822 = vadd.f32 0.0, %v1821
    %v1823 = vpop.f32.mrb[0].mxu0
    %1824 = vmatprep.mubr.f32.mxu0 0.0
    %1825 = vmatmul.mubr.f32.gmra.mrb[0].mxu0 %v1403
    %v1826 = vpop.f32.mrb[0].mxu0
    %v1827 = vadd.f32 0.0, %v1826
    %v1828 = vpop.f32.mrb[0].mxu0
    %1829 = vmatprep.mubr.f32.mxu0 0.0
    %1830 = vmatmul.mubr.f32.gmra.mrb[0].mxu0 %v1406
    %v1831 = vpop.f32.mrb[0].mxu0
    %v1832 = vadd.f32 0.0, %v1831
    %v1833 = vpop.f32.mrb[0].mxu0
    %1834 = vmatprep.mubr.f32.mxu0 0.0
    %1835 = vmatmul.mubr.f32.gmra.mrb[0].mxu0 %v1408
    %v1836 = vpop.f32.mrb[0].mxu0
    %v1837 = vadd.f32 0.0, %v1836
    %v1838 = vpop.f32.mrb[0].mxu0
    %1839 = vmatprep.mubr.f32.mxu0 0.0
    %1840 = vmatmul.mubr.f32.gmra.mrb[0].mxu0 %v1411
    %v1841 = vpop.f32.mrb[0].mxu0
    %v1842 = vadd.f32 0.0, %v1841
    %v1843 = vpop.f32.mrb[0].mxu0
    %1844 = vmatprep.mubr.f32.mxu0 0.0
    %1845 = vmatmul.mubr.f32.gmra.mrb[0].mxu0 %v1413
    %v1846 = vpop.f32.mrb[0].mxu0
    %v1847 = vadd.f32 0.0, %v1846
    %v1848 = vpop.f32.mrb[0].mxu0
    %1849 = vmatprep.mubr.f32.mxu0 0.0
    %1850 = vmatmul.mubr.f32.gmra.mrb[0].mxu0 %v1416
    %v1851 = vpop.f32.mrb[0].mxu0
    %v1852 = vadd.f32 0.0, %v1851
    %v1853 = vpop.f32.mrb[0].mxu0
    %1854 = vmatprep.mubr.f32.mxu0 0.0
    %1855 = vmatmul.mubr.f32.gmra.mrb[0].mxu0 %v1418
    %v1856 = vpop.f32.mrb[0].mxu0
    %v1857 = vadd.f32 0.0, %v1856
    %v1858 = vpop.f32.mrb[0].mxu0
    %1859 = vmatprep.mubr.f32.mxu0 0.0
    %1860 = vmatmul.mubr.f32.gmra.mrb[0].mxu0 %v1421
    %v1861 = vpop.f32.mrb[0].mxu0
    %v1862 = vadd.f32 0.0, %v1861
    %v1863 = vpop.f32.mrb[0].mxu0
    %1864 = vmatprep.mubr.f32.mxu0 0.0
    %1865 = vmatmul.mubr.f32.gmra.mrb[0].mxu0 %v1423
    %v1866 = vpop.f32.mrb[0].mxu0
    %v1867 = vadd.f32 0.0, %v1866
    %v1868 = vpop.f32.mrb[0].mxu0
    %1869 = vmatprep.mubr.f32.mxu0 0.0
    %1870 = vmatmul.mubr.f32.gmra.mrb[0].mxu0 %v1426
    %v1871 = vpop.f32.mrb[0].mxu0
    %v1872 = vadd.f32 0.0, %v1871
    %v1873 = vpop.f32.mrb[0].mxu0
    %1874 = vmatprep.mubr.f32.mxu0 0.0
    %1875 = vmatmul.mubr.f32.gmra.mrb[0].mxu0 %v1428
    %v1876 = vpop.f32.mrb[0].mxu0
    %v1877 = vadd.f32 0.0, %v1876
    %v1878 = vpop.f32.mrb[0].mxu0
    %1879 = vmatprep.mubr.f32.mxu0 0.0
    %1880 = vmatmul.mubr.f32.gmra.mrb[0].mxu0 %v1431
    %v1881 = vpop.f32.mrb[0].mxu0
    %v1882 = vadd.f32 0.0, %v1881
    %v1883 = vpop.f32.mrb[0].mxu0
    %1884 = vmatprep.mubr.f32.mxu0 0.0
    %1885 = vmatmul.mubr.f32.gmra.mrb[0].mxu0 %v1433
    %v1886 = vpop.f32.mrb[0].mxu0
    %v1887 = vadd.f32 0.0, %v1886
    %v1888 = vpop.f32.mrb[0].mxu0
    %1889 = vmatprep.mubr.f32.mxu0 0.0
    %1890 = vmatmul.mubr.f32.gmra.mrb[0].mxu0 %v1436
    %v1891 = vpop.f32.mrb[0].mxu0
    %v1892 = vadd.f32 0.0, %v1891
    %v1893 = vpop.f32.mrb[0].mxu0
    %1894 = vmatprep.mubr.f32.mxu0 0.0
    %1895 = vmatmul.mubr.f32.gmra.mrb[0].mxu0 %v1438
    %v1896 = vpop.f32.mrb[0].mxu0
    %v1897 = vadd.f32 0.0, %v1896
    %v1898 = vpop.f32.mrb[0].mxu0
    %1899 = vmatprep.mubr.f32.mxu0 0.0
    %1900 = vmatmul.mubr.f32.gmra.mrb[0].mxu0 %v1441
    %v1901 = vpop.f32.mrb[0].mxu0
    %v1902 = vadd.f32 0.0, %v1901
    %v1903 = vpop.f32.mrb[0].mxu0
    %1904 = vmatprep.mubr.f32.mxu0 0.0
    %1905 = vmatmul.mubr.f32.gmra.mrb[0].mxu0 %v1443
    %v1906 = vpop.f32.mrb[0].mxu0
    %v1907 = vadd.f32 0.0, %v1906
    %v1908 = vpop.f32.mrb[0].mxu0
    %1909 = vdwg.mxu0
    %v1910 = vadd.f32 %v965, %v1592
    %v1911 = vadd.f32 %v970, %v1597
    %v1912 = vadd.f32 %v975, %v1602
    %v1913 = vadd.f32 %v980, %v1607
    %v1914 = vadd.f32 %v985, %v1612
    %v1915 = vadd.f32 %v990, %v1617
    %v1916 = vadd.f32 %v995, %v1622
    %v1917 = vadd.f32 %v1000, %v1627
    %v1918 = vadd.f32 %v1005, %v1632
    %v1919 = vadd.f32 %v1010, %v1637
    %v1920 = vadd.f32 %v1015, %v1642
    %v1921 = vadd.f32 %v1020, %v1647
    %v1922 = vadd.f32 %v1025, %v1652
    %v1923 = vadd.f32 %v1030, %v1657
    %v1924 = vadd.f32 %v1035, %v1662
    %v1925 = vadd.f32 %v1040, %v1667
    %v1926 = vadd.f32 %v1045, %v1672
    %v1927 = vadd.f32 %v1050, %v1677
    %v1928 = vadd.f32 %v1055, %v1682
    %v1929 = vadd.f32 %v1060, %v1687
    %v1930 = vadd.f32 %v1065, %v1692
    %v1931 = vadd.f32 %v1070, %v1697
    %v1932 = vadd.f32 %v1075, %v1702
    %v1933 = vadd.f32 %v1080, %v1707
    %v1934 = vadd.f32 %v1085, %v1712
    %v1935 = vadd.f32 %v1090, %v1717
    %v1936 = vadd.f32 %v1095, %v1722
    %v1937 = vadd.f32 %v1100, %v1727
    %v1938 = vadd.f32 %v1105, %v1732
    %v1939 = vadd.f32 %v1110, %v1737
    %v1940 = vadd.f32 %v1115, %v1742
    %v1941 = vadd.f32 %v1120, %v1747
    %v1942 = vadd.f32 %v1125, %v1752
    %v1943 = vadd.f32 %v1130, %v1757
    %v1944 = vadd.f32 %v1135, %v1762
    %v1945 = vadd.f32 %v1140, %v1767
    %v1946 = vadd.f32 %v1145, %v1772
    %v1947 = vadd.f32 %v1150, %v1777
    %v1948 = vadd.f32 %v1155, %v1782
    %v1949 = vadd.f32 %v1160, %v1787
    %v1950 = vadd.f32 %v1165, %v1792
    %v1951 = vadd.f32 %v1170, %v1797
    %v1952 = vadd.f32 %v1175, %v1802
    %v1953 = vadd.f32 %v1180, %v1807
    %v1954 = vadd.f32 %v1185, %v1812
    %v1955 = vadd.f32 %v1190, %v1817
    %v1956 = vadd.f32 %v1195, %v1822
    %v1957 = vadd.f32 %v1200, %v1827
    %v1958 = vadd.f32 %v1205, %v1832
    %v1959 = vadd.f32 %v1210, %v1837
    %v1960 = vadd.f32 %v1215, %v1842
    %v1961 = vadd.f32 %v1220, %v1847
    %v1962 = vadd.f32 %v1225, %v1852
    %v1963 = vadd.f32 %v1230, %v1857
    %v1964 = vadd.f32 %v1235, %v1862
    %v1965 = vadd.f32 %v1240, %v1867
    %v1966 = vadd.f32 %v1245, %v1872
    %v1967 = vadd.f32 %v1250, %v1877
    %v1968 = vadd.f32 %v1255, %v1882
    %v1969 = vadd.f32 %v1260, %v1887
    %v1970 = vadd.f32 %v1265, %v1892
    %v1971 = vadd.f32 %v1270, %v1897
    %v1972 = vadd.f32 %v1275, %v1902
    %v1973 = vadd.f32 %v1280, %v1907
    %s1974 = scalar_lea.vmem %s1, 384
    %v1975 = vld [vmem:[%s1974] sm:$0xff]
    %v1976 = vld [vmem:[%s1974 + $0x8] sm:$0xff]
    %v1977 = vld [vmem:[%s1974 + $0x10] sm:$0xff]
    %v1978 = vld [vmem:[%s1974 + $0x18] sm:$0xff]
    %v1979 = vld [vmem:[%s1974 + $0x20] sm:$0xff]
    %v1980 = vld [vmem:[%s1974 + $0x28] sm:$0xff]
    %v1981 = vld [vmem:[%s1974 + $0x30] sm:$0xff]
    %v1982 = vld [vmem:[%s1974 + $0x38] sm:$0xff]
    %v1983 = vld [vmem:[%s1974 + $0x40] sm:$0xff]
    %v1984 = vld [vmem:[%s1974 + $0x48] sm:$0xff]
    %v1985 = vld [vmem:[%s1974 + $0x50] sm:$0xff]
    %v1986 = vld [vmem:[%s1974 + $0x58] sm:$0xff]
    %v1987 = vld [vmem:[%s1974 + $0x60] sm:$0xff]
    %v1988 = vld [vmem:[%s1974 + $0x68] sm:$0xff]
    %v1989 = vld [vmem:[%s1974 + $0x70] sm:$0xff]
    %v1990 = vld [vmem:[%s1974 + $0x78] sm:$0xff]
    %1991 = vmatprep.subr.mxu0 0.0
    %1992 = vmatpush1.msra.mxu0 %v1975
    %1993 = vmatprep.subr.mxu0 0.0
    %1994 = vmatpush1.msra.mxu0 %v1976
    %1995 = vmatprep.subr.mxu0 0.0
    %1996 = vmatpush1.msra.mxu0 %v1977
    %1997 = vmatprep.subr.mxu0 0.0
    %1998 = vmatpush1.msra.mxu0 %v1978
    %1999 = vmatprep.subr.mxu0 0.0
    %2000 = vmatpush1.msra.mxu0 %v1979
    %2001 = vmatprep.subr.mxu0 0.0
    %2002 = vmatpush1.msra.mxu0 %v1980
    %2003 = vmatprep.subr.mxu0 0.0
    %2004 = vmatpush1.msra.mxu0 %v1981
    %2005 = vmatprep.subr.mxu0 0.0
    %2006 = vmatpush1.msra.mxu0 %v1982
    %2007 = vmatprep.subr.mxu0 0.0
    %2008 = vmatpush1.msra.mxu0 %v1983
    %2009 = vmatprep.subr.mxu0 0.0
    %2010 = vmatpush1.msra.mxu0 %v1984
    %2011 = vmatprep.subr.mxu0 0.0
    %2012 = vmatpush1.msra.mxu0 %v1985
    %2013 = vmatprep.subr.mxu0 0.0
    %2014 = vmatpush1.msra.mxu0 %v1986
    %2015 = vmatprep.subr.mxu0 0.0
    %2016 = vmatpush1.msra.mxu0 %v1987
    %2017 = vmatprep.subr.mxu0 0.0
    %2018 = vmatpush1.msra.mxu0 %v1988
    %2019 = vmatprep.subr.mxu0 0.0
    %2020 = vmatpush1.msra.mxu0 %v1989
    %2021 = vmatprep.subr.mxu0 0.0
    %2022 = vmatpush1.msra.mxu0 %v1990
    %2023 = vmatprep.subr.mxu0 0.0
    %2024 = vmatpush1.msra.mxu0 0.0
    %2025 = vmatprep.subr.mxu0 0.0
    %2026 = vmatpush1.msra.mxu0 0.0
    %2027 = vmatprep.subr.mxu0 0.0
    %2028 = vmatpush1.msra.mxu0 0.0
    %2029 = vmatprep.subr.mxu0 0.0
    %2030 = vmatpush1.msra.mxu0 0.0
    %2031 = vmatprep.subr.mxu0 0.0
    %2032 = vmatpush1.msra.mxu0 0.0
    %2033 = vmatprep.subr.mxu0 0.0
    %2034 = vmatpush1.msra.mxu0 0.0
    %2035 = vmatprep.subr.mxu0 0.0
    %2036 = vmatpush1.msra.mxu0 0.0
    %2037 = vmatprep.subr.mxu0 0.0
    %2038 = vmatpush1.msra.mxu0 0.0
    %2039 = vmatprep.subr.mxu0 0.0
    %2040 = vmatpush1.msra.mxu0 0.0
    %2041 = vmatprep.subr.mxu0 0.0
    %2042 = vmatpush1.msra.mxu0 0.0
    %2043 = vmatprep.subr.mxu0 0.0
    %2044 = vmatpush1.msra.mxu0 0.0
    %2045 = vmatprep.subr.mxu0 0.0
    %2046 = vmatpush1.msra.mxu0 0.0
    %2047 = vmatprep.subr.mxu0 0.0
    %2048 = vmatpush1.msra.mxu0 0.0
    %2049 = vmatprep.subr.mxu0 0.0
    %2050 = vmatpush1.msra.mxu0 0.0
    %2051 = vmatprep.subr.mxu0 0.0
    %2052 = vmatpush1.msra.mxu0 0.0
    %2053 = vmatprep.subr.mxu0 0.0
    %2054 = vmatpush1.msra.mxu0 0.0
    %2055 = vmatprep.mubr.f32.mxu0 0.0
    %2056 = vmatmul.mubr.f32.gmra.mrb[0].mxu0 %v54
    %v2057 = vpop.f32.mrb[0].mxu0
    %v2058 = vadd.f32 0.0, %v2057
    %v2059 = vpop.f32.mrb[0].mxu0
    %2060 = vmatprep.mubr.f32.mxu0 0.0
    %2061 = vmatmul.mubr.f32.gmra.mrb[0].mxu0 %v55
    %v2062 = vpop.f32.mrb[0].mxu0
    %v2063 = vadd.f32 0.0, %v2062
    %v2064 = vpop.f32.mrb[0].mxu0
    %2065 = vmatprep.mubr.f32.mxu0 0.0
    %2066 = vmatmul.mubr.f32.gmra.mrb[0].mxu0 %v57
    %v2067 = vpop.f32.mrb[0].mxu0
    %v2068 = vadd.f32 0.0, %v2067
    %v2069 = vpop.f32.mrb[0].mxu0
    %2070 = vmatprep.mubr.f32.mxu0 0.0
    %2071 = vmatmul.mubr.f32.gmra.mrb[0].mxu0 %v58
    %v2072 = vpop.f32.mrb[0].mxu0
    %v2073 = vadd.f32 0.0, %v2072
    %v2074 = vpop.f32.mrb[0].mxu0
    %2075 = vmatprep.mubr.f32.mxu0 0.0
    %2076 = vmatmul.mubr.f32.gmra.mrb[0].mxu0 %v60
    %v2077 = vpop.f32.mrb[0].mxu0
    %v2078 = vadd.f32 0.0, %v2077
    %v2079 = vpop.f32.mrb[0].mxu0
    %2080 = vmatprep.mubr.f32.mxu0 0.0
    %2081 = vmatmul.mubr.f32.gmra.mrb[0].mxu0 %v61
    %v2082 = vpop.f32.mrb[0].mxu0
    %v2083 = vadd.f32 0.0, %v2082
    %v2084 = vpop.f32.mrb[0].mxu0
    %2085 = vmatprep.mubr.f32.mxu0 0.0
    %2086 = vmatmul.mubr.f32.gmra.mrb[0].mxu0 %v63
    %v2087 = vpop.f32.mrb[0].mxu0
    %v2088 = vadd.f32 0.0, %v2087
    %v2089 = vpop.f32.mrb[0].mxu0
    %2090 = vmatprep.mubr.f32.mxu0 0.0
    %2091 = vmatmul.mubr.f32.gmra.mrb[0].mxu0 %v64
    %v2092 = vpop.f32.mrb[0].mxu0
    %v2093 = vadd.f32 0.0, %v2092
    %v2094 = vpop.f32.mrb[0].mxu0
    %2095 = vmatprep.mubr.f32.mxu0 0.0
    %2096 = vmatmul.mubr.f32.gmra.mrb[0].mxu0 %v66
    %v2097 = vpop.f32.mrb[0].mxu0
    %v2098 = vadd.f32 0.0, %v2097
    %v2099 = vpop.f32.mrb[0].mxu0
    %2100 = vmatprep.mubr.f32.mxu0 0.0
    %2101 = vmatmul.mubr.f32.gmra.mrb[0].mxu0 %v67
    %v2102 = vpop.f32.mrb[0].mxu0
    %v2103 = vadd.f32 0.0, %v2102
    %v2104 = vpop.f32.mrb[0].mxu0
    %2105 = vmatprep.mubr.f32.mxu0 0.0
    %2106 = vmatmul.mubr.f32.gmra.mrb[0].mxu0 %v69
    %v2107 = vpop.f32.mrb[0].mxu0
    %v2108 = vadd.f32 0.0, %v2107
    %v2109 = vpop.f32.mrb[0].mxu0
    %2110 = vmatprep.mubr.f32.mxu0 0.0
    %2111 = vmatmul.mubr.f32.gmra.mrb[0].mxu0 %v70
    %v2112 = vpop.f32.mrb[0].mxu0
    %v2113 = vadd.f32 0.0, %v2112
    %v2114 = vpop.f32.mrb[0].mxu0
    %2115 = vmatprep.mubr.f32.mxu0 0.0
    %2116 = vmatmul.mubr.f32.gmra.mrb[0].mxu0 %v72
    %v2117 = vpop.f32.mrb[0].mxu0
    %v2118 = vadd.f32 0.0, %v2117
    %v2119 = vpop.f32.mrb[0].mxu0
    %2120 = vmatprep.mubr.f32.mxu0 0.0
    %2121 = vmatmul.mubr.f32.gmra.mrb[0].mxu0 %v73
    %v2122 = vpop.f32.mrb[0].mxu0
    %v2123 = vadd.f32 0.0, %v2122
    %v2124 = vpop.f32.mrb[0].mxu0
    %2125 = vmatprep.mubr.f32.mxu0 0.0
    %2126 = vmatmul.mubr.f32.gmra.mrb[0].mxu0 %v75
    %v2127 = vpop.f32.mrb[0].mxu0
    %v2128 = vadd.f32 0.0, %v2127
    %v2129 = vpop.f32.mrb[0].mxu0
    %2130 = vmatprep.mubr.f32.mxu0 0.0
    %2131 = vmatmul.mubr.f32.gmra.mrb[0].mxu0 %v76
    %v2132 = vpop.f32.mrb[0].mxu0
    %v2133 = vadd.f32 0.0, %v2132
    %v2134 = vpop.f32.mrb[0].mxu0
    %2135 = vmatprep.mubr.f32.mxu0 0.0
    %2136 = vmatmul.mubr.f32.gmra.mrb[0].mxu0 %v78
    %v2137 = vpop.f32.mrb[0].mxu0
    %v2138 = vadd.f32 0.0, %v2137
    %v2139 = vpop.f32.mrb[0].mxu0
    %2140 = vmatprep.mubr.f32.mxu0 0.0
    %2141 = vmatmul.mubr.f32.gmra.mrb[0].mxu0 %v79
    %v2142 = vpop.f32.mrb[0].mxu0
    %v2143 = vadd.f32 0.0, %v2142
    %v2144 = vpop.f32.mrb[0].mxu0
    %2145 = vmatprep.mubr.f32.mxu0 0.0
    %2146 = vmatmul.mubr.f32.gmra.mrb[0].mxu0 %v81
    %v2147 = vpop.f32.mrb[0].mxu0
    %v2148 = vadd.f32 0.0, %v2147
    %v2149 = vpop.f32.mrb[0].mxu0
    %2150 = vmatprep.mubr.f32.mxu0 0.0
    %2151 = vmatmul.mubr.f32.gmra.mrb[0].mxu0 %v82
    %v2152 = vpop.f32.mrb[0].mxu0
    %v2153 = vadd.f32 0.0, %v2152
    %v2154 = vpop.f32.mrb[0].mxu0
    %2155 = vmatprep.mubr.f32.mxu0 0.0
    %2156 = vmatmul.mubr.f32.gmra.mrb[0].mxu0 %v84
    %v2157 = vpop.f32.mrb[0].mxu0
    %v2158 = vadd.f32 0.0, %v2157
    %v2159 = vpop.f32.mrb[0].mxu0
    %2160 = vmatprep.mubr.f32.mxu0 0.0
    %2161 = vmatmul.mubr.f32.gmra.mrb[0].mxu0 %v85
    %v2162 = vpop.f32.mrb[0].mxu0
    %v2163 = vadd.f32 0.0, %v2162
    %v2164 = vpop.f32.mrb[0].mxu0
    %2165 = vmatprep.mubr.f32.mxu0 0.0
    %2166 = vmatmul.mubr.f32.gmra.mrb[0].mxu0 %v87
    %v2167 = vpop.f32.mrb[0].mxu0
    %v2168 = vadd.f32 0.0, %v2167
    %v2169 = vpop.f32.mrb[0].mxu0
    %2170 = vmatprep.mubr.f32.mxu0 0.0
    %2171 = vmatmul.mubr.f32.gmra.mrb[0].mxu0 %v88
    %v2172 = vpop.f32.mrb[0].mxu0
    %v2173 = vadd.f32 0.0, %v2172
    %v2174 = vpop.f32.mrb[0].mxu0
    %2175 = vmatprep.mubr.f32.mxu0 0.0
    %2176 = vmatmul.mubr.f32.gmra.mrb[0].mxu0 %v90
    %v2177 = vpop.f32.mrb[0].mxu0
    %v2178 = vadd.f32 0.0, %v2177
    %v2179 = vpop.f32.mrb[0].mxu0
    %2180 = vmatprep.mubr.f32.mxu0 0.0
    %2181 = vmatmul.mubr.f32.gmra.mrb[0].mxu0 %v91
    %v2182 = vpop.f32.mrb[0].mxu0
    %v2183 = vadd.f32 0.0, %v2182
    %v2184 = vpop.f32.mrb[0].mxu0
    %2185 = vmatprep.mubr.f32.mxu0 0.0
    %2186 = vmatmul.mubr.f32.gmra.mrb[0].mxu0 %v93
    %v2187 = vpop.f32.mrb[0].mxu0
    %v2188 = vadd.f32 0.0, %v2187
    %v2189 = vpop.f32.mrb[0].mxu0
    %2190 = vmatprep.mubr.f32.mxu0 0.0
    %2191 = vmatmul.mubr.f32.gmra.mrb[0].mxu0 %v94
    %v2192 = vpop.f32.mrb[0].mxu0
    %v2193 = vadd.f32 0.0, %v2192
    %v2194 = vpop.f32.mrb[0].mxu0
    %2195 = vmatprep.mubr.f32.mxu0 0.0
    %2196 = vmatmul.mubr.f32.gmra.mrb[0].mxu0 %v96
    %v2197 = vpop.f32.mrb[0].mxu0
    %v2198 = vadd.f32 0.0, %v2197
    %v2199 = vpop.f32.mrb[0].mxu0
    %2200 = vmatprep.mubr.f32.mxu0 0.0
    %2201 = vmatmul.mubr.f32.gmra.mrb[0].mxu0 %v97
    %v2202 = vpop.f32.mrb[0].mxu0
    %v2203 = vadd.f32 0.0, %v2202
    %v2204 = vpop.f32.mrb[0].mxu0
    %2205 = vmatprep.mubr.f32.mxu0 0.0
    %2206 = vmatmul.mubr.f32.gmra.mrb[0].mxu0 %v99
    %v2207 = vpop.f32.mrb[0].mxu0
    %v2208 = vadd.f32 0.0, %v2207
    %v2209 = vpop.f32.mrb[0].mxu0
    %2210 = vmatprep.mubr.f32.mxu0 0.0
    %2211 = vmatmul.mubr.f32.gmra.mrb[0].mxu0 %v100
    %v2212 = vpop.f32.mrb[0].mxu0
    %v2213 = vadd.f32 0.0, %v2212
    %v2214 = vpop.f32.mrb[0].mxu0
    %2215 = vmatprep.mubr.f32.mxu0 0.0
    %2216 = vmatmul.mubr.f32.gmra.mrb[0].mxu0 %v108
    %v2217 = vpop.f32.mrb[0].mxu0
    %v2218 = vadd.f32 0.0, %v2217
    %v2219 = vpop.f32.mrb[0].mxu0
    %2220 = vmatprep.mubr.f32.mxu0 0.0
    %2221 = vmatmul.mubr.f32.gmra.mrb[0].mxu0 %v109
    %v2222 = vpop.f32.mrb[0].mxu0
    %v2223 = vadd.f32 0.0, %v2222
    %v2224 = vpop.f32.mrb[0].mxu0
    %2225 = vmatprep.mubr.f32.mxu0 0.0
    %2226 = vmatmul.mubr.f32.gmra.mrb[0].mxu0 %v111
    %v2227 = vpop.f32.mrb[0].mxu0
    %v2228 = vadd.f32 0.0, %v2227
    %v2229 = vpop.f32.mrb[0].mxu0
    %2230 = vmatprep.mubr.f32.mxu0 0.0
    %2231 = vmatmul.mubr.f32.gmra.mrb[0].mxu0 %v112
    %v2232 = vpop.f32.mrb[0].mxu0
    %v2233 = vadd.f32 0.0, %v2232
    %v2234 = vpop.f32.mrb[0].mxu0
    %2235 = vmatprep.mubr.f32.mxu0 0.0
    %2236 = vmatmul.mubr.f32.gmra.mrb[0].mxu0 %v114
    %v2237 = vpop.f32.mrb[0].mxu0
    %v2238 = vadd.f32 0.0, %v2237
    %v2239 = vpop.f32.mrb[0].mxu0
    %2240 = vmatprep.mubr.f32.mxu0 0.0
    %2241 = vmatmul.mubr.f32.gmra.mrb[0].mxu0 %v115
    %v2242 = vpop.f32.mrb[0].mxu0
    %v2243 = vadd.f32 0.0, %v2242
    %v2244 = vpop.f32.mrb[0].mxu0
    %2245 = vmatprep.mubr.f32.mxu0 0.0
    %2246 = vmatmul.mubr.f32.gmra.mrb[0].mxu0 %v117
    %v2247 = vpop.f32.mrb[0].mxu0
    %v2248 = vadd.f32 0.0, %v2247
    %v2249 = vpop.f32.mrb[0].mxu0
    %2250 = vmatprep.mubr.f32.mxu0 0.0
    %2251 = vmatmul.mubr.f32.gmra.mrb[0].mxu0 %v118
    %v2252 = vpop.f32.mrb[0].mxu0
    %v2253 = vadd.f32 0.0, %v2252
    %v2254 = vpop.f32.mrb[0].mxu0
    %2255 = vmatprep.mubr.f32.mxu0 0.0
    %2256 = vmatmul.mubr.f32.gmra.mrb[0].mxu0 %v120
    %v2257 = vpop.f32.mrb[0].mxu0
    %v2258 = vadd.f32 0.0, %v2257
    %v2259 = vpop.f32.mrb[0].mxu0
    %2260 = vmatprep.mubr.f32.mxu0 0.0
    %2261 = vmatmul.mubr.f32.gmra.mrb[0].mxu0 %v121
    %v2262 = vpop.f32.mrb[0].mxu0
    %v2263 = vadd.f32 0.0, %v2262
    %v2264 = vpop.f32.mrb[0].mxu0
    %2265 = vmatprep.mubr.f32.mxu0 0.0
    %2266 = vmatmul.mubr.f32.gmra.mrb[0].mxu0 %v123
    %v2267 = vpop.f32.mrb[0].mxu0
    %v2268 = vadd.f32 0.0, %v2267
    %v2269 = vpop.f32.mrb[0].mxu0
    %2270 = vmatprep.mubr.f32.mxu0 0.0
    %2271 = vmatmul.mubr.f32.gmra.mrb[0].mxu0 %v124
    %v2272 = vpop.f32.mrb[0].mxu0
    %v2273 = vadd.f32 0.0, %v2272
    %v2274 = vpop.f32.mrb[0].mxu0
    %2275 = vmatprep.mubr.f32.mxu0 0.0
    %2276 = vmatmul.mubr.f32.gmra.mrb[0].mxu0 %v126
    %v2277 = vpop.f32.mrb[0].mxu0
    %v2278 = vadd.f32 0.0, %v2277
    %v2279 = vpop.f32.mrb[0].mxu0
    %2280 = vmatprep.mubr.f32.mxu0 0.0
    %2281 = vmatmul.mubr.f32.gmra.mrb[0].mxu0 %v127
    %v2282 = vpop.f32.mrb[0].mxu0
    %v2283 = vadd.f32 0.0, %v2282
    %v2284 = vpop.f32.mrb[0].mxu0
    %2285 = vmatprep.mubr.f32.mxu0 0.0
    %2286 = vmatmul.mubr.f32.gmra.mrb[0].mxu0 %v129
    %v2287 = vpop.f32.mrb[0].mxu0
    %v2288 = vadd.f32 0.0, %v2287
    %v2289 = vpop.f32.mrb[0].mxu0
    %2290 = vmatprep.mubr.f32.mxu0 0.0
    %2291 = vmatmul.mubr.f32.gmra.mrb[0].mxu0 %v130
    %v2292 = vpop.f32.mrb[0].mxu0
    %v2293 = vadd.f32 0.0, %v2292
    %v2294 = vpop.f32.mrb[0].mxu0
    %2295 = vmatprep.mubr.f32.mxu0 0.0
    %2296 = vmatmul.mubr.f32.gmra.mrb[0].mxu0 %v132
    %v2297 = vpop.f32.mrb[0].mxu0
    %v2298 = vadd.f32 0.0, %v2297
    %v2299 = vpop.f32.mrb[0].mxu0
    %2300 = vmatprep.mubr.f32.mxu0 0.0
    %2301 = vmatmul.mubr.f32.gmra.mrb[0].mxu0 %v133
    %v2302 = vpop.f32.mrb[0].mxu0
    %v2303 = vadd.f32 0.0, %v2302
    %v2304 = vpop.f32.mrb[0].mxu0
    %2305 = vmatprep.mubr.f32.mxu0 0.0
    %2306 = vmatmul.mubr.f32.gmra.mrb[0].mxu0 %v135
    %v2307 = vpop.f32.mrb[0].mxu0
    %v2308 = vadd.f32 0.0, %v2307
    %v2309 = vpop.f32.mrb[0].mxu0
    %2310 = vmatprep.mubr.f32.mxu0 0.0
    %2311 = vmatmul.mubr.f32.gmra.mrb[0].mxu0 %v136
    %v2312 = vpop.f32.mrb[0].mxu0
    %v2313 = vadd.f32 0.0, %v2312
    %v2314 = vpop.f32.mrb[0].mxu0
    %2315 = vmatprep.mubr.f32.mxu0 0.0
    %2316 = vmatmul.mubr.f32.gmra.mrb[0].mxu0 %v138
    %v2317 = vpop.f32.mrb[0].mxu0
    %v2318 = vadd.f32 0.0, %v2317
    %v2319 = vpop.f32.mrb[0].mxu0
    %2320 = vmatprep.mubr.f32.mxu0 0.0
    %2321 = vmatmul.mubr.f32.gmra.mrb[0].mxu0 %v139
    %v2322 = vpop.f32.mrb[0].mxu0
    %v2323 = vadd.f32 0.0, %v2322
    %v2324 = vpop.f32.mrb[0].mxu0
    %2325 = vmatprep.mubr.f32.mxu0 0.0
    %2326 = vmatmul.mubr.f32.gmra.mrb[0].mxu0 %v141
    %v2327 = vpop.f32.mrb[0].mxu0
    %v2328 = vadd.f32 0.0, %v2327
    %v2329 = vpop.f32.mrb[0].mxu0
    %2330 = vmatprep.mubr.f32.mxu0 0.0
    %2331 = vmatmul.mubr.f32.gmra.mrb[0].mxu0 %v142
    %v2332 = vpop.f32.mrb[0].mxu0
    %v2333 = vadd.f32 0.0, %v2332
    %v2334 = vpop.f32.mrb[0].mxu0
    %2335 = vmatprep.mubr.f32.mxu0 0.0
    %2336 = vmatmul.mubr.f32.gmra.mrb[0].mxu0 %v144
    %v2337 = vpop.f32.mrb[0].mxu0
    %v2338 = vadd.f32 0.0, %v2337
    %v2339 = vpop.f32.mrb[0].mxu0
    %2340 = vmatprep.mubr.f32.mxu0 0.0
    %2341 = vmatmul.mubr.f32.gmra.mrb[0].mxu0 %v145
    %v2342 = vpop.f32.mrb[0].mxu0
    %v2343 = vadd.f32 0.0, %v2342
    %v2344 = vpop.f32.mrb[0].mxu0
    %2345 = vmatprep.mubr.f32.mxu0 0.0
    %2346 = vmatmul.mubr.f32.gmra.mrb[0].mxu0 %v147
    %v2347 = vpop.f32.mrb[0].mxu0
    %v2348 = vadd.f32 0.0, %v2347
    %v2349 = vpop.f32.mrb[0].mxu0
    %2350 = vmatprep.mubr.f32.mxu0 0.0
    %2351 = vmatmul.mubr.f32.gmra.mrb[0].mxu0 %v148
    %v2352 = vpop.f32.mrb[0].mxu0
    %v2353 = vadd.f32 0.0, %v2352
    %v2354 = vpop.f32.mrb[0].mxu0
    %2355 = vmatprep.mubr.f32.mxu0 0.0
    %2356 = vmatmul.mubr.f32.gmra.mrb[0].mxu0 %v150
    %v2357 = vpop.f32.mrb[0].mxu0
    %v2358 = vadd.f32 0.0, %v2357
    %v2359 = vpop.f32.mrb[0].mxu0
    %2360 = vmatprep.mubr.f32.mxu0 0.0
    %2361 = vmatmul.mubr.f32.gmra.mrb[0].mxu0 %v151
    %v2362 = vpop.f32.mrb[0].mxu0
    %v2363 = vadd.f32 0.0, %v2362
    %v2364 = vpop.f32.mrb[0].mxu0
    %2365 = vmatprep.mubr.f32.mxu0 0.0
    %2366 = vmatmul.mubr.f32.gmra.mrb[0].mxu0 %v153
    %v2367 = vpop.f32.mrb[0].mxu0
    %v2368 = vadd.f32 0.0, %v2367
    %v2369 = vpop.f32.mrb[0].mxu0
    %2370 = vmatprep.mubr.f32.mxu0 0.0
    %2371 = vmatmul.mubr.f32.gmra.mrb[0].mxu0 %v154
    %v2372 = vpop.f32.mrb[0].mxu0
    %v2373 = vadd.f32 0.0, %v2372
    %v2374 = vpop.f32.mrb[0].mxu0
    %2375 = vdwg.mxu0
    %v2376 = vadd.f32 %v1910, %v2058
    %v2377 = vadd.f32 %v1911, %v2063
    %v2378 = vadd.f32 %v1912, %v2068
    %v2379 = vadd.f32 %v1913, %v2073
    %v2380 = vadd.f32 %v1914, %v2078
    %v2381 = vadd.f32 %v1915, %v2083
    %v2382 = vadd.f32 %v1916, %v2088
    %v2383 = vadd.f32 %v1917, %v2093
    %v2384 = vadd.f32 %v1918, %v2098
    %v2385 = vadd.f32 %v1919, %v2103
    %v2386 = vadd.f32 %v1920, %v2108
    %v2387 = vadd.f32 %v1921, %v2113
    %v2388 = vadd.f32 %v1922, %v2118
    %v2389 = vadd.f32 %v1923, %v2123
    %v2390 = vadd.f32 %v1924, %v2128
    %v2391 = vadd.f32 %v1925, %v2133
    %v2392 = vadd.f32 %v1926, %v2138
    %v2393 = vadd.f32 %v1927, %v2143
    %v2394 = vadd.f32 %v1928, %v2148
    %v2395 = vadd.f32 %v1929, %v2153
    %v2396 = vadd.f32 %v1930, %v2158
    %v2397 = vadd.f32 %v1931, %v2163
    %v2398 = vadd.f32 %v1932, %v2168
    %v2399 = vadd.f32 %v1933, %v2173
    %v2400 = vadd.f32 %v1934, %v2178
    %v2401 = vadd.f32 %v1935, %v2183
    %v2402 = vadd.f32 %v1936, %v2188
    %v2403 = vadd.f32 %v1937, %v2193
    %v2404 = vadd.f32 %v1938, %v2198
    %v2405 = vadd.f32 %v1939, %v2203
    %v2406 = vadd.f32 %v1940, %v2208
    %v2407 = vadd.f32 %v1941, %v2213
    %v2408 = vadd.f32 %v1942, %v2218
    %v2409 = vadd.f32 %v1943, %v2223
    %v2410 = vadd.f32 %v1944, %v2228
    %v2411 = vadd.f32 %v1945, %v2233
    %v2412 = vadd.f32 %v1946, %v2238
    %v2413 = vadd.f32 %v1947, %v2243
    %v2414 = vadd.f32 %v1948, %v2248
    %v2415 = vadd.f32 %v1949, %v2253
    %v2416 = vadd.f32 %v1950, %v2258
    %v2417 = vadd.f32 %v1951, %v2263
    %v2418 = vadd.f32 %v1952, %v2268
    %v2419 = vadd.f32 %v1953, %v2273
    %v2420 = vadd.f32 %v1954, %v2278
    %v2421 = vadd.f32 %v1955, %v2283
    %v2422 = vadd.f32 %v1956, %v2288
    %v2423 = vadd.f32 %v1957, %v2293
    %v2424 = vadd.f32 %v1958, %v2298
    %v2425 = vadd.f32 %v1959, %v2303
    %v2426 = vadd.f32 %v1960, %v2308
    %v2427 = vadd.f32 %v1961, %v2313
    %v2428 = vadd.f32 %v1962, %v2318
    %v2429 = vadd.f32 %v1963, %v2323
    %v2430 = vadd.f32 %v1964, %v2328
    %v2431 = vadd.f32 %v1965, %v2333
    %v2432 = vadd.f32 %v1966, %v2338
    %v2433 = vadd.f32 %v1967, %v2343
    %v2434 = vadd.f32 %v1968, %v2348
    %v2435 = vadd.f32 %v1969, %v2353
    %v2436 = vadd.f32 %v1970, %v2358
    %v2437 = vadd.f32 %v1971, %v2363
    %v2438 = vadd.f32 %v1972, %v2368
    %v2439 = vadd.f32 %v1973, %v2373
    %v2446 = vrot.slane %v99, 1
    %v2447 = vrot.slane %v100, 1
    %v2448 = vsel %vm271, %v2446, %v2447
    %v2449 = vrot.slane %v101, 1
    %v2450 = vsel %vm271, %v2447, %v2449
    %v2451 = vrot.slane %v153, 1
    %v2452 = vrot.slane %v154, 1
    %v2453 = vsel %vm271, %v2451, %v2452
    %v2454 = vrot.slane %v155, 1
    %v2455 = vsel %vm271, %v2452, %v2454
    %s2460 = scalar_lea.vmem %s1, 512
    %v2461 = vld [vmem:[%s2460] sm:$0xff]
    %v2462 = vld [vmem:[%s2460 + $0x8] sm:$0xff]
    %v2463 = vld [vmem:[%s2460 + $0x10] sm:$0xff]
    %v2464 = vld [vmem:[%s2460 + $0x18] sm:$0xff]
    %v2465 = vld [vmem:[%s2460 + $0x20] sm:$0xff]
    %v2466 = vld [vmem:[%s2460 + $0x28] sm:$0xff]
    %v2467 = vld [vmem:[%s2460 + $0x30] sm:$0xff]
    %v2468 = vld [vmem:[%s2460 + $0x38] sm:$0xff]
    %v2469 = vld [vmem:[%s2460 + $0x40] sm:$0xff]
    %v2470 = vld [vmem:[%s2460 + $0x48] sm:$0xff]
    %v2471 = vld [vmem:[%s2460 + $0x50] sm:$0xff]
    %v2472 = vld [vmem:[%s2460 + $0x58] sm:$0xff]
    %v2473 = vld [vmem:[%s2460 + $0x60] sm:$0xff]
    %v2474 = vld [vmem:[%s2460 + $0x68] sm:$0xff]
    %v2475 = vld [vmem:[%s2460 + $0x70] sm:$0xff]
    %v2476 = vld [vmem:[%s2460 + $0x78] sm:$0xff]
    %2477 = vmatprep.subr.mxu0 0.0
    %2478 = vmatpush1.msra.mxu0 %v2461
    %2479 = vmatprep.subr.mxu0 0.0
    %2480 = vmatpush1.msra.mxu0 %v2462
    %2481 = vmatprep.subr.mxu0 0.0
    %2482 = vmatpush1.msra.mxu0 %v2463
    %2483 = vmatprep.subr.mxu0 0.0
    %2484 = vmatpush1.msra.mxu0 %v2464
    %2485 = vmatprep.subr.mxu0 0.0
    %2486 = vmatpush1.msra.mxu0 %v2465
    %2487 = vmatprep.subr.mxu0 0.0
    %2488 = vmatpush1.msra.mxu0 %v2466
    %2489 = vmatprep.subr.mxu0 0.0
    %2490 = vmatpush1.msra.mxu0 %v2467
    %2491 = vmatprep.subr.mxu0 0.0
    %2492 = vmatpush1.msra.mxu0 %v2468
    %2493 = vmatprep.subr.mxu0 0.0
    %2494 = vmatpush1.msra.mxu0 %v2469
    %2495 = vmatprep.subr.mxu0 0.0
    %2496 = vmatpush1.msra.mxu0 %v2470
    %2497 = vmatprep.subr.mxu0 0.0
    %2498 = vmatpush1.msra.mxu0 %v2471
    %2499 = vmatprep.subr.mxu0 0.0
    %2500 = vmatpush1.msra.mxu0 %v2472
    %2501 = vmatprep.subr.mxu0 0.0
    %2502 = vmatpush1.msra.mxu0 %v2473
    %2503 = vmatprep.subr.mxu0 0.0
    %2504 = vmatpush1.msra.mxu0 %v2474
    %2505 = vmatprep.subr.mxu0 0.0
    %2506 = vmatpush1.msra.mxu0 %v2475
    %2507 = vmatprep.subr.mxu0 0.0
    %2508 = vmatpush1.msra.mxu0 %v2476
    %2509 = vmatprep.subr.mxu0 0.0
    %2510 = vmatpush1.msra.mxu0 0.0
    %2511 = vmatprep.subr.mxu0 0.0
    %2512 = vmatpush1.msra.mxu0 0.0
    %2513 = vmatprep.subr.mxu0 0.0
    %2514 = vmatpush1.msra.mxu0 0.0
    %2515 = vmatprep.subr.mxu0 0.0
    %2516 = vmatpush1.msra.mxu0 0.0
    %2517 = vmatprep.subr.mxu0 0.0
    %2518 = vmatpush1.msra.mxu0 0.0
    %2519 = vmatprep.subr.mxu0 0.0
    %2520 = vmatpush1.msra.mxu0 0.0
    %2521 = vmatprep.subr.mxu0 0.0
    %2522 = vmatpush1.msra.mxu0 0.0
    %2523 = vmatprep.subr.mxu0 0.0
    %2524 = vmatpush1.msra.mxu0 0.0
    %2525 = vmatprep.subr.mxu0 0.0
    %2526 = vmatpush1.msra.mxu0 0.0
    %2527 = vmatprep.subr.mxu0 0.0
    %2528 = vmatpush1.msra.mxu0 0.0
    %2529 = vmatprep.subr.mxu0 0.0
    %2530 = vmatpush1.msra.mxu0 0.0
    %2531 = vmatprep.subr.mxu0 0.0
    %2532 = vmatpush1.msra.mxu0 0.0
    %2533 = vmatprep.subr.mxu0 0.0
    %2534 = vmatpush1.msra.mxu0 0.0
    %2535 = vmatprep.subr.mxu0 0.0
    %2536 = vmatpush1.msra.mxu0 0.0
    %2537 = vmatprep.subr.mxu0 0.0
    %2538 = vmatpush1.msra.mxu0 0.0
    %2539 = vmatprep.subr.mxu0 0.0
    %2540 = vmatpush1.msra.mxu0 0.0
    %2541 = vmatprep.mubr.f32.mxu0 0.0
    %2542 = vmatmul.mubr.f32.gmra.mrb[0].mxu0 %v279
    %v2543 = vpop.f32.mrb[0].mxu0
    %v2544 = vadd.f32 0.0, %v2543
    %v2545 = vpop.f32.mrb[0].mxu0
    %2546 = vmatprep.mubr.f32.mxu0 0.0
    %2547 = vmatmul.mubr.f32.gmra.mrb[0].mxu0 %v281
    %v2548 = vpop.f32.mrb[0].mxu0
    %v2549 = vadd.f32 0.0, %v2548
    %v2550 = vpop.f32.mrb[0].mxu0
    %2551 = vmatprep.mubr.f32.mxu0 0.0
    %2552 = vmatmul.mubr.f32.gmra.mrb[0].mxu0 %v284
    %v2553 = vpop.f32.mrb[0].mxu0
    %v2554 = vadd.f32 0.0, %v2553
    %v2555 = vpop.f32.mrb[0].mxu0
    %2556 = vmatprep.mubr.f32.mxu0 0.0
    %2557 = vmatmul.mubr.f32.gmra.mrb[0].mxu0 %v286
    %v2558 = vpop.f32.mrb[0].mxu0
    %v2559 = vadd.f32 0.0, %v2558
    %v2560 = vpop.f32.mrb[0].mxu0
    %2561 = vmatprep.mubr.f32.mxu0 0.0
    %2562 = vmatmul.mubr.f32.gmra.mrb[0].mxu0 %v289
    %v2563 = vpop.f32.mrb[0].mxu0
    %v2564 = vadd.f32 0.0, %v2563
    %v2565 = vpop.f32.mrb[0].mxu0
    %2566 = vmatprep.mubr.f32.mxu0 0.0
    %2567 = vmatmul.mubr.f32.gmra.mrb[0].mxu0 %v291
    %v2568 = vpop.f32.mrb[0].mxu0
    %v2569 = vadd.f32 0.0, %v2568
    %v2570 = vpop.f32.mrb[0].mxu0
    %2571 = vmatprep.mubr.f32.mxu0 0.0
    %2572 = vmatmul.mubr.f32.gmra.mrb[0].mxu0 %v294
    %v2573 = vpop.f32.mrb[0].mxu0
    %v2574 = vadd.f32 0.0, %v2573
    %v2575 = vpop.f32.mrb[0].mxu0
    %2576 = vmatprep.mubr.f32.mxu0 0.0
    %2577 = vmatmul.mubr.f32.gmra.mrb[0].mxu0 %v296
    %v2578 = vpop.f32.mrb[0].mxu0
    %v2579 = vadd.f32 0.0, %v2578
    %v2580 = vpop.f32.mrb[0].mxu0
    %2581 = vmatprep.mubr.f32.mxu0 0.0
    %2582 = vmatmul.mubr.f32.gmra.mrb[0].mxu0 %v299
    %v2583 = vpop.f32.mrb[0].mxu0
    %v2584 = vadd.f32 0.0, %v2583
    %v2585 = vpop.f32.mrb[0].mxu0
    %2586 = vmatprep.mubr.f32.mxu0 0.0
    %2587 = vmatmul.mubr.f32.gmra.mrb[0].mxu0 %v301
    %v2588 = vpop.f32.mrb[0].mxu0
    %v2589 = vadd.f32 0.0, %v2588
    %v2590 = vpop.f32.mrb[0].mxu0
    %2591 = vmatprep.mubr.f32.mxu0 0.0
    %2592 = vmatmul.mubr.f32.gmra.mrb[0].mxu0 %v304
    %v2593 = vpop.f32.mrb[0].mxu0
    %v2594 = vadd.f32 0.0, %v2593
    %v2595 = vpop.f32.mrb[0].mxu0
    %2596 = vmatprep.mubr.f32.mxu0 0.0
    %2597 = vmatmul.mubr.f32.gmra.mrb[0].mxu0 %v306
    %v2598 = vpop.f32.mrb[0].mxu0
    %v2599 = vadd.f32 0.0, %v2598
    %v2600 = vpop.f32.mrb[0].mxu0
    %2601 = vmatprep.mubr.f32.mxu0 0.0
    %2602 = vmatmul.mubr.f32.gmra.mrb[0].mxu0 %v309
    %v2603 = vpop.f32.mrb[0].mxu0
    %v2604 = vadd.f32 0.0, %v2603
    %v2605 = vpop.f32.mrb[0].mxu0
    %2606 = vmatprep.mubr.f32.mxu0 0.0
    %2607 = vmatmul.mubr.f32.gmra.mrb[0].mxu0 %v311
    %v2608 = vpop.f32.mrb[0].mxu0
    %v2609 = vadd.f32 0.0, %v2608
    %v2610 = vpop.f32.mrb[0].mxu0
    %2611 = vmatprep.mubr.f32.mxu0 0.0
    %2612 = vmatmul.mubr.f32.gmra.mrb[0].mxu0 %v314
    %v2613 = vpop.f32.mrb[0].mxu0
    %v2614 = vadd.f32 0.0, %v2613
    %v2615 = vpop.f32.mrb[0].mxu0
    %2616 = vmatprep.mubr.f32.mxu0 0.0
    %2617 = vmatmul.mubr.f32.gmra.mrb[0].mxu0 %v316
    %v2618 = vpop.f32.mrb[0].mxu0
    %v2619 = vadd.f32 0.0, %v2618
    %v2620 = vpop.f32.mrb[0].mxu0
    %2621 = vmatprep.mubr.f32.mxu0 0.0
    %2622 = vmatmul.mubr.f32.gmra.mrb[0].mxu0 %v319
    %v2623 = vpop.f32.mrb[0].mxu0
    %v2624 = vadd.f32 0.0, %v2623
    %v2625 = vpop.f32.mrb[0].mxu0
    %2626 = vmatprep.mubr.f32.mxu0 0.0
    %2627 = vmatmul.mubr.f32.gmra.mrb[0].mxu0 %v321
    %v2628 = vpop.f32.mrb[0].mxu0
    %v2629 = vadd.f32 0.0, %v2628
    %v2630 = vpop.f32.mrb[0].mxu0
    %2631 = vmatprep.mubr.f32.mxu0 0.0
    %2632 = vmatmul.mubr.f32.gmra.mrb[0].mxu0 %v324
    %v2633 = vpop.f32.mrb[0].mxu0
    %v2634 = vadd.f32 0.0, %v2633
    %v2635 = vpop.f32.mrb[0].mxu0
    %2636 = vmatprep.mubr.f32.mxu0 0.0
    %2637 = vmatmul.mubr.f32.gmra.mrb[0].mxu0 %v326
    %v2638 = vpop.f32.mrb[0].mxu0
    %v2639 = vadd.f32 0.0, %v2638
    %v2640 = vpop.f32.mrb[0].mxu0
    %2641 = vmatprep.mubr.f32.mxu0 0.0
    %2642 = vmatmul.mubr.f32.gmra.mrb[0].mxu0 %v329
    %v2643 = vpop.f32.mrb[0].mxu0
    %v2644 = vadd.f32 0.0, %v2643
    %v2645 = vpop.f32.mrb[0].mxu0
    %2646 = vmatprep.mubr.f32.mxu0 0.0
    %2647 = vmatmul.mubr.f32.gmra.mrb[0].mxu0 %v331
    %v2648 = vpop.f32.mrb[0].mxu0
    %v2649 = vadd.f32 0.0, %v2648
    %v2650 = vpop.f32.mrb[0].mxu0
    %2651 = vmatprep.mubr.f32.mxu0 0.0
    %2652 = vmatmul.mubr.f32.gmra.mrb[0].mxu0 %v334
    %v2653 = vpop.f32.mrb[0].mxu0
    %v2654 = vadd.f32 0.0, %v2653
    %v2655 = vpop.f32.mrb[0].mxu0
    %2656 = vmatprep.mubr.f32.mxu0 0.0
    %2657 = vmatmul.mubr.f32.gmra.mrb[0].mxu0 %v336
    %v2658 = vpop.f32.mrb[0].mxu0
    %v2659 = vadd.f32 0.0, %v2658
    %v2660 = vpop.f32.mrb[0].mxu0
    %2661 = vmatprep.mubr.f32.mxu0 0.0
    %2662 = vmatmul.mubr.f32.gmra.mrb[0].mxu0 %v339
    %v2663 = vpop.f32.mrb[0].mxu0
    %v2664 = vadd.f32 0.0, %v2663
    %v2665 = vpop.f32.mrb[0].mxu0
    %2666 = vmatprep.mubr.f32.mxu0 0.0
    %2667 = vmatmul.mubr.f32.gmra.mrb[0].mxu0 %v341
    %v2668 = vpop.f32.mrb[0].mxu0
    %v2669 = vadd.f32 0.0, %v2668
    %v2670 = vpop.f32.mrb[0].mxu0
    %2671 = vmatprep.mubr.f32.mxu0 0.0
    %2672 = vmatmul.mubr.f32.gmra.mrb[0].mxu0 %v344
    %v2673 = vpop.f32.mrb[0].mxu0
    %v2674 = vadd.f32 0.0, %v2673
    %v2675 = vpop.f32.mrb[0].mxu0
    %2676 = vmatprep.mubr.f32.mxu0 0.0
    %2677 = vmatmul.mubr.f32.gmra.mrb[0].mxu0 %v346
    %v2678 = vpop.f32.mrb[0].mxu0
    %v2679 = vadd.f32 0.0, %v2678
    %v2680 = vpop.f32.mrb[0].mxu0
    %2681 = vmatprep.mubr.f32.mxu0 0.0
    %2682 = vmatmul.mubr.f32.gmra.mrb[0].mxu0 %v349
    %v2683 = vpop.f32.mrb[0].mxu0
    %v2684 = vadd.f32 0.0, %v2683
    %v2685 = vpop.f32.mrb[0].mxu0
    %2686 = vmatprep.mubr.f32.mxu0 0.0
    %2687 = vmatmul.mubr.f32.gmra.mrb[0].mxu0 %v351
    %v2688 = vpop.f32.mrb[0].mxu0
    %v2689 = vadd.f32 0.0, %v2688
    %v2690 = vpop.f32.mrb[0].mxu0
    %2691 = vmatprep.mubr.f32.mxu0 0.0
    %2692 = vmatmul.mubr.f32.gmra.mrb[0].mxu0 %v2448
    %v2693 = vpop.f32.mrb[0].mxu0
    %v2694 = vadd.f32 0.0, %v2693
    %v2695 = vpop.f32.mrb[0].mxu0
    %2696 = vmatprep.mubr.f32.mxu0 0.0
    %2697 = vmatmul.mubr.f32.gmra.mrb[0].mxu0 %v2450
    %v2698 = vpop.f32.mrb[0].mxu0
    %v2699 = vadd.f32 0.0, %v2698
    %v2700 = vpop.f32.mrb[0].mxu0
    %2701 = vmatprep.mubr.f32.mxu0 0.0
    %2702 = vmatmul.mubr.f32.gmra.mrb[0].mxu0 %v359
    %v2703 = vpop.f32.mrb[0].mxu0
    %v2704 = vadd.f32 0.0, %v2703
    %v2705 = vpop.f32.mrb[0].mxu0
    %2706 = vmatprep.mubr.f32.mxu0 0.0
    %2707 = vmatmul.mubr.f32.gmra.mrb[0].mxu0 %v361
    %v2708 = vpop.f32.mrb[0].mxu0
    %v2709 = vadd.f32 0.0, %v2708
    %v2710 = vpop.f32.mrb[0].mxu0
    %2711 = vmatprep.mubr.f32.mxu0 0.0
    %2712 = vmatmul.mubr.f32.gmra.mrb[0].mxu0 %v364
    %v2713 = vpop.f32.mrb[0].mxu0
    %v2714 = vadd.f32 0.0, %v2713
    %v2715 = vpop.f32.mrb[0].mxu0
    %2716 = vmatprep.mubr.f32.mxu0 0.0
    %2717 = vmatmul.mubr.f32.gmra.mrb[0].mxu0 %v366
    %v2718 = vpop.f32.mrb[0].mxu0
    %v2719 = vadd.f32 0.0, %v2718
    %v2720 = vpop.f32.mrb[0].mxu0
    %2721 = vmatprep.mubr.f32.mxu0 0.0
    %2722 = vmatmul.mubr.f32.gmra.mrb[0].mxu0 %v369
    %v2723 = vpop.f32.mrb[0].mxu0
    %v2724 = vadd.f32 0.0, %v2723
    %v2725 = vpop.f32.mrb[0].mxu0
    %2726 = vmatprep.mubr.f32.mxu0 0.0
    %2727 = vmatmul.mubr.f32.gmra.mrb[0].mxu0 %v371
    %v2728 = vpop.f32.mrb[0].mxu0
    %v2729 = vadd.f32 0.0, %v2728
    %v2730 = vpop.f32.mrb[0].mxu0
    %2731 = vmatprep.mubr.f32.mxu0 0.0
    %2732 = vmatmul.mubr.f32.gmra.mrb[0].mxu0 %v374
    %v2733 = vpop.f32.mrb[0].mxu0
    %v2734 = vadd.f32 0.0, %v2733
    %v2735 = vpop.f32.mrb[0].mxu0
    %2736 = vmatprep.mubr.f32.mxu0 0.0
    %2737 = vmatmul.mubr.f32.gmra.mrb[0].mxu0 %v376
    %v2738 = vpop.f32.mrb[0].mxu0
    %v2739 = vadd.f32 0.0, %v2738
    %v2740 = vpop.f32.mrb[0].mxu0
    %2741 = vmatprep.mubr.f32.mxu0 0.0
    %2742 = vmatmul.mubr.f32.gmra.mrb[0].mxu0 %v379
    %v2743 = vpop.f32.mrb[0].mxu0
    %v2744 = vadd.f32 0.0, %v2743
    %v2745 = vpop.f32.mrb[0].mxu0
    %2746 = vmatprep.mubr.f32.mxu0 0.0
    %2747 = vmatmul.mubr.f32.gmra.mrb[0].mxu0 %v381
    %v2748 = vpop.f32.mrb[0].mxu0
    %v2749 = vadd.f32 0.0, %v2748
    %v2750 = vpop.f32.mrb[0].mxu0
    %2751 = vmatprep.mubr.f32.mxu0 0.0
    %2752 = vmatmul.mubr.f32.gmra.mrb[0].mxu0 %v384
    %v2753 = vpop.f32.mrb[0].mxu0
    %v2754 = vadd.f32 0.0, %v2753
    %v2755 = vpop.f32.mrb[0].mxu0
    %2756 = vmatprep.mubr.f32.mxu0 0.0
    %2757 = vmatmul.mubr.f32.gmra.mrb[0].mxu0 %v386
    %v2758 = vpop.f32.mrb[0].mxu0
    %v2759 = vadd.f32 0.0, %v2758
    %v2760 = vpop.f32.mrb[0].mxu0
    %2761 = vmatprep.mubr.f32.mxu0 0.0
    %2762 = vmatmul.mubr.f32.gmra.mrb[0].mxu0 %v389
    %v2763 = vpop.f32.mrb[0].mxu0
    %v2764 = vadd.f32 0.0, %v2763
    %v2765 = vpop.f32.mrb[0].mxu0
    %2766 = vmatprep.mubr.f32.mxu0 0.0
    %2767 = vmatmul.mubr.f32.gmra.mrb[0].mxu0 %v391
    %v2768 = vpop.f32.mrb[0].mxu0
    %v2769 = vadd.f32 0.0, %v2768
    %v2770 = vpop.f32.mrb[0].mxu0
    %2771 = vmatprep.mubr.f32.mxu0 0.0
    %2772 = vmatmul.mubr.f32.gmra.mrb[0].mxu0 %v394
    %v2773 = vpop.f32.mrb[0].mxu0
    %v2774 = vadd.f32 0.0, %v2773
    %v2775 = vpop.f32.mrb[0].mxu0
    %2776 = vmatprep.mubr.f32.mxu0 0.0
    %2777 = vmatmul.mubr.f32.gmra.mrb[0].mxu0 %v396
    %v2778 = vpop.f32.mrb[0].mxu0
    %v2779 = vadd.f32 0.0, %v2778
    %v2780 = vpop.f32.mrb[0].mxu0
    %2781 = vmatprep.mubr.f32.mxu0 0.0
    %2782 = vmatmul.mubr.f32.gmra.mrb[0].mxu0 %v399
    %v2783 = vpop.f32.mrb[0].mxu0
    %v2784 = vadd.f32 0.0, %v2783
    %v2785 = vpop.f32.mrb[0].mxu0
    %2786 = vmatprep.mubr.f32.mxu0 0.0
    %2787 = vmatmul.mubr.f32.gmra.mrb[0].mxu0 %v401
    %v2788 = vpop.f32.mrb[0].mxu0
    %v2789 = vadd.f32 0.0, %v2788
    %v2790 = vpop.f32.mrb[0].mxu0
    %2791 = vmatprep.mubr.f32.mxu0 0.0
    %2792 = vmatmul.mubr.f32.gmra.mrb[0].mxu0 %v404
    %v2793 = vpop.f32.mrb[0].mxu0
    %v2794 = vadd.f32 0.0, %v2793
    %v2795 = vpop.f32.mrb[0].mxu0
    %2796 = vmatprep.mubr.f32.mxu0 0.0
    %2797 = vmatmul.mubr.f32.gmra.mrb[0].mxu0 %v406
    %v2798 = vpop.f32.mrb[0].mxu0
    %v2799 = vadd.f32 0.0, %v2798
    %v2800 = vpop.f32.mrb[0].mxu0
    %2801 = vmatprep.mubr.f32.mxu0 0.0
    %2802 = vmatmul.mubr.f32.gmra.mrb[0].mxu0 %v409
    %v2803 = vpop.f32.mrb[0].mxu0
    %v2804 = vadd.f32 0.0, %v2803
    %v2805 = vpop.f32.mrb[0].mxu0
    %2806 = vmatprep.mubr.f32.mxu0 0.0
    %2807 = vmatmul.mubr.f32.gmra.mrb[0].mxu0 %v411
    %v2808 = vpop.f32.mrb[0].mxu0
    %v2809 = vadd.f32 0.0, %v2808
    %v2810 = vpop.f32.mrb[0].mxu0
    %2811 = vmatprep.mubr.f32.mxu0 0.0
    %2812 = vmatmul.mubr.f32.gmra.mrb[0].mxu0 %v414
    %v2813 = vpop.f32.mrb[0].mxu0
    %v2814 = vadd.f32 0.0, %v2813
    %v2815 = vpop.f32.mrb[0].mxu0
    %2816 = vmatprep.mubr.f32.mxu0 0.0
    %2817 = vmatmul.mubr.f32.gmra.mrb[0].mxu0 %v416
    %v2818 = vpop.f32.mrb[0].mxu0
    %v2819 = vadd.f32 0.0, %v2818
    %v2820 = vpop.f32.mrb[0].mxu0
    %2821 = vmatprep.mubr.f32.mxu0 0.0
    %2822 = vmatmul.mubr.f32.gmra.mrb[0].mxu0 %v419
    %v2823 = vpop.f32.mrb[0].mxu0
    %v2824 = vadd.f32 0.0, %v2823
    %v2825 = vpop.f32.mrb[0].mxu0
    %2826 = vmatprep.mubr.f32.mxu0 0.0
    %2827 = vmatmul.mubr.f32.gmra.mrb[0].mxu0 %v421
    %v2828 = vpop.f32.mrb[0].mxu0
    %v2829 = vadd.f32 0.0, %v2828
    %v2830 = vpop.f32.mrb[0].mxu0
    %2831 = vmatprep.mubr.f32.mxu0 0.0
    %2832 = vmatmul.mubr.f32.gmra.mrb[0].mxu0 %v424
    %v2833 = vpop.f32.mrb[0].mxu0
    %v2834 = vadd.f32 0.0, %v2833
    %v2835 = vpop.f32.mrb[0].mxu0
    %2836 = vmatprep.mubr.f32.mxu0 0.0
    %2837 = vmatmul.mubr.f32.gmra.mrb[0].mxu0 %v426
    %v2838 = vpop.f32.mrb[0].mxu0
    %v2839 = vadd.f32 0.0, %v2838
    %v2840 = vpop.f32.mrb[0].mxu0
    %2841 = vmatprep.mubr.f32.mxu0 0.0
    %2842 = vmatmul.mubr.f32.gmra.mrb[0].mxu0 %v429
    %v2843 = vpop.f32.mrb[0].mxu0
    %v2844 = vadd.f32 0.0, %v2843
    %v2845 = vpop.f32.mrb[0].mxu0
    %2846 = vmatprep.mubr.f32.mxu0 0.0
    %2847 = vmatmul.mubr.f32.gmra.mrb[0].mxu0 %v431
    %v2848 = vpop.f32.mrb[0].mxu0
    %v2849 = vadd.f32 0.0, %v2848
    %v2850 = vpop.f32.mrb[0].mxu0
    %2851 = vmatprep.mubr.f32.mxu0 0.0
    %2852 = vmatmul.mubr.f32.gmra.mrb[0].mxu0 %v2453
    %v2853 = vpop.f32.mrb[0].mxu0
    %v2854 = vadd.f32 0.0, %v2853
    %v2855 = vpop.f32.mrb[0].mxu0
    %2856 = vmatprep.mubr.f32.mxu0 0.0
    %2857 = vmatmul.mubr.f32.gmra.mrb[0].mxu0 %v2455
    %v2858 = vpop.f32.mrb[0].mxu0
    %v2859 = vadd.f32 0.0, %v2858
    %v2860 = vpop.f32.mrb[0].mxu0
    %2861 = vdwg.mxu0
    %v2862 = vadd.f32 %v2376, %v2544
    %v2863 = vadd.f32 %v2377, %v2549
    %v2864 = vadd.f32 %v2378, %v2554
    %v2865 = vadd.f32 %v2379, %v2559
    %v2866 = vadd.f32 %v2380, %v2564
    %v2867 = vadd.f32 %v2381, %v2569
    %v2868 = vadd.f32 %v2382, %v2574
    %v2869 = vadd.f32 %v2383, %v2579
    %v2870 = vadd.f32 %v2384, %v2584
    %v2871 = vadd.f32 %v2385, %v2589
    %v2872 = vadd.f32 %v2386, %v2594
    %v2873 = vadd.f32 %v2387, %v2599
    %v2874 = vadd.f32 %v2388, %v2604
    %v2875 = vadd.f32 %v2389, %v2609
    %v2876 = vadd.f32 %v2390, %v2614
    %v2877 = vadd.f32 %v2391, %v2619
    %v2878 = vadd.f32 %v2392, %v2624
    %v2879 = vadd.f32 %v2393, %v2629
    %v2880 = vadd.f32 %v2394, %v2634
    %v2881 = vadd.f32 %v2395, %v2639
    %v2882 = vadd.f32 %v2396, %v2644
    %v2883 = vadd.f32 %v2397, %v2649
    %v2884 = vadd.f32 %v2398, %v2654
    %v2885 = vadd.f32 %v2399, %v2659
    %v2886 = vadd.f32 %v2400, %v2664
    %v2887 = vadd.f32 %v2401, %v2669
    %v2888 = vadd.f32 %v2402, %v2674
    %v2889 = vadd.f32 %v2403, %v2679
    %v2890 = vadd.f32 %v2404, %v2684
    %v2891 = vadd.f32 %v2405, %v2689
    %v2892 = vadd.f32 %v2406, %v2694
    %v2893 = vadd.f32 %v2407, %v2699
    %v2894 = vadd.f32 %v2408, %v2704
    %v2895 = vadd.f32 %v2409, %v2709
    %v2896 = vadd.f32 %v2410, %v2714
    %v2897 = vadd.f32 %v2411, %v2719
    %v2898 = vadd.f32 %v2412, %v2724
    %v2899 = vadd.f32 %v2413, %v2729
    %v2900 = vadd.f32 %v2414, %v2734
    %v2901 = vadd.f32 %v2415, %v2739
    %v2902 = vadd.f32 %v2416, %v2744
    %v2903 = vadd.f32 %v2417, %v2749
    %v2904 = vadd.f32 %v2418, %v2754
    %v2905 = vadd.f32 %v2419, %v2759
    %v2906 = vadd.f32 %v2420, %v2764
    %v2907 = vadd.f32 %v2421, %v2769
    %v2908 = vadd.f32 %v2422, %v2774
    %v2909 = vadd.f32 %v2423, %v2779
    %v2910 = vadd.f32 %v2424, %v2784
    %v2911 = vadd.f32 %v2425, %v2789
    %v2912 = vadd.f32 %v2426, %v2794
    %v2913 = vadd.f32 %v2427, %v2799
    %v2914 = vadd.f32 %v2428, %v2804
    %v2915 = vadd.f32 %v2429, %v2809
    %v2916 = vadd.f32 %v2430, %v2814
    %v2917 = vadd.f32 %v2431, %v2819
    %v2918 = vadd.f32 %v2432, %v2824
    %v2919 = vadd.f32 %v2433, %v2829
    %v2920 = vadd.f32 %v2434, %v2834
    %v2921 = vadd.f32 %v2435, %v2839
    %v2922 = vadd.f32 %v2436, %v2844
    %v2923 = vadd.f32 %v2437, %v2849
    %v2924 = vadd.f32 %v2438, %v2854
    %v2925 = vadd.f32 %v2439, %v2859
    %v2926 = vrot.slane %v99, 2
    %v2927 = vrot.slane %v100, 2
    %v2928 = vsel %vm1283, %v2926, %v2927
    %v2929 = vrot.slane %v101, 2
    %v2930 = vsel %vm1283, %v2927, %v2929
    %v2931 = vrot.slane %v153, 2
    %v2932 = vrot.slane %v154, 2
    %v2933 = vsel %vm1283, %v2931, %v2932
    %v2934 = vrot.slane %v155, 2
    %v2935 = vsel %vm1283, %v2932, %v2934
    %s2940 = scalar_lea.vmem %s1, 640
    %v2941 = vld [vmem:[%s2940] sm:$0xff]
    %v2942 = vld [vmem:[%s2940 + $0x8] sm:$0xff]
    %v2943 = vld [vmem:[%s2940 + $0x10] sm:$0xff]
    %v2944 = vld [vmem:[%s2940 + $0x18] sm:$0xff]
    %v2945 = vld [vmem:[%s2940 + $0x20] sm:$0xff]
    %v2946 = vld [vmem:[%s2940 + $0x28] sm:$0xff]
    %v2947 = vld [vmem:[%s2940 + $0x30] sm:$0xff]
    %v2948 = vld [vmem:[%s2940 + $0x38] sm:$0xff]
    %v2949 = vld [vmem:[%s2940 + $0x40] sm:$0xff]
    %v2950 = vld [vmem:[%s2940 + $0x48] sm:$0xff]
    %v2951 = vld [vmem:[%s2940 + $0x50] sm:$0xff]
    %v2952 = vld [vmem:[%s2940 + $0x58] sm:$0xff]
    %v2953 = vld [vmem:[%s2940 + $0x60] sm:$0xff]
    %v2954 = vld [vmem:[%s2940 + $0x68] sm:$0xff]
    %v2955 = vld [vmem:[%s2940 + $0x70] sm:$0xff]
    %v2956 = vld [vmem:[%s2940 + $0x78] sm:$0xff]
    %2957 = vmatprep.subr.mxu0 0.0
    %2958 = vmatpush1.msra.mxu0 %v2941
    %2959 = vmatprep.subr.mxu0 0.0
    %2960 = vmatpush1.msra.mxu0 %v2942
    %2961 = vmatprep.subr.mxu0 0.0
    %2962 = vmatpush1.msra.mxu0 %v2943
    %2963 = vmatprep.subr.mxu0 0.0
    %2964 = vmatpush1.msra.mxu0 %v2944
    %2965 = vmatprep.subr.mxu0 0.0
    %2966 = vmatpush1.msra.mxu0 %v2945
    %2967 = vmatprep.subr.mxu0 0.0
    %2968 = vmatpush1.msra.mxu0 %v2946
    %2969 = vmatprep.subr.mxu0 0.0
    %2970 = vmatpush1.msra.mxu0 %v2947
    %2971 = vmatprep.subr.mxu0 0.0
    %2972 = vmatpush1.msra.mxu0 %v2948
    %2973 = vmatprep.subr.mxu0 0.0
    %2974 = vmatpush1.msra.mxu0 %v2949
    %2975 = vmatprep.subr.mxu0 0.0
    %2976 = vmatpush1.msra.mxu0 %v2950
    %2977 = vmatprep.subr.mxu0 0.0
    %2978 = vmatpush1.msra.mxu0 %v2951
    %2979 = vmatprep.subr.mxu0 0.0
    %2980 = vmatpush1.msra.mxu0 %v2952
    %2981 = vmatprep.subr.mxu0 0.0
    %2982 = vmatpush1.msra.mxu0 %v2953
    %2983 = vmatprep.subr.mxu0 0.0
    %2984 = vmatpush1.msra.mxu0 %v2954
    %2985 = vmatprep.subr.mxu0 0.0
    %2986 = vmatpush1.msra.mxu0 %v2955
    %2987 = vmatprep.subr.mxu0 0.0
    %2988 = vmatpush1.msra.mxu0 %v2956
    %2989 = vmatprep.subr.mxu0 0.0
    %2990 = vmatpush1.msra.mxu0 0.0
    %2991 = vmatprep.subr.mxu0 0.0
    %2992 = vmatpush1.msra.mxu0 0.0
    %2993 = vmatprep.subr.mxu0 0.0
    %2994 = vmatpush1.msra.mxu0 0.0
    %2995 = vmatprep.subr.mxu0 0.0
    %2996 = vmatpush1.msra.mxu0 0.0
    %2997 = vmatprep.subr.mxu0 0.0
    %2998 = vmatpush1.msra.mxu0 0.0
    %2999 = vmatprep.subr.mxu0 0.0
    %3000 = vmatpush1.msra.mxu0 0.0
    %3001 = vmatprep.subr.mxu0 0.0
    %3002 = vmatpush1.msra.mxu0 0.0
    %3003 = vmatprep.subr.mxu0 0.0
    %3004 = vmatpush1.msra.mxu0 0.0
    %3005 = vmatprep.subr.mxu0 0.0
    %3006 = vmatpush1.msra.mxu0 0.0
    %3007 = vmatprep.subr.mxu0 0.0
    %3008 = vmatpush1.msra.mxu0 0.0
    %3009 = vmatprep.subr.mxu0 0.0
    %3010 = vmatpush1.msra.mxu0 0.0
    %3011 = vmatprep.subr.mxu0 0.0
    %3012 = vmatpush1.msra.mxu0 0.0
    %3013 = vmatprep.subr.mxu0 0.0
    %3014 = vmatpush1.msra.mxu0 0.0
    %3015 = vmatprep.subr.mxu0 0.0
    %3016 = vmatpush1.msra.mxu0 0.0
    %3017 = vmatprep.subr.mxu0 0.0
    %3018 = vmatpush1.msra.mxu0 0.0
    %3019 = vmatprep.subr.mxu0 0.0
    %3020 = vmatpush1.msra.mxu0 0.0
    %3021 = vmatprep.mubr.f32.mxu0 0.0
    %3022 = vmatmul.mubr.f32.gmra.mrb[0].mxu0 %v1291
    %v3023 = vpop.f32.mrb[0].mxu0
    %v3024 = vadd.f32 0.0, %v3023
    %v3025 = vpop.f32.mrb[0].mxu0
    %3026 = vmatprep.mubr.f32.mxu0 0.0
    %3027 = vmatmul.mubr.f32.gmra.mrb[0].mxu0 %v1293
    %v3028 = vpop.f32.mrb[0].mxu0
    %v3029 = vadd.f32 0.0, %v3028
    %v3030 = vpop.f32.mrb[0].mxu0
    %3031 = vmatprep.mubr.f32.mxu0 0.0
    %3032 = vmatmul.mubr.f32.gmra.mrb[0].mxu0 %v1296
    %v3033 = vpop.f32.mrb[0].mxu0
    %v3034 = vadd.f32 0.0, %v3033
    %v3035 = vpop.f32.mrb[0].mxu0
    %3036 = vmatprep.mubr.f32.mxu0 0.0
    %3037 = vmatmul.mubr.f32.gmra.mrb[0].mxu0 %v1298
    %v3038 = vpop.f32.mrb[0].mxu0
    %v3039 = vadd.f32 0.0, %v3038
    %v3040 = vpop.f32.mrb[0].mxu0
    %3041 = vmatprep.mubr.f32.mxu0 0.0
    %3042 = vmatmul.mubr.f32.gmra.mrb[0].mxu0 %v1301
    %v3043 = vpop.f32.mrb[0].mxu0
    %v3044 = vadd.f32 0.0, %v3043
    %v3045 = vpop.f32.mrb[0].mxu0
    %3046 = vmatprep.mubr.f32.mxu0 0.0
    %3047 = vmatmul.mubr.f32.gmra.mrb[0].mxu0 %v1303
    %v3048 = vpop.f32.mrb[0].mxu0
    %v3049 = vadd.f32 0.0, %v3048
    %v3050 = vpop.f32.mrb[0].mxu0
    %3051 = vmatprep.mubr.f32.mxu0 0.0
    %3052 = vmatmul.mubr.f32.gmra.mrb[0].mxu0 %v1306
    %v3053 = vpop.f32.mrb[0].mxu0
    %v3054 = vadd.f32 0.0, %v3053
    %v3055 = vpop.f32.mrb[0].mxu0
    %3056 = vmatprep.mubr.f32.mxu0 0.0
    %3057 = vmatmul.mubr.f32.gmra.mrb[0].mxu0 %v1308
    %v3058 = vpop.f32.mrb[0].mxu0
    %v3059 = vadd.f32 0.0, %v3058
    %v3060 = vpop.f32.mrb[0].mxu0
    %3061 = vmatprep.mubr.f32.mxu0 0.0
    %3062 = vmatmul.mubr.f32.gmra.mrb[0].mxu0 %v1311
    %v3063 = vpop.f32.mrb[0].mxu0
    %v3064 = vadd.f32 0.0, %v3063
    %v3065 = vpop.f32.mrb[0].mxu0
    %3066 = vmatprep.mubr.f32.mxu0 0.0
    %3067 = vmatmul.mubr.f32.gmra.mrb[0].mxu0 %v1313
    %v3068 = vpop.f32.mrb[0].mxu0
    %v3069 = vadd.f32 0.0, %v3068
    %v3070 = vpop.f32.mrb[0].mxu0
    %3071 = vmatprep.mubr.f32.mxu0 0.0
    %3072 = vmatmul.mubr.f32.gmra.mrb[0].mxu0 %v1316
    %v3073 = vpop.f32.mrb[0].mxu0
    %v3074 = vadd.f32 0.0, %v3073
    %v3075 = vpop.f32.mrb[0].mxu0
    %3076 = vmatprep.mubr.f32.mxu0 0.0
    %3077 = vmatmul.mubr.f32.gmra.mrb[0].mxu0 %v1318
    %v3078 = vpop.f32.mrb[0].mxu0
    %v3079 = vadd.f32 0.0, %v3078
    %v3080 = vpop.f32.mrb[0].mxu0
    %3081 = vmatprep.mubr.f32.mxu0 0.0
    %3082 = vmatmul.mubr.f32.gmra.mrb[0].mxu0 %v1321
    %v3083 = vpop.f32.mrb[0].mxu0
    %v3084 = vadd.f32 0.0, %v3083
    %v3085 = vpop.f32.mrb[0].mxu0
    %3086 = vmatprep.mubr.f32.mxu0 0.0
    %3087 = vmatmul.mubr.f32.gmra.mrb[0].mxu0 %v1323
    %v3088 = vpop.f32.mrb[0].mxu0
    %v3089 = vadd.f32 0.0, %v3088
    %v3090 = vpop.f32.mrb[0].mxu0
    %3091 = vmatprep.mubr.f32.mxu0 0.0
    %3092 = vmatmul.mubr.f32.gmra.mrb[0].mxu0 %v1326
    %v3093 = vpop.f32.mrb[0].mxu0
    %v3094 = vadd.f32 0.0, %v3093
    %v3095 = vpop.f32.mrb[0].mxu0
    %3096 = vmatprep.mubr.f32.mxu0 0.0
    %3097 = vmatmul.mubr.f32.gmra.mrb[0].mxu0 %v1328
    %v3098 = vpop.f32.mrb[0].mxu0
    %v3099 = vadd.f32 0.0, %v3098
    %v3100 = vpop.f32.mrb[0].mxu0
    %3101 = vmatprep.mubr.f32.mxu0 0.0
    %3102 = vmatmul.mubr.f32.gmra.mrb[0].mxu0 %v1331
    %v3103 = vpop.f32.mrb[0].mxu0
    %v3104 = vadd.f32 0.0, %v3103
    %v3105 = vpop.f32.mrb[0].mxu0
    %3106 = vmatprep.mubr.f32.mxu0 0.0
    %3107 = vmatmul.mubr.f32.gmra.mrb[0].mxu0 %v1333
    %v3108 = vpop.f32.mrb[0].mxu0
    %v3109 = vadd.f32 0.0, %v3108
    %v3110 = vpop.f32.mrb[0].mxu0
    %3111 = vmatprep.mubr.f32.mxu0 0.0
    %3112 = vmatmul.mubr.f32.gmra.mrb[0].mxu0 %v1336
    %v3113 = vpop.f32.mrb[0].mxu0
    %v3114 = vadd.f32 0.0, %v3113
    %v3115 = vpop.f32.mrb[0].mxu0
    %3116 = vmatprep.mubr.f32.mxu0 0.0
    %3117 = vmatmul.mubr.f32.gmra.mrb[0].mxu0 %v1338
    %v3118 = vpop.f32.mrb[0].mxu0
    %v3119 = vadd.f32 0.0, %v3118
    %v3120 = vpop.f32.mrb[0].mxu0
    %3121 = vmatprep.mubr.f32.mxu0 0.0
    %3122 = vmatmul.mubr.f32.gmra.mrb[0].mxu0 %v1341
    %v3123 = vpop.f32.mrb[0].mxu0
    %v3124 = vadd.f32 0.0, %v3123
    %v3125 = vpop.f32.mrb[0].mxu0
    %3126 = vmatprep.mubr.f32.mxu0 0.0
    %3127 = vmatmul.mubr.f32.gmra.mrb[0].mxu0 %v1343
    %v3128 = vpop.f32.mrb[0].mxu0
    %v3129 = vadd.f32 0.0, %v3128
    %v3130 = vpop.f32.mrb[0].mxu0
    %3131 = vmatprep.mubr.f32.mxu0 0.0
    %3132 = vmatmul.mubr.f32.gmra.mrb[0].mxu0 %v1346
    %v3133 = vpop.f32.mrb[0].mxu0
    %v3134 = vadd.f32 0.0, %v3133
    %v3135 = vpop.f32.mrb[0].mxu0
    %3136 = vmatprep.mubr.f32.mxu0 0.0
    %3137 = vmatmul.mubr.f32.gmra.mrb[0].mxu0 %v1348
    %v3138 = vpop.f32.mrb[0].mxu0
    %v3139 = vadd.f32 0.0, %v3138
    %v3140 = vpop.f32.mrb[0].mxu0
    %3141 = vmatprep.mubr.f32.mxu0 0.0
    %3142 = vmatmul.mubr.f32.gmra.mrb[0].mxu0 %v1351
    %v3143 = vpop.f32.mrb[0].mxu0
    %v3144 = vadd.f32 0.0, %v3143
    %v3145 = vpop.f32.mrb[0].mxu0
    %3146 = vmatprep.mubr.f32.mxu0 0.0
    %3147 = vmatmul.mubr.f32.gmra.mrb[0].mxu0 %v1353
    %v3148 = vpop.f32.mrb[0].mxu0
    %v3149 = vadd.f32 0.0, %v3148
    %v3150 = vpop.f32.mrb[0].mxu0
    %3151 = vmatprep.mubr.f32.mxu0 0.0
    %3152 = vmatmul.mubr.f32.gmra.mrb[0].mxu0 %v1356
    %v3153 = vpop.f32.mrb[0].mxu0
    %v3154 = vadd.f32 0.0, %v3153
    %v3155 = vpop.f32.mrb[0].mxu0
    %3156 = vmatprep.mubr.f32.mxu0 0.0
    %3157 = vmatmul.mubr.f32.gmra.mrb[0].mxu0 %v1358
    %v3158 = vpop.f32.mrb[0].mxu0
    %v3159 = vadd.f32 0.0, %v3158
    %v3160 = vpop.f32.mrb[0].mxu0
    %3161 = vmatprep.mubr.f32.mxu0 0.0
    %3162 = vmatmul.mubr.f32.gmra.mrb[0].mxu0 %v1361
    %v3163 = vpop.f32.mrb[0].mxu0
    %v3164 = vadd.f32 0.0, %v3163
    %v3165 = vpop.f32.mrb[0].mxu0
    %3166 = vmatprep.mubr.f32.mxu0 0.0
    %3167 = vmatmul.mubr.f32.gmra.mrb[0].mxu0 %v1363
    %v3168 = vpop.f32.mrb[0].mxu0
    %v3169 = vadd.f32 0.0, %v3168
    %v3170 = vpop.f32.mrb[0].mxu0
    %3171 = vmatprep.mubr.f32.mxu0 0.0
    %3172 = vmatmul.mubr.f32.gmra.mrb[0].mxu0 %v2928
    %v3173 = vpop.f32.mrb[0].mxu0
    %v3174 = vadd.f32 0.0, %v3173
    %v3175 = vpop.f32.mrb[0].mxu0
    %3176 = vmatprep.mubr.f32.mxu0 0.0
    %3177 = vmatmul.mubr.f32.gmra.mrb[0].mxu0 %v2930
    %v3178 = vpop.f32.mrb[0].mxu0
    %v3179 = vadd.f32 0.0, %v3178
    %v3180 = vpop.f32.mrb[0].mxu0
    %3181 = vmatprep.mubr.f32.mxu0 0.0
    %3182 = vmatmul.mubr.f32.gmra.mrb[0].mxu0 %v1371
    %v3183 = vpop.f32.mrb[0].mxu0
    %v3184 = vadd.f32 0.0, %v3183
    %v3185 = vpop.f32.mrb[0].mxu0
    %3186 = vmatprep.mubr.f32.mxu0 0.0
    %3187 = vmatmul.mubr.f32.gmra.mrb[0].mxu0 %v1373
    %v3188 = vpop.f32.mrb[0].mxu0
    %v3189 = vadd.f32 0.0, %v3188
    %v3190 = vpop.f32.mrb[0].mxu0
    %3191 = vmatprep.mubr.f32.mxu0 0.0
    %3192 = vmatmul.mubr.f32.gmra.mrb[0].mxu0 %v1376
    %v3193 = vpop.f32.mrb[0].mxu0
    %v3194 = vadd.f32 0.0, %v3193
    %v3195 = vpop.f32.mrb[0].mxu0
    %3196 = vmatprep.mubr.f32.mxu0 0.0
    %3197 = vmatmul.mubr.f32.gmra.mrb[0].mxu0 %v1378
    %v3198 = vpop.f32.mrb[0].mxu0
    %v3199 = vadd.f32 0.0, %v3198
    %v3200 = vpop.f32.mrb[0].mxu0
    %3201 = vmatprep.mubr.f32.mxu0 0.0
    %3202 = vmatmul.mubr.f32.gmra.mrb[0].mxu0 %v1381
    %v3203 = vpop.f32.mrb[0].mxu0
    %v3204 = vadd.f32 0.0, %v3203
    %v3205 = vpop.f32.mrb[0].mxu0
    %3206 = vmatprep.mubr.f32.mxu0 0.0
    %3207 = vmatmul.mubr.f32.gmra.mrb[0].mxu0 %v1383
    %v3208 = vpop.f32.mrb[0].mxu0
    %v3209 = vadd.f32 0.0, %v3208
    %v3210 = vpop.f32.mrb[0].mxu0
    %3211 = vmatprep.mubr.f32.mxu0 0.0
    %3212 = vmatmul.mubr.f32.gmra.mrb[0].mxu0 %v1386
    %v3213 = vpop.f32.mrb[0].mxu0
    %v3214 = vadd.f32 0.0, %v3213
    %v3215 = vpop.f32.mrb[0].mxu0
    %3216 = vmatprep.mubr.f32.mxu0 0.0
    %3217 = vmatmul.mubr.f32.gmra.mrb[0].mxu0 %v1388
    %v3218 = vpop.f32.mrb[0].mxu0
    %v3219 = vadd.f32 0.0, %v3218
    %v3220 = vpop.f32.mrb[0].mxu0
    %3221 = vmatprep.mubr.f32.mxu0 0.0
    %3222 = vmatmul.mubr.f32.gmra.mrb[0].mxu0 %v1391
    %v3223 = vpop.f32.mrb[0].mxu0
    %v3224 = vadd.f32 0.0, %v3223
    %v3225 = vpop.f32.mrb[0].mxu0
    %3226 = vmatprep.mubr.f32.mxu0 0.0
    %3227 = vmatmul.mubr.f32.gmra.mrb[0].mxu0 %v1393
    %v3228 = vpop.f32.mrb[0].mxu0
    %v3229 = vadd.f32 0.0, %v3228
    %v3230 = vpop.f32.mrb[0].mxu0
    %3231 = vmatprep.mubr.f32.mxu0 0.0
    %3232 = vmatmul.mubr.f32.gmra.mrb[0].mxu0 %v1396
    %v3233 = vpop.f32.mrb[0].mxu0
    %v3234 = vadd.f32 0.0, %v3233
    %v3235 = vpop.f32.mrb[0].mxu0
    %3236 = vmatprep.mubr.f32.mxu0 0.0
    %3237 = vmatmul.mubr.f32.gmra.mrb[0].mxu0 %v1398
    %v3238 = vpop.f32.mrb[0].mxu0
    %v3239 = vadd.f32 0.0, %v3238
    %v3240 = vpop.f32.mrb[0].mxu0
    %3241 = vmatprep.mubr.f32.mxu0 0.0
    %3242 = vmatmul.mubr.f32.gmra.mrb[0].mxu0 %v1401
    %v3243 = vpop.f32.mrb[0].mxu0
    %v3244 = vadd.f32 0.0, %v3243
    %v3245 = vpop.f32.mrb[0].mxu0
    %3246 = vmatprep.mubr.f32.mxu0 0.0
    %3247 = vmatmul.mubr.f32.gmra.mrb[0].mxu0 %v1403
    %v3248 = vpop.f32.mrb[0].mxu0
    %v3249 = vadd.f32 0.0, %v3248
    %v3250 = vpop.f32.mrb[0].mxu0
    %3251 = vmatprep.mubr.f32.mxu0 0.0
    %3252 = vmatmul.mubr.f32.gmra.mrb[0].mxu0 %v1406
    %v3253 = vpop.f32.mrb[0].mxu0
    %v3254 = vadd.f32 0.0, %v3253
    %v3255 = vpop.f32.mrb[0].mxu0
    %3256 = vmatprep.mubr.f32.mxu0 0.0
    %3257 = vmatmul.mubr.f32.gmra.mrb[0].mxu0 %v1408
    %v3258 = vpop.f32.mrb[0].mxu0
    %v3259 = vadd.f32 0.0, %v3258
    %v3260 = vpop.f32.mrb[0].mxu0
    %3261 = vmatprep.mubr.f32.mxu0 0.0
    %3262 = vmatmul.mubr.f32.gmra.mrb[0].mxu0 %v1411
    %v3263 = vpop.f32.mrb[0].mxu0
    %v3264 = vadd.f32 0.0, %v3263
    %v3265 = vpop.f32.mrb[0].mxu0
    %3266 = vmatprep.mubr.f32.mxu0 0.0
    %3267 = vmatmul.mubr.f32.gmra.mrb[0].mxu0 %v1413
    %v3268 = vpop.f32.mrb[0].mxu0
    %v3269 = vadd.f32 0.0, %v3268
    %v3270 = vpop.f32.mrb[0].mxu0
    %3271 = vmatprep.mubr.f32.mxu0 0.0
    %3272 = vmatmul.mubr.f32.gmra.mrb[0].mxu0 %v1416
    %v3273 = vpop.f32.mrb[0].mxu0
    %v3274 = vadd.f32 0.0, %v3273
    %v3275 = vpop.f32.mrb[0].mxu0
    %3276 = vmatprep.mubr.f32.mxu0 0.0
    %3277 = vmatmul.mubr.f32.gmra.mrb[0].mxu0 %v1418
    %v3278 = vpop.f32.mrb[0].mxu0
    %v3279 = vadd.f32 0.0, %v3278
    %v3280 = vpop.f32.mrb[0].mxu0
    %3281 = vmatprep.mubr.f32.mxu0 0.0
    %3282 = vmatmul.mubr.f32.gmra.mrb[0].mxu0 %v1421
    %v3283 = vpop.f32.mrb[0].mxu0
    %v3284 = vadd.f32 0.0, %v3283
    %v3285 = vpop.f32.mrb[0].mxu0
    %3286 = vmatprep.mubr.f32.mxu0 0.0
    %3287 = vmatmul.mubr.f32.gmra.mrb[0].mxu0 %v1423
    %v3288 = vpop.f32.mrb[0].mxu0
    %v3289 = vadd.f32 0.0, %v3288
    %v3290 = vpop.f32.mrb[0].mxu0
    %3291 = vmatprep.mubr.f32.mxu0 0.0
    %3292 = vmatmul.mubr.f32.gmra.mrb[0].mxu0 %v1426
    %v3293 = vpop.f32.mrb[0].mxu0
    %v3294 = vadd.f32 0.0, %v3293
    %v3295 = vpop.f32.mrb[0].mxu0
    %3296 = vmatprep.mubr.f32.mxu0 0.0
    %3297 = vmatmul.mubr.f32.gmra.mrb[0].mxu0 %v1428
    %v3298 = vpop.f32.mrb[0].mxu0
    %v3299 = vadd.f32 0.0, %v3298
    %v3300 = vpop.f32.mrb[0].mxu0
    %3301 = vmatprep.mubr.f32.mxu0 0.0
    %3302 = vmatmul.mubr.f32.gmra.mrb[0].mxu0 %v1431
    %v3303 = vpop.f32.mrb[0].mxu0
    %v3304 = vadd.f32 0.0, %v3303
    %v3305 = vpop.f32.mrb[0].mxu0
    %3306 = vmatprep.mubr.f32.mxu0 0.0
    %3307 = vmatmul.mubr.f32.gmra.mrb[0].mxu0 %v1433
    %v3308 = vpop.f32.mrb[0].mxu0
    %v3309 = vadd.f32 0.0, %v3308
    %v3310 = vpop.f32.mrb[0].mxu0
    %3311 = vmatprep.mubr.f32.mxu0 0.0
    %3312 = vmatmul.mubr.f32.gmra.mrb[0].mxu0 %v1436
    %v3313 = vpop.f32.mrb[0].mxu0
    %v3314 = vadd.f32 0.0, %v3313
    %v3315 = vpop.f32.mrb[0].mxu0
    %3316 = vmatprep.mubr.f32.mxu0 0.0
    %3317 = vmatmul.mubr.f32.gmra.mrb[0].mxu0 %v1438
    %v3318 = vpop.f32.mrb[0].mxu0
    %v3319 = vadd.f32 0.0, %v3318
    %v3320 = vpop.f32.mrb[0].mxu0
    %3321 = vmatprep.mubr.f32.mxu0 0.0
    %3322 = vmatmul.mubr.f32.gmra.mrb[0].mxu0 %v1441
    %v3323 = vpop.f32.mrb[0].mxu0
    %v3324 = vadd.f32 0.0, %v3323
    %v3325 = vpop.f32.mrb[0].mxu0
    %3326 = vmatprep.mubr.f32.mxu0 0.0
    %3327 = vmatmul.mubr.f32.gmra.mrb[0].mxu0 %v1443
    %v3328 = vpop.f32.mrb[0].mxu0
    %v3329 = vadd.f32 0.0, %v3328
    %v3330 = vpop.f32.mrb[0].mxu0
    %3331 = vmatprep.mubr.f32.mxu0 0.0
    %3332 = vmatmul.mubr.f32.gmra.mrb[0].mxu0 %v2933
    %v3333 = vpop.f32.mrb[0].mxu0
    %v3334 = vadd.f32 0.0, %v3333
    %v3335 = vpop.f32.mrb[0].mxu0
    %3336 = vmatprep.mubr.f32.mxu0 0.0
    %3337 = vmatmul.mubr.f32.gmra.mrb[0].mxu0 %v2935
    %v3338 = vpop.f32.mrb[0].mxu0
    %v3339 = vadd.f32 0.0, %v3338
    %v3340 = vpop.f32.mrb[0].mxu0
    %3341 = vdwg.mxu0
    %v3342 = vadd.f32 %v2862, %v3024
    %v3343 = vadd.f32 %v2863, %v3029
    %v3344 = vadd.f32 %v2864, %v3034
    %v3345 = vadd.f32 %v2865, %v3039
    %v3346 = vadd.f32 %v2866, %v3044
    %v3347 = vadd.f32 %v2867, %v3049
    %v3348 = vadd.f32 %v2868, %v3054
    %v3349 = vadd.f32 %v2869, %v3059
    %v3350 = vadd.f32 %v2870, %v3064
    %v3351 = vadd.f32 %v2871, %v3069
    %v3352 = vadd.f32 %v2872, %v3074
    %v3353 = vadd.f32 %v2873, %v3079
    %v3354 = vadd.f32 %v2874, %v3084
    %v3355 = vadd.f32 %v2875, %v3089
    %v3356 = vadd.f32 %v2876, %v3094
    %v3357 = vadd.f32 %v2877, %v3099
    %v3358 = vadd.f32 %v2878, %v3104
    %v3359 = vadd.f32 %v2879, %v3109
    %v3360 = vadd.f32 %v2880, %v3114
    %v3361 = vadd.f32 %v2881, %v3119
    %v3362 = vadd.f32 %v2882, %v3124
    %v3363 = vadd.f32 %v2883, %v3129
    %v3364 = vadd.f32 %v2884, %v3134
    %v3365 = vadd.f32 %v2885, %v3139
    %v3366 = vadd.f32 %v2886, %v3144
    %v3367 = vadd.f32 %v2887, %v3149
    %v3368 = vadd.f32 %v2888, %v3154
    %v3369 = vadd.f32 %v2889, %v3159
    %v3370 = vadd.f32 %v2890, %v3164
    %v3371 = vadd.f32 %v2891, %v3169
    %v3372 = vadd.f32 %v2892, %v3174
    %v3373 = vadd.f32 %v2893, %v3179
    %v3374 = vadd.f32 %v2894, %v3184
    %v3375 = vadd.f32 %v2895, %v3189
    %v3376 = vadd.f32 %v2896, %v3194
    %v3377 = vadd.f32 %v2897, %v3199
    %v3378 = vadd.f32 %v2898, %v3204
    %v3379 = vadd.f32 %v2899, %v3209
    %v3380 = vadd.f32 %v2900, %v3214
    %v3381 = vadd.f32 %v2901, %v3219
    %v3382 = vadd.f32 %v2902, %v3224
    %v3383 = vadd.f32 %v2903, %v3229
    %v3384 = vadd.f32 %v2904, %v3234
    %v3385 = vadd.f32 %v2905, %v3239
    %v3386 = vadd.f32 %v2906, %v3244
    %v3387 = vadd.f32 %v2907, %v3249
    %v3388 = vadd.f32 %v2908, %v3254
    %v3389 = vadd.f32 %v2909, %v3259
    %v3390 = vadd.f32 %v2910, %v3264
    %v3391 = vadd.f32 %v2911, %v3269
    %v3392 = vadd.f32 %v2912, %v3274
    %v3393 = vadd.f32 %v2913, %v3279
    %v3394 = vadd.f32 %v2914, %v3284
    %v3395 = vadd.f32 %v2915, %v3289
    %v3396 = vadd.f32 %v2916, %v3294
    %v3397 = vadd.f32 %v2917, %v3299
    %v3398 = vadd.f32 %v2918, %v3304
    %v3399 = vadd.f32 %v2919, %v3309
    %v3400 = vadd.f32 %v2920, %v3314
    %v3401 = vadd.f32 %v2921, %v3319
    %v3402 = vadd.f32 %v2922, %v3324
    %v3403 = vadd.f32 %v2923, %v3329
    %v3404 = vadd.f32 %v2924, %v3334
    %v3405 = vadd.f32 %v2925, %v3339
    %s3406 = scalar_lea.vmem %s1, 768
    %v3407 = vld [vmem:[%s3406] sm:$0xff]
    %v3408 = vld [vmem:[%s3406 + $0x8] sm:$0xff]
    %v3409 = vld [vmem:[%s3406 + $0x10] sm:$0xff]
    %v3410 = vld [vmem:[%s3406 + $0x18] sm:$0xff]
    %v3411 = vld [vmem:[%s3406 + $0x20] sm:$0xff]
    %v3412 = vld [vmem:[%s3406 + $0x28] sm:$0xff]
    %v3413 = vld [vmem:[%s3406 + $0x30] sm:$0xff]
    %v3414 = vld [vmem:[%s3406 + $0x38] sm:$0xff]
    %v3415 = vld [vmem:[%s3406 + $0x40] sm:$0xff]
    %v3416 = vld [vmem:[%s3406 + $0x48] sm:$0xff]
    %v3417 = vld [vmem:[%s3406 + $0x50] sm:$0xff]
    %v3418 = vld [vmem:[%s3406 + $0x58] sm:$0xff]
    %v3419 = vld [vmem:[%s3406 + $0x60] sm:$0xff]
    %v3420 = vld [vmem:[%s3406 + $0x68] sm:$0xff]
    %v3421 = vld [vmem:[%s3406 + $0x70] sm:$0xff]
    %v3422 = vld [vmem:[%s3406 + $0x78] sm:$0xff]
    %3423 = vmatprep.subr.mxu0 0.0
    %3424 = vmatpush1.msra.mxu0 %v3407
    %3425 = vmatprep.subr.mxu0 0.0
    %3426 = vmatpush1.msra.mxu0 %v3408
    %3427 = vmatprep.subr.mxu0 0.0
    %3428 = vmatpush1.msra.mxu0 %v3409
    %3429 = vmatprep.subr.mxu0 0.0
    %3430 = vmatpush1.msra.mxu0 %v3410
    %3431 = vmatprep.subr.mxu0 0.0
    %3432 = vmatpush1.msra.mxu0 %v3411
    %3433 = vmatprep.subr.mxu0 0.0
    %3434 = vmatpush1.msra.mxu0 %v3412
    %3435 = vmatprep.subr.mxu0 0.0
    %3436 = vmatpush1.msra.mxu0 %v3413
    %3437 = vmatprep.subr.mxu0 0.0
    %3438 = vmatpush1.msra.mxu0 %v3414
    %3439 = vmatprep.subr.mxu0 0.0
    %3440 = vmatpush1.msra.mxu0 %v3415
    %3441 = vmatprep.subr.mxu0 0.0
    %3442 = vmatpush1.msra.mxu0 %v3416
    %3443 = vmatprep.subr.mxu0 0.0
    %3444 = vmatpush1.msra.mxu0 %v3417
    %3445 = vmatprep.subr.mxu0 0.0
    %3446 = vmatpush1.msra.mxu0 %v3418
    %3447 = vmatprep.subr.mxu0 0.0
    %3448 = vmatpush1.msra.mxu0 %v3419
    %3449 = vmatprep.subr.mxu0 0.0
    %3450 = vmatpush1.msra.mxu0 %v3420
    %3451 = vmatprep.subr.mxu0 0.0
    %3452 = vmatpush1.msra.mxu0 %v3421
    %3453 = vmatprep.subr.mxu0 0.0
    %3454 = vmatpush1.msra.mxu0 %v3422
    %3455 = vmatprep.subr.mxu0 0.0
    %3456 = vmatpush1.msra.mxu0 0.0
    %3457 = vmatprep.subr.mxu0 0.0
    %3458 = vmatpush1.msra.mxu0 0.0
    %3459 = vmatprep.subr.mxu0 0.0
    %3460 = vmatpush1.msra.mxu0 0.0
    %3461 = vmatprep.subr.mxu0 0.0
    %3462 = vmatpush1.msra.mxu0 0.0
    %3463 = vmatprep.subr.mxu0 0.0
    %3464 = vmatpush1.msra.mxu0 0.0
    %3465 = vmatprep.subr.mxu0 0.0
    %3466 = vmatpush1.msra.mxu0 0.0
    %3467 = vmatprep.subr.mxu0 0.0
    %3468 = vmatpush1.msra.mxu0 0.0
    %3469 = vmatprep.subr.mxu0 0.0
    %3470 = vmatpush1.msra.mxu0 0.0
    %3471 = vmatprep.subr.mxu0 0.0
    %3472 = vmatpush1.msra.mxu0 0.0
    %3473 = vmatprep.subr.mxu0 0.0
    %3474 = vmatpush1.msra.mxu0 0.0
    %3475 = vmatprep.subr.mxu0 0.0
    %3476 = vmatpush1.msra.mxu0 0.0
    %3477 = vmatprep.subr.mxu0 0.0
    %3478 = vmatpush1.msra.mxu0 0.0
    %3479 = vmatprep.subr.mxu0 0.0
    %3480 = vmatpush1.msra.mxu0 0.0
    %3481 = vmatprep.subr.mxu0 0.0
    %3482 = vmatpush1.msra.mxu0 0.0
    %3483 = vmatprep.subr.mxu0 0.0
    %3484 = vmatpush1.msra.mxu0 0.0
    %3485 = vmatprep.subr.mxu0 0.0
    %3486 = vmatpush1.msra.mxu0 0.0
    %3487 = vmatprep.mubr.f32.mxu0 0.0
    %3488 = vmatmul.mubr.f32.gmra.mrb[0].mxu0 %v57
    %v3489 = vpop.f32.mrb[0].mxu0
    %v3490 = vadd.f32 0.0, %v3489
    %v3491 = vpop.f32.mrb[0].mxu0
    %3492 = vmatprep.mubr.f32.mxu0 0.0
    %3493 = vmatmul.mubr.f32.gmra.mrb[0].mxu0 %v58
    %v3494 = vpop.f32.mrb[0].mxu0
    %v3495 = vadd.f32 0.0, %v3494
    %v3496 = vpop.f32.mrb[0].mxu0
    %3497 = vmatprep.mubr.f32.mxu0 0.0
    %3498 = vmatmul.mubr.f32.gmra.mrb[0].mxu0 %v60
    %v3499 = vpop.f32.mrb[0].mxu0
    %v3500 = vadd.f32 0.0, %v3499
    %v3501 = vpop.f32.mrb[0].mxu0
    %3502 = vmatprep.mubr.f32.mxu0 0.0
    %3503 = vmatmul.mubr.f32.gmra.mrb[0].mxu0 %v61
    %v3504 = vpop.f32.mrb[0].mxu0
    %v3505 = vadd.f32 0.0, %v3504
    %v3506 = vpop.f32.mrb[0].mxu0
    %3507 = vmatprep.mubr.f32.mxu0 0.0
    %3508 = vmatmul.mubr.f32.gmra.mrb[0].mxu0 %v63
    %v3509 = vpop.f32.mrb[0].mxu0
    %v3510 = vadd.f32 0.0, %v3509
    %v3511 = vpop.f32.mrb[0].mxu0
    %3512 = vmatprep.mubr.f32.mxu0 0.0
    %3513 = vmatmul.mubr.f32.gmra.mrb[0].mxu0 %v64
    %v3514 = vpop.f32.mrb[0].mxu0
    %v3515 = vadd.f32 0.0, %v3514
    %v3516 = vpop.f32.mrb[0].mxu0
    %3517 = vmatprep.mubr.f32.mxu0 0.0
    %3518 = vmatmul.mubr.f32.gmra.mrb[0].mxu0 %v66
    %v3519 = vpop.f32.mrb[0].mxu0
    %v3520 = vadd.f32 0.0, %v3519
    %v3521 = vpop.f32.mrb[0].mxu0
    %3522 = vmatprep.mubr.f32.mxu0 0.0
    %3523 = vmatmul.mubr.f32.gmra.mrb[0].mxu0 %v67
    %v3524 = vpop.f32.mrb[0].mxu0
    %v3525 = vadd.f32 0.0, %v3524
    %v3526 = vpop.f32.mrb[0].mxu0
    %3527 = vmatprep.mubr.f32.mxu0 0.0
    %3528 = vmatmul.mubr.f32.gmra.mrb[0].mxu0 %v69
    %v3529 = vpop.f32.mrb[0].mxu0
    %v3530 = vadd.f32 0.0, %v3529
    %v3531 = vpop.f32.mrb[0].mxu0
    %3532 = vmatprep.mubr.f32.mxu0 0.0
    %3533 = vmatmul.mubr.f32.gmra.mrb[0].mxu0 %v70
    %v3534 = vpop.f32.mrb[0].mxu0
    %v3535 = vadd.f32 0.0, %v3534
    %v3536 = vpop.f32.mrb[0].mxu0
    %3537 = vmatprep.mubr.f32.mxu0 0.0
    %3538 = vmatmul.mubr.f32.gmra.mrb[0].mxu0 %v72
    %v3539 = vpop.f32.mrb[0].mxu0
    %v3540 = vadd.f32 0.0, %v3539
    %v3541 = vpop.f32.mrb[0].mxu0
    %3542 = vmatprep.mubr.f32.mxu0 0.0
    %3543 = vmatmul.mubr.f32.gmra.mrb[0].mxu0 %v73
    %v3544 = vpop.f32.mrb[0].mxu0
    %v3545 = vadd.f32 0.0, %v3544
    %v3546 = vpop.f32.mrb[0].mxu0
    %3547 = vmatprep.mubr.f32.mxu0 0.0
    %3548 = vmatmul.mubr.f32.gmra.mrb[0].mxu0 %v75
    %v3549 = vpop.f32.mrb[0].mxu0
    %v3550 = vadd.f32 0.0, %v3549
    %v3551 = vpop.f32.mrb[0].mxu0
    %3552 = vmatprep.mubr.f32.mxu0 0.0
    %3553 = vmatmul.mubr.f32.gmra.mrb[0].mxu0 %v76
    %v3554 = vpop.f32.mrb[0].mxu0
    %v3555 = vadd.f32 0.0, %v3554
    %v3556 = vpop.f32.mrb[0].mxu0
    %3557 = vmatprep.mubr.f32.mxu0 0.0
    %3558 = vmatmul.mubr.f32.gmra.mrb[0].mxu0 %v78
    %v3559 = vpop.f32.mrb[0].mxu0
    %v3560 = vadd.f32 0.0, %v3559
    %v3561 = vpop.f32.mrb[0].mxu0
    %3562 = vmatprep.mubr.f32.mxu0 0.0
    %3563 = vmatmul.mubr.f32.gmra.mrb[0].mxu0 %v79
    %v3564 = vpop.f32.mrb[0].mxu0
    %v3565 = vadd.f32 0.0, %v3564
    %v3566 = vpop.f32.mrb[0].mxu0
    %3567 = vmatprep.mubr.f32.mxu0 0.0
    %3568 = vmatmul.mubr.f32.gmra.mrb[0].mxu0 %v81
    %v3569 = vpop.f32.mrb[0].mxu0
    %v3570 = vadd.f32 0.0, %v3569
    %v3571 = vpop.f32.mrb[0].mxu0
    %3572 = vmatprep.mubr.f32.mxu0 0.0
    %3573 = vmatmul.mubr.f32.gmra.mrb[0].mxu0 %v82
    %v3574 = vpop.f32.mrb[0].mxu0
    %v3575 = vadd.f32 0.0, %v3574
    %v3576 = vpop.f32.mrb[0].mxu0
    %3577 = vmatprep.mubr.f32.mxu0 0.0
    %3578 = vmatmul.mubr.f32.gmra.mrb[0].mxu0 %v84
    %v3579 = vpop.f32.mrb[0].mxu0
    %v3580 = vadd.f32 0.0, %v3579
    %v3581 = vpop.f32.mrb[0].mxu0
    %3582 = vmatprep.mubr.f32.mxu0 0.0
    %3583 = vmatmul.mubr.f32.gmra.mrb[0].mxu0 %v85
    %v3584 = vpop.f32.mrb[0].mxu0
    %v3585 = vadd.f32 0.0, %v3584
    %v3586 = vpop.f32.mrb[0].mxu0
    %3587 = vmatprep.mubr.f32.mxu0 0.0
    %3588 = vmatmul.mubr.f32.gmra.mrb[0].mxu0 %v87
    %v3589 = vpop.f32.mrb[0].mxu0
    %v3590 = vadd.f32 0.0, %v3589
    %v3591 = vpop.f32.mrb[0].mxu0
    %3592 = vmatprep.mubr.f32.mxu0 0.0
    %3593 = vmatmul.mubr.f32.gmra.mrb[0].mxu0 %v88
    %v3594 = vpop.f32.mrb[0].mxu0
    %v3595 = vadd.f32 0.0, %v3594
    %v3596 = vpop.f32.mrb[0].mxu0
    %3597 = vmatprep.mubr.f32.mxu0 0.0
    %3598 = vmatmul.mubr.f32.gmra.mrb[0].mxu0 %v90
    %v3599 = vpop.f32.mrb[0].mxu0
    %v3600 = vadd.f32 0.0, %v3599
    %v3601 = vpop.f32.mrb[0].mxu0
    %3602 = vmatprep.mubr.f32.mxu0 0.0
    %3603 = vmatmul.mubr.f32.gmra.mrb[0].mxu0 %v91
    %v3604 = vpop.f32.mrb[0].mxu0
    %v3605 = vadd.f32 0.0, %v3604
    %v3606 = vpop.f32.mrb[0].mxu0
    %3607 = vmatprep.mubr.f32.mxu0 0.0
    %3608 = vmatmul.mubr.f32.gmra.mrb[0].mxu0 %v93
    %v3609 = vpop.f32.mrb[0].mxu0
    %v3610 = vadd.f32 0.0, %v3609
    %v3611 = vpop.f32.mrb[0].mxu0
    %3612 = vmatprep.mubr.f32.mxu0 0.0
    %3613 = vmatmul.mubr.f32.gmra.mrb[0].mxu0 %v94
    %v3614 = vpop.f32.mrb[0].mxu0
    %v3615 = vadd.f32 0.0, %v3614
    %v3616 = vpop.f32.mrb[0].mxu0
    %3617 = vmatprep.mubr.f32.mxu0 0.0
    %3618 = vmatmul.mubr.f32.gmra.mrb[0].mxu0 %v96
    %v3619 = vpop.f32.mrb[0].mxu0
    %v3620 = vadd.f32 0.0, %v3619
    %v3621 = vpop.f32.mrb[0].mxu0
    %3622 = vmatprep.mubr.f32.mxu0 0.0
    %3623 = vmatmul.mubr.f32.gmra.mrb[0].mxu0 %v97
    %v3624 = vpop.f32.mrb[0].mxu0
    %v3625 = vadd.f32 0.0, %v3624
    %v3626 = vpop.f32.mrb[0].mxu0
    %3627 = vmatprep.mubr.f32.mxu0 0.0
    %3628 = vmatmul.mubr.f32.gmra.mrb[0].mxu0 %v99
    %v3629 = vpop.f32.mrb[0].mxu0
    %v3630 = vadd.f32 0.0, %v3629
    %v3631 = vpop.f32.mrb[0].mxu0
    %3632 = vmatprep.mubr.f32.mxu0 0.0
    %3633 = vmatmul.mubr.f32.gmra.mrb[0].mxu0 %v100
    %v3634 = vpop.f32.mrb[0].mxu0
    %v3635 = vadd.f32 0.0, %v3634
    %v3636 = vpop.f32.mrb[0].mxu0
    %3637 = vmatprep.mubr.f32.mxu0 0.0
    %3638 = vmatmul.mubr.f32.gmra.mrb[0].mxu0 %v102
    %v3639 = vpop.f32.mrb[0].mxu0
    %v3640 = vadd.f32 0.0, %v3639
    %v3641 = vpop.f32.mrb[0].mxu0
    %3642 = vmatprep.mubr.f32.mxu0 0.0
    %3643 = vmatmul.mubr.f32.gmra.mrb[0].mxu0 %v103
    %v3644 = vpop.f32.mrb[0].mxu0
    %v3645 = vadd.f32 0.0, %v3644
    %v3646 = vpop.f32.mrb[0].mxu0
    %3647 = vmatprep.mubr.f32.mxu0 0.0
    %3648 = vmatmul.mubr.f32.gmra.mrb[0].mxu0 %v111
    %v3649 = vpop.f32.mrb[0].mxu0
    %v3650 = vadd.f32 0.0, %v3649
    %v3651 = vpop.f32.mrb[0].mxu0
    %3652 = vmatprep.mubr.f32.mxu0 0.0
    %3653 = vmatmul.mubr.f32.gmra.mrb[0].mxu0 %v112
    %v3654 = vpop.f32.mrb[0].mxu0
    %v3655 = vadd.f32 0.0, %v3654
    %v3656 = vpop.f32.mrb[0].mxu0
    %3657 = vmatprep.mubr.f32.mxu0 0.0
    %3658 = vmatmul.mubr.f32.gmra.mrb[0].mxu0 %v114
    %v3659 = vpop.f32.mrb[0].mxu0
    %v3660 = vadd.f32 0.0, %v3659
    %v3661 = vpop.f32.mrb[0].mxu0
    %3662 = vmatprep.mubr.f32.mxu0 0.0
    %3663 = vmatmul.mubr.f32.gmra.mrb[0].mxu0 %v115
    %v3664 = vpop.f32.mrb[0].mxu0
    %v3665 = vadd.f32 0.0, %v3664
    %v3666 = vpop.f32.mrb[0].mxu0
    %3667 = vmatprep.mubr.f32.mxu0 0.0
    %3668 = vmatmul.mubr.f32.gmra.mrb[0].mxu0 %v117
    %v3669 = vpop.f32.mrb[0].mxu0
    %v3670 = vadd.f32 0.0, %v3669
    %v3671 = vpop.f32.mrb[0].mxu0
    %3672 = vmatprep.mubr.f32.mxu0 0.0
    %3673 = vmatmul.mubr.f32.gmra.mrb[0].mxu0 %v118
    %v3674 = vpop.f32.mrb[0].mxu0
    %v3675 = vadd.f32 0.0, %v3674
    %v3676 = vpop.f32.mrb[0].mxu0
    %3677 = vmatprep.mubr.f32.mxu0 0.0
    %3678 = vmatmul.mubr.f32.gmra.mrb[0].mxu0 %v120
    %v3679 = vpop.f32.mrb[0].mxu0
    %v3680 = vadd.f32 0.0, %v3679
    %v3681 = vpop.f32.mrb[0].mxu0
    %3682 = vmatprep.mubr.f32.mxu0 0.0
    %3683 = vmatmul.mubr.f32.gmra.mrb[0].mxu0 %v121
    %v3684 = vpop.f32.mrb[0].mxu0
    %v3685 = vadd.f32 0.0, %v3684
    %v3686 = vpop.f32.mrb[0].mxu0
    %3687 = vmatprep.mubr.f32.mxu0 0.0
    %3688 = vmatmul.mubr.f32.gmra.mrb[0].mxu0 %v123
    %v3689 = vpop.f32.mrb[0].mxu0
    %v3690 = vadd.f32 0.0, %v3689
    %v3691 = vpop.f32.mrb[0].mxu0
    %3692 = vmatprep.mubr.f32.mxu0 0.0
    %3693 = vmatmul.mubr.f32.gmra.mrb[0].mxu0 %v124
    %v3694 = vpop.f32.mrb[0].mxu0
    %v3695 = vadd.f32 0.0, %v3694
    %v3696 = vpop.f32.mrb[0].mxu0
    %3697 = vmatprep.mubr.f32.mxu0 0.0
    %3698 = vmatmul.mubr.f32.gmra.mrb[0].mxu0 %v126
    %v3699 = vpop.f32.mrb[0].mxu0
    %v3700 = vadd.f32 0.0, %v3699
    %v3701 = vpop.f32.mrb[0].mxu0
    %3702 = vmatprep.mubr.f32.mxu0 0.0
    %3703 = vmatmul.mubr.f32.gmra.mrb[0].mxu0 %v127
    %v3704 = vpop.f32.mrb[0].mxu0
    %v3705 = vadd.f32 0.0, %v3704
    %v3706 = vpop.f32.mrb[0].mxu0
    %3707 = vmatprep.mubr.f32.mxu0 0.0
    %3708 = vmatmul.mubr.f32.gmra.mrb[0].mxu0 %v129
    %v3709 = vpop.f32.mrb[0].mxu0
    %v3710 = vadd.f32 0.0, %v3709
    %v3711 = vpop.f32.mrb[0].mxu0
    %3712 = vmatprep.mubr.f32.mxu0 0.0
    %3713 = vmatmul.mubr.f32.gmra.mrb[0].mxu0 %v130
    %v3714 = vpop.f32.mrb[0].mxu0
    %v3715 = vadd.f32 0.0, %v3714
    %v3716 = vpop.f32.mrb[0].mxu0
    %3717 = vmatprep.mubr.f32.mxu0 0.0
    %3718 = vmatmul.mubr.f32.gmra.mrb[0].mxu0 %v132
    %v3719 = vpop.f32.mrb[0].mxu0
    %v3720 = vadd.f32 0.0, %v3719
    %v3721 = vpop.f32.mrb[0].mxu0
    %3722 = vmatprep.mubr.f32.mxu0 0.0
    %3723 = vmatmul.mubr.f32.gmra.mrb[0].mxu0 %v133
    %v3724 = vpop.f32.mrb[0].mxu0
    %v3725 = vadd.f32 0.0, %v3724
    %v3726 = vpop.f32.mrb[0].mxu0
    %3727 = vmatprep.mubr.f32.mxu0 0.0
    %3728 = vmatmul.mubr.f32.gmra.mrb[0].mxu0 %v135
    %v3729 = vpop.f32.mrb[0].mxu0
    %v3730 = vadd.f32 0.0, %v3729
    %v3731 = vpop.f32.mrb[0].mxu0
    %3732 = vmatprep.mubr.f32.mxu0 0.0
    %3733 = vmatmul.mubr.f32.gmra.mrb[0].mxu0 %v136
    %v3734 = vpop.f32.mrb[0].mxu0
    %v3735 = vadd.f32 0.0, %v3734
    %v3736 = vpop.f32.mrb[0].mxu0
    %3737 = vmatprep.mubr.f32.mxu0 0.0
    %3738 = vmatmul.mubr.f32.gmra.mrb[0].mxu0 %v138
    %v3739 = vpop.f32.mrb[0].mxu0
    %v3740 = vadd.f32 0.0, %v3739
    %v3741 = vpop.f32.mrb[0].mxu0
    %3742 = vmatprep.mubr.f32.mxu0 0.0
    %3743 = vmatmul.mubr.f32.gmra.mrb[0].mxu0 %v139
    %v3744 = vpop.f32.mrb[0].mxu0
    %v3745 = vadd.f32 0.0, %v3744
    %v3746 = vpop.f32.mrb[0].mxu0
    %3747 = vmatprep.mubr.f32.mxu0 0.0
    %3748 = vmatmul.mubr.f32.gmra.mrb[0].mxu0 %v141
    %v3749 = vpop.f32.mrb[0].mxu0
    %v3750 = vadd.f32 0.0, %v3749
    %v3751 = vpop.f32.mrb[0].mxu0
    %3752 = vmatprep.mubr.f32.mxu0 0.0
    %3753 = vmatmul.mubr.f32.gmra.mrb[0].mxu0 %v142
    %v3754 = vpop.f32.mrb[0].mxu0
    %v3755 = vadd.f32 0.0, %v3754
    %v3756 = vpop.f32.mrb[0].mxu0
    %3757 = vmatprep.mubr.f32.mxu0 0.0
    %3758 = vmatmul.mubr.f32.gmra.mrb[0].mxu0 %v144
    %v3759 = vpop.f32.mrb[0].mxu0
    %v3760 = vadd.f32 0.0, %v3759
    %v3761 = vpop.f32.mrb[0].mxu0
    %3762 = vmatprep.mubr.f32.mxu0 0.0
    %3763 = vmatmul.mubr.f32.gmra.mrb[0].mxu0 %v145
    %v3764 = vpop.f32.mrb[0].mxu0
    %v3765 = vadd.f32 0.0, %v3764
    %v3766 = vpop.f32.mrb[0].mxu0
    %3767 = vmatprep.mubr.f32.mxu0 0.0
    %3768 = vmatmul.mubr.f32.gmra.mrb[0].mxu0 %v147
    %v3769 = vpop.f32.mrb[0].mxu0
    %v3770 = vadd.f32 0.0, %v3769
    %v3771 = vpop.f32.mrb[0].mxu0
    %3772 = vmatprep.mubr.f32.mxu0 0.0
    %3773 = vmatmul.mubr.f32.gmra.mrb[0].mxu0 %v148
    %v3774 = vpop.f32.mrb[0].mxu0
    %v3775 = vadd.f32 0.0, %v3774
    %v3776 = vpop.f32.mrb[0].mxu0
    %3777 = vmatprep.mubr.f32.mxu0 0.0
    %3778 = vmatmul.mubr.f32.gmra.mrb[0].mxu0 %v150
    %v3779 = vpop.f32.mrb[0].mxu0
    %v3780 = vadd.f32 0.0, %v3779
    %v3781 = vpop.f32.mrb[0].mxu0
    %3782 = vmatprep.mubr.f32.mxu0 0.0
    %3783 = vmatmul.mubr.f32.gmra.mrb[0].mxu0 %v151
    %v3784 = vpop.f32.mrb[0].mxu0
    %v3785 = vadd.f32 0.0, %v3784
    %v3786 = vpop.f32.mrb[0].mxu0
    %3787 = vmatprep.mubr.f32.mxu0 0.0
    %3788 = vmatmul.mubr.f32.gmra.mrb[0].mxu0 %v153
    %v3789 = vpop.f32.mrb[0].mxu0
    %v3790 = vadd.f32 0.0, %v3789
    %v3791 = vpop.f32.mrb[0].mxu0
    %3792 = vmatprep.mubr.f32.mxu0 0.0
    %3793 = vmatmul.mubr.f32.gmra.mrb[0].mxu0 %v154
    %v3794 = vpop.f32.mrb[0].mxu0
    %v3795 = vadd.f32 0.0, %v3794
    %v3796 = vpop.f32.mrb[0].mxu0
    %3797 = vmatprep.mubr.f32.mxu0 0.0
    %3798 = vmatmul.mubr.f32.gmra.mrb[0].mxu0 %v156
    %v3799 = vpop.f32.mrb[0].mxu0
    %v3800 = vadd.f32 0.0, %v3799
    %v3801 = vpop.f32.mrb[0].mxu0
    %3802 = vmatprep.mubr.f32.mxu0 0.0
    %3803 = vmatmul.mubr.f32.gmra.mrb[0].mxu0 %v157
    %v3804 = vpop.f32.mrb[0].mxu0
    %v3805 = vadd.f32 0.0, %v3804
    %v3806 = vpop.f32.mrb[0].mxu0
    %3807 = vdwg.mxu0
    %v3808 = vadd.f32 %v3342, %v3490
    %v3809 = vadd.f32 %v3343, %v3495
    %v3810 = vadd.f32 %v3344, %v3500
    %v3811 = vadd.f32 %v3345, %v3505
    %v3812 = vadd.f32 %v3346, %v3510
    %v3813 = vadd.f32 %v3347, %v3515
    %v3814 = vadd.f32 %v3348, %v3520
    %v3815 = vadd.f32 %v3349, %v3525
    %v3816 = vadd.f32 %v3350, %v3530
    %v3817 = vadd.f32 %v3351, %v3535
    %v3818 = vadd.f32 %v3352, %v3540
    %v3819 = vadd.f32 %v3353, %v3545
    %v3820 = vadd.f32 %v3354, %v3550
    %v3821 = vadd.f32 %v3355, %v3555
    %v3822 = vadd.f32 %v3356, %v3560
    %v3823 = vadd.f32 %v3357, %v3565
    %v3824 = vadd.f32 %v3358, %v3570
    %v3825 = vadd.f32 %v3359, %v3575
    %v3826 = vadd.f32 %v3360, %v3580
    %v3827 = vadd.f32 %v3361, %v3585
    %v3828 = vadd.f32 %v3362, %v3590
    %v3829 = vadd.f32 %v3363, %v3595
    %v3830 = vadd.f32 %v3364, %v3600
    %v3831 = vadd.f32 %v3365, %v3605
    %v3832 = vadd.f32 %v3366, %v3610
    %v3833 = vadd.f32 %v3367, %v3615
    %v3834 = vadd.f32 %v3368, %v3620
    %v3835 = vadd.f32 %v3369, %v3625
    %v3836 = vadd.f32 %v3370, %v3630
    %v3837 = vadd.f32 %v3371, %v3635
    %v3838 = vadd.f32 %v3372, %v3640
    %v3839 = vadd.f32 %v3373, %v3645
    %v3840 = vadd.f32 %v3374, %v3650
    %v3841 = vadd.f32 %v3375, %v3655
    %v3842 = vadd.f32 %v3376, %v3660
    %v3843 = vadd.f32 %v3377, %v3665
    %v3844 = vadd.f32 %v3378, %v3670
    %v3845 = vadd.f32 %v3379, %v3675
    %v3846 = vadd.f32 %v3380, %v3680
    %v3847 = vadd.f32 %v3381, %v3685
    %v3848 = vadd.f32 %v3382, %v3690
    %v3849 = vadd.f32 %v3383, %v3695
    %v3850 = vadd.f32 %v3384, %v3700
    %v3851 = vadd.f32 %v3385, %v3705
    %v3852 = vadd.f32 %v3386, %v3710
    %v3853 = vadd.f32 %v3387, %v3715
    %v3854 = vadd.f32 %v3388, %v3720
    %v3855 = vadd.f32 %v3389, %v3725
    %v3856 = vadd.f32 %v3390, %v3730
    %v3857 = vadd.f32 %v3391, %v3735
    %v3858 = vadd.f32 %v3392, %v3740
    %v3859 = vadd.f32 %v3393, %v3745
    %v3860 = vadd.f32 %v3394, %v3750
    %v3861 = vadd.f32 %v3395, %v3755
    %v3862 = vadd.f32 %v3396, %v3760
    %v3863 = vadd.f32 %v3397, %v3765
    %v3864 = vadd.f32 %v3398, %v3770
    %v3865 = vadd.f32 %v3399, %v3775
    %v3866 = vadd.f32 %v3400, %v3780
    %v3867 = vadd.f32 %v3401, %v3785
    %v3868 = vadd.f32 %v3402, %v3790
    %v3869 = vadd.f32 %v3403, %v3795
    %v3870 = vadd.f32 %v3404, %v3800
    %v3871 = vadd.f32 %v3405, %v3805
    %v3878 = vrot.slane %v102, 1
    %v3879 = vrot.slane %v103, 1
    %v3880 = vsel %vm271, %v3878, %v3879
    %v3881 = vrot.slane %v104, 1
    %v3882 = vsel %vm271, %v3879, %v3881
    %v3883 = vrot.slane %v156, 1
    %v3884 = vrot.slane %v157, 1
    %v3885 = vsel %vm271, %v3883, %v3884
    %v3886 = vrot.slane %v158, 1
    %v3887 = vsel %vm271, %v3884, %v3886
    %s3892 = scalar_lea.vmem %s1, 896
    %v3893 = vld [vmem:[%s3892] sm:$0xff]
    %v3894 = vld [vmem:[%s3892 + $0x8] sm:$0xff]
    %v3895 = vld [vmem:[%s3892 + $0x10] sm:$0xff]
    %v3896 = vld [vmem:[%s3892 + $0x18] sm:$0xff]
    %v3897 = vld [vmem:[%s3892 + $0x20] sm:$0xff]
    %v3898 = vld [vmem:[%s3892 + $0x28] sm:$0xff]
    %v3899 = vld [vmem:[%s3892 + $0x30] sm:$0xff]
    %v3900 = vld [vmem:[%s3892 + $0x38] sm:$0xff]
    %v3901 = vld [vmem:[%s3892 + $0x40] sm:$0xff]
    %v3902 = vld [vmem:[%s3892 + $0x48] sm:$0xff]
    %v3903 = vld [vmem:[%s3892 + $0x50] sm:$0xff]
    %v3904 = vld [vmem:[%s3892 + $0x58] sm:$0xff]
    %v3905 = vld [vmem:[%s3892 + $0x60] sm:$0xff]
    %v3906 = vld [vmem:[%s3892 + $0x68] sm:$0xff]
    %v3907 = vld [vmem:[%s3892 + $0x70] sm:$0xff]
    %v3908 = vld [vmem:[%s3892 + $0x78] sm:$0xff]
    %3909 = vmatprep.subr.mxu0 0.0
    %3910 = vmatpush1.msra.mxu0 %v3893
    %3911 = vmatprep.subr.mxu0 0.0
    %3912 = vmatpush1.msra.mxu0 %v3894
    %3913 = vmatprep.subr.mxu0 0.0
    %3914 = vmatpush1.msra.mxu0 %v3895
    %3915 = vmatprep.subr.mxu0 0.0
    %3916 = vmatpush1.msra.mxu0 %v3896
    %3917 = vmatprep.subr.mxu0 0.0
    %3918 = vmatpush1.msra.mxu0 %v3897
    %3919 = vmatprep.subr.mxu0 0.0
    %3920 = vmatpush1.msra.mxu0 %v3898
    %3921 = vmatprep.subr.mxu0 0.0
    %3922 = vmatpush1.msra.mxu0 %v3899
    %3923 = vmatprep.subr.mxu0 0.0
    %3924 = vmatpush1.msra.mxu0 %v3900
    %3925 = vmatprep.subr.mxu0 0.0
    %3926 = vmatpush1.msra.mxu0 %v3901
    %3927 = vmatprep.subr.mxu0 0.0
    %3928 = vmatpush1.msra.mxu0 %v3902
    %3929 = vmatprep.subr.mxu0 0.0
    %3930 = vmatpush1.msra.mxu0 %v3903
    %3931 = vmatprep.subr.mxu0 0.0
    %3932 = vmatpush1.msra.mxu0 %v3904
    %3933 = vmatprep.subr.mxu0 0.0
    %3934 = vmatpush1.msra.mxu0 %v3905
    %3935 = vmatprep.subr.mxu0 0.0
    %3936 = vmatpush1.msra.mxu0 %v3906
    %3937 = vmatprep.subr.mxu0 0.0
    %3938 = vmatpush1.msra.mxu0 %v3907
    %3939 = vmatprep.subr.mxu0 0.0
    %3940 = vmatpush1.msra.mxu0 %v3908
    %3941 = vmatprep.subr.mxu0 0.0
    %3942 = vmatpush1.msra.mxu0 0.0
    %3943 = vmatprep.subr.mxu0 0.0
    %3944 = vmatpush1.msra.mxu0 0.0
    %3945 = vmatprep.subr.mxu0 0.0
    %3946 = vmatpush1.msra.mxu0 0.0
    %3947 = vmatprep.subr.mxu0 0.0
    %3948 = vmatpush1.msra.mxu0 0.0
    %3949 = vmatprep.subr.mxu0 0.0
    %3950 = vmatpush1.msra.mxu0 0.0
    %3951 = vmatprep.subr.mxu0 0.0
    %3952 = vmatpush1.msra.mxu0 0.0
    %3953 = vmatprep.subr.mxu0 0.0
    %3954 = vmatpush1.msra.mxu0 0.0
    %3955 = vmatprep.subr.mxu0 0.0
    %3956 = vmatpush1.msra.mxu0 0.0
    %3957 = vmatprep.subr.mxu0 0.0
    %3958 = vmatpush1.msra.mxu0 0.0
    %3959 = vmatprep.subr.mxu0 0.0
    %3960 = vmatpush1.msra.mxu0 0.0
    %3961 = vmatprep.subr.mxu0 0.0
    %3962 = vmatpush1.msra.mxu0 0.0
    %3963 = vmatprep.subr.mxu0 0.0
    %3964 = vmatpush1.msra.mxu0 0.0
    %3965 = vmatprep.subr.mxu0 0.0
    %3966 = vmatpush1.msra.mxu0 0.0
    %3967 = vmatprep.subr.mxu0 0.0
    %3968 = vmatpush1.msra.mxu0 0.0
    %3969 = vmatprep.subr.mxu0 0.0
    %3970 = vmatpush1.msra.mxu0 0.0
    %3971 = vmatprep.subr.mxu0 0.0
    %3972 = vmatpush1.msra.mxu0 0.0
    %3973 = vmatprep.mubr.f32.mxu0 0.0
    %3974 = vmatmul.mubr.f32.gmra.mrb[0].mxu0 %v284
    %v3975 = vpop.f32.mrb[0].mxu0
    %v3976 = vadd.f32 0.0, %v3975
    %v3977 = vpop.f32.mrb[0].mxu0
    %3978 = vmatprep.mubr.f32.mxu0 0.0
    %3979 = vmatmul.mubr.f32.gmra.mrb[0].mxu0 %v286
    %v3980 = vpop.f32.mrb[0].mxu0
    %v3981 = vadd.f32 0.0, %v3980
    %v3982 = vpop.f32.mrb[0].mxu0
    %3983 = vmatprep.mubr.f32.mxu0 0.0
    %3984 = vmatmul.mubr.f32.gmra.mrb[0].mxu0 %v289
    %v3985 = vpop.f32.mrb[0].mxu0
    %v3986 = vadd.f32 0.0, %v3985
    %v3987 = vpop.f32.mrb[0].mxu0
    %3988 = vmatprep.mubr.f32.mxu0 0.0
    %3989 = vmatmul.mubr.f32.gmra.mrb[0].mxu0 %v291
    %v3990 = vpop.f32.mrb[0].mxu0
    %v3991 = vadd.f32 0.0, %v3990
    %v3992 = vpop.f32.mrb[0].mxu0
    %3993 = vmatprep.mubr.f32.mxu0 0.0
    %3994 = vmatmul.mubr.f32.gmra.mrb[0].mxu0 %v294
    %v3995 = vpop.f32.mrb[0].mxu0
    %v3996 = vadd.f32 0.0, %v3995
    %v3997 = vpop.f32.mrb[0].mxu0
    %3998 = vmatprep.mubr.f32.mxu0 0.0
    %3999 = vmatmul.mubr.f32.gmra.mrb[0].mxu0 %v296
    %v4000 = vpop.f32.mrb[0].mxu0
    %v4001 = vadd.f32 0.0, %v4000
    %v4002 = vpop.f32.mrb[0].mxu0
    %4003 = vmatprep.mubr.f32.mxu0 0.0
    %4004 = vmatmul.mubr.f32.gmra.mrb[0].mxu0 %v299
    %v4005 = vpop.f32.mrb[0].mxu0
    %v4006 = vadd.f32 0.0, %v4005
    %v4007 = vpop.f32.mrb[0].mxu0
    %4008 = vmatprep.mubr.f32.mxu0 0.0
    %4009 = vmatmul.mubr.f32.gmra.mrb[0].mxu0 %v301
    %v4010 = vpop.f32.mrb[0].mxu0
    %v4011 = vadd.f32 0.0, %v4010
    %v4012 = vpop.f32.mrb[0].mxu0
    %4013 = vmatprep.mubr.f32.mxu0 0.0
    %4014 = vmatmul.mubr.f32.gmra.mrb[0].mxu0 %v304
    %v4015 = vpop.f32.mrb[0].mxu0
    %v4016 = vadd.f32 0.0, %v4015
    %v4017 = vpop.f32.mrb[0].mxu0
    %4018 = vmatprep.mubr.f32.mxu0 0.0
    %4019 = vmatmul.mubr.f32.gmra.mrb[0].mxu0 %v306
    %v4020 = vpop.f32.mrb[0].mxu0
    %v4021 = vadd.f32 0.0, %v4020
    %v4022 = vpop.f32.mrb[0].mxu0
    %4023 = vmatprep.mubr.f32.mxu0 0.0
    %4024 = vmatmul.mubr.f32.gmra.mrb[0].mxu0 %v309
    %v4025 = vpop.f32.mrb[0].mxu0
    %v4026 = vadd.f32 0.0, %v4025
    %v4027 = vpop.f32.mrb[0].mxu0
    %4028 = vmatprep.mubr.f32.mxu0 0.0
    %4029 = vmatmul.mubr.f32.gmra.mrb[0].mxu0 %v311
    %v4030 = vpop.f32.mrb[0].mxu0
    %v4031 = vadd.f32 0.0, %v4030
    %v4032 = vpop.f32.mrb[0].mxu0
    %4033 = vmatprep.mubr.f32.mxu0 0.0
    %4034 = vmatmul.mubr.f32.gmra.mrb[0].mxu0 %v314
    %v4035 = vpop.f32.mrb[0].mxu0
    %v4036 = vadd.f32 0.0, %v4035
    %v4037 = vpop.f32.mrb[0].mxu0
    %4038 = vmatprep.mubr.f32.mxu0 0.0
    %4039 = vmatmul.mubr.f32.gmra.mrb[0].mxu0 %v316
    %v4040 = vpop.f32.mrb[0].mxu0
    %v4041 = vadd.f32 0.0, %v4040
    %v4042 = vpop.f32.mrb[0].mxu0
    %4043 = vmatprep.mubr.f32.mxu0 0.0
    %4044 = vmatmul.mubr.f32.gmra.mrb[0].mxu0 %v319
    %v4045 = vpop.f32.mrb[0].mxu0
    %v4046 = vadd.f32 0.0, %v4045
    %v4047 = vpop.f32.mrb[0].mxu0
    %4048 = vmatprep.mubr.f32.mxu0 0.0
    %4049 = vmatmul.mubr.f32.gmra.mrb[0].mxu0 %v321
    %v4050 = vpop.f32.mrb[0].mxu0
    %v4051 = vadd.f32 0.0, %v4050
    %v4052 = vpop.f32.mrb[0].mxu0
    %4053 = vmatprep.mubr.f32.mxu0 0.0
    %4054 = vmatmul.mubr.f32.gmra.mrb[0].mxu0 %v324
    %v4055 = vpop.f32.mrb[0].mxu0
    %v4056 = vadd.f32 0.0, %v4055
    %v4057 = vpop.f32.mrb[0].mxu0
    %4058 = vmatprep.mubr.f32.mxu0 0.0
    %4059 = vmatmul.mubr.f32.gmra.mrb[0].mxu0 %v326
    %v4060 = vpop.f32.mrb[0].mxu0
    %v4061 = vadd.f32 0.0, %v4060
    %v4062 = vpop.f32.mrb[0].mxu0
    %4063 = vmatprep.mubr.f32.mxu0 0.0
    %4064 = vmatmul.mubr.f32.gmra.mrb[0].mxu0 %v329
    %v4065 = vpop.f32.mrb[0].mxu0
    %v4066 = vadd.f32 0.0, %v4065
    %v4067 = vpop.f32.mrb[0].mxu0
    %4068 = vmatprep.mubr.f32.mxu0 0.0
    %4069 = vmatmul.mubr.f32.gmra.mrb[0].mxu0 %v331
    %v4070 = vpop.f32.mrb[0].mxu0
    %v4071 = vadd.f32 0.0, %v4070
    %v4072 = vpop.f32.mrb[0].mxu0
    %4073 = vmatprep.mubr.f32.mxu0 0.0
    %4074 = vmatmul.mubr.f32.gmra.mrb[0].mxu0 %v334
    %v4075 = vpop.f32.mrb[0].mxu0
    %v4076 = vadd.f32 0.0, %v4075
    %v4077 = vpop.f32.mrb[0].mxu0
    %4078 = vmatprep.mubr.f32.mxu0 0.0
    %4079 = vmatmul.mubr.f32.gmra.mrb[0].mxu0 %v336
    %v4080 = vpop.f32.mrb[0].mxu0
    %v4081 = vadd.f32 0.0, %v4080
    %v4082 = vpop.f32.mrb[0].mxu0
    %4083 = vmatprep.mubr.f32.mxu0 0.0
    %4084 = vmatmul.mubr.f32.gmra.mrb[0].mxu0 %v339
    %v4085 = vpop.f32.mrb[0].mxu0
    %v4086 = vadd.f32 0.0, %v4085
    %v4087 = vpop.f32.mrb[0].mxu0
    %4088 = vmatprep.mubr.f32.mxu0 0.0
    %4089 = vmatmul.mubr.f32.gmra.mrb[0].mxu0 %v341
    %v4090 = vpop.f32.mrb[0].mxu0
    %v4091 = vadd.f32 0.0, %v4090
    %v4092 = vpop.f32.mrb[0].mxu0
    %4093 = vmatprep.mubr.f32.mxu0 0.0
    %4094 = vmatmul.mubr.f32.gmra.mrb[0].mxu0 %v344
    %v4095 = vpop.f32.mrb[0].mxu0
    %v4096 = vadd.f32 0.0, %v4095
    %v4097 = vpop.f32.mrb[0].mxu0
    %4098 = vmatprep.mubr.f32.mxu0 0.0
    %4099 = vmatmul.mubr.f32.gmra.mrb[0].mxu0 %v346
    %v4100 = vpop.f32.mrb[0].mxu0
    %v4101 = vadd.f32 0.0, %v4100
    %v4102 = vpop.f32.mrb[0].mxu0
    %4103 = vmatprep.mubr.f32.mxu0 0.0
    %4104 = vmatmul.mubr.f32.gmra.mrb[0].mxu0 %v349
    %v4105 = vpop.f32.mrb[0].mxu0
    %v4106 = vadd.f32 0.0, %v4105
    %v4107 = vpop.f32.mrb[0].mxu0
    %4108 = vmatprep.mubr.f32.mxu0 0.0
    %4109 = vmatmul.mubr.f32.gmra.mrb[0].mxu0 %v351
    %v4110 = vpop.f32.mrb[0].mxu0
    %v4111 = vadd.f32 0.0, %v4110
    %v4112 = vpop.f32.mrb[0].mxu0
    %4113 = vmatprep.mubr.f32.mxu0 0.0
    %4114 = vmatmul.mubr.f32.gmra.mrb[0].mxu0 %v2448
    %v4115 = vpop.f32.mrb[0].mxu0
    %v4116 = vadd.f32 0.0, %v4115
    %v4117 = vpop.f32.mrb[0].mxu0
    %4118 = vmatprep.mubr.f32.mxu0 0.0
    %4119 = vmatmul.mubr.f32.gmra.mrb[0].mxu0 %v2450
    %v4120 = vpop.f32.mrb[0].mxu0
    %v4121 = vadd.f32 0.0, %v4120
    %v4122 = vpop.f32.mrb[0].mxu0
    %4123 = vmatprep.mubr.f32.mxu0 0.0
    %4124 = vmatmul.mubr.f32.gmra.mrb[0].mxu0 %v3880
    %v4125 = vpop.f32.mrb[0].mxu0
    %v4126 = vadd.f32 0.0, %v4125
    %v4127 = vpop.f32.mrb[0].mxu0
    %4128 = vmatprep.mubr.f32.mxu0 0.0
    %4129 = vmatmul.mubr.f32.gmra.mrb[0].mxu0 %v3882
    %v4130 = vpop.f32.mrb[0].mxu0
    %v4131 = vadd.f32 0.0, %v4130
    %v4132 = vpop.f32.mrb[0].mxu0
    %4133 = vmatprep.mubr.f32.mxu0 0.0
    %4134 = vmatmul.mubr.f32.gmra.mrb[0].mxu0 %v364
    %v4135 = vpop.f32.mrb[0].mxu0
    %v4136 = vadd.f32 0.0, %v4135
    %v4137 = vpop.f32.mrb[0].mxu0
    %4138 = vmatprep.mubr.f32.mxu0 0.0
    %4139 = vmatmul.mubr.f32.gmra.mrb[0].mxu0 %v366
    %v4140 = vpop.f32.mrb[0].mxu0
    %v4141 = vadd.f32 0.0, %v4140
    %v4142 = vpop.f32.mrb[0].mxu0
    %4143 = vmatprep.mubr.f32.mxu0 0.0
    %4144 = vmatmul.mubr.f32.gmra.mrb[0].mxu0 %v369
    %v4145 = vpop.f32.mrb[0].mxu0
    %v4146 = vadd.f32 0.0, %v4145
    %v4147 = vpop.f32.mrb[0].mxu0
    %4148 = vmatprep.mubr.f32.mxu0 0.0
    %4149 = vmatmul.mubr.f32.gmra.mrb[0].mxu0 %v371
    %v4150 = vpop.f32.mrb[0].mxu0
    %v4151 = vadd.f32 0.0, %v4150
    %v4152 = vpop.f32.mrb[0].mxu0
    %4153 = vmatprep.mubr.f32.mxu0 0.0
    %4154 = vmatmul.mubr.f32.gmra.mrb[0].mxu0 %v374
    %v4155 = vpop.f32.mrb[0].mxu0
    %v4156 = vadd.f32 0.0, %v4155
    %v4157 = vpop.f32.mrb[0].mxu0
    %4158 = vmatprep.mubr.f32.mxu0 0.0
    %4159 = vmatmul.mubr.f32.gmra.mrb[0].mxu0 %v376
    %v4160 = vpop.f32.mrb[0].mxu0
    %v4161 = vadd.f32 0.0, %v4160
    %v4162 = vpop.f32.mrb[0].mxu0
    %4163 = vmatprep.mubr.f32.mxu0 0.0
    %4164 = vmatmul.mubr.f32.gmra.mrb[0].mxu0 %v379
    %v4165 = vpop.f32.mrb[0].mxu0
    %v4166 = vadd.f32 0.0, %v4165
    %v4167 = vpop.f32.mrb[0].mxu0
    %4168 = vmatprep.mubr.f32.mxu0 0.0
    %4169 = vmatmul.mubr.f32.gmra.mrb[0].mxu0 %v381
    %v4170 = vpop.f32.mrb[0].mxu0
    %v4171 = vadd.f32 0.0, %v4170
    %v4172 = vpop.f32.mrb[0].mxu0
    %4173 = vmatprep.mubr.f32.mxu0 0.0
    %4174 = vmatmul.mubr.f32.gmra.mrb[0].mxu0 %v384
    %v4175 = vpop.f32.mrb[0].mxu0
    %v4176 = vadd.f32 0.0, %v4175
    %v4177 = vpop.f32.mrb[0].mxu0
    %4178 = vmatprep.mubr.f32.mxu0 0.0
    %4179 = vmatmul.mubr.f32.gmra.mrb[0].mxu0 %v386
    %v4180 = vpop.f32.mrb[0].mxu0
    %v4181 = vadd.f32 0.0, %v4180
    %v4182 = vpop.f32.mrb[0].mxu0
    %4183 = vmatprep.mubr.f32.mxu0 0.0
    %4184 = vmatmul.mubr.f32.gmra.mrb[0].mxu0 %v389
    %v4185 = vpop.f32.mrb[0].mxu0
    %v4186 = vadd.f32 0.0, %v4185
    %v4187 = vpop.f32.mrb[0].mxu0
    %4188 = vmatprep.mubr.f32.mxu0 0.0
    %4189 = vmatmul.mubr.f32.gmra.mrb[0].mxu0 %v391
    %v4190 = vpop.f32.mrb[0].mxu0
    %v4191 = vadd.f32 0.0, %v4190
    %v4192 = vpop.f32.mrb[0].mxu0
    %4193 = vmatprep.mubr.f32.mxu0 0.0
    %4194 = vmatmul.mubr.f32.gmra.mrb[0].mxu0 %v394
    %v4195 = vpop.f32.mrb[0].mxu0
    %v4196 = vadd.f32 0.0, %v4195
    %v4197 = vpop.f32.mrb[0].mxu0
    %4198 = vmatprep.mubr.f32.mxu0 0.0
    %4199 = vmatmul.mubr.f32.gmra.mrb[0].mxu0 %v396
    %v4200 = vpop.f32.mrb[0].mxu0
    %v4201 = vadd.f32 0.0, %v4200
    %v4202 = vpop.f32.mrb[0].mxu0
    %4203 = vmatprep.mubr.f32.mxu0 0.0
    %4204 = vmatmul.mubr.f32.gmra.mrb[0].mxu0 %v399
    %v4205 = vpop.f32.mrb[0].mxu0
    %v4206 = vadd.f32 0.0, %v4205
    %v4207 = vpop.f32.mrb[0].mxu0
    %4208 = vmatprep.mubr.f32.mxu0 0.0
    %4209 = vmatmul.mubr.f32.gmra.mrb[0].mxu0 %v401
    %v4210 = vpop.f32.mrb[0].mxu0
    %v4211 = vadd.f32 0.0, %v4210
    %v4212 = vpop.f32.mrb[0].mxu0
    %4213 = vmatprep.mubr.f32.mxu0 0.0
    %4214 = vmatmul.mubr.f32.gmra.mrb[0].mxu0 %v404
    %v4215 = vpop.f32.mrb[0].mxu0
    %v4216 = vadd.f32 0.0, %v4215
    %v4217 = vpop.f32.mrb[0].mxu0
    %4218 = vmatprep.mubr.f32.mxu0 0.0
    %4219 = vmatmul.mubr.f32.gmra.mrb[0].mxu0 %v406
    %v4220 = vpop.f32.mrb[0].mxu0
    %v4221 = vadd.f32 0.0, %v4220
    %v4222 = vpop.f32.mrb[0].mxu0
    %4223 = vmatprep.mubr.f32.mxu0 0.0
    %4224 = vmatmul.mubr.f32.gmra.mrb[0].mxu0 %v409
    %v4225 = vpop.f32.mrb[0].mxu0
    %v4226 = vadd.f32 0.0, %v4225
    %v4227 = vpop.f32.mrb[0].mxu0
    %4228 = vmatprep.mubr.f32.mxu0 0.0
    %4229 = vmatmul.mubr.f32.gmra.mrb[0].mxu0 %v411
    %v4230 = vpop.f32.mrb[0].mxu0
    %v4231 = vadd.f32 0.0, %v4230
    %v4232 = vpop.f32.mrb[0].mxu0
    %4233 = vmatprep.mubr.f32.mxu0 0.0
    %4234 = vmatmul.mubr.f32.gmra.mrb[0].mxu0 %v414
    %v4235 = vpop.f32.mrb[0].mxu0
    %v4236 = vadd.f32 0.0, %v4235
    %v4237 = vpop.f32.mrb[0].mxu0
    %4238 = vmatprep.mubr.f32.mxu0 0.0
    %4239 = vmatmul.mubr.f32.gmra.mrb[0].mxu0 %v416
    %v4240 = vpop.f32.mrb[0].mxu0
    %v4241 = vadd.f32 0.0, %v4240
    %v4242 = vpop.f32.mrb[0].mxu0
    %4243 = vmatprep.mubr.f32.mxu0 0.0
    %4244 = vmatmul.mubr.f32.gmra.mrb[0].mxu0 %v419
    %v4245 = vpop.f32.mrb[0].mxu0
    %v4246 = vadd.f32 0.0, %v4245
    %v4247 = vpop.f32.mrb[0].mxu0
    %4248 = vmatprep.mubr.f32.mxu0 0.0
    %4249 = vmatmul.mubr.f32.gmra.mrb[0].mxu0 %v421
    %v4250 = vpop.f32.mrb[0].mxu0
    %v4251 = vadd.f32 0.0, %v4250
    %v4252 = vpop.f32.mrb[0].mxu0
    %4253 = vmatprep.mubr.f32.mxu0 0.0
    %4254 = vmatmul.mubr.f32.gmra.mrb[0].mxu0 %v424
    %v4255 = vpop.f32.mrb[0].mxu0
    %v4256 = vadd.f32 0.0, %v4255
    %v4257 = vpop.f32.mrb[0].mxu0
    %4258 = vmatprep.mubr.f32.mxu0 0.0
    %4259 = vmatmul.mubr.f32.gmra.mrb[0].mxu0 %v426
    %v4260 = vpop.f32.mrb[0].mxu0
    %v4261 = vadd.f32 0.0, %v4260
    %v4262 = vpop.f32.mrb[0].mxu0
    %4263 = vmatprep.mubr.f32.mxu0 0.0
    %4264 = vmatmul.mubr.f32.gmra.mrb[0].mxu0 %v429
    %v4265 = vpop.f32.mrb[0].mxu0
    %v4266 = vadd.f32 0.0, %v4265
    %v4267 = vpop.f32.mrb[0].mxu0
    %4268 = vmatprep.mubr.f32.mxu0 0.0
    %4269 = vmatmul.mubr.f32.gmra.mrb[0].mxu0 %v431
    %v4270 = vpop.f32.mrb[0].mxu0
    %v4271 = vadd.f32 0.0, %v4270
    %v4272 = vpop.f32.mrb[0].mxu0
    %4273 = vmatprep.mubr.f32.mxu0 0.0
    %4274 = vmatmul.mubr.f32.gmra.mrb[0].mxu0 %v2453
    %v4275 = vpop.f32.mrb[0].mxu0
    %v4276 = vadd.f32 0.0, %v4275
    %v4277 = vpop.f32.mrb[0].mxu0
    %4278 = vmatprep.mubr.f32.mxu0 0.0
    %4279 = vmatmul.mubr.f32.gmra.mrb[0].mxu0 %v2455
    %v4280 = vpop.f32.mrb[0].mxu0
    %v4281 = vadd.f32 0.0, %v4280
    %v4282 = vpop.f32.mrb[0].mxu0
    %4283 = vmatprep.mubr.f32.mxu0 0.0
    %4284 = vmatmul.mubr.f32.gmra.mrb[0].mxu0 %v3885
    %v4285 = vpop.f32.mrb[0].mxu0
    %v4286 = vadd.f32 0.0, %v4285
    %v4287 = vpop.f32.mrb[0].mxu0
    %4288 = vmatprep.mubr.f32.mxu0 0.0
    %4289 = vmatmul.mubr.f32.gmra.mrb[0].mxu0 %v3887
    %v4290 = vpop.f32.mrb[0].mxu0
    %v4291 = vadd.f32 0.0, %v4290
    %v4292 = vpop.f32.mrb[0].mxu0
    %4293 = vdwg.mxu0
    %v4294 = vadd.f32 %v3808, %v3976
    %v4295 = vadd.f32 %v3809, %v3981
    %v4296 = vadd.f32 %v3810, %v3986
    %v4297 = vadd.f32 %v3811, %v3991
    %v4298 = vadd.f32 %v3812, %v3996
    %v4299 = vadd.f32 %v3813, %v4001
    %v4300 = vadd.f32 %v3814, %v4006
    %v4301 = vadd.f32 %v3815, %v4011
    %v4302 = vadd.f32 %v3816, %v4016
    %v4303 = vadd.f32 %v3817, %v4021
    %v4304 = vadd.f32 %v3818, %v4026
    %v4305 = vadd.f32 %v3819, %v4031
    %v4306 = vadd.f32 %v3820, %v4036
    %v4307 = vadd.f32 %v3821, %v4041
    %v4308 = vadd.f32 %v3822, %v4046
    %v4309 = vadd.f32 %v3823, %v4051
    %v4310 = vadd.f32 %v3824, %v4056
    %v4311 = vadd.f32 %v3825, %v4061
    %v4312 = vadd.f32 %v3826, %v4066
    %v4313 = vadd.f32 %v3827, %v4071
    %v4314 = vadd.f32 %v3828, %v4076
    %v4315 = vadd.f32 %v3829, %v4081
    %v4316 = vadd.f32 %v3830, %v4086
    %v4317 = vadd.f32 %v3831, %v4091
    %v4318 = vadd.f32 %v3832, %v4096
    %v4319 = vadd.f32 %v3833, %v4101
    %v4320 = vadd.f32 %v3834, %v4106
    %v4321 = vadd.f32 %v3835, %v4111
    %v4322 = vadd.f32 %v3836, %v4116
    %v4323 = vadd.f32 %v3837, %v4121
    %v4324 = vadd.f32 %v3838, %v4126
    %v4325 = vadd.f32 %v3839, %v4131
    %v4326 = vadd.f32 %v3840, %v4136
    %v4327 = vadd.f32 %v3841, %v4141
    %v4328 = vadd.f32 %v3842, %v4146
    %v4329 = vadd.f32 %v3843, %v4151
    %v4330 = vadd.f32 %v3844, %v4156
    %v4331 = vadd.f32 %v3845, %v4161
    %v4332 = vadd.f32 %v3846, %v4166
    %v4333 = vadd.f32 %v3847, %v4171
    %v4334 = vadd.f32 %v3848, %v4176
    %v4335 = vadd.f32 %v3849, %v4181
    %v4336 = vadd.f32 %v3850, %v4186
    %v4337 = vadd.f32 %v3851, %v4191
    %v4338 = vadd.f32 %v3852, %v4196
    %v4339 = vadd.f32 %v3853, %v4201
    %v4340 = vadd.f32 %v3854, %v4206
    %v4341 = vadd.f32 %v3855, %v4211
    %v4342 = vadd.f32 %v3856, %v4216
    %v4343 = vadd.f32 %v3857, %v4221
    %v4344 = vadd.f32 %v3858, %v4226
    %v4345 = vadd.f32 %v3859, %v4231
    %v4346 = vadd.f32 %v3860, %v4236
    %v4347 = vadd.f32 %v3861, %v4241
    %v4348 = vadd.f32 %v3862, %v4246
    %v4349 = vadd.f32 %v3863, %v4251
    %v4350 = vadd.f32 %v3864, %v4256
    %v4351 = vadd.f32 %v3865, %v4261
    %v4352 = vadd.f32 %v3866, %v4266
    %v4353 = vadd.f32 %v3867, %v4271
    %v4354 = vadd.f32 %v3868, %v4276
    %v4355 = vadd.f32 %v3869, %v4281
    %v4356 = vadd.f32 %v3870, %v4286
    %v4357 = vadd.f32 %v3871, %v4291
    %v4358 = vrot.slane %v102, 2
    %v4359 = vrot.slane %v103, 2
    %v4360 = vsel %vm1283, %v4358, %v4359
    %v4361 = vrot.slane %v104, 2
    %v4362 = vsel %vm1283, %v4359, %v4361
    %v4363 = vrot.slane %v156, 2
    %v4364 = vrot.slane %v157, 2
    %v4365 = vsel %vm1283, %v4363, %v4364
    %v4366 = vrot.slane %v158, 2
    %v4367 = vsel %vm1283, %v4364, %v4366
    %s4372 = scalar_lea.vmem %s1, 1024
    %v4373 = vld [vmem:[%s4372] sm:$0xff]
    %v4374 = vld [vmem:[%s4372 + $0x8] sm:$0xff]
    %v4375 = vld [vmem:[%s4372 + $0x10] sm:$0xff]
    %v4376 = vld [vmem:[%s4372 + $0x18] sm:$0xff]
    %v4377 = vld [vmem:[%s4372 + $0x20] sm:$0xff]
    %v4378 = vld [vmem:[%s4372 + $0x28] sm:$0xff]
    %v4379 = vld [vmem:[%s4372 + $0x30] sm:$0xff]
    %v4380 = vld [vmem:[%s4372 + $0x38] sm:$0xff]
    %v4381 = vld [vmem:[%s4372 + $0x40] sm:$0xff]
    %v4382 = vld [vmem:[%s4372 + $0x48] sm:$0xff]
    %v4383 = vld [vmem:[%s4372 + $0x50] sm:$0xff]
    %v4384 = vld [vmem:[%s4372 + $0x58] sm:$0xff]
    %v4385 = vld [vmem:[%s4372 + $0x60] sm:$0xff]
    %v4386 = vld [vmem:[%s4372 + $0x68] sm:$0xff]
    %v4387 = vld [vmem:[%s4372 + $0x70] sm:$0xff]
    %v4388 = vld [vmem:[%s4372 + $0x78] sm:$0xff]
    %4389 = vmatprep.subr.mxu0 0.0
    %4390 = vmatpush1.msra.mxu0 %v4373
    %4391 = vmatprep.subr.mxu0 0.0
    %4392 = vmatpush1.msra.mxu0 %v4374
    %4393 = vmatprep.subr.mxu0 0.0
    %4394 = vmatpush1.msra.mxu0 %v4375
    %4395 = vmatprep.subr.mxu0 0.0
    %4396 = vmatpush1.msra.mxu0 %v4376
    %4397 = vmatprep.subr.mxu0 0.0
    %4398 = vmatpush1.msra.mxu0 %v4377
    %4399 = vmatprep.subr.mxu0 0.0
    %4400 = vmatpush1.msra.mxu0 %v4378
    %4401 = vmatprep.subr.mxu0 0.0
    %4402 = vmatpush1.msra.mxu0 %v4379
    %4403 = vmatprep.subr.mxu0 0.0
    %4404 = vmatpush1.msra.mxu0 %v4380
    %4405 = vmatprep.subr.mxu0 0.0
    %4406 = vmatpush1.msra.mxu0 %v4381
    %4407 = vmatprep.subr.mxu0 0.0
    %4408 = vmatpush1.msra.mxu0 %v4382
    %4409 = vmatprep.subr.mxu0 0.0
    %4410 = vmatpush1.msra.mxu0 %v4383
    %4411 = vmatprep.subr.mxu0 0.0
    %4412 = vmatpush1.msra.mxu0 %v4384
    %4413 = vmatprep.subr.mxu0 0.0
    %4414 = vmatpush1.msra.mxu0 %v4385
    %4415 = vmatprep.subr.mxu0 0.0
    %4416 = vmatpush1.msra.mxu0 %v4386
    %4417 = vmatprep.subr.mxu0 0.0
    %4418 = vmatpush1.msra.mxu0 %v4387
    %4419 = vmatprep.subr.mxu0 0.0
    %4420 = vmatpush1.msra.mxu0 %v4388
    %4421 = vmatprep.subr.mxu0 0.0
    %4422 = vmatpush1.msra.mxu0 0.0
    %4423 = vmatprep.subr.mxu0 0.0
    %4424 = vmatpush1.msra.mxu0 0.0
    %4425 = vmatprep.subr.mxu0 0.0
    %4426 = vmatpush1.msra.mxu0 0.0
    %4427 = vmatprep.subr.mxu0 0.0
    %4428 = vmatpush1.msra.mxu0 0.0
    %4429 = vmatprep.subr.mxu0 0.0
    %4430 = vmatpush1.msra.mxu0 0.0
    %4431 = vmatprep.subr.mxu0 0.0
    %4432 = vmatpush1.msra.mxu0 0.0
    %4433 = vmatprep.subr.mxu0 0.0
    %4434 = vmatpush1.msra.mxu0 0.0
    %4435 = vmatprep.subr.mxu0 0.0
    %4436 = vmatpush1.msra.mxu0 0.0
    %4437 = vmatprep.subr.mxu0 0.0
    %4438 = vmatpush1.msra.mxu0 0.0
    %4439 = vmatprep.subr.mxu0 0.0
    %4440 = vmatpush1.msra.mxu0 0.0
    %4441 = vmatprep.subr.mxu0 0.0
    %4442 = vmatpush1.msra.mxu0 0.0
    %4443 = vmatprep.subr.mxu0 0.0
    %4444 = vmatpush1.msra.mxu0 0.0
    %4445 = vmatprep.subr.mxu0 0.0
    %4446 = vmatpush1.msra.mxu0 0.0
    %4447 = vmatprep.subr.mxu0 0.0
    %4448 = vmatpush1.msra.mxu0 0.0
    %4449 = vmatprep.subr.mxu0 0.0
    %4450 = vmatpush1.msra.mxu0 0.0
    %4451 = vmatprep.subr.mxu0 0.0
    %4452 = vmatpush1.msra.mxu0 0.0
    %4453 = vmatprep.mubr.f32.mxu0 0.0
    %4454 = vmatmul.mubr.f32.gmra.mrb[0].mxu0 %v1296
    %v4455 = vpop.f32.mrb[0].mxu0
    %v4456 = vadd.f32 0.0, %v4455
    %v4457 = vpop.f32.mrb[0].mxu0
    %4458 = vmatprep.mubr.f32.mxu0 0.0
    %4459 = vmatmul.mubr.f32.gmra.mrb[0].mxu0 %v1298
    %v4460 = vpop.f32.mrb[0].mxu0
    %v4461 = vadd.f32 0.0, %v4460
    %v4462 = vpop.f32.mrb[0].mxu0
    %4463 = vmatprep.mubr.f32.mxu0 0.0
    %4464 = vmatmul.mubr.f32.gmra.mrb[0].mxu0 %v1301
    %v4465 = vpop.f32.mrb[0].mxu0
    %v4466 = vadd.f32 0.0, %v4465
    %v4467 = vpop.f32.mrb[0].mxu0
    %4468 = vmatprep.mubr.f32.mxu0 0.0
    %4469 = vmatmul.mubr.f32.gmra.mrb[0].mxu0 %v1303
    %v4470 = vpop.f32.mrb[0].mxu0
    %v4471 = vadd.f32 0.0, %v4470
    %v4472 = vpop.f32.mrb[0].mxu0
    %4473 = vmatprep.mubr.f32.mxu0 0.0
    %4474 = vmatmul.mubr.f32.gmra.mrb[0].mxu0 %v1306
    %v4475 = vpop.f32.mrb[0].mxu0
    %v4476 = vadd.f32 0.0, %v4475
    %v4477 = vpop.f32.mrb[0].mxu0
    %4478 = vmatprep.mubr.f32.mxu0 0.0
    %4479 = vmatmul.mubr.f32.gmra.mrb[0].mxu0 %v1308
    %v4480 = vpop.f32.mrb[0].mxu0
    %v4481 = vadd.f32 0.0, %v4480
    %v4482 = vpop.f32.mrb[0].mxu0
    %4483 = vmatprep.mubr.f32.mxu0 0.0
    %4484 = vmatmul.mubr.f32.gmra.mrb[0].mxu0 %v1311
    %v4485 = vpop.f32.mrb[0].mxu0
    %v4486 = vadd.f32 0.0, %v4485
    %v4487 = vpop.f32.mrb[0].mxu0
    %4488 = vmatprep.mubr.f32.mxu0 0.0
    %4489 = vmatmul.mubr.f32.gmra.mrb[0].mxu0 %v1313
    %v4490 = vpop.f32.mrb[0].mxu0
    %v4491 = vadd.f32 0.0, %v4490
    %v4492 = vpop.f32.mrb[0].mxu0
    %4493 = vmatprep.mubr.f32.mxu0 0.0
    %4494 = vmatmul.mubr.f32.gmra.mrb[0].mxu0 %v1316
    %v4495 = vpop.f32.mrb[0].mxu0
    %v4496 = vadd.f32 0.0, %v4495
    %v4497 = vpop.f32.mrb[0].mxu0
    %4498 = vmatprep.mubr.f32.mxu0 0.0
    %4499 = vmatmul.mubr.f32.gmra.mrb[0].mxu0 %v1318
    %v4500 = vpop.f32.mrb[0].mxu0
    %v4501 = vadd.f32 0.0, %v4500
    %v4502 = vpop.f32.mrb[0].mxu0
    %4503 = vmatprep.mubr.f32.mxu0 0.0
    %4504 = vmatmul.mubr.f32.gmra.mrb[0].mxu0 %v1321
    %v4505 = vpop.f32.mrb[0].mxu0
    %v4506 = vadd.f32 0.0, %v4505
    %v4507 = vpop.f32.mrb[0].mxu0
    %4508 = vmatprep.mubr.f32.mxu0 0.0
    %4509 = vmatmul.mubr.f32.gmra.mrb[0].mxu0 %v1323
    %v4510 = vpop.f32.mrb[0].mxu0
    %v4511 = vadd.f32 0.0, %v4510
    %v4512 = vpop.f32.mrb[0].mxu0
    %4513 = vmatprep.mubr.f32.mxu0 0.0
    %4514 = vmatmul.mubr.f32.gmra.mrb[0].mxu0 %v1326
    %v4515 = vpop.f32.mrb[0].mxu0
    %v4516 = vadd.f32 0.0, %v4515
    %v4517 = vpop.f32.mrb[0].mxu0
    %4518 = vmatprep.mubr.f32.mxu0 0.0
    %4519 = vmatmul.mubr.f32.gmra.mrb[0].mxu0 %v1328
    %v4520 = vpop.f32.mrb[0].mxu0
    %v4521 = vadd.f32 0.0, %v4520
    %v4522 = vpop.f32.mrb[0].mxu0
    %4523 = vmatprep.mubr.f32.mxu0 0.0
    %4524 = vmatmul.mubr.f32.gmra.mrb[0].mxu0 %v1331
    %v4525 = vpop.f32.mrb[0].mxu0
    %v4526 = vadd.f32 0.0, %v4525
    %v4527 = vpop.f32.mrb[0].mxu0
    %4528 = vmatprep.mubr.f32.mxu0 0.0
    %4529 = vmatmul.mubr.f32.gmra.mrb[0].mxu0 %v1333
    %v4530 = vpop.f32.mrb[0].mxu0
    %v4531 = vadd.f32 0.0, %v4530
    %v4532 = vpop.f32.mrb[0].mxu0
    %4533 = vmatprep.mubr.f32.mxu0 0.0
    %4534 = vmatmul.mubr.f32.gmra.mrb[0].mxu0 %v1336
    %v4535 = vpop.f32.mrb[0].mxu0
    %v4536 = vadd.f32 0.0, %v4535
    %v4537 = vpop.f32.mrb[0].mxu0
    %4538 = vmatprep.mubr.f32.mxu0 0.0
    %4539 = vmatmul.mubr.f32.gmra.mrb[0].mxu0 %v1338
    %v4540 = vpop.f32.mrb[0].mxu0
    %v4541 = vadd.f32 0.0, %v4540
    %v4542 = vpop.f32.mrb[0].mxu0
    %4543 = vmatprep.mubr.f32.mxu0 0.0
    %4544 = vmatmul.mubr.f32.gmra.mrb[0].mxu0 %v1341
    %v4545 = vpop.f32.mrb[0].mxu0
    %v4546 = vadd.f32 0.0, %v4545
    %v4547 = vpop.f32.mrb[0].mxu0
    %4548 = vmatprep.mubr.f32.mxu0 0.0
    %4549 = vmatmul.mubr.f32.gmra.mrb[0].mxu0 %v1343
    %v4550 = vpop.f32.mrb[0].mxu0
    %v4551 = vadd.f32 0.0, %v4550
    %v4552 = vpop.f32.mrb[0].mxu0
    %4553 = vmatprep.mubr.f32.mxu0 0.0
    %4554 = vmatmul.mubr.f32.gmra.mrb[0].mxu0 %v1346
    %v4555 = vpop.f32.mrb[0].mxu0
    %v4556 = vadd.f32 0.0, %v4555
    %v4557 = vpop.f32.mrb[0].mxu0
    %4558 = vmatprep.mubr.f32.mxu0 0.0
    %4559 = vmatmul.mubr.f32.gmra.mrb[0].mxu0 %v1348
    %v4560 = vpop.f32.mrb[0].mxu0
    %v4561 = vadd.f32 0.0, %v4560
    %v4562 = vpop.f32.mrb[0].mxu0
    %4563 = vmatprep.mubr.f32.mxu0 0.0
    %4564 = vmatmul.mubr.f32.gmra.mrb[0].mxu0 %v1351
    %v4565 = vpop.f32.mrb[0].mxu0
    %v4566 = vadd.f32 0.0, %v4565
    %v4567 = vpop.f32.mrb[0].mxu0
    %4568 = vmatprep.mubr.f32.mxu0 0.0
    %4569 = vmatmul.mubr.f32.gmra.mrb[0].mxu0 %v1353
    %v4570 = vpop.f32.mrb[0].mxu0
    %v4571 = vadd.f32 0.0, %v4570
    %v4572 = vpop.f32.mrb[0].mxu0
    %4573 = vmatprep.mubr.f32.mxu0 0.0
    %4574 = vmatmul.mubr.f32.gmra.mrb[0].mxu0 %v1356
    %v4575 = vpop.f32.mrb[0].mxu0
    %v4576 = vadd.f32 0.0, %v4575
    %v4577 = vpop.f32.mrb[0].mxu0
    %4578 = vmatprep.mubr.f32.mxu0 0.0
    %4579 = vmatmul.mubr.f32.gmra.mrb[0].mxu0 %v1358
    %v4580 = vpop.f32.mrb[0].mxu0
    %v4581 = vadd.f32 0.0, %v4580
    %v4582 = vpop.f32.mrb[0].mxu0
    %4583 = vmatprep.mubr.f32.mxu0 0.0
    %4584 = vmatmul.mubr.f32.gmra.mrb[0].mxu0 %v1361
    %v4585 = vpop.f32.mrb[0].mxu0
    %v4586 = vadd.f32 0.0, %v4585
    %v4587 = vpop.f32.mrb[0].mxu0
    %4588 = vmatprep.mubr.f32.mxu0 0.0
    %4589 = vmatmul.mubr.f32.gmra.mrb[0].mxu0 %v1363
    %v4590 = vpop.f32.mrb[0].mxu0
    %v4591 = vadd.f32 0.0, %v4590
    %v4592 = vpop.f32.mrb[0].mxu0
    %4593 = vmatprep.mubr.f32.mxu0 0.0
    %4594 = vmatmul.mubr.f32.gmra.mrb[0].mxu0 %v2928
    %v4595 = vpop.f32.mrb[0].mxu0
    %v4596 = vadd.f32 0.0, %v4595
    %v4597 = vpop.f32.mrb[0].mxu0
    %4598 = vmatprep.mubr.f32.mxu0 0.0
    %4599 = vmatmul.mubr.f32.gmra.mrb[0].mxu0 %v2930
    %v4600 = vpop.f32.mrb[0].mxu0
    %v4601 = vadd.f32 0.0, %v4600
    %v4602 = vpop.f32.mrb[0].mxu0
    %4603 = vmatprep.mubr.f32.mxu0 0.0
    %4604 = vmatmul.mubr.f32.gmra.mrb[0].mxu0 %v4360
    %v4605 = vpop.f32.mrb[0].mxu0
    %v4606 = vadd.f32 0.0, %v4605
    %v4607 = vpop.f32.mrb[0].mxu0
    %4608 = vmatprep.mubr.f32.mxu0 0.0
    %4609 = vmatmul.mubr.f32.gmra.mrb[0].mxu0 %v4362
    %v4610 = vpop.f32.mrb[0].mxu0
    %v4611 = vadd.f32 0.0, %v4610
    %v4612 = vpop.f32.mrb[0].mxu0
    %4613 = vmatprep.mubr.f32.mxu0 0.0
    %4614 = vmatmul.mubr.f32.gmra.mrb[0].mxu0 %v1376
    %v4615 = vpop.f32.mrb[0].mxu0
    %v4616 = vadd.f32 0.0, %v4615
    %v4617 = vpop.f32.mrb[0].mxu0
    %4618 = vmatprep.mubr.f32.mxu0 0.0
    %4619 = vmatmul.mubr.f32.gmra.mrb[0].mxu0 %v1378
    %v4620 = vpop.f32.mrb[0].mxu0
    %v4621 = vadd.f32 0.0, %v4620
    %v4622 = vpop.f32.mrb[0].mxu0
    %4623 = vmatprep.mubr.f32.mxu0 0.0
    %4624 = vmatmul.mubr.f32.gmra.mrb[0].mxu0 %v1381
    %v4625 = vpop.f32.mrb[0].mxu0
    %v4626 = vadd.f32 0.0, %v4625
    %v4627 = vpop.f32.mrb[0].mxu0
    %4628 = vmatprep.mubr.f32.mxu0 0.0
    %4629 = vmatmul.mubr.f32.gmra.mrb[0].mxu0 %v1383
    %v4630 = vpop.f32.mrb[0].mxu0
    %v4631 = vadd.f32 0.0, %v4630
    %v4632 = vpop.f32.mrb[0].mxu0
    %4633 = vmatprep.mubr.f32.mxu0 0.0
    %4634 = vmatmul.mubr.f32.gmra.mrb[0].mxu0 %v1386
    %v4635 = vpop.f32.mrb[0].mxu0
    %v4636 = vadd.f32 0.0, %v4635
    %v4637 = vpop.f32.mrb[0].mxu0
    %4638 = vmatprep.mubr.f32.mxu0 0.0
    %4639 = vmatmul.mubr.f32.gmra.mrb[0].mxu0 %v1388
    %v4640 = vpop.f32.mrb[0].mxu0
    %v4641 = vadd.f32 0.0, %v4640
    %v4642 = vpop.f32.mrb[0].mxu0
    %4643 = vmatprep.mubr.f32.mxu0 0.0
    %4644 = vmatmul.mubr.f32.gmra.mrb[0].mxu0 %v1391
    %v4645 = vpop.f32.mrb[0].mxu0
    %v4646 = vadd.f32 0.0, %v4645
    %v4647 = vpop.f32.mrb[0].mxu0
    %4648 = vmatprep.mubr.f32.mxu0 0.0
    %4649 = vmatmul.mubr.f32.gmra.mrb[0].mxu0 %v1393
    %v4650 = vpop.f32.mrb[0].mxu0
    %v4651 = vadd.f32 0.0, %v4650
    %v4652 = vpop.f32.mrb[0].mxu0
    %4653 = vmatprep.mubr.f32.mxu0 0.0
    %4654 = vmatmul.mubr.f32.gmra.mrb[0].mxu0 %v1396
    %v4655 = vpop.f32.mrb[0].mxu0
    %v4656 = vadd.f32 0.0, %v4655
    %v4657 = vpop.f32.mrb[0].mxu0
    %4658 = vmatprep.mubr.f32.mxu0 0.0
    %4659 = vmatmul.mubr.f32.gmra.mrb[0].mxu0 %v1398
    %v4660 = vpop.f32.mrb[0].mxu0
    %v4661 = vadd.f32 0.0, %v4660
    %v4662 = vpop.f32.mrb[0].mxu0
    %4663 = vmatprep.mubr.f32.mxu0 0.0
    %4664 = vmatmul.mubr.f32.gmra.mrb[0].mxu0 %v1401
    %v4665 = vpop.f32.mrb[0].mxu0
    %v4666 = vadd.f32 0.0, %v4665
    %v4667 = vpop.f32.mrb[0].mxu0
    %4668 = vmatprep.mubr.f32.mxu0 0.0
    %4669 = vmatmul.mubr.f32.gmra.mrb[0].mxu0 %v1403
    %v4670 = vpop.f32.mrb[0].mxu0
    %v4671 = vadd.f32 0.0, %v4670
    %v4672 = vpop.f32.mrb[0].mxu0
    %4673 = vmatprep.mubr.f32.mxu0 0.0
    %4674 = vmatmul.mubr.f32.gmra.mrb[0].mxu0 %v1406
    %v4675 = vpop.f32.mrb[0].mxu0
    %v4676 = vadd.f32 0.0, %v4675
    %v4677 = vpop.f32.mrb[0].mxu0
    %4678 = vmatprep.mubr.f32.mxu0 0.0
    %4679 = vmatmul.mubr.f32.gmra.mrb[0].mxu0 %v1408
    %v4680 = vpop.f32.mrb[0].mxu0
    %v4681 = vadd.f32 0.0, %v4680
    %v4682 = vpop.f32.mrb[0].mxu0
    %4683 = vmatprep.mubr.f32.mxu0 0.0
    %4684 = vmatmul.mubr.f32.gmra.mrb[0].mxu0 %v1411
    %v4685 = vpop.f32.mrb[0].mxu0
    %v4686 = vadd.f32 0.0, %v4685
    %v4687 = vpop.f32.mrb[0].mxu0
    %4688 = vmatprep.mubr.f32.mxu0 0.0
    %4689 = vmatmul.mubr.f32.gmra.mrb[0].mxu0 %v1413
    %v4690 = vpop.f32.mrb[0].mxu0
    %v4691 = vadd.f32 0.0, %v4690
    %v4692 = vpop.f32.mrb[0].mxu0
    %4693 = vmatprep.mubr.f32.mxu0 0.0
    %4694 = vmatmul.mubr.f32.gmra.mrb[0].mxu0 %v1416
    %v4695 = vpop.f32.mrb[0].mxu0
    %v4696 = vadd.f32 0.0, %v4695
    %v4697 = vpop.f32.mrb[0].mxu0
    %4698 = vmatprep.mubr.f32.mxu0 0.0
    %4699 = vmatmul.mubr.f32.gmra.mrb[0].mxu0 %v1418
    %v4700 = vpop.f32.mrb[0].mxu0
    %v4701 = vadd.f32 0.0, %v4700
    %v4702 = vpop.f32.mrb[0].mxu0
    %4703 = vmatprep.mubr.f32.mxu0 0.0
    %4704 = vmatmul.mubr.f32.gmra.mrb[0].mxu0 %v1421
    %v4705 = vpop.f32.mrb[0].mxu0
    %v4706 = vadd.f32 0.0, %v4705
    %v4707 = vpop.f32.mrb[0].mxu0
    %4708 = vmatprep.mubr.f32.mxu0 0.0
    %4709 = vmatmul.mubr.f32.gmra.mrb[0].mxu0 %v1423
    %v4710 = vpop.f32.mrb[0].mxu0
    %v4711 = vadd.f32 0.0, %v4710
    %v4712 = vpop.f32.mrb[0].mxu0
    %4713 = vmatprep.mubr.f32.mxu0 0.0
    %4714 = vmatmul.mubr.f32.gmra.mrb[0].mxu0 %v1426
    %v4715 = vpop.f32.mrb[0].mxu0
    %v4716 = vadd.f32 0.0, %v4715
    %v4717 = vpop.f32.mrb[0].mxu0
    %4718 = vmatprep.mubr.f32.mxu0 0.0
    %4719 = vmatmul.mubr.f32.gmra.mrb[0].mxu0 %v1428
    %v4720 = vpop.f32.mrb[0].mxu0
    %v4721 = vadd.f32 0.0, %v4720
    %v4722 = vpop.f32.mrb[0].mxu0
    %4723 = vmatprep.mubr.f32.mxu0 0.0
    %4724 = vmatmul.mubr.f32.gmra.mrb[0].mxu0 %v1431
    %v4725 = vpop.f32.mrb[0].mxu0
    %v4726 = vadd.f32 0.0, %v4725
    %v4727 = vpop.f32.mrb[0].mxu0
    %4728 = vmatprep.mubr.f32.mxu0 0.0
    %4729 = vmatmul.mubr.f32.gmra.mrb[0].mxu0 %v1433
    %v4730 = vpop.f32.mrb[0].mxu0
    %v4731 = vadd.f32 0.0, %v4730
    %v4732 = vpop.f32.mrb[0].mxu0
    %4733 = vmatprep.mubr.f32.mxu0 0.0
    %4734 = vmatmul.mubr.f32.gmra.mrb[0].mxu0 %v1436
    %v4735 = vpop.f32.mrb[0].mxu0
    %v4736 = vadd.f32 0.0, %v4735
    %v4737 = vpop.f32.mrb[0].mxu0
    %4738 = vmatprep.mubr.f32.mxu0 0.0
    %4739 = vmatmul.mubr.f32.gmra.mrb[0].mxu0 %v1438
    %v4740 = vpop.f32.mrb[0].mxu0
    %v4741 = vadd.f32 0.0, %v4740
    %v4742 = vpop.f32.mrb[0].mxu0
    %4743 = vmatprep.mubr.f32.mxu0 0.0
    %4744 = vmatmul.mubr.f32.gmra.mrb[0].mxu0 %v1441
    %v4745 = vpop.f32.mrb[0].mxu0
    %v4746 = vadd.f32 0.0, %v4745
    %v4747 = vpop.f32.mrb[0].mxu0
    %4748 = vmatprep.mubr.f32.mxu0 0.0
    %4749 = vmatmul.mubr.f32.gmra.mrb[0].mxu0 %v1443
    %v4750 = vpop.f32.mrb[0].mxu0
    %v4751 = vadd.f32 0.0, %v4750
    %v4752 = vpop.f32.mrb[0].mxu0
    %4753 = vmatprep.mubr.f32.mxu0 0.0
    %4754 = vmatmul.mubr.f32.gmra.mrb[0].mxu0 %v2933
    %v4755 = vpop.f32.mrb[0].mxu0
    %v4756 = vadd.f32 0.0, %v4755
    %v4757 = vpop.f32.mrb[0].mxu0
    %4758 = vmatprep.mubr.f32.mxu0 0.0
    %4759 = vmatmul.mubr.f32.gmra.mrb[0].mxu0 %v2935
    %v4760 = vpop.f32.mrb[0].mxu0
    %v4761 = vadd.f32 0.0, %v4760
    %v4762 = vpop.f32.mrb[0].mxu0
    %4763 = vmatprep.mubr.f32.mxu0 0.0
    %4764 = vmatmul.mubr.f32.gmra.mrb[0].mxu0 %v4365
    %v4765 = vpop.f32.mrb[0].mxu0
    %v4766 = vadd.f32 0.0, %v4765
    %v4767 = vpop.f32.mrb[0].mxu0
    %4768 = vmatprep.mubr.f32.mxu0 0.0
    %4769 = vmatmul.mubr.f32.gmra.mrb[0].mxu0 %v4367
    %v4770 = vpop.f32.mrb[0].mxu0
    %v4771 = vadd.f32 0.0, %v4770
    %v4772 = vpop.f32.mrb[0].mxu0
    %4773 = vdwg.mxu0
    %v4774 = vadd.f32 %v4294, %v4456
    %v4775 = vadd.f32 %v4295, %v4461
    %v4776 = vadd.f32 %v4296, %v4466
    %v4777 = vadd.f32 %v4297, %v4471
    %v4778 = vadd.f32 %v4298, %v4476
    %v4779 = vadd.f32 %v4299, %v4481
    %v4780 = vadd.f32 %v4300, %v4486
    %v4781 = vadd.f32 %v4301, %v4491
    %v4782 = vadd.f32 %v4302, %v4496
    %v4783 = vadd.f32 %v4303, %v4501
    %v4784 = vadd.f32 %v4304, %v4506
    %v4785 = vadd.f32 %v4305, %v4511
    %v4786 = vadd.f32 %v4306, %v4516
    %v4787 = vadd.f32 %v4307, %v4521
    %v4788 = vadd.f32 %v4308, %v4526
    %v4789 = vadd.f32 %v4309, %v4531
    %v4790 = vadd.f32 %v4310, %v4536
    %v4791 = vadd.f32 %v4311, %v4541
    %v4792 = vadd.f32 %v4312, %v4546
    %v4793 = vadd.f32 %v4313, %v4551
    %v4794 = vadd.f32 %v4314, %v4556
    %v4795 = vadd.f32 %v4315, %v4561
    %v4796 = vadd.f32 %v4316, %v4566
    %v4797 = vadd.f32 %v4317, %v4571
    %v4798 = vadd.f32 %v4318, %v4576
    %v4799 = vadd.f32 %v4319, %v4581
    %v4800 = vadd.f32 %v4320, %v4586
    %v4801 = vadd.f32 %v4321, %v4591
    %v4802 = vadd.f32 %v4322, %v4596
    %v4803 = vadd.f32 %v4323, %v4601
    %v4804 = vadd.f32 %v4324, %v4606
    %v4805 = vadd.f32 %v4325, %v4611
    %v4806 = vadd.f32 %v4326, %v4616
    %v4807 = vadd.f32 %v4327, %v4621
    %v4808 = vadd.f32 %v4328, %v4626
    %v4809 = vadd.f32 %v4329, %v4631
    %v4810 = vadd.f32 %v4330, %v4636
    %v4811 = vadd.f32 %v4331, %v4641
    %v4812 = vadd.f32 %v4332, %v4646
    %v4813 = vadd.f32 %v4333, %v4651
    %v4814 = vadd.f32 %v4334, %v4656
    %v4815 = vadd.f32 %v4335, %v4661
    %v4816 = vadd.f32 %v4336, %v4666
    %v4817 = vadd.f32 %v4337, %v4671
    %v4818 = vadd.f32 %v4338, %v4676
    %v4819 = vadd.f32 %v4339, %v4681
    %v4820 = vadd.f32 %v4340, %v4686
    %v4821 = vadd.f32 %v4341, %v4691
    %v4822 = vadd.f32 %v4342, %v4696
    %v4823 = vadd.f32 %v4343, %v4701
    %v4824 = vadd.f32 %v4344, %v4706
    %v4825 = vadd.f32 %v4345, %v4711
    %v4826 = vadd.f32 %v4346, %v4716
    %v4827 = vadd.f32 %v4347, %v4721
    %v4828 = vadd.f32 %v4348, %v4726
    %v4829 = vadd.f32 %v4349, %v4731
    %v4830 = vadd.f32 %v4350, %v4736
    %v4831 = vadd.f32 %v4351, %v4741
    %v4832 = vadd.f32 %v4352, %v4746
    %v4833 = vadd.f32 %v4353, %v4751
    %v4834 = vadd.f32 %v4354, %v4756
    %v4835 = vadd.f32 %v4355, %v4761
    %v4836 = vadd.f32 %v4356, %v4766
    %v4837 = vadd.f32 %v4357, %v4771
    %v4838 = vld [vmem:[%s2] sm:$0x1]
    %v4840 = vlaneseq
    %v4841 = vshrl.u32 %v4840, 7
    %v4842 = vsub.s32 0, %v4841
    %v4843 = vrot.slane %v4838, %v4842
    %v4845 = vadd.f32 %v4774, %v4843
    %v4846 = vadd.f32 %v4775, %v4843
    %v4847 = vadd.f32 %v4776, %v4843
    %v4848 = vadd.f32 %v4777, %v4843
    %v4849 = vadd.f32 %v4778, %v4843
    %v4850 = vadd.f32 %v4779, %v4843
    %v4851 = vadd.f32 %v4780, %v4843
    %v4852 = vadd.f32 %v4781, %v4843
    %v4853 = vadd.f32 %v4782, %v4843
    %v4854 = vadd.f32 %v4783, %v4843
    %v4855 = vadd.f32 %v4784, %v4843
    %v4856 = vadd.f32 %v4785, %v4843
    %v4857 = vadd.f32 %v4786, %v4843
    %v4858 = vadd.f32 %v4787, %v4843
    %v4859 = vadd.f32 %v4788, %v4843
    %v4860 = vadd.f32 %v4789, %v4843
    %v4861 = vadd.f32 %v4790, %v4843
    %v4862 = vadd.f32 %v4791, %v4843
    %v4863 = vadd.f32 %v4792, %v4843
    %v4864 = vadd.f32 %v4793, %v4843
    %v4865 = vadd.f32 %v4794, %v4843
    %v4866 = vadd.f32 %v4795, %v4843
    %v4867 = vadd.f32 %v4796, %v4843
    %v4868 = vadd.f32 %v4797, %v4843
    %v4869 = vadd.f32 %v4798, %v4843
    %v4870 = vadd.f32 %v4799, %v4843
    %v4871 = vadd.f32 %v4800, %v4843
    %v4872 = vadd.f32 %v4801, %v4843
    %v4873 = vadd.f32 %v4802, %v4843
    %v4874 = vadd.f32 %v4803, %v4843
    %v4875 = vadd.f32 %v4804, %v4843
    %v4876 = vadd.f32 %v4805, %v4843
    %v4877 = vadd.f32 %v4806, %v4843
    %v4878 = vadd.f32 %v4807, %v4843
    %v4879 = vadd.f32 %v4808, %v4843
    %v4880 = vadd.f32 %v4809, %v4843
    %v4881 = vadd.f32 %v4810, %v4843
    %v4882 = vadd.f32 %v4811, %v4843
    %v4883 = vadd.f32 %v4812, %v4843
    %v4884 = vadd.f32 %v4813, %v4843
    %v4885 = vadd.f32 %v4814, %v4843
    %v4886 = vadd.f32 %v4815, %v4843
    %v4887 = vadd.f32 %v4816, %v4843
    %v4888 = vadd.f32 %v4817, %v4843
    %v4889 = vadd.f32 %v4818, %v4843
    %v4890 = vadd.f32 %v4819, %v4843
    %v4891 = vadd.f32 %v4820, %v4843
    %v4892 = vadd.f32 %v4821, %v4843
    %v4893 = vadd.f32 %v4822, %v4843
    %v4894 = vadd.f32 %v4823, %v4843
    %v4895 = vadd.f32 %v4824, %v4843
    %v4896 = vadd.f32 %v4825, %v4843
    %v4897 = vadd.f32 %v4826, %v4843
    %v4898 = vadd.f32 %v4827, %v4843
    %v4899 = vadd.f32 %v4828, %v4843
    %v4900 = vadd.f32 %v4829, %v4843
    %v4901 = vadd.f32 %v4830, %v4843
    %v4902 = vadd.f32 %v4831, %v4843
    %v4903 = vadd.f32 %v4832, %v4843
    %v4904 = vadd.f32 %v4833, %v4843
    %v4905 = vadd.f32 %v4834, %v4843
    %v4906 = vadd.f32 %v4835, %v4843
    %v4907 = vadd.f32 %v4836, %v4843
    %v4908 = vadd.f32 %v4837, %v4843
    %v4909 = vadd.f32 %v4845, %v4846
    %v4910 = vadd.f32 %v4909, %v4847
    %v4911 = vadd.f32 %v4910, %v4848
    %v4912 = vadd.f32 %v4911, %v4849
    %v4913 = vadd.f32 %v4912, %v4850
    %v4914 = vadd.f32 %v4913, %v4851
    %v4915 = vadd.f32 %v4914, %v4852
    %v4916 = vadd.f32 %v4915, %v4853
    %v4917 = vadd.f32 %v4916, %v4854
    %v4918 = vadd.f32 %v4917, %v4855
    %v4919 = vadd.f32 %v4918, %v4856
    %v4920 = vadd.f32 %v4919, %v4857
    %v4921 = vadd.f32 %v4920, %v4858
    %v4922 = vadd.f32 %v4921, %v4859
    %v4923 = vadd.f32 %v4922, %v4860
    %v4924 = vadd.f32 %v4923, %v4861
    %v4925 = vadd.f32 %v4924, %v4862
    %v4926 = vadd.f32 %v4925, %v4863
    %v4927 = vadd.f32 %v4926, %v4864
    %v4928 = vadd.f32 %v4927, %v4865
    %v4929 = vadd.f32 %v4928, %v4866
    %v4930 = vadd.f32 %v4929, %v4867
    %v4931 = vadd.f32 %v4930, %v4868
    %v4932 = vadd.f32 %v4931, %v4869
    %v4933 = vadd.f32 %v4932, %v4870
    %v4934 = vadd.f32 %v4933, %v4871
    %v4935 = vadd.f32 %v4934, %v4872
    %v4936 = vadd.f32 %v4935, %v4873
    %v4937 = vadd.f32 %v4936, %v4874
    %v4938 = vadd.f32 %v4937, %v4875
    %v4939 = vadd.f32 %v4938, %v4876
    %v4940 = vadd.f32 %v4939, %v4877
    %v4941 = vadd.f32 %v4940, %v4878
    %v4942 = vadd.f32 %v4941, %v4879
    %v4943 = vadd.f32 %v4942, %v4880
    %v4944 = vadd.f32 %v4943, %v4881
    %v4945 = vadd.f32 %v4944, %v4882
    %v4946 = vadd.f32 %v4945, %v4883
    %v4947 = vadd.f32 %v4946, %v4884
    %v4948 = vadd.f32 %v4947, %v4885
    %v4949 = vadd.f32 %v4948, %v4886
    %v4950 = vadd.f32 %v4949, %v4887
    %v4951 = vadd.f32 %v4950, %v4888
    %v4952 = vadd.f32 %v4951, %v4889
    %v4953 = vadd.f32 %v4952, %v4890
    %v4954 = vadd.f32 %v4953, %v4891
    %v4955 = vadd.f32 %v4954, %v4892
    %v4956 = vadd.f32 %v4955, %v4893
    %v4957 = vadd.f32 %v4956, %v4894
    %v4958 = vadd.f32 %v4957, %v4895
    %v4959 = vadd.f32 %v4958, %v4896
    %v4960 = vadd.f32 %v4959, %v4897
    %v4961 = vadd.f32 %v4960, %v4898
    %v4962 = vadd.f32 %v4961, %v4899
    %v4963 = vadd.f32 %v4962, %v4900
    %v4964 = vadd.f32 %v4963, %v4901
    %v4965 = vadd.f32 %v4964, %v4902
    %v4966 = vadd.f32 %v4965, %v4903
    %v4967 = vadd.f32 %v4966, %v4904
    %v4968 = vadd.f32 %v4967, %v4905
    %v4969 = vadd.f32 %v4968, %v4906
    %v4970 = vadd.f32 %v4969, %v4907
    %v4971 = vadd.f32 %v4970, %v4908
    %v4972 = vrot.slane %v4971, 4
    %v4973 = vadd.f32 %v4971, %v4972
    %v4974 = vrot.slane %v4973, 2
    %v4975 = vadd.f32 %v4973, %v4974
    %v4976 = vrot.slane %v4975, 1
    %v4977 = vadd.f32 %v4975, %v4976
    %v4978 = vmul.f32 %v4845, %v4845
    %v4979 = vmul.f32 %v4846, %v4846
    %v4980 = vmul.f32 %v4847, %v4847
    %v4981 = vmul.f32 %v4848, %v4848
    %v4982 = vmul.f32 %v4849, %v4849
    %v4983 = vmul.f32 %v4850, %v4850
    %v4984 = vmul.f32 %v4851, %v4851
    %v4985 = vmul.f32 %v4852, %v4852
    %v4986 = vmul.f32 %v4853, %v4853
    %v4987 = vmul.f32 %v4854, %v4854
    %v4988 = vmul.f32 %v4855, %v4855
    %v4989 = vmul.f32 %v4856, %v4856
    %v4990 = vmul.f32 %v4857, %v4857
    %v4991 = vmul.f32 %v4858, %v4858
    %v4992 = vmul.f32 %v4859, %v4859
    %v4993 = vmul.f32 %v4860, %v4860
    %v4994 = vmul.f32 %v4861, %v4861
    %v4995 = vmul.f32 %v4862, %v4862
    %v4996 = vmul.f32 %v4863, %v4863
    %v4997 = vmul.f32 %v4864, %v4864
    %v4998 = vmul.f32 %v4865, %v4865
    %v4999 = vmul.f32 %v4866, %v4866
    %v5000 = vmul.f32 %v4867, %v4867
    %v5001 = vmul.f32 %v4868, %v4868
    %v5002 = vmul.f32 %v4869, %v4869
    %v5003 = vmul.f32 %v4870, %v4870
    %v5004 = vmul.f32 %v4871, %v4871
    %v5005 = vmul.f32 %v4872, %v4872
    %v5006 = vmul.f32 %v4873, %v4873
    %v5007 = vmul.f32 %v4874, %v4874
    %v5008 = vmul.f32 %v4875, %v4875
    %v5009 = vmul.f32 %v4876, %v4876
    %v5010 = vmul.f32 %v4877, %v4877
    %v5011 = vmul.f32 %v4878, %v4878
    %v5012 = vmul.f32 %v4879, %v4879
    %v5013 = vmul.f32 %v4880, %v4880
    %v5014 = vmul.f32 %v4881, %v4881
    %v5015 = vmul.f32 %v4882, %v4882
    %v5016 = vmul.f32 %v4883, %v4883
    %v5017 = vmul.f32 %v4884, %v4884
    %v5018 = vmul.f32 %v4885, %v4885
    %v5019 = vmul.f32 %v4886, %v4886
    %v5020 = vmul.f32 %v4887, %v4887
    %v5021 = vmul.f32 %v4888, %v4888
    %v5022 = vmul.f32 %v4889, %v4889
    %v5023 = vmul.f32 %v4890, %v4890
    %v5024 = vmul.f32 %v4891, %v4891
    %v5025 = vmul.f32 %v4892, %v4892
    %v5026 = vmul.f32 %v4893, %v4893
    %v5027 = vmul.f32 %v4894, %v4894
    %v5028 = vmul.f32 %v4895, %v4895
    %v5029 = vmul.f32 %v4896, %v4896
    %v5030 = vmul.f32 %v4897, %v4897
    %v5031 = vmul.f32 %v4898, %v4898
    %v5032 = vmul.f32 %v4899, %v4899
    %v5033 = vmul.f32 %v4900, %v4900
    %v5034 = vmul.f32 %v4901, %v4901
    %v5035 = vmul.f32 %v4902, %v4902
    %v5036 = vmul.f32 %v4903, %v4903
    %v5037 = vmul.f32 %v4904, %v4904
    %v5038 = vmul.f32 %v4905, %v4905
    %v5039 = vmul.f32 %v4906, %v4906
    %v5040 = vmul.f32 %v4907, %v4907
    %v5041 = vmul.f32 %v4908, %v4908
    %v5042 = vadd.f32 %v4978, %v4979
    %v5043 = vadd.f32 %v5042, %v4980
    %v5044 = vadd.f32 %v5043, %v4981
    %v5045 = vadd.f32 %v5044, %v4982
    %v5046 = vadd.f32 %v5045, %v4983
    %v5047 = vadd.f32 %v5046, %v4984
    %v5048 = vadd.f32 %v5047, %v4985
    %v5049 = vadd.f32 %v5048, %v4986
    %v5050 = vadd.f32 %v5049, %v4987
    %v5051 = vadd.f32 %v5050, %v4988
    %v5052 = vadd.f32 %v5051, %v4989
    %v5053 = vadd.f32 %v5052, %v4990
    %v5054 = vadd.f32 %v5053, %v4991
    %v5055 = vadd.f32 %v5054, %v4992
    %v5056 = vadd.f32 %v5055, %v4993
    %v5057 = vadd.f32 %v5056, %v4994
    %v5058 = vadd.f32 %v5057, %v4995
    %v5059 = vadd.f32 %v5058, %v4996
    %v5060 = vadd.f32 %v5059, %v4997
    %v5061 = vadd.f32 %v5060, %v4998
    %v5062 = vadd.f32 %v5061, %v4999
    %v5063 = vadd.f32 %v5062, %v5000
    %v5064 = vadd.f32 %v5063, %v5001
    %v5065 = vadd.f32 %v5064, %v5002
    %v5066 = vadd.f32 %v5065, %v5003
    %v5067 = vadd.f32 %v5066, %v5004
    %v5068 = vadd.f32 %v5067, %v5005
    %v5069 = vadd.f32 %v5068, %v5006
    %v5070 = vadd.f32 %v5069, %v5007
    %v5071 = vadd.f32 %v5070, %v5008
    %v5072 = vadd.f32 %v5071, %v5009
    %v5073 = vadd.f32 %v5072, %v5010
    %v5074 = vadd.f32 %v5073, %v5011
    %v5075 = vadd.f32 %v5074, %v5012
    %v5076 = vadd.f32 %v5075, %v5013
    %v5077 = vadd.f32 %v5076, %v5014
    %v5078 = vadd.f32 %v5077, %v5015
    %v5079 = vadd.f32 %v5078, %v5016
    %v5080 = vadd.f32 %v5079, %v5017
    %v5081 = vadd.f32 %v5080, %v5018
    %v5082 = vadd.f32 %v5081, %v5019
    %v5083 = vadd.f32 %v5082, %v5020
    %v5084 = vadd.f32 %v5083, %v5021
    %v5085 = vadd.f32 %v5084, %v5022
    %v5086 = vadd.f32 %v5085, %v5023
    %v5087 = vadd.f32 %v5086, %v5024
    %v5088 = vadd.f32 %v5087, %v5025
    %v5089 = vadd.f32 %v5088, %v5026
    %v5090 = vadd.f32 %v5089, %v5027
    %v5091 = vadd.f32 %v5090, %v5028
    %v5092 = vadd.f32 %v5091, %v5029
    %v5093 = vadd.f32 %v5092, %v5030
    %v5094 = vadd.f32 %v5093, %v5031
    %v5095 = vadd.f32 %v5094, %v5032
    %v5096 = vadd.f32 %v5095, %v5033
    %v5097 = vadd.f32 %v5096, %v5034
    %v5098 = vadd.f32 %v5097, %v5035
    %v5099 = vadd.f32 %v5098, %v5036
    %v5100 = vadd.f32 %v5099, %v5037
    %v5101 = vadd.f32 %v5100, %v5038
    %v5102 = vadd.f32 %v5101, %v5039
    %v5103 = vadd.f32 %v5102, %v5040
    %v5104 = vadd.f32 %v5103, %v5041
    %v5105 = vrot.slane %v5104, 4
    %v5106 = vadd.f32 %v5104, %v5105
    %v5107 = vrot.slane %v5106, 2
    %v5108 = vadd.f32 %v5106, %v5107
    %v5109 = vrot.slane %v5108, 1
    %v5110 = vadd.f32 %v5108, %v5109
    %v5111 = vmul.f32 %v4977, 0.001953125
    %v5112 = vmul.f32 %v5110, 0.001953125
    %v5113 = vmul.f32 %v5111, %v5111
    %v5114 = vsub.f32 %v5112, %v5113
    %v5115 = vld [vmem:[%s3] sm:$0x1]
    %v5116 = vadd.f32 %v5114, 1e-05
    %v5117 = vrsqrt.pop %v5116
    %v5118 = vmul.f32 %v5115, %v5117
    %v5119 = vld [vmem:[%s4] sm:$0x1]
    %v5120 = vmul.f32 %v5111, %v5118
    %v5121 = vsub.f32 %v5119, %v5120
    %v5123 = vlaneseq
    %v5124 = vshrl.u32 %v5123, 7
    %v5125 = vsub.s32 0, %v5124
    %v5126 = vrot.slane %v5118, %v5125
    %v5128 = vmul.f32 %v4845, %v5126
    %v5129 = vmul.f32 %v4846, %v5126
    %v5130 = vmul.f32 %v4847, %v5126
    %v5131 = vmul.f32 %v4848, %v5126
    %v5132 = vmul.f32 %v4849, %v5126
    %v5133 = vmul.f32 %v4850, %v5126
    %v5134 = vmul.f32 %v4851, %v5126
    %v5135 = vmul.f32 %v4852, %v5126
    %v5136 = vmul.f32 %v4853, %v5126
    %v5137 = vmul.f32 %v4854, %v5126
    %v5138 = vmul.f32 %v4855, %v5126
    %v5139 = vmul.f32 %v4856, %v5126
    %v5140 = vmul.f32 %v4857, %v5126
    %v5141 = vmul.f32 %v4858, %v5126
    %v5142 = vmul.f32 %v4859, %v5126
    %v5143 = vmul.f32 %v4860, %v5126
    %v5144 = vmul.f32 %v4861, %v5126
    %v5145 = vmul.f32 %v4862, %v5126
    %v5146 = vmul.f32 %v4863, %v5126
    %v5147 = vmul.f32 %v4864, %v5126
    %v5148 = vmul.f32 %v4865, %v5126
    %v5149 = vmul.f32 %v4866, %v5126
    %v5150 = vmul.f32 %v4867, %v5126
    %v5151 = vmul.f32 %v4868, %v5126
    %v5152 = vmul.f32 %v4869, %v5126
    %v5153 = vmul.f32 %v4870, %v5126
    %v5154 = vmul.f32 %v4871, %v5126
    %v5155 = vmul.f32 %v4872, %v5126
    %v5156 = vmul.f32 %v4873, %v5126
    %v5157 = vmul.f32 %v4874, %v5126
    %v5158 = vmul.f32 %v4875, %v5126
    %v5159 = vmul.f32 %v4876, %v5126
    %v5160 = vmul.f32 %v4877, %v5126
    %v5161 = vmul.f32 %v4878, %v5126
    %v5162 = vmul.f32 %v4879, %v5126
    %v5163 = vmul.f32 %v4880, %v5126
    %v5164 = vmul.f32 %v4881, %v5126
    %v5165 = vmul.f32 %v4882, %v5126
    %v5166 = vmul.f32 %v4883, %v5126
    %v5167 = vmul.f32 %v4884, %v5126
    %v5168 = vmul.f32 %v4885, %v5126
    %v5169 = vmul.f32 %v4886, %v5126
    %v5170 = vmul.f32 %v4887, %v5126
    %v5171 = vmul.f32 %v4888, %v5126
    %v5172 = vmul.f32 %v4889, %v5126
    %v5173 = vmul.f32 %v4890, %v5126
    %v5174 = vmul.f32 %v4891, %v5126
    %v5175 = vmul.f32 %v4892, %v5126
    %v5176 = vmul.f32 %v4893, %v5126
    %v5177 = vmul.f32 %v4894, %v5126
    %v5178 = vmul.f32 %v4895, %v5126
    %v5179 = vmul.f32 %v4896, %v5126
    %v5180 = vmul.f32 %v4897, %v5126
    %v5181 = vmul.f32 %v4898, %v5126
    %v5182 = vmul.f32 %v4899, %v5126
    %v5183 = vmul.f32 %v4900, %v5126
    %v5184 = vmul.f32 %v4901, %v5126
    %v5185 = vmul.f32 %v4902, %v5126
    %v5186 = vmul.f32 %v4903, %v5126
    %v5187 = vmul.f32 %v4904, %v5126
    %v5188 = vmul.f32 %v4905, %v5126
    %v5189 = vmul.f32 %v4906, %v5126
    %v5190 = vmul.f32 %v4907, %v5126
    %v5191 = vmul.f32 %v4908, %v5126
    %v5193 = vlaneseq
    %v5194 = vshrl.u32 %v5193, 7
    %v5195 = vsub.s32 0, %v5194
    %v5196 = vrot.slane %v5121, %v5195
    %v5198 = vadd.f32 %v5128, %v5196
    %v5199 = vadd.f32 %v5129, %v5196
    %v5200 = vadd.f32 %v5130, %v5196
    %v5201 = vadd.f32 %v5131, %v5196
    %v5202 = vadd.f32 %v5132, %v5196
    %v5203 = vadd.f32 %v5133, %v5196
    %v5204 = vadd.f32 %v5134, %v5196
    %v5205 = vadd.f32 %v5135, %v5196
    %v5206 = vadd.f32 %v5136, %v5196
    %v5207 = vadd.f32 %v5137, %v5196
    %v5208 = vadd.f32 %v5138, %v5196
    %v5209 = vadd.f32 %v5139, %v5196
    %v5210 = vadd.f32 %v5140, %v5196
    %v5211 = vadd.f32 %v5141, %v5196
    %v5212 = vadd.f32 %v5142, %v5196
    %v5213 = vadd.f32 %v5143, %v5196
    %v5214 = vadd.f32 %v5144, %v5196
    %v5215 = vadd.f32 %v5145, %v5196
    %v5216 = vadd.f32 %v5146, %v5196
    %v5217 = vadd.f32 %v5147, %v5196
    %v5218 = vadd.f32 %v5148, %v5196
    %v5219 = vadd.f32 %v5149, %v5196
    %v5220 = vadd.f32 %v5150, %v5196
    %v5221 = vadd.f32 %v5151, %v5196
    %v5222 = vadd.f32 %v5152, %v5196
    %v5223 = vadd.f32 %v5153, %v5196
    %v5224 = vadd.f32 %v5154, %v5196
    %v5225 = vadd.f32 %v5155, %v5196
    %v5226 = vadd.f32 %v5156, %v5196
    %v5227 = vadd.f32 %v5157, %v5196
    %v5228 = vadd.f32 %v5158, %v5196
    %v5229 = vadd.f32 %v5159, %v5196
    %v5230 = vadd.f32 %v5160, %v5196
    %v5231 = vadd.f32 %v5161, %v5196
    %v5232 = vadd.f32 %v5162, %v5196
    %v5233 = vadd.f32 %v5163, %v5196
    %v5234 = vadd.f32 %v5164, %v5196
    %v5235 = vadd.f32 %v5165, %v5196
    %v5236 = vadd.f32 %v5166, %v5196
    %v5237 = vadd.f32 %v5167, %v5196
    %v5238 = vadd.f32 %v5168, %v5196
    %v5239 = vadd.f32 %v5169, %v5196
    %v5240 = vadd.f32 %v5170, %v5196
    %v5241 = vadd.f32 %v5171, %v5196
    %v5242 = vadd.f32 %v5172, %v5196
    %v5243 = vadd.f32 %v5173, %v5196
    %v5244 = vadd.f32 %v5174, %v5196
    %v5245 = vadd.f32 %v5175, %v5196
    %v5246 = vadd.f32 %v5176, %v5196
    %v5247 = vadd.f32 %v5177, %v5196
    %v5248 = vadd.f32 %v5178, %v5196
    %v5249 = vadd.f32 %v5179, %v5196
    %v5250 = vadd.f32 %v5180, %v5196
    %v5251 = vadd.f32 %v5181, %v5196
    %v5252 = vadd.f32 %v5182, %v5196
    %v5253 = vadd.f32 %v5183, %v5196
    %v5254 = vadd.f32 %v5184, %v5196
    %v5255 = vadd.f32 %v5185, %v5196
    %v5256 = vadd.f32 %v5186, %v5196
    %v5257 = vadd.f32 %v5187, %v5196
    %v5258 = vadd.f32 %v5188, %v5196
    %v5259 = vadd.f32 %v5189, %v5196
    %v5260 = vadd.f32 %v5190, %v5196
    %v5261 = vadd.f32 %v5191, %v5196
    %s5262 = sld [smem:[#allocation3]]
    %vm5263 = vcmp.gt.f32.partialorder %v5198, 0.0
    %vm5264 = vcmp.gt.f32.partialorder %v5199, 0.0
    %vm5265 = vcmp.gt.f32.partialorder %v5200, 0.0
    %vm5266 = vcmp.gt.f32.partialorder %v5201, 0.0
    %vm5267 = vcmp.gt.f32.partialorder %v5202, 0.0
    %vm5268 = vcmp.gt.f32.partialorder %v5203, 0.0
    %vm5269 = vcmp.gt.f32.partialorder %v5204, 0.0
    %vm5270 = vcmp.gt.f32.partialorder %v5205, 0.0
    %vm5271 = vcmp.gt.f32.partialorder %v5206, 0.0
    %vm5272 = vcmp.gt.f32.partialorder %v5207, 0.0
    %vm5273 = vcmp.gt.f32.partialorder %v5208, 0.0
    %vm5274 = vcmp.gt.f32.partialorder %v5209, 0.0
    %vm5275 = vcmp.gt.f32.partialorder %v5210, 0.0
    %vm5276 = vcmp.gt.f32.partialorder %v5211, 0.0
    %vm5277 = vcmp.gt.f32.partialorder %v5212, 0.0
    %vm5278 = vcmp.gt.f32.partialorder %v5213, 0.0
    %vm5279 = vcmp.gt.f32.partialorder %v5214, 0.0
    %vm5280 = vcmp.gt.f32.partialorder %v5215, 0.0
    %vm5281 = vcmp.gt.f32.partialorder %v5216, 0.0
    %vm5282 = vcmp.gt.f32.partialorder %v5217, 0.0
    %vm5283 = vcmp.gt.f32.partialorder %v5218, 0.0
    %vm5284 = vcmp.gt.f32.partialorder %v5219, 0.0
    %vm5285 = vcmp.gt.f32.partialorder %v5220, 0.0
    %vm5286 = vcmp.gt.f32.partialorder %v5221, 0.0
    %vm5287 = vcmp.gt.f32.partialorder %v5222, 0.0
    %vm5288 = vcmp.gt.f32.partialorder %v5223, 0.0
    %vm5289 = vcmp.gt.f32.partialorder %v5224, 0.0
    %vm5290 = vcmp.gt.f32.partialorder %v5225, 0.0
    %vm5291 = vcmp.gt.f32.partialorder %v5226, 0.0
    %vm5292 = vcmp.gt.f32.partialorder %v5227, 0.0
    %vm5293 = vcmp.gt.f32.partialorder %v5228, 0.0
    %vm5294 = vcmp.gt.f32.partialorder %v5229, 0.0
    %vm5295 = vcmp.gt.f32.partialorder %v5230, 0.0
    %vm5296 = vcmp.gt.f32.partialorder %v5231, 0.0
    %vm5297 = vcmp.gt.f32.partialorder %v5232, 0.0
    %vm5298 = vcmp.gt.f32.partialorder %v5233, 0.0
    %vm5299 = vcmp.gt.f32.partialorder %v5234, 0.0
    %vm5300 = vcmp.gt.f32.partialorder %v5235, 0.0
    %vm5301 = vcmp.gt.f32.partialorder %v5236, 0.0
    %vm5302 = vcmp.gt.f32.partialorder %v5237, 0.0
    %vm5303 = vcmp.gt.f32.partialorder %v5238, 0.0
    %vm5304 = vcmp.gt.f32.partialorder %v5239, 0.0
    %vm5305 = vcmp.gt.f32.partialorder %v5240, 0.0
    %vm5306 = vcmp.gt.f32.partialorder %v5241, 0.0
    %vm5307 = vcmp.gt.f32.partialorder %v5242, 0.0
    %vm5308 = vcmp.gt.f32.partialorder %v5243, 0.0
    %vm5309 = vcmp.gt.f32.partialorder %v5244, 0.0
    %vm5310 = vcmp.gt.f32.partialorder %v5245, 0.0
    %vm5311 = vcmp.gt.f32.partialorder %v5246, 0.0
    %vm5312 = vcmp.gt.f32.partialorder %v5247, 0.0
    %vm5313 = vcmp.gt.f32.partialorder %v5248, 0.0
    %vm5314 = vcmp.gt.f32.partialorder %v5249, 0.0
    %vm5315 = vcmp.gt.f32.partialorder %v5250, 0.0
    %vm5316 = vcmp.gt.f32.partialorder %v5251, 0.0
    %vm5317 = vcmp.gt.f32.partialorder %v5252, 0.0
    %vm5318 = vcmp.gt.f32.partialorder %v5253, 0.0
    %vm5319 = vcmp.gt.f32.partialorder %v5254, 0.0
    %vm5320 = vcmp.gt.f32.partialorder %v5255, 0.0
    %vm5321 = vcmp.gt.f32.partialorder %v5256, 0.0
    %vm5322 = vcmp.gt.f32.partialorder %v5257, 0.0
    %vm5323 = vcmp.gt.f32.partialorder %v5258, 0.0
    %vm5324 = vcmp.gt.f32.partialorder %v5259, 0.0
    %vm5325 = vcmp.gt.f32.partialorder %v5260, 0.0
    %vm5326 = vcmp.gt.f32.partialorder %v5261, 0.0
    %v5327 = vstv %s5262
    %v5328 = vmul.f32 %v5198, %v5327
    %v5329 = vmul.f32 %v5199, %v5327
    %v5330 = vmul.f32 %v5200, %v5327
    %v5331 = vmul.f32 %v5201, %v5327
    %v5332 = vmul.f32 %v5202, %v5327
    %v5333 = vmul.f32 %v5203, %v5327
    %v5334 = vmul.f32 %v5204, %v5327
    %v5335 = vmul.f32 %v5205, %v5327
    %v5336 = vmul.f32 %v5206, %v5327
    %v5337 = vmul.f32 %v5207, %v5327
    %v5338 = vmul.f32 %v5208, %v5327
    %v5339 = vmul.f32 %v5209, %v5327
    %v5340 = vmul.f32 %v5210, %v5327
    %v5341 = vmul.f32 %v5211, %v5327
    %v5342 = vmul.f32 %v5212, %v5327
    %v5343 = vmul.f32 %v5213, %v5327
    %v5344 = vmul.f32 %v5214, %v5327
    %v5345 = vmul.f32 %v5215, %v5327
    %v5346 = vmul.f32 %v5216, %v5327
    %v5347 = vmul.f32 %v5217, %v5327
    %v5348 = vmul.f32 %v5218, %v5327
    %v5349 = vmul.f32 %v5219, %v5327
    %v5350 = vmul.f32 %v5220, %v5327
    %v5351 = vmul.f32 %v5221, %v5327
    %v5352 = vmul.f32 %v5222, %v5327
    %v5353 = vmul.f32 %v5223, %v5327
    %v5354 = vmul.f32 %v5224, %v5327
    %v5355 = vmul.f32 %v5225, %v5327
    %v5356 = vmul.f32 %v5226, %v5327
    %v5357 = vmul.f32 %v5227, %v5327
    %v5358 = vmul.f32 %v5228, %v5327
    %v5359 = vmul.f32 %v5229, %v5327
    %v5360 = vmul.f32 %v5230, %v5327
    %v5361 = vmul.f32 %v5231, %v5327
    %v5362 = vmul.f32 %v5232, %v5327
    %v5363 = vmul.f32 %v5233, %v5327
    %v5364 = vmul.f32 %v5234, %v5327
    %v5365 = vmul.f32 %v5235, %v5327
    %v5366 = vmul.f32 %v5236, %v5327
    %v5367 = vmul.f32 %v5237, %v5327
    %v5368 = vmul.f32 %v5238, %v5327
    %v5369 = vmul.f32 %v5239, %v5327
    %v5370 = vmul.f32 %v5240, %v5327
    %v5371 = vmul.f32 %v5241, %v5327
    %v5372 = vmul.f32 %v5242, %v5327
    %v5373 = vmul.f32 %v5243, %v5327
    %v5374 = vmul.f32 %v5244, %v5327
    %v5375 = vmul.f32 %v5245, %v5327
    %v5376 = vmul.f32 %v5246, %v5327
    %v5377 = vmul.f32 %v5247, %v5327
    %v5378 = vmul.f32 %v5248, %v5327
    %v5379 = vmul.f32 %v5249, %v5327
    %v5380 = vmul.f32 %v5250, %v5327
    %v5381 = vmul.f32 %v5251, %v5327
    %v5382 = vmul.f32 %v5252, %v5327
    %v5383 = vmul.f32 %v5253, %v5327
    %v5384 = vmul.f32 %v5254, %v5327
    %v5385 = vmul.f32 %v5255, %v5327
    %v5386 = vmul.f32 %v5256, %v5327
    %v5387 = vmul.f32 %v5257, %v5327
    %v5388 = vmul.f32 %v5258, %v5327
    %v5389 = vmul.f32 %v5259, %v5327
    %v5390 = vmul.f32 %v5260, %v5327
    %v5391 = vmul.f32 %v5261, %v5327
    %v5392 = vsel %vm5263, %v5198, %v5328
    %v5393 = vsel %vm5264, %v5199, %v5329
    %v5394 = vsel %vm5265, %v5200, %v5330
    %v5395 = vsel %vm5266, %v5201, %v5331
    %v5396 = vsel %vm5267, %v5202, %v5332
    %v5397 = vsel %vm5268, %v5203, %v5333
    %v5398 = vsel %vm5269, %v5204, %v5334
    %v5399 = vsel %vm5270, %v5205, %v5335
    %v5400 = vsel %vm5271, %v5206, %v5336
    %v5401 = vsel %vm5272, %v5207, %v5337
    %v5402 = vsel %vm5273, %v5208, %v5338
    %v5403 = vsel %vm5274, %v5209, %v5339
    %v5404 = vsel %vm5275, %v5210, %v5340
    %v5405 = vsel %vm5276, %v5211, %v5341
    %v5406 = vsel %vm5277, %v5212, %v5342
    %v5407 = vsel %vm5278, %v5213, %v5343
    %v5408 = vsel %vm5279, %v5214, %v5344
    %v5409 = vsel %vm5280, %v5215, %v5345
    %v5410 = vsel %vm5281, %v5216, %v5346
    %v5411 = vsel %vm5282, %v5217, %v5347
    %v5412 = vsel %vm5283, %v5218, %v5348
    %v5413 = vsel %vm5284, %v5219, %v5349
    %v5414 = vsel %vm5285, %v5220, %v5350
    %v5415 = vsel %vm5286, %v5221, %v5351
    %v5416 = vsel %vm5287, %v5222, %v5352
    %v5417 = vsel %vm5288, %v5223, %v5353
    %v5418 = vsel %vm5289, %v5224, %v5354
    %v5419 = vsel %vm5290, %v5225, %v5355
    %v5420 = vsel %vm5291, %v5226, %v5356
    %v5421 = vsel %vm5292, %v5227, %v5357
    %v5422 = vsel %vm5293, %v5228, %v5358
    %v5423 = vsel %vm5294, %v5229, %v5359
    %v5424 = vsel %vm5295, %v5230, %v5360
    %v5425 = vsel %vm5296, %v5231, %v5361
    %v5426 = vsel %vm5297, %v5232, %v5362
    %v5427 = vsel %vm5298, %v5233, %v5363
    %v5428 = vsel %vm5299, %v5234, %v5364
    %v5429 = vsel %vm5300, %v5235, %v5365
    %v5430 = vsel %vm5301, %v5236, %v5366
    %v5431 = vsel %vm5302, %v5237, %v5367
    %v5432 = vsel %vm5303, %v5238, %v5368
    %v5433 = vsel %vm5304, %v5239, %v5369
    %v5434 = vsel %vm5305, %v5240, %v5370
    %v5435 = vsel %vm5306, %v5241, %v5371
    %v5436 = vsel %vm5307, %v5242, %v5372
    %v5437 = vsel %vm5308, %v5243, %v5373
    %v5438 = vsel %vm5309, %v5244, %v5374
    %v5439 = vsel %vm5310, %v5245, %v5375
    %v5440 = vsel %vm5311, %v5246, %v5376
    %v5441 = vsel %vm5312, %v5247, %v5377
    %v5442 = vsel %vm5313, %v5248, %v5378
    %v5443 = vsel %vm5314, %v5249, %v5379
    %v5444 = vsel %vm5315, %v5250, %v5380
    %v5445 = vsel %vm5316, %v5251, %v5381
    %v5446 = vsel %vm5317, %v5252, %v5382
    %v5447 = vsel %vm5318, %v5253, %v5383
    %v5448 = vsel %vm5319, %v5254, %v5384
    %v5449 = vsel %vm5320, %v5255, %v5385
    %v5450 = vsel %vm5321, %v5256, %v5386
    %v5451 = vsel %vm5322, %v5257, %v5387
    %v5452 = vsel %vm5323, %v5258, %v5388
    %v5453 = vsel %vm5324, %v5259, %v5389
    %v5454 = vsel %vm5325, %v5260, %v5390
    %v5455 = vsel %vm5326, %v5261, %v5391
    %5456 = vst [vmem:[#allocation2] sm:$0xff] 0.0
    %5457 = vst [vmem:[#allocation2 + $0x8] sm:$0xff] 0.0
    %5458 = vst [vmem:[#allocation2 + $0x10] sm:$0x3] 0.0
    %5459 = vst [vmem:[#allocation2 + $0x18] sm:$0xff] 0.0
    %5460 = vst [vmem:[#allocation2 + $0x20] sm:$0xff] 0.0
    %5461 = vst [vmem:[#allocation2 + $0x28] sm:$0x3] 0.0
    %5462 = vst [vmem:[#allocation2 + $0x30] sm:$0xff] 0.0
    %5463 = vst [vmem:[#allocation2 + $0x38] sm:$0xff] 0.0
    %5464 = vst [vmem:[#allocation2 + $0x40] sm:$0x3] 0.0
    %5465 = vst [vmem:[#allocation2 + $0x48] sm:$0xff] 0.0
    %5466 = vst [vmem:[#allocation2 + $0x50] sm:$0xff] 0.0
    %5467 = vst [vmem:[#allocation2 + $0x58] sm:$0x3] 0.0
    %5468 = vst [vmem:[#allocation2 + $0x60] sm:$0xff] 0.0
    %5469 = vst [vmem:[#allocation2 + $0x68] sm:$0xff] 0.0
    %5470 = vst [vmem:[#allocation2 + $0x70] sm:$0x3] 0.0
    %5471 = vst [vmem:[#allocation2 + $0x78] sm:$0xff] 0.0
    %5472 = vst [vmem:[#allocation2 + $0x80] sm:$0xff] 0.0
    %5473 = vst [vmem:[#allocation2 + $0x88] sm:$0x3] 0.0
    %5474 = vst [vmem:[#allocation2 + $0x90] sm:$0xff] 0.0
    %5475 = vst [vmem:[#allocation2 + $0x98] sm:$0xff] 0.0
    %5476 = vst [vmem:[#allocation2 + $0xa0] sm:$0x3] 0.0
    %5477 = vst [vmem:[#allocation2 + $0xa8] sm:$0xff] 0.0
    %5478 = vst [vmem:[#allocation2 + $0xb0] sm:$0xff] 0.0
    %5479 = vst [vmem:[#allocation2 + $0xb8] sm:$0x3] 0.0
    %5480 = vst [vmem:[#allocation2 + $0xc0] sm:$0xff] 0.0
    %5481 = vst [vmem:[#allocation2 + $0xc8] sm:$0xff] 0.0
    %5482 = vst [vmem:[#allocation2 + $0xd0] sm:$0x3] 0.0
    %5483 = vst [vmem:[#allocation2 + $0xd8] sm:$0xff] 0.0
    %5484 = vst [vmem:[#allocation2 + $0xe0] sm:$0xff] 0.0
    %5485 = vst [vmem:[#allocation2 + $0xe8] sm:$0x3] 0.0
    %5486 = vst [vmem:[#allocation2 + $0xf0] sm:$0xff] 0.0
    %5487 = vst [vmem:[#allocation2 + $0xf8] sm:$0xff] 0.0
    %5488 = vst [vmem:[#allocation2 + $0x100] sm:$0x3] 0.0
    %5489 = vst [vmem:[#allocation2 + $0x108] sm:$0xff] 0.0
    %5490 = vst [vmem:[#allocation2 + $0x110] sm:$0xff] 0.0
    %5491 = vst [vmem:[#allocation2 + $0x118] sm:$0x3] 0.0
    %5492 = vst [vmem:[#allocation2 + $0x120] sm:$0xff] 0.0
    %5493 = vst [vmem:[#allocation2 + $0x128] sm:$0xff] 0.0
    %5494 = vst [vmem:[#allocation2 + $0x130] sm:$0x3] 0.0
    %5495 = vst [vmem:[#allocation2 + $0x138] sm:$0xff] 0.0
    %5496 = vst [vmem:[#allocation2 + $0x140] sm:$0xff] 0.0
    %5497 = vst [vmem:[#allocation2 + $0x148] sm:$0x3] 0.0
    %5498 = vst [vmem:[#allocation2 + $0x150] sm:$0xff] 0.0
    %5499 = vst [vmem:[#allocation2 + $0x158] sm:$0xff] 0.0
    %5500 = vst [vmem:[#allocation2 + $0x160] sm:$0x3] 0.0
    %5501 = vst [vmem:[#allocation2 + $0x168] sm:$0xff] 0.0
    %5502 = vst [vmem:[#allocation2 + $0x170] sm:$0xff] 0.0
    %5503 = vst [vmem:[#allocation2 + $0x178] sm:$0x3] 0.0
    %5504 = vst [vmem:[#allocation2 + $0x180] sm:$0xff] 0.0
    %5505 = vst [vmem:[#allocation2 + $0x188] sm:$0xff] 0.0
    %5506 = vst [vmem:[#allocation2 + $0x190] sm:$0x3] 0.0
    %5507 = vst [vmem:[#allocation2 + $0x198] sm:$0xff] 0.0
    %5508 = vst [vmem:[#allocation2 + $0x1a0] sm:$0xff] 0.0
    %5509 = vst [vmem:[#allocation2 + $0x1a8] sm:$0x3] 0.0
    %5510 = vst [vmem:[#allocation2 + $0x1b0] sm:$0xff] 0.0
    %5511 = vst [vmem:[#allocation2 + $0x1b8] sm:$0xff] 0.0
    %5512 = vst [vmem:[#allocation2 + $0x1c0] sm:$0x3] 0.0
    %5513 = vst [vmem:[#allocation2 + $0x1c8] sm:$0xff] 0.0
    %5514 = vst [vmem:[#allocation2 + $0x1d0] sm:$0xff] 0.0
    %5515 = vst [vmem:[#allocation2 + $0x1d8] sm:$0x3] 0.0
    %5516 = vst [vmem:[#allocation2 + $0x1e0] sm:$0xff] 0.0
    %5517 = vst [vmem:[#allocation2 + $0x1e8] sm:$0xff] 0.0
    %5518 = vst [vmem:[#allocation2 + $0x1f0] sm:$0x3] 0.0
    %5519 = vst [vmem:[#allocation2 + $0x1f8] sm:$0xff] 0.0
    %5520 = vst [vmem:[#allocation2 + $0x200] sm:$0xff] 0.0
    %5521 = vst [vmem:[#allocation2 + $0x208] sm:$0x3] 0.0
    %5522 = vst [vmem:[#allocation2 + $0x210] sm:$0xff] 0.0
    %5523 = vst [vmem:[#allocation2 + $0x218] sm:$0xff] 0.0
    %5524 = vst [vmem:[#allocation2 + $0x220] sm:$0x3] 0.0
    %5525 = vst [vmem:[#allocation2 + $0x228] sm:$0xff] 0.0
    %5526 = vst [vmem:[#allocation2 + $0x230] sm:$0xff] 0.0
    %5527 = vst [vmem:[#allocation2 + $0x238] sm:$0x3] 0.0
    %5528 = vst [vmem:[#allocation2 + $0x240] sm:$0xff] 0.0
    %5529 = vst [vmem:[#allocation2 + $0x248] sm:$0xff] 0.0
    %5530 = vst [vmem:[#allocation2 + $0x250] sm:$0x3] 0.0
    %5531 = vst [vmem:[#allocation2 + $0x258] sm:$0xff] 0.0
    %5532 = vst [vmem:[#allocation2 + $0x260] sm:$0xff] 0.0
    %5533 = vst [vmem:[#allocation2 + $0x268] sm:$0x3] 0.0
    %5534 = vst [vmem:[#allocation2 + $0x270] sm:$0xff] 0.0
    %5535 = vst [vmem:[#allocation2 + $0x278] sm:$0xff] 0.0
    %5536 = vst [vmem:[#allocation2 + $0x280] sm:$0x3] 0.0
    %5537 = vst [vmem:[#allocation2 + $0x288] sm:$0xff] 0.0
    %5538 = vst [vmem:[#allocation2 + $0x290] sm:$0xff] 0.0
    %5539 = vst [vmem:[#allocation2 + $0x298] sm:$0x3] 0.0
    %5540 = vst [vmem:[#allocation2 + $0x2a0] sm:$0xff] 0.0
    %5541 = vst [vmem:[#allocation2 + $0x2a8] sm:$0xff] 0.0
    %5542 = vst [vmem:[#allocation2 + $0x2b0] sm:$0x3] 0.0
    %5543 = vst [vmem:[#allocation2 + $0x2b8] sm:$0xff] 0.0
    %5544 = vst [vmem:[#allocation2 + $0x2c0] sm:$0xff] 0.0
    %5545 = vst [vmem:[#allocation2 + $0x2c8] sm:$0x3] 0.0
    %5546 = vst [vmem:[#allocation2 + $0x2d0] sm:$0xff] 0.0
    %5547 = vst [vmem:[#allocation2 + $0x2d8] sm:$0xff] 0.0
    %5548 = vst [vmem:[#allocation2 + $0x2e0] sm:$0x3] 0.0
    %5549 = vst [vmem:[#allocation2 + $0x2e8] sm:$0xff] 0.0
    %5550 = vst [vmem:[#allocation2 + $0x2f0] sm:$0xff] 0.0
    %5551 = vst [vmem:[#allocation2 + $0x2f8] sm:$0x3] 0.0
    %5552 = vst [vmem:[#allocation2 + $0x300] sm:$0xff] 0.0
    %5553 = vst [vmem:[#allocation2 + $0x308] sm:$0xff] 0.0
    %5554 = vst [vmem:[#allocation2 + $0x310] sm:$0x3] 0.0
    %5555 = vst [vmem:[#allocation2 + $0x318] sm:$0xff] 0.0
    %5556 = vst [vmem:[#allocation2 + $0x320] sm:$0xff] 0.0
    %5557 = vst [vmem:[#allocation2 + $0x328] sm:$0x3] 0.0
    %5558 = vst [vmem:[#allocation2 + $0x330] sm:$0xff] 0.0
    %5559 = vst [vmem:[#allocation2 + $0x338] sm:$0xff] 0.0
    %5560 = vst [vmem:[#allocation2 + $0x340] sm:$0x3] 0.0
    %5561 = vst [vmem:[#allocation2 + $0x348] sm:$0xff] 0.0
    %5562 = vst [vmem:[#allocation2 + $0x350] sm:$0xff] 0.0
    %5563 = vst [vmem:[#allocation2 + $0x358] sm:$0x3] 0.0
    %s5564 = scalar_lea.vmem [#allocation2], 24
    %5565 = vst [vmem:[%s5564 + $0x1] sm:$0xff] %v5392
    %5566 = vst [vmem:[%s5564 + $0x9] sm:$0xff] %v5393
    %5567 = vst [vmem:[%s5564 + $0x19] sm:$0xff] %v5394
    %5568 = vst [vmem:[%s5564 + $0x21] sm:$0xff] %v5395
    %5569 = vst [vmem:[%s5564 + $0x31] sm:$0xff] %v5396
    %5570 = vst [vmem:[%s5564 + $0x39] sm:$0xff] %v5397
    %5571 = vst [vmem:[%s5564 + $0x49] sm:$0xff] %v5398
    %5572 = vst [vmem:[%s5564 + $0x51] sm:$0xff] %v5399
    %5573 = vst [vmem:[%s5564 + $0x61] sm:$0xff] %v5400
    %5574 = vst [vmem:[%s5564 + $0x69] sm:$0xff] %v5401
    %5575 = vst [vmem:[%s5564 + $0x79] sm:$0xff] %v5402
    %5576 = vst [vmem:[%s5564 + $0x81] sm:$0xff] %v5403
    %5577 = vst [vmem:[%s5564 + $0x91] sm:$0xff] %v5404
    %5578 = vst [vmem:[%s5564 + $0x99] sm:$0xff] %v5405
    %5579 = vst [vmem:[%s5564 + $0xa9] sm:$0xff] %v5406
    %5580 = vst [vmem:[%s5564 + $0xb1] sm:$0xff] %v5407
    %5581 = vst [vmem:[%s5564 + $0xc1] sm:$0xff] %v5408
    %5582 = vst [vmem:[%s5564 + $0xc9] sm:$0xff] %v5409
    %5583 = vst [vmem:[%s5564 + $0xd9] sm:$0xff] %v5410
    %5584 = vst [vmem:[%s5564 + $0xe1] sm:$0xff] %v5411
    %5585 = vst [vmem:[%s5564 + $0xf1] sm:$0xff] %v5412
    %5586 = vst [vmem:[%s5564 + $0xf9] sm:$0xff] %v5413
    %5587 = vst [vmem:[%s5564 + $0x109] sm:$0xff] %v5414
    %5588 = vst [vmem:[%s5564 + $0x111] sm:$0xff] %v5415
    %5589 = vst [vmem:[%s5564 + $0x121] sm:$0xff] %v5416
    %5590 = vst [vmem:[%s5564 + $0x129] sm:$0xff] %v5417
    %5591 = vst [vmem:[%s5564 + $0x139] sm:$0xff] %v5418
    %5592 = vst [vmem:[%s5564 + $0x141] sm:$0xff] %v5419
    %5593 = vst [vmem:[%s5564 + $0x151] sm:$0xff] %v5420
    %5594 = vst [vmem:[%s5564 + $0x159] sm:$0xff] %v5421
    %5595 = vst [vmem:[%s5564 + $0x169] sm:$0xff] %v5422
    %5596 = vst [vmem:[%s5564 + $0x171] sm:$0xff] %v5423
    %5597 = vst [vmem:[%s5564 + $0x1b1] sm:$0xff] %v5424
    %5598 = vst [vmem:[%s5564 + $0x1b9] sm:$0xff] %v5425
    %5599 = vst [vmem:[%s5564 + $0x1c9] sm:$0xff] %v5426
    %5600 = vst [vmem:[%s5564 + $0x1d1] sm:$0xff] %v5427
    %5601 = vst [vmem:[%s5564 + $0x1e1] sm:$0xff] %v5428
    %5602 = vst [vmem:[%s5564 + $0x1e9] sm:$0xff] %v5429
    %5603 = vst [vmem:[%s5564 + $0x1f9] sm:$0xff] %v5430
    %5604 = vst [vmem:[%s5564 + $0x201] sm:$0xff] %v5431
    %5605 = vst [vmem:[%s5564 + $0x211] sm:$0xff] %v5432
    %5606 = vst [vmem:[%s5564 + $0x219] sm:$0xff] %v5433
    %5607 = vst [vmem:[%s5564 + $0x229] sm:$0xff] %v5434
    %5608 = vst [vmem:[%s5564 + $0x231] sm:$0xff] %v5435
    %5609 = vst [vmem:[%s5564 + $0x241] sm:$0xff] %v5436
    %5610 = vst [vmem:[%s5564 + $0x249] sm:$0xff] %v5437
    %5611 = vst [vmem:[%s5564 + $0x259] sm:$0xff] %v5438
    %5612 = vst [vmem:[%s5564 + $0x261] sm:$0xff] %v5439
    %5613 = vst [vmem:[%s5564 + $0x271] sm:$0xff] %v5440
    %5614 = vst [vmem:[%s5564 + $0x279] sm:$0xff] %v5441
    %5615 = vst [vmem:[%s5564 + $0x289] sm:$0xff] %v5442
    %5616 = vst [vmem:[%s5564 + $0x291] sm:$0xff] %v5443
    %5617 = vst [vmem:[%s5564 + $0x2a1] sm:$0xff] %v5444
    %5618 = vst [vmem:[%s5564 + $0x2a9] sm:$0xff] %v5445
    %5619 = vst [vmem:[%s5564 + $0x2b9] sm:$0xff] %v5446
    %5620 = vst [vmem:[%s5564 + $0x2c1] sm:$0xff] %v5447
    %5621 = vst [vmem:[%s5564 + $0x2d1] sm:$0xff] %v5448
    %5622 = vst [vmem:[%s5564 + $0x2d9] sm:$0xff] %v5449
    %5623 = vst [vmem:[%s5564 + $0x2e9] sm:$0xff] %v5450
    %5624 = vst [vmem:[%s5564 + $0x2f1] sm:$0xff] %v5451
    %5625 = vst [vmem:[%s5564 + $0x301] sm:$0xff] %v5452
    %5626 = vst [vmem:[%s5564 + $0x309] sm:$0xff] %v5453
    %5627 = vst [vmem:[%s5564 + $0x319] sm:$0xff] %v5454
    %5628 = vst [vmem:[%s5564 + $0x321] sm:$0xff] %v5455
    %v5629 = vld [vmem:[#allocation2] sm:$0xff]
    %v5630 = vld [vmem:[#allocation2 + $0x8] sm:$0xff]
    %v5631 = vld [vmem:[#allocation2 + $0x10] sm:$0x3]
    %v5632 = vld [vmem:[#allocation2 + $0x18] sm:$0xff]
    %v5633 = vld [vmem:[#allocation2 + $0x20] sm:$0xff]
    %v5634 = vld [vmem:[#allocation2 + $0x28] sm:$0x3]
    %v5635 = vld [vmem:[#allocation2 + $0x30] sm:$0xff]
    %v5636 = vld [vmem:[#allocation2 + $0x38] sm:$0xff]
    %v5637 = vld [vmem:[#allocation2 + $0x40] sm:$0x3]
    %v5638 = vld [vmem:[#allocation2 + $0x48] sm:$0xff]
    %v5639 = vld [vmem:[#allocation2 + $0x50] sm:$0xff]
    %v5640 = vld [vmem:[#allocation2 + $0x58] sm:$0x3]
    %v5641 = vld [vmem:[#allocation2 + $0x60] sm:$0xff]
    %v5642 = vld [vmem:[#allocation2 + $0x68] sm:$0xff]
    %v5643 = vld [vmem:[#allocation2 + $0x70] sm:$0x3]
    %v5644 = vld [vmem:[#allocation2 + $0x78] sm:$0xff]
    %v5645 = vld [vmem:[#allocation2 + $0x80] sm:$0xff]
    %v5646 = vld [vmem:[#allocation2 + $0x88] sm:$0x3]
    %v5647 = vld [vmem:[#allocation2 + $0x90] sm:$0xff]
    %v5648 = vld [vmem:[#allocation2 + $0x98] sm:$0xff]
    %v5649 = vld [vmem:[#allocation2 + $0xa0] sm:$0x3]
    %v5650 = vld [vmem:[#allocation2 + $0xa8] sm:$0xff]
    %v5651 = vld [vmem:[#allocation2 + $0xb0] sm:$0xff]
    %v5652 = vld [vmem:[#allocation2 + $0xb8] sm:$0x3]
    %v5653 = vld [vmem:[#allocation2 + $0xc0] sm:$0xff]
    %v5654 = vld [vmem:[#allocation2 + $0xc8] sm:$0xff]
    %v5655 = vld [vmem:[#allocation2 + $0xd0] sm:$0x3]
    %v5656 = vld [vmem:[#allocation2 + $0xd8] sm:$0xff]
    %v5657 = vld [vmem:[#allocation2 + $0xe0] sm:$0xff]
    %v5658 = vld [vmem:[#allocation2 + $0xe8] sm:$0x3]
    %v5659 = vld [vmem:[#allocation2 + $0xf0] sm:$0xff]
    %v5660 = vld [vmem:[#allocation2 + $0xf8] sm:$0xff]
    %v5661 = vld [vmem:[#allocation2 + $0x100] sm:$0x3]
    %v5662 = vld [vmem:[#allocation2 + $0x108] sm:$0xff]
    %v5663 = vld [vmem:[#allocation2 + $0x110] sm:$0xff]
    %v5664 = vld [vmem:[#allocation2 + $0x118] sm:$0x3]
    %v5665 = vld [vmem:[#allocation2 + $0x120] sm:$0xff]
    %v5666 = vld [vmem:[#allocation2 + $0x128] sm:$0xff]
    %v5667 = vld [vmem:[#allocation2 + $0x130] sm:$0x3]
    %v5668 = vld [vmem:[#allocation2 + $0x138] sm:$0xff]
    %v5669 = vld [vmem:[#allocation2 + $0x140] sm:$0xff]
    %v5670 = vld [vmem:[#allocation2 + $0x148] sm:$0x3]
    %v5671 = vld [vmem:[#allocation2 + $0x150] sm:$0xff]
    %v5672 = vld [vmem:[#allocation2 + $0x158] sm:$0xff]
    %v5673 = vld [vmem:[#allocation2 + $0x160] sm:$0x3]
    %v5674 = vld [vmem:[#allocation2 + $0x168] sm:$0xff]
    %v5675 = vld [vmem:[#allocation2 + $0x170] sm:$0xff]
    %v5676 = vld [vmem:[#allocation2 + $0x178] sm:$0x3]
    %v5677 = vld [vmem:[#allocation2 + $0x180] sm:$0xff]
    %v5678 = vld [vmem:[#allocation2 + $0x188] sm:$0xff]
    %v5679 = vld [vmem:[#allocation2 + $0x190] sm:$0x3]
    %v5680 = vld [vmem:[#allocation2 + $0x198] sm:$0xff]
    %v5681 = vld [vmem:[#allocation2 + $0x1a0] sm:$0xff]
    %v5682 = vld [vmem:[#allocation2 + $0x1a8] sm:$0x3]
    %v5683 = vld [vmem:[#allocation2 + $0x1b0] sm:$0xff]
    %v5684 = vld [vmem:[#allocation2 + $0x1b8] sm:$0xff]
    %v5685 = vld [vmem:[#allocation2 + $0x1c0] sm:$0x3]
    %v5686 = vld [vmem:[#allocation2 + $0x1c8] sm:$0xff]
    %v5687 = vld [vmem:[#allocation2 + $0x1d0] sm:$0xff]
    %v5688 = vld [vmem:[#allocation2 + $0x1d8] sm:$0x3]
    %v5689 = vld [vmem:[#allocation2 + $0x1e0] sm:$0xff]
    %v5690 = vld [vmem:[#allocation2 + $0x1e8] sm:$0xff]
    %v5691 = vld [vmem:[#allocation2 + $0x1f0] sm:$0x3]
    %v5692 = vld [vmem:[#allocation2 + $0x1f8] sm:$0xff]
    %v5693 = vld [vmem:[#allocation2 + $0x200] sm:$0xff]
    %v5694 = vld [vmem:[#allocation2 + $0x208] sm:$0x3]
    %v5695 = vld [vmem:[#allocation2 + $0x210] sm:$0xff]
    %v5696 = vld [vmem:[#allocation2 + $0x218] sm:$0xff]
    %v5697 = vld [vmem:[#allocation2 + $0x220] sm:$0x3]
    %v5698 = vld [vmem:[#allocation2 + $0x228] sm:$0xff]
    %v5699 = vld [vmem:[#allocation2 + $0x230] sm:$0xff]
    %v5700 = vld [vmem:[#allocation2 + $0x238] sm:$0x3]
    %v5701 = vld [vmem:[#allocation2 + $0x240] sm:$0xff]
    %v5702 = vld [vmem:[#allocation2 + $0x248] sm:$0xff]
    %v5703 = vld [vmem:[#allocation2 + $0x250] sm:$0x3]
    %v5704 = vld [vmem:[#allocation2 + $0x258] sm:$0xff]
    %v5705 = vld [vmem:[#allocation2 + $0x260] sm:$0xff]
    %v5706 = vld [vmem:[#allocation2 + $0x268] sm:$0x3]
    %v5707 = vld [vmem:[#allocation2 + $0x270] sm:$0xff]
    %v5708 = vld [vmem:[#allocation2 + $0x278] sm:$0xff]
    %v5709 = vld [vmem:[#allocation2 + $0x280] sm:$0x3]
    %v5710 = vld [vmem:[#allocation2 + $0x288] sm:$0xff]
    %v5711 = vld [vmem:[#allocation2 + $0x290] sm:$0xff]
    %v5712 = vld [vmem:[#allocation2 + $0x298] sm:$0x3]
    %v5713 = vld [vmem:[#allocation2 + $0x2a0] sm:$0xff]
    %v5714 = vld [vmem:[#allocation2 + $0x2a8] sm:$0xff]
    %v5715 = vld [vmem:[#allocation2 + $0x2b0] sm:$0x3]
    %v5716 = vld [vmem:[#allocation2 + $0x2b8] sm:$0xff]
    %v5717 = vld [vmem:[#allocation2 + $0x2c0] sm:$0xff]
    %v5718 = vld [vmem:[#allocation2 + $0x2c8] sm:$0x3]
    %v5719 = vld [vmem:[#allocation2 + $0x2d0] sm:$0xff]
    %v5720 = vld [vmem:[#allocation2 + $0x2d8] sm:$0xff]
    %v5721 = vld [vmem:[#allocation2 + $0x2e0] sm:$0x3]
    %v5722 = vld [vmem:[#allocation2 + $0x2e8] sm:$0xff]
    %v5723 = vld [vmem:[#allocation2 + $0x2f0] sm:$0xff]
    %v5724 = vld [vmem:[#allocation2 + $0x2f8] sm:$0x3]
    %v5725 = vld [vmem:[#allocation2 + $0x300] sm:$0xff]
    %v5726 = vld [vmem:[#allocation2 + $0x308] sm:$0xff]
    %v5727 = vld [vmem:[#allocation2 + $0x310] sm:$0x3]
    %v5728 = vld [vmem:[#allocation2 + $0x318] sm:$0xff]
    %v5729 = vld [vmem:[#allocation2 + $0x320] sm:$0xff]
    %v5730 = vld [vmem:[#allocation2 + $0x328] sm:$0x3]
    %v5731 = vld [vmem:[#allocation2 + $0x330] sm:$0xff]
    %v5732 = vld [vmem:[#allocation2 + $0x338] sm:$0xff]
    %v5733 = vld [vmem:[#allocation2 + $0x340] sm:$0x3]
    %v5734 = vld [vmem:[#allocation2 + $0x348] sm:$0xff]
    %v5735 = vld [vmem:[#allocation2 + $0x350] sm:$0xff]
    %v5736 = vld [vmem:[#allocation2 + $0x358] sm:$0x3]
    %v5737 = vld [vmem:[#allocation4] sm:$0xff]
    %v5738 = vld [vmem:[#allocation4 + $0x8] sm:$0xff]
    %v5739 = vld [vmem:[#allocation4 + $0x10] sm:$0xff]
    %v5740 = vld [vmem:[#allocation4 + $0x18] sm:$0xff]
    %v5741 = vld [vmem:[#allocation4 + $0x20] sm:$0xff]
    %v5742 = vld [vmem:[#allocation4 + $0x28] sm:$0xff]
    %v5743 = vld [vmem:[#allocation4 + $0x30] sm:$0xff]
    %v5744 = vld [vmem:[#allocation4 + $0x38] sm:$0xff]
    %v5745 = vld [vmem:[#allocation4 + $0x40] sm:$0xff]
    %v5746 = vld [vmem:[#allocation4 + $0x48] sm:$0xff]
    %v5747 = vld [vmem:[#allocation4 + $0x50] sm:$0xff]
    %v5748 = vld [vmem:[#allocation4 + $0x58] sm:$0xff]
    %v5749 = vld [vmem:[#allocation4 + $0x60] sm:$0xff]
    %v5750 = vld [vmem:[#allocation4 + $0x68] sm:$0xff]
    %v5751 = vld [vmem:[#allocation4 + $0x70] sm:$0xff]
    %v5752 = vld [vmem:[#allocation4 + $0x78] sm:$0xff]
    %v5849 = vrot.slane %v5629, 1
    %v5850 = vrot.slane %v5630, 1
    %v5851 = vsel %vm271, %v5849, %v5850
    %v5852 = vrot.slane %v5631, 1
    %v5853 = vsel %vm271, %v5850, %v5852
    %v5854 = vrot.slane %v5632, 1
    %v5855 = vrot.slane %v5633, 1
    %v5856 = vsel %vm271, %v5854, %v5855
    %v5857 = vrot.slane %v5634, 1
    %v5858 = vsel %vm271, %v5855, %v5857
    %v5859 = vrot.slane %v5635, 1
    %v5860 = vrot.slane %v5636, 1
    %v5861 = vsel %vm271, %v5859, %v5860
    %v5862 = vrot.slane %v5637, 1
    %v5863 = vsel %vm271, %v5860, %v5862
    %v5864 = vrot.slane %v5638, 1
    %v5865 = vrot.slane %v5639, 1
    %v5866 = vsel %vm271, %v5864, %v5865
    %v5867 = vrot.slane %v5640, 1
    %v5868 = vsel %vm271, %v5865, %v5867
    %v5869 = vrot.slane %v5641, 1
    %v5870 = vrot.slane %v5642, 1
    %v5871 = vsel %vm271, %v5869, %v5870
    %v5872 = vrot.slane %v5643, 1
    %v5873 = vsel %vm271, %v5870, %v5872
    %v5874 = vrot.slane %v5644, 1
    %v5875 = vrot.slane %v5645, 1
    %v5876 = vsel %vm271, %v5874, %v5875
    %v5877 = vrot.slane %v5646, 1
    %v5878 = vsel %vm271, %v5875, %v5877
    %v5879 = vrot.slane %v5647, 1
    %v5880 = vrot.slane %v5648, 1
    %v5881 = vsel %vm271, %v5879, %v5880
    %v5882 = vrot.slane %v5649, 1
    %v5883 = vsel %vm271, %v5880, %v5882
    %v5884 = vrot.slane %v5650, 1
    %v5885 = vrot.slane %v5651, 1
    %v5886 = vsel %vm271, %v5884, %v5885
    %v5887 = vrot.slane %v5652, 1
    %v5888 = vsel %vm271, %v5885, %v5887
    %v5889 = vrot.slane %v5653, 1
    %v5890 = vrot.slane %v5654, 1
    %v5891 = vsel %vm271, %v5889, %v5890
    %v5892 = vrot.slane %v5655, 1
    %v5893 = vsel %vm271, %v5890, %v5892
    %v5894 = vrot.slane %v5656, 1
    %v5895 = vrot.slane %v5657, 1
    %v5896 = vsel %vm271, %v5894, %v5895
    %v5897 = vrot.slane %v5658, 1
    %v5898 = vsel %vm271, %v5895, %v5897
    %v5899 = vrot.slane %v5659, 1
    %v5900 = vrot.slane %v5660, 1
    %v5901 = vsel %vm271, %v5899, %v5900
    %v5902 = vrot.slane %v5661, 1
    %v5903 = vsel %vm271, %v5900, %v5902
    %v5904 = vrot.slane %v5662, 1
    %v5905 = vrot.slane %v5663, 1
    %v5906 = vsel %vm271, %v5904, %v5905
    %v5907 = vrot.slane %v5664, 1
    %v5908 = vsel %vm271, %v5905, %v5907
    %v5909 = vrot.slane %v5665, 1
    %v5910 = vrot.slane %v5666, 1
    %v5911 = vsel %vm271, %v5909, %v5910
    %v5912 = vrot.slane %v5667, 1
    %v5913 = vsel %vm271, %v5910, %v5912
    %v5914 = vrot.slane %v5668, 1
    %v5915 = vrot.slane %v5669, 1
    %v5916 = vsel %vm271, %v5914, %v5915
    %v5917 = vrot.slane %v5670, 1
    %v5918 = vsel %vm271, %v5915, %v5917
    %v5919 = vrot.slane %v5671, 1
    %v5920 = vrot.slane %v5672, 1
    %v5921 = vsel %vm271, %v5919, %v5920
    %v5922 = vrot.slane %v5673, 1
    %v5923 = vsel %vm271, %v5920, %v5922
    %v5924 = vrot.slane %v5674, 1
    %v5925 = vrot.slane %v5675, 1
    %v5926 = vsel %vm271, %v5924, %v5925
    %v5927 = vrot.slane %v5676, 1
    %v5928 = vsel %vm271, %v5925, %v5927
    %v5929 = vrot.slane %v5683, 1
    %v5930 = vrot.slane %v5684, 1
    %v5931 = vsel %vm271, %v5929, %v5930
    %v5932 = vrot.slane %v5685, 1
    %v5933 = vsel %vm271, %v5930, %v5932
    %v5934 = vrot.slane %v5686, 1
    %v5935 = vrot.slane %v5687, 1
    %v5936 = vsel %vm271, %v5934, %v5935
    %v5937 = vrot.slane %v5688, 1
    %v5938 = vsel %vm271, %v5935, %v5937
    %v5939 = vrot.slane %v5689, 1
    %v5940 = vrot.slane %v5690, 1
    %v5941 = vsel %vm271, %v5939, %v5940
    %v5942 = vrot.slane %v5691, 1
    %v5943 = vsel %vm271, %v5940, %v5942
    %v5944 = vrot.slane %v5692, 1
    %v5945 = vrot.slane %v5693, 1
    %v5946 = vsel %vm271, %v5944, %v5945
    %v5947 = vrot.slane %v5694, 1
    %v5948 = vsel %vm271, %v5945, %v5947
    %v5949 = vrot.slane %v5695, 1
    %v5950 = vrot.slane %v5696, 1
    %v5951 = vsel %vm271, %v5949, %v5950
    %v5952 = vrot.slane %v5697, 1
    %v5953 = vsel %vm271, %v5950, %v5952
    %v5954 = vrot.slane %v5698, 1
    %v5955 = vrot.slane %v5699, 1
    %v5956 = vsel %vm271, %v5954, %v5955
    %v5957 = vrot.slane %v5700, 1
    %v5958 = vsel %vm271, %v5955, %v5957
    %v5959 = vrot.slane %v5701, 1
    %v5960 = vrot.slane %v5702, 1
    %v5961 = vsel %vm271, %v5959, %v5960
    %v5962 = vrot.slane %v5703, 1
    %v5963 = vsel %vm271, %v5960, %v5962
    %v5964 = vrot.slane %v5704, 1
    %v5965 = vrot.slane %v5705, 1
    %v5966 = vsel %vm271, %v5964, %v5965
    %v5967 = vrot.slane %v5706, 1
    %v5968 = vsel %vm271, %v5965, %v5967
    %v5969 = vrot.slane %v5707, 1
    %v5970 = vrot.slane %v5708, 1
    %v5971 = vsel %vm271, %v5969, %v5970
    %v5972 = vrot.slane %v5709, 1
    %v5973 = vsel %vm271, %v5970, %v5972
    %v5974 = vrot.slane %v5710, 1
    %v5975 = vrot.slane %v5711, 1
    %v5976 = vsel %vm271, %v5974, %v5975
    %v5977 = vrot.slane %v5712, 1
    %v5978 = vsel %vm271, %v5975, %v5977
    %v5979 = vrot.slane %v5713, 1
    %v5980 = vrot.slane %v5714, 1
    %v5981 = vsel %vm271, %v5979, %v5980
    %v5982 = vrot.slane %v5715, 1
    %v5983 = vsel %vm271, %v5980, %v5982
    %v5984 = vrot.slane %v5716, 1
    %v5985 = vrot.slane %v5717, 1
    %v5986 = vsel %vm271, %v5984, %v5985
    %v5987 = vrot.slane %v5718, 1
    %v5988 = vsel %vm271, %v5985, %v5987
    %v5989 = vrot.slane %v5719, 1
    %v5990 = vrot.slane %v5720, 1
    %v5991 = vsel %vm271, %v5989, %v5990
    %v5992 = vrot.slane %v5721, 1
    %v5993 = vsel %vm271, %v5990, %v5992
    %v5994 = vrot.slane %v5722, 1
    %v5995 = vrot.slane %v5723, 1
    %v5996 = vsel %vm271, %v5994, %v5995
    %v5997 = vrot.slane %v5724, 1
    %v5998 = vsel %vm271, %v5995, %v5997
    %v5999 = vrot.slane %v5725, 1
    %v6000 = vrot.slane %v5726, 1
    %v6001 = vsel %vm271, %v5999, %v6000
    %v6002 = vrot.slane %v5727, 1
    %v6003 = vsel %vm271, %v6000, %v6002
    %v6004 = vrot.slane %v5728, 1
    %v6005 = vrot.slane %v5729, 1
    %v6006 = vsel %vm271, %v6004, %v6005
    %v6007 = vrot.slane %v5730, 1
    %v6008 = vsel %vm271, %v6005, %v6007
    %s6073 = scalar_lea.vmem [#allocation4], 128
    %v6074 = vld [vmem:[%s6073] sm:$0xff]
    %v6075 = vld [vmem:[%s6073 + $0x8] sm:$0xff]
    %v6076 = vld [vmem:[%s6073 + $0x10] sm:$0xff]
    %v6077 = vld [vmem:[%s6073 + $0x18] sm:$0xff]
    %v6078 = vld [vmem:[%s6073 + $0x20] sm:$0xff]
    %v6079 = vld [vmem:[%s6073 + $0x28] sm:$0xff]
    %v6080 = vld [vmem:[%s6073 + $0x30] sm:$0xff]
    %v6081 = vld [vmem:[%s6073 + $0x38] sm:$0xff]
    %v6082 = vld [vmem:[%s6073 + $0x40] sm:$0xff]
    %v6083 = vld [vmem:[%s6073 + $0x48] sm:$0xff]
    %v6084 = vld [vmem:[%s6073 + $0x50] sm:$0xff]
    %v6085 = vld [vmem:[%s6073 + $0x58] sm:$0xff]
    %v6086 = vld [vmem:[%s6073 + $0x60] sm:$0xff]
    %v6087 = vld [vmem:[%s6073 + $0x68] sm:$0xff]
    %v6088 = vld [vmem:[%s6073 + $0x70] sm:$0xff]
    %v6089 = vld [vmem:[%s6073 + $0x78] sm:$0xff]
    %6090 = vmatprep.subr.mxu0 0.0
    %6091 = vmatpush1.msra.mxu0 %v6074
    %6092 = vmatprep.subr.mxu0 0.0
    %6093 = vmatpush1.msra.mxu0 %v6075
    %6094 = vmatprep.subr.mxu0 0.0
    %6095 = vmatpush1.msra.mxu0 %v6076
    %6096 = vmatprep.subr.mxu0 0.0
    %6097 = vmatpush1.msra.mxu0 %v6077
    %6098 = vmatprep.subr.mxu0 0.0
    %6099 = vmatpush1.msra.mxu0 %v6078
    %6100 = vmatprep.subr.mxu0 0.0
    %6101 = vmatpush1.msra.mxu0 %v6079
    %6102 = vmatprep.subr.mxu0 0.0
    %6103 = vmatpush1.msra.mxu0 %v6080
    %6104 = vmatprep.subr.mxu0 0.0
    %6105 = vmatpush1.msra.mxu0 %v6081
    %6106 = vmatprep.subr.mxu0 0.0
    %6107 = vmatpush1.msra.mxu0 %v6082
    %6108 = vmatprep.subr.mxu0 0.0
    %6109 = vmatpush1.msra.mxu0 %v6083
    %6110 = vmatprep.subr.mxu0 0.0
    %6111 = vmatpush1.msra.mxu0 %v6084
    %6112 = vmatprep.subr.mxu0 0.0
    %6113 = vmatpush1.msra.mxu0 %v6085
    %6114 = vmatprep.subr.mxu0 0.0
    %6115 = vmatpush1.msra.mxu0 %v6086
    %6116 = vmatprep.subr.mxu0 0.0
    %6117 = vmatpush1.msra.mxu0 %v6087
    %6118 = vmatprep.subr.mxu0 0.0
    %6119 = vmatpush1.msra.mxu0 %v6088
    %6120 = vmatprep.subr.mxu0 0.0
    %6121 = vmatpush1.msra.mxu0 %v6089
    %6122 = vmatprep.subr.mxu0 0.0
    %6123 = vmatpush1.msra.mxu0 0.0
    %6124 = vmatprep.subr.mxu0 0.0
    %6125 = vmatpush1.msra.mxu0 0.0
    %6126 = vmatprep.subr.mxu0 0.0
    %6127 = vmatpush1.msra.mxu0 0.0
    %6128 = vmatprep.subr.mxu0 0.0
    %6129 = vmatpush1.msra.mxu0 0.0
    %6130 = vmatprep.subr.mxu0 0.0
    %6131 = vmatpush1.msra.mxu0 0.0
    %6132 = vmatprep.subr.mxu0 0.0
    %6133 = vmatpush1.msra.mxu0 0.0
    %6134 = vmatprep.subr.mxu0 0.0
    %6135 = vmatpush1.msra.mxu0 0.0
    %6136 = vmatprep.subr.mxu0 0.0
    %6137 = vmatpush1.msra.mxu0 0.0
    %6138 = vmatprep.subr.mxu0 0.0
    %6139 = vmatpush1.msra.mxu0 0.0
    %6140 = vmatprep.subr.mxu0 0.0
    %6141 = vmatpush1.msra.mxu0 0.0
    %6142 = vmatprep.subr.mxu0 0.0
    %6143 = vmatpush1.msra.mxu0 0.0
    %6144 = vmatprep.subr.mxu0 0.0
    %6145 = vmatpush1.msra.mxu0 0.0
    %6146 = vmatprep.subr.mxu0 0.0
    %6147 = vmatpush1.msra.mxu0 0.0
    %6148 = vmatprep.subr.mxu0 0.0
    %6149 = vmatpush1.msra.mxu0 0.0
    %6150 = vmatprep.subr.mxu0 0.0
    %6151 = vmatpush1.msra.mxu0 0.0
    %6152 = vmatprep.subr.mxu0 0.0
    %6153 = vmatpush1.msra.mxu0 0.0
    %6154 = vmatprep.mubr.f32.mxu0 0.0
    %6155 = vmatmul.mubr.f32.gmra.mrb[0].mxu0 %v5851
    %v6156 = vpop.f32.mrb[0].mxu0
    %v6157 = vadd.f32 0.0, %v6156
    %v6158 = vpop.f32.mrb[0].mxu0
    %6159 = vmatprep.mubr.f32.mxu0 0.0
    %6160 = vmatmul.mubr.f32.gmra.mrb[0].mxu0 %v5853
    %v6161 = vpop.f32.mrb[0].mxu0
    %v6162 = vadd.f32 0.0, %v6161
    %v6163 = vpop.f32.mrb[0].mxu0
    %6164 = vmatprep.mubr.f32.mxu0 0.0
    %6165 = vmatmul.mubr.f32.gmra.mrb[0].mxu0 %v5856
    %v6166 = vpop.f32.mrb[0].mxu0
    %v6167 = vadd.f32 0.0, %v6166
    %v6168 = vpop.f32.mrb[0].mxu0
    %6169 = vmatprep.mubr.f32.mxu0 0.0
    %6170 = vmatmul.mubr.f32.gmra.mrb[0].mxu0 %v5858
    %v6171 = vpop.f32.mrb[0].mxu0
    %v6172 = vadd.f32 0.0, %v6171
    %v6173 = vpop.f32.mrb[0].mxu0
    %6174 = vmatprep.mubr.f32.mxu0 0.0
    %6175 = vmatmul.mubr.f32.gmra.mrb[0].mxu0 %v5861
    %v6176 = vpop.f32.mrb[0].mxu0
    %v6177 = vadd.f32 0.0, %v6176
    %v6178 = vpop.f32.mrb[0].mxu0
    %6179 = vmatprep.mubr.f32.mxu0 0.0
    %6180 = vmatmul.mubr.f32.gmra.mrb[0].mxu0 %v5863
    %v6181 = vpop.f32.mrb[0].mxu0
    %v6182 = vadd.f32 0.0, %v6181
    %v6183 = vpop.f32.mrb[0].mxu0
    %6184 = vmatprep.mubr.f32.mxu0 0.0
    %6185 = vmatmul.mubr.f32.gmra.mrb[0].mxu0 %v5866
    %v6186 = vpop.f32.mrb[0].mxu0
    %v6187 = vadd.f32 0.0, %v6186
    %v6188 = vpop.f32.mrb[0].mxu0
    %6189 = vmatprep.mubr.f32.mxu0 0.0
    %6190 = vmatmul.mubr.f32.gmra.mrb[0].mxu0 %v5868
    %v6191 = vpop.f32.mrb[0].mxu0
    %v6192 = vadd.f32 0.0, %v6191
    %v6193 = vpop.f32.mrb[0].mxu0
    %6194 = vmatprep.mubr.f32.mxu0 0.0
    %6195 = vmatmul.mubr.f32.gmra.mrb[0].mxu0 %v5871
    %v6196 = vpop.f32.mrb[0].mxu0
    %v6197 = vadd.f32 0.0, %v6196
    %v6198 = vpop.f32.mrb[0].mxu0
    %6199 = vmatprep.mubr.f32.mxu0 0.0
    %6200 = vmatmul.mubr.f32.gmra.mrb[0].mxu0 %v5873
    %v6201 = vpop.f32.mrb[0].mxu0
    %v6202 = vadd.f32 0.0, %v6201
    %v6203 = vpop.f32.mrb[0].mxu0
    %6204 = vmatprep.mubr.f32.mxu0 0.0
    %6205 = vmatmul.mubr.f32.gmra.mrb[0].mxu0 %v5876
    %v6206 = vpop.f32.mrb[0].mxu0
    %v6207 = vadd.f32 0.0, %v6206
    %v6208 = vpop.f32.mrb[0].mxu0
    %6209 = vmatprep.mubr.f32.mxu0 0.0
    %6210 = vmatmul.mubr.f32.gmra.mrb[0].mxu0 %v5878
    %v6211 = vpop.f32.mrb[0].mxu0
    %v6212 = vadd.f32 0.0, %v6211
    %v6213 = vpop.f32.mrb[0].mxu0
    %6214 = vmatprep.mubr.f32.mxu0 0.0
    %6215 = vmatmul.mubr.f32.gmra.mrb[0].mxu0 %v5881
    %v6216 = vpop.f32.mrb[0].mxu0
    %v6217 = vadd.f32 0.0, %v6216
    %v6218 = vpop.f32.mrb[0].mxu0
    %6219 = vmatprep.mubr.f32.mxu0 0.0
    %6220 = vmatmul.mubr.f32.gmra.mrb[0].mxu0 %v5883
    %v6221 = vpop.f32.mrb[0].mxu0
    %v6222 = vadd.f32 0.0, %v6221
    %v6223 = vpop.f32.mrb[0].mxu0
    %6224 = vmatprep.mubr.f32.mxu0 0.0
    %6225 = vmatmul.mubr.f32.gmra.mrb[0].mxu0 %v5886
    %v6226 = vpop.f32.mrb[0].mxu0
    %v6227 = vadd.f32 0.0, %v6226
    %v6228 = vpop.f32.mrb[0].mxu0
    %6229 = vmatprep.mubr.f32.mxu0 0.0
    %6230 = vmatmul.mubr.f32.gmra.mrb[0].mxu0 %v5888
    %v6231 = vpop.f32.mrb[0].mxu0
    %v6232 = vadd.f32 0.0, %v6231
    %v6233 = vpop.f32.mrb[0].mxu0
    %6234 = vmatprep.mubr.f32.mxu0 0.0
    %6235 = vmatmul.mubr.f32.gmra.mrb[0].mxu0 %v5891
    %v6236 = vpop.f32.mrb[0].mxu0
    %v6237 = vadd.f32 0.0, %v6236
    %v6238 = vpop.f32.mrb[0].mxu0
    %6239 = vmatprep.mubr.f32.mxu0 0.0
    %6240 = vmatmul.mubr.f32.gmra.mrb[0].mxu0 %v5893
    %v6241 = vpop.f32.mrb[0].mxu0
    %v6242 = vadd.f32 0.0, %v6241
    %v6243 = vpop.f32.mrb[0].mxu0
    %6244 = vmatprep.mubr.f32.mxu0 0.0
    %6245 = vmatmul.mubr.f32.gmra.mrb[0].mxu0 %v5896
    %v6246 = vpop.f32.mrb[0].mxu0
    %v6247 = vadd.f32 0.0, %v6246
    %v6248 = vpop.f32.mrb[0].mxu0
    %6249 = vmatprep.mubr.f32.mxu0 0.0
    %6250 = vmatmul.mubr.f32.gmra.mrb[0].mxu0 %v5898
    %v6251 = vpop.f32.mrb[0].mxu0
    %v6252 = vadd.f32 0.0, %v6251
    %v6253 = vpop.f32.mrb[0].mxu0
    %6254 = vmatprep.mubr.f32.mxu0 0.0
    %6255 = vmatmul.mubr.f32.gmra.mrb[0].mxu0 %v5901
    %v6256 = vpop.f32.mrb[0].mxu0
    %v6257 = vadd.f32 0.0, %v6256
    %v6258 = vpop.f32.mrb[0].mxu0
    %6259 = vmatprep.mubr.f32.mxu0 0.0
    %6260 = vmatmul.mubr.f32.gmra.mrb[0].mxu0 %v5903
    %v6261 = vpop.f32.mrb[0].mxu0
    %v6262 = vadd.f32 0.0, %v6261
    %v6263 = vpop.f32.mrb[0].mxu0
    %6264 = vmatprep.mubr.f32.mxu0 0.0
    %6265 = vmatmul.mubr.f32.gmra.mrb[0].mxu0 %v5906
    %v6266 = vpop.f32.mrb[0].mxu0
    %v6267 = vadd.f32 0.0, %v6266
    %v6268 = vpop.f32.mrb[0].mxu0
    %6269 = vmatprep.mubr.f32.mxu0 0.0
    %6270 = vmatmul.mubr.f32.gmra.mrb[0].mxu0 %v5908
    %v6271 = vpop.f32.mrb[0].mxu0
    %v6272 = vadd.f32 0.0, %v6271
    %v6273 = vpop.f32.mrb[0].mxu0
    %6274 = vmatprep.mubr.f32.mxu0 0.0
    %6275 = vmatmul.mubr.f32.gmra.mrb[0].mxu0 %v5911
    %v6276 = vpop.f32.mrb[0].mxu0
    %v6277 = vadd.f32 0.0, %v6276
    %v6278 = vpop.f32.mrb[0].mxu0
    %6279 = vmatprep.mubr.f32.mxu0 0.0
    %6280 = vmatmul.mubr.f32.gmra.mrb[0].mxu0 %v5913
    %v6281 = vpop.f32.mrb[0].mxu0
    %v6282 = vadd.f32 0.0, %v6281
    %v6283 = vpop.f32.mrb[0].mxu0
    %6284 = vmatprep.mubr.f32.mxu0 0.0
    %6285 = vmatmul.mubr.f32.gmra.mrb[0].mxu0 %v5916
    %v6286 = vpop.f32.mrb[0].mxu0
    %v6287 = vadd.f32 0.0, %v6286
    %v6288 = vpop.f32.mrb[0].mxu0
    %6289 = vmatprep.mubr.f32.mxu0 0.0
    %6290 = vmatmul.mubr.f32.gmra.mrb[0].mxu0 %v5918
    %v6291 = vpop.f32.mrb[0].mxu0
    %v6292 = vadd.f32 0.0, %v6291
    %v6293 = vpop.f32.mrb[0].mxu0
    %6294 = vmatprep.mubr.f32.mxu0 0.0
    %6295 = vmatmul.mubr.f32.gmra.mrb[0].mxu0 %v5921
    %v6296 = vpop.f32.mrb[0].mxu0
    %v6297 = vadd.f32 0.0, %v6296
    %v6298 = vpop.f32.mrb[0].mxu0
    %6299 = vmatprep.mubr.f32.mxu0 0.0
    %6300 = vmatmul.mubr.f32.gmra.mrb[0].mxu0 %v5923
    %v6301 = vpop.f32.mrb[0].mxu0
    %v6302 = vadd.f32 0.0, %v6301
    %v6303 = vpop.f32.mrb[0].mxu0
    %6304 = vmatprep.mubr.f32.mxu0 0.0
    %6305 = vmatmul.mubr.f32.gmra.mrb[0].mxu0 %v5926
    %v6306 = vpop.f32.mrb[0].mxu0
    %v6307 = vadd.f32 0.0, %v6306
    %v6308 = vpop.f32.mrb[0].mxu0
    %6309 = vmatprep.mubr.f32.mxu0 0.0
    %6310 = vmatmul.mubr.f32.gmra.mrb[0].mxu0 %v5928
    %v6311 = vpop.f32.mrb[0].mxu0
    %v6312 = vadd.f32 0.0, %v6311
    %v6313 = vpop.f32.mrb[0].mxu0
    %6314 = vmatprep.mubr.f32.mxu0 0.0
    %6315 = vmatmul.mubr.f32.gmra.mrb[0].mxu0 %v5931
    %v6316 = vpop.f32.mrb[0].mxu0
    %v6317 = vadd.f32 0.0, %v6316
    %v6318 = vpop.f32.mrb[0].mxu0
    %6319 = vmatprep.mubr.f32.mxu0 0.0
    %6320 = vmatmul.mubr.f32.gmra.mrb[0].mxu0 %v5933
    %v6321 = vpop.f32.mrb[0].mxu0
    %v6322 = vadd.f32 0.0, %v6321
    %v6323 = vpop.f32.mrb[0].mxu0
    %6324 = vmatprep.mubr.f32.mxu0 0.0
    %6325 = vmatmul.mubr.f32.gmra.mrb[0].mxu0 %v5936
    %v6326 = vpop.f32.mrb[0].mxu0
    %v6327 = vadd.f32 0.0, %v6326
    %v6328 = vpop.f32.mrb[0].mxu0
    %6329 = vmatprep.mubr.f32.mxu0 0.0
    %6330 = vmatmul.mubr.f32.gmra.mrb[0].mxu0 %v5938
    %v6331 = vpop.f32.mrb[0].mxu0
    %v6332 = vadd.f32 0.0, %v6331
    %v6333 = vpop.f32.mrb[0].mxu0
    %6334 = vmatprep.mubr.f32.mxu0 0.0
    %6335 = vmatmul.mubr.f32.gmra.mrb[0].mxu0 %v5941
    %v6336 = vpop.f32.mrb[0].mxu0
    %v6337 = vadd.f32 0.0, %v6336
    %v6338 = vpop.f32.mrb[0].mxu0
    %6339 = vmatprep.mubr.f32.mxu0 0.0
    %6340 = vmatmul.mubr.f32.gmra.mrb[0].mxu0 %v5943
    %v6341 = vpop.f32.mrb[0].mxu0
    %v6342 = vadd.f32 0.0, %v6341
    %v6343 = vpop.f32.mrb[0].mxu0
    %6344 = vmatprep.mubr.f32.mxu0 0.0
    %6345 = vmatmul.mubr.f32.gmra.mrb[0].mxu0 %v5946
    %v6346 = vpop.f32.mrb[0].mxu0
    %v6347 = vadd.f32 0.0, %v6346
    %v6348 = vpop.f32.mrb[0].mxu0
    %6349 = vmatprep.mubr.f32.mxu0 0.0
    %6350 = vmatmul.mubr.f32.gmra.mrb[0].mxu0 %v5948
    %v6351 = vpop.f32.mrb[0].mxu0
    %v6352 = vadd.f32 0.0, %v6351
    %v6353 = vpop.f32.mrb[0].mxu0
    %6354 = vmatprep.mubr.f32.mxu0 0.0
    %6355 = vmatmul.mubr.f32.gmra.mrb[0].mxu0 %v5951
    %v6356 = vpop.f32.mrb[0].mxu0
    %v6357 = vadd.f32 0.0, %v6356
    %v6358 = vpop.f32.mrb[0].mxu0
    %6359 = vmatprep.mubr.f32.mxu0 0.0
    %6360 = vmatmul.mubr.f32.gmra.mrb[0].mxu0 %v5953
    %v6361 = vpop.f32.mrb[0].mxu0
    %v6362 = vadd.f32 0.0, %v6361
    %v6363 = vpop.f32.mrb[0].mxu0
    %6364 = vmatprep.mubr.f32.mxu0 0.0
    %6365 = vmatmul.mubr.f32.gmra.mrb[0].mxu0 %v5956
    %v6366 = vpop.f32.mrb[0].mxu0
    %v6367 = vadd.f32 0.0, %v6366
    %v6368 = vpop.f32.mrb[0].mxu0
    %6369 = vmatprep.mubr.f32.mxu0 0.0
    %6370 = vmatmul.mubr.f32.gmra.mrb[0].mxu0 %v5958
    %v6371 = vpop.f32.mrb[0].mxu0
    %v6372 = vadd.f32 0.0, %v6371
    %v6373 = vpop.f32.mrb[0].mxu0
    %6374 = vmatprep.mubr.f32.mxu0 0.0
    %6375 = vmatmul.mubr.f32.gmra.mrb[0].mxu0 %v5961
    %v6376 = vpop.f32.mrb[0].mxu0
    %v6377 = vadd.f32 0.0, %v6376
    %v6378 = vpop.f32.mrb[0].mxu0
    %6379 = vmatprep.mubr.f32.mxu0 0.0
    %6380 = vmatmul.mubr.f32.gmra.mrb[0].mxu0 %v5963
    %v6381 = vpop.f32.mrb[0].mxu0
    %v6382 = vadd.f32 0.0, %v6381
    %v6383 = vpop.f32.mrb[0].mxu0
    %6384 = vmatprep.mubr.f32.mxu0 0.0
    %6385 = vmatmul.mubr.f32.gmra.mrb[0].mxu0 %v5966
    %v6386 = vpop.f32.mrb[0].mxu0
    %v6387 = vadd.f32 0.0, %v6386
    %v6388 = vpop.f32.mrb[0].mxu0
    %6389 = vmatprep.mubr.f32.mxu0 0.0
    %6390 = vmatmul.mubr.f32.gmra.mrb[0].mxu0 %v5968
    %v6391 = vpop.f32.mrb[0].mxu0
    %v6392 = vadd.f32 0.0, %v6391
    %v6393 = vpop.f32.mrb[0].mxu0
    %6394 = vmatprep.mubr.f32.mxu0 0.0
    %6395 = vmatmul.mubr.f32.gmra.mrb[0].mxu0 %v5971
    %v6396 = vpop.f32.mrb[0].mxu0
    %v6397 = vadd.f32 0.0, %v6396
    %v6398 = vpop.f32.mrb[0].mxu0
    %6399 = vmatprep.mubr.f32.mxu0 0.0
    %6400 = vmatmul.mubr.f32.gmra.mrb[0].mxu0 %v5973
    %v6401 = vpop.f32.mrb[0].mxu0
    %v6402 = vadd.f32 0.0, %v6401
    %v6403 = vpop.f32.mrb[0].mxu0
    %6404 = vmatprep.mubr.f32.mxu0 0.0
    %6405 = vmatmul.mubr.f32.gmra.mrb[0].mxu0 %v5976
    %v6406 = vpop.f32.mrb[0].mxu0
    %v6407 = vadd.f32 0.0, %v6406
    %v6408 = vpop.f32.mrb[0].mxu0
    %6409 = vmatprep.mubr.f32.mxu0 0.0
    %6410 = vmatmul.mubr.f32.gmra.mrb[0].mxu0 %v5978
    %v6411 = vpop.f32.mrb[0].mxu0
    %v6412 = vadd.f32 0.0, %v6411
    %v6413 = vpop.f32.mrb[0].mxu0
    %6414 = vmatprep.mubr.f32.mxu0 0.0
    %6415 = vmatmul.mubr.f32.gmra.mrb[0].mxu0 %v5981
    %v6416 = vpop.f32.mrb[0].mxu0
    %v6417 = vadd.f32 0.0, %v6416
    %v6418 = vpop.f32.mrb[0].mxu0
    %6419 = vmatprep.mubr.f32.mxu0 0.0
    %6420 = vmatmul.mubr.f32.gmra.mrb[0].mxu0 %v5983
    %v6421 = vpop.f32.mrb[0].mxu0
    %v6422 = vadd.f32 0.0, %v6421
    %v6423 = vpop.f32.mrb[0].mxu0
    %6424 = vmatprep.mubr.f32.mxu0 0.0
    %6425 = vmatmul.mubr.f32.gmra.mrb[0].mxu0 %v5986
    %v6426 = vpop.f32.mrb[0].mxu0
    %v6427 = vadd.f32 0.0, %v6426
    %v6428 = vpop.f32.mrb[0].mxu0
    %6429 = vmatprep.mubr.f32.mxu0 0.0
    %6430 = vmatmul.mubr.f32.gmra.mrb[0].mxu0 %v5988
    %v6431 = vpop.f32.mrb[0].mxu0
    %v6432 = vadd.f32 0.0, %v6431
    %v6433 = vpop.f32.mrb[0].mxu0
    %6434 = vmatprep.mubr.f32.mxu0 0.0
    %6435 = vmatmul.mubr.f32.gmra.mrb[0].mxu0 %v5991
    %v6436 = vpop.f32.mrb[0].mxu0
    %v6437 = vadd.f32 0.0, %v6436
    %v6438 = vpop.f32.mrb[0].mxu0
    %6439 = vmatprep.mubr.f32.mxu0 0.0
    %6440 = vmatmul.mubr.f32.gmra.mrb[0].mxu0 %v5993
    %v6441 = vpop.f32.mrb[0].mxu0
    %v6442 = vadd.f32 0.0, %v6441
    %v6443 = vpop.f32.mrb[0].mxu0
    %6444 = vmatprep.mubr.f32.mxu0 0.0
    %6445 = vmatmul.mubr.f32.gmra.mrb[0].mxu0 %v5996
    %v6446 = vpop.f32.mrb[0].mxu0
    %v6447 = vadd.f32 0.0, %v6446
    %v6448 = vpop.f32.mrb[0].mxu0
    %6449 = vmatprep.mubr.f32.mxu0 0.0
    %6450 = vmatmul.mubr.f32.gmra.mrb[0].mxu0 %v5998
    %v6451 = vpop.f32.mrb[0].mxu0
    %v6452 = vadd.f32 0.0, %v6451
    %v6453 = vpop.f32.mrb[0].mxu0
    %6454 = vmatprep.mubr.f32.mxu0 0.0
    %6455 = vmatmul.mubr.f32.gmra.mrb[0].mxu0 %v6001
    %v6456 = vpop.f32.mrb[0].mxu0
    %v6457 = vadd.f32 0.0, %v6456
    %v6458 = vpop.f32.mrb[0].mxu0
    %6459 = vmatprep.mubr.f32.mxu0 0.0
    %6460 = vmatmul.mubr.f32.gmra.mrb[0].mxu0 %v6003
    %v6461 = vpop.f32.mrb[0].mxu0
    %v6462 = vadd.f32 0.0, %v6461
    %v6463 = vpop.f32.mrb[0].mxu0
    %6464 = vmatprep.mubr.f32.mxu0 0.0
    %6465 = vmatmul.mubr.f32.gmra.mrb[0].mxu0 %v6006
    %v6466 = vpop.f32.mrb[0].mxu0
    %v6467 = vadd.f32 0.0, %v6466
    %v6468 = vpop.f32.mrb[0].mxu0
    %6469 = vmatprep.mubr.f32.mxu0 0.0
    %6470 = vmatmul.mubr.f32.gmra.mrb[0].mxu0 %v6008
    %v6471 = vpop.f32.mrb[0].mxu0
    %v6472 = vadd.f32 0.0, %v6471
    %v6473 = vpop.f32.mrb[0].mxu0
    %6474 = vdwg.mxu0
    %6475 = vmatprep.subr.mxu0 0.0
    %6476 = vmatpush1.msra.mxu0 %v5737
    %6477 = vmatprep.subr.mxu0 0.0
    %6478 = vmatpush1.msra.mxu0 %v5738
    %6479 = vmatprep.subr.mxu0 0.0
    %6480 = vmatpush1.msra.mxu0 %v5739
    %6481 = vmatprep.subr.mxu0 0.0
    %6482 = vmatpush1.msra.mxu0 %v5740
    %6483 = vmatprep.subr.mxu0 0.0
    %6484 = vmatpush1.msra.mxu0 %v5741
    %6485 = vmatprep.subr.mxu0 0.0
    %6486 = vmatpush1.msra.mxu0 %v5742
    %6487 = vmatprep.subr.mxu0 0.0
    %6488 = vmatpush1.msra.mxu0 %v5743
    %6489 = vmatprep.subr.mxu0 0.0
    %6490 = vmatpush1.msra.mxu0 %v5744
    %6491 = vmatprep.subr.mxu0 0.0
    %6492 = vmatpush1.msra.mxu0 %v5745
    %6493 = vmatprep.subr.mxu0 0.0
    %6494 = vmatpush1.msra.mxu0 %v5746
    %6495 = vmatprep.subr.mxu0 0.0
    %6496 = vmatpush1.msra.mxu0 %v5747
    %6497 = vmatprep.subr.mxu0 0.0
    %6498 = vmatpush1.msra.mxu0 %v5748
    %6499 = vmatprep.subr.mxu0 0.0
    %6500 = vmatpush1.msra.mxu0 %v5749
    %6501 = vmatprep.subr.mxu0 0.0
    %6502 = vmatpush1.msra.mxu0 %v5750
    %6503 = vmatprep.subr.mxu0 0.0
    %6504 = vmatpush1.msra.mxu0 %v5751
    %6505 = vmatprep.subr.mxu0 0.0
    %6506 = vmatpush1.msra.mxu0 %v5752
    %6507 = vmatprep.subr.mxu0 0.0
    %6508 = vmatpush1.msra.mxu0 0.0
    %6509 = vmatprep.subr.mxu0 0.0
    %6510 = vmatpush1.msra.mxu0 0.0
    %6511 = vmatprep.subr.mxu0 0.0
    %6512 = vmatpush1.msra.mxu0 0.0
    %6513 = vmatprep.subr.mxu0 0.0
    %6514 = vmatpush1.msra.mxu0 0.0
    %6515 = vmatprep.subr.mxu0 0.0
    %6516 = vmatpush1.msra.mxu0 0.0
    %6517 = vmatprep.subr.mxu0 0.0
    %6518 = vmatpush1.msra.mxu0 0.0
    %6519 = vmatprep.subr.mxu0 0.0
    %6520 = vmatpush1.msra.mxu0 0.0
    %6521 = vmatprep.subr.mxu0 0.0
    %6522 = vmatpush1.msra.mxu0 0.0
    %6523 = vmatprep.subr.mxu0 0.0
    %6524 = vmatpush1.msra.mxu0 0.0
    %6525 = vmatprep.subr.mxu0 0.0
    %6526 = vmatpush1.msra.mxu0 0.0
    %6527 = vmatprep.subr.mxu0 0.0
    %6528 = vmatpush1.msra.mxu0 0.0
    %6529 = vmatprep.subr.mxu0 0.0
    %6530 = vmatpush1.msra.mxu0 0.0
    %6531 = vmatprep.subr.mxu0 0.0
    %6532 = vmatpush1.msra.mxu0 0.0
    %6533 = vmatprep.subr.mxu0 0.0
    %6534 = vmatpush1.msra.mxu0 0.0
    %6535 = vmatprep.subr.mxu0 0.0
    %6536 = vmatpush1.msra.mxu0 0.0
    %6537 = vmatprep.subr.mxu0 0.0
    %6538 = vmatpush1.msra.mxu0 0.0
    %6539 = vmatprep.mubr.f32.mxu0 0.0
    %6540 = vmatmul.mubr.f32.gmra.mrb[0].mxu0 %v5629
    %v6541 = vpop.f32.mrb[0].mxu0
    %v6542 = vadd.f32 %v6157, %v6541
    %v6543 = vpop.f32.mrb[0].mxu0
    %6544 = vmatprep.mubr.f32.mxu0 0.0
    %6545 = vmatmul.mubr.f32.gmra.mrb[0].mxu0 %v5630
    %v6546 = vpop.f32.mrb[0].mxu0
    %v6547 = vadd.f32 %v6162, %v6546
    %v6548 = vpop.f32.mrb[0].mxu0
    %6549 = vmatprep.mubr.f32.mxu0 0.0
    %6550 = vmatmul.mubr.f32.gmra.mrb[0].mxu0 %v5632
    %v6551 = vpop.f32.mrb[0].mxu0
    %v6552 = vadd.f32 %v6167, %v6551
    %v6553 = vpop.f32.mrb[0].mxu0
    %6554 = vmatprep.mubr.f32.mxu0 0.0
    %6555 = vmatmul.mubr.f32.gmra.mrb[0].mxu0 %v5633
    %v6556 = vpop.f32.mrb[0].mxu0
    %v6557 = vadd.f32 %v6172, %v6556
    %v6558 = vpop.f32.mrb[0].mxu0
    %6559 = vmatprep.mubr.f32.mxu0 0.0
    %6560 = vmatmul.mubr.f32.gmra.mrb[0].mxu0 %v5635
    %v6561 = vpop.f32.mrb[0].mxu0
    %v6562 = vadd.f32 %v6177, %v6561
    %v6563 = vpop.f32.mrb[0].mxu0
    %6564 = vmatprep.mubr.f32.mxu0 0.0
    %6565 = vmatmul.mubr.f32.gmra.mrb[0].mxu0 %v5636
    %v6566 = vpop.f32.mrb[0].mxu0
    %v6567 = vadd.f32 %v6182, %v6566
    %v6568 = vpop.f32.mrb[0].mxu0
    %6569 = vmatprep.mubr.f32.mxu0 0.0
    %6570 = vmatmul.mubr.f32.gmra.mrb[0].mxu0 %v5638
    %v6571 = vpop.f32.mrb[0].mxu0
    %v6572 = vadd.f32 %v6187, %v6571
    %v6573 = vpop.f32.mrb[0].mxu0
    %6574 = vmatprep.mubr.f32.mxu0 0.0
    %6575 = vmatmul.mubr.f32.gmra.mrb[0].mxu0 %v5639
    %v6576 = vpop.f32.mrb[0].mxu0
    %v6577 = vadd.f32 %v6192, %v6576
    %v6578 = vpop.f32.mrb[0].mxu0
    %6579 = vmatprep.mubr.f32.mxu0 0.0
    %6580 = vmatmul.mubr.f32.gmra.mrb[0].mxu0 %v5641
    %v6581 = vpop.f32.mrb[0].mxu0
    %v6582 = vadd.f32 %v6197, %v6581
    %v6583 = vpop.f32.mrb[0].mxu0
    %6584 = vmatprep.mubr.f32.mxu0 0.0
    %6585 = vmatmul.mubr.f32.gmra.mrb[0].mxu0 %v5642
    %v6586 = vpop.f32.mrb[0].mxu0
    %v6587 = vadd.f32 %v6202, %v6586
    %v6588 = vpop.f32.mrb[0].mxu0
    %6589 = vmatprep.mubr.f32.mxu0 0.0
    %6590 = vmatmul.mubr.f32.gmra.mrb[0].mxu0 %v5644
    %v6591 = vpop.f32.mrb[0].mxu0
    %v6592 = vadd.f32 %v6207, %v6591
    %v6593 = vpop.f32.mrb[0].mxu0
    %6594 = vmatprep.mubr.f32.mxu0 0.0
    %6595 = vmatmul.mubr.f32.gmra.mrb[0].mxu0 %v5645
    %v6596 = vpop.f32.mrb[0].mxu0
    %v6597 = vadd.f32 %v6212, %v6596
    %v6598 = vpop.f32.mrb[0].mxu0
    %6599 = vmatprep.mubr.f32.mxu0 0.0
    %6600 = vmatmul.mubr.f32.gmra.mrb[0].mxu0 %v5647
    %v6601 = vpop.f32.mrb[0].mxu0
    %v6602 = vadd.f32 %v6217, %v6601
    %v6603 = vpop.f32.mrb[0].mxu0
    %6604 = vmatprep.mubr.f32.mxu0 0.0
    %6605 = vmatmul.mubr.f32.gmra.mrb[0].mxu0 %v5648
    %v6606 = vpop.f32.mrb[0].mxu0
    %v6607 = vadd.f32 %v6222, %v6606
    %v6608 = vpop.f32.mrb[0].mxu0
    %6609 = vmatprep.mubr.f32.mxu0 0.0
    %6610 = vmatmul.mubr.f32.gmra.mrb[0].mxu0 %v5650
    %v6611 = vpop.f32.mrb[0].mxu0
    %v6612 = vadd.f32 %v6227, %v6611
    %v6613 = vpop.f32.mrb[0].mxu0
    %6614 = vmatprep.mubr.f32.mxu0 0.0
    %6615 = vmatmul.mubr.f32.gmra.mrb[0].mxu0 %v5651
    %v6616 = vpop.f32.mrb[0].mxu0
    %v6617 = vadd.f32 %v6232, %v6616
    %v6618 = vpop.f32.mrb[0].mxu0
    %6619 = vmatprep.mubr.f32.mxu0 0.0
    %6620 = vmatmul.mubr.f32.gmra.mrb[0].mxu0 %v5653
    %v6621 = vpop.f32.mrb[0].mxu0
    %v6622 = vadd.f32 %v6237, %v6621
    %v6623 = vpop.f32.mrb[0].mxu0
    %6624 = vmatprep.mubr.f32.mxu0 0.0
    %6625 = vmatmul.mubr.f32.gmra.mrb[0].mxu0 %v5654
    %v6626 = vpop.f32.mrb[0].mxu0
    %v6627 = vadd.f32 %v6242, %v6626
    %v6628 = vpop.f32.mrb[0].mxu0
    %6629 = vmatprep.mubr.f32.mxu0 0.0
    %6630 = vmatmul.mubr.f32.gmra.mrb[0].mxu0 %v5656
    %v6631 = vpop.f32.mrb[0].mxu0
    %v6632 = vadd.f32 %v6247, %v6631
    %v6633 = vpop.f32.mrb[0].mxu0
    %6634 = vmatprep.mubr.f32.mxu0 0.0
    %6635 = vmatmul.mubr.f32.gmra.mrb[0].mxu0 %v5657
    %v6636 = vpop.f32.mrb[0].mxu0
    %v6637 = vadd.f32 %v6252, %v6636
    %v6638 = vpop.f32.mrb[0].mxu0
    %6639 = vmatprep.mubr.f32.mxu0 0.0
    %6640 = vmatmul.mubr.f32.gmra.mrb[0].mxu0 %v5659
    %v6641 = vpop.f32.mrb[0].mxu0
    %v6642 = vadd.f32 %v6257, %v6641
    %v6643 = vpop.f32.mrb[0].mxu0
    %6644 = vmatprep.mubr.f32.mxu0 0.0
    %6645 = vmatmul.mubr.f32.gmra.mrb[0].mxu0 %v5660
    %v6646 = vpop.f32.mrb[0].mxu0
    %v6647 = vadd.f32 %v6262, %v6646
    %v6648 = vpop.f32.mrb[0].mxu0
    %6649 = vmatprep.mubr.f32.mxu0 0.0
    %6650 = vmatmul.mubr.f32.gmra.mrb[0].mxu0 %v5662
    %v6651 = vpop.f32.mrb[0].mxu0
    %v6652 = vadd.f32 %v6267, %v6651
    %v6653 = vpop.f32.mrb[0].mxu0
    %6654 = vmatprep.mubr.f32.mxu0 0.0
    %6655 = vmatmul.mubr.f32.gmra.mrb[0].mxu0 %v5663
    %v6656 = vpop.f32.mrb[0].mxu0
    %v6657 = vadd.f32 %v6272, %v6656
    %v6658 = vpop.f32.mrb[0].mxu0
    %6659 = vmatprep.mubr.f32.mxu0 0.0
    %6660 = vmatmul.mubr.f32.gmra.mrb[0].mxu0 %v5665
    %v6661 = vpop.f32.mrb[0].mxu0
    %v6662 = vadd.f32 %v6277, %v6661
    %v6663 = vpop.f32.mrb[0].mxu0
    %6664 = vmatprep.mubr.f32.mxu0 0.0
    %6665 = vmatmul.mubr.f32.gmra.mrb[0].mxu0 %v5666
    %v6666 = vpop.f32.mrb[0].mxu0
    %v6667 = vadd.f32 %v6282, %v6666
    %v6668 = vpop.f32.mrb[0].mxu0
    %6669 = vmatprep.mubr.f32.mxu0 0.0
    %6670 = vmatmul.mubr.f32.gmra.mrb[0].mxu0 %v5668
    %v6671 = vpop.f32.mrb[0].mxu0
    %v6672 = vadd.f32 %v6287, %v6671
    %v6673 = vpop.f32.mrb[0].mxu0
    %6674 = vmatprep.mubr.f32.mxu0 0.0
    %6675 = vmatmul.mubr.f32.gmra.mrb[0].mxu0 %v5669
    %v6676 = vpop.f32.mrb[0].mxu0
    %v6677 = vadd.f32 %v6292, %v6676
    %v6678 = vpop.f32.mrb[0].mxu0
    %6679 = vmatprep.mubr.f32.mxu0 0.0
    %6680 = vmatmul.mubr.f32.gmra.mrb[0].mxu0 %v5671
    %v6681 = vpop.f32.mrb[0].mxu0
    %v6682 = vadd.f32 %v6297, %v6681
    %v6683 = vpop.f32.mrb[0].mxu0
    %6684 = vmatprep.mubr.f32.mxu0 0.0
    %6685 = vmatmul.mubr.f32.gmra.mrb[0].mxu0 %v5672
    %v6686 = vpop.f32.mrb[0].mxu0
    %v6687 = vadd.f32 %v6302, %v6686
    %v6688 = vpop.f32.mrb[0].mxu0
    %6689 = vmatprep.mubr.f32.mxu0 0.0
    %6690 = vmatmul.mubr.f32.gmra.mrb[0].mxu0 %v5674
    %v6691 = vpop.f32.mrb[0].mxu0
    %v6692 = vadd.f32 %v6307, %v6691
    %v6693 = vpop.f32.mrb[0].mxu0
    %6694 = vmatprep.mubr.f32.mxu0 0.0
    %6695 = vmatmul.mubr.f32.gmra.mrb[0].mxu0 %v5675
    %v6696 = vpop.f32.mrb[0].mxu0
    %v6697 = vadd.f32 %v6312, %v6696
    %v6698 = vpop.f32.mrb[0].mxu0
    %6699 = vmatprep.mubr.f32.mxu0 0.0
    %6700 = vmatmul.mubr.f32.gmra.mrb[0].mxu0 %v5683
    %v6701 = vpop.f32.mrb[0].mxu0
    %v6702 = vadd.f32 %v6317, %v6701
    %v6703 = vpop.f32.mrb[0].mxu0
    %6704 = vmatprep.mubr.f32.mxu0 0.0
    %6705 = vmatmul.mubr.f32.gmra.mrb[0].mxu0 %v5684
    %v6706 = vpop.f32.mrb[0].mxu0
    %v6707 = vadd.f32 %v6322, %v6706
    %v6708 = vpop.f32.mrb[0].mxu0
    %6709 = vmatprep.mubr.f32.mxu0 0.0
    %6710 = vmatmul.mubr.f32.gmra.mrb[0].mxu0 %v5686
    %v6711 = vpop.f32.mrb[0].mxu0
    %v6712 = vadd.f32 %v6327, %v6711
    %v6713 = vpop.f32.mrb[0].mxu0
    %6714 = vmatprep.mubr.f32.mxu0 0.0
    %6715 = vmatmul.mubr.f32.gmra.mrb[0].mxu0 %v5687
    %v6716 = vpop.f32.mrb[0].mxu0
    %v6717 = vadd.f32 %v6332, %v6716
    %v6718 = vpop.f32.mrb[0].mxu0
    %6719 = vmatprep.mubr.f32.mxu0 0.0
    %6720 = vmatmul.mubr.f32.gmra.mrb[0].mxu0 %v5689
    %v6721 = vpop.f32.mrb[0].mxu0
    %v6722 = vadd.f32 %v6337, %v6721
    %v6723 = vpop.f32.mrb[0].mxu0
    %6724 = vmatprep.mubr.f32.mxu0 0.0
    %6725 = vmatmul.mubr.f32.gmra.mrb[0].mxu0 %v5690
    %v6726 = vpop.f32.mrb[0].mxu0
    %v6727 = vadd.f32 %v6342, %v6726
    %v6728 = vpop.f32.mrb[0].mxu0
    %6729 = vmatprep.mubr.f32.mxu0 0.0
    %6730 = vmatmul.mubr.f32.gmra.mrb[0].mxu0 %v5692
    %v6731 = vpop.f32.mrb[0].mxu0
    %v6732 = vadd.f32 %v6347, %v6731
    %v6733 = vpop.f32.mrb[0].mxu0
    %6734 = vmatprep.mubr.f32.mxu0 0.0
    %6735 = vmatmul.mubr.f32.gmra.mrb[0].mxu0 %v5693
    %v6736 = vpop.f32.mrb[0].mxu0
    %v6737 = vadd.f32 %v6352, %v6736
    %v6738 = vpop.f32.mrb[0].mxu0
    %6739 = vmatprep.mubr.f32.mxu0 0.0
    %6740 = vmatmul.mubr.f32.gmra.mrb[0].mxu0 %v5695
    %v6741 = vpop.f32.mrb[0].mxu0
    %v6742 = vadd.f32 %v6357, %v6741
    %v6743 = vpop.f32.mrb[0].mxu0
    %6744 = vmatprep.mubr.f32.mxu0 0.0
    %6745 = vmatmul.mubr.f32.gmra.mrb[0].mxu0 %v5696
    %v6746 = vpop.f32.mrb[0].mxu0
    %v6747 = vadd.f32 %v6362, %v6746
    %v6748 = vpop.f32.mrb[0].mxu0
    %6749 = vmatprep.mubr.f32.mxu0 0.0
    %6750 = vmatmul.mubr.f32.gmra.mrb[0].mxu0 %v5698
    %v6751 = vpop.f32.mrb[0].mxu0
    %v6752 = vadd.f32 %v6367, %v6751
    %v6753 = vpop.f32.mrb[0].mxu0
    %6754 = vmatprep.mubr.f32.mxu0 0.0
    %6755 = vmatmul.mubr.f32.gmra.mrb[0].mxu0 %v5699
    %v6756 = vpop.f32.mrb[0].mxu0
    %v6757 = vadd.f32 %v6372, %v6756
    %v6758 = vpop.f32.mrb[0].mxu0
    %6759 = vmatprep.mubr.f32.mxu0 0.0
    %6760 = vmatmul.mubr.f32.gmra.mrb[0].mxu0 %v5701
    %v6761 = vpop.f32.mrb[0].mxu0
    %v6762 = vadd.f32 %v6377, %v6761
    %v6763 = vpop.f32.mrb[0].mxu0
    %6764 = vmatprep.mubr.f32.mxu0 0.0
    %6765 = vmatmul.mubr.f32.gmra.mrb[0].mxu0 %v5702
    %v6766 = vpop.f32.mrb[0].mxu0
    %v6767 = vadd.f32 %v6382, %v6766
    %v6768 = vpop.f32.mrb[0].mxu0
    %6769 = vmatprep.mubr.f32.mxu0 0.0
    %6770 = vmatmul.mubr.f32.gmra.mrb[0].mxu0 %v5704
    %v6771 = vpop.f32.mrb[0].mxu0
    %v6772 = vadd.f32 %v6387, %v6771
    %v6773 = vpop.f32.mrb[0].mxu0
    %6774 = vmatprep.mubr.f32.mxu0 0.0
    %6775 = vmatmul.mubr.f32.gmra.mrb[0].mxu0 %v5705
    %v6776 = vpop.f32.mrb[0].mxu0
    %v6777 = vadd.f32 %v6392, %v6776
    %v6778 = vpop.f32.mrb[0].mxu0
    %6779 = vmatprep.mubr.f32.mxu0 0.0
    %6780 = vmatmul.mubr.f32.gmra.mrb[0].mxu0 %v5707
    %v6781 = vpop.f32.mrb[0].mxu0
    %v6782 = vadd.f32 %v6397, %v6781
    %v6783 = vpop.f32.mrb[0].mxu0
    %6784 = vmatprep.mubr.f32.mxu0 0.0
    %6785 = vmatmul.mubr.f32.gmra.mrb[0].mxu0 %v5708
    %v6786 = vpop.f32.mrb[0].mxu0
    %v6787 = vadd.f32 %v6402, %v6786
    %v6788 = vpop.f32.mrb[0].mxu0
    %6789 = vmatprep.mubr.f32.mxu0 0.0
    %6790 = vmatmul.mubr.f32.gmra.mrb[0].mxu0 %v5710
    %v6791 = vpop.f32.mrb[0].mxu0
    %v6792 = vadd.f32 %v6407, %v6791
    %v6793 = vpop.f32.mrb[0].mxu0
    %6794 = vmatprep.mubr.f32.mxu0 0.0
    %6795 = vmatmul.mubr.f32.gmra.mrb[0].mxu0 %v5711
    %v6796 = vpop.f32.mrb[0].mxu0
    %v6797 = vadd.f32 %v6412, %v6796
    %v6798 = vpop.f32.mrb[0].mxu0
    %6799 = vmatprep.mubr.f32.mxu0 0.0
    %6800 = vmatmul.mubr.f32.gmra.mrb[0].mxu0 %v5713
    %v6801 = vpop.f32.mrb[0].mxu0
    %v6802 = vadd.f32 %v6417, %v6801
    %v6803 = vpop.f32.mrb[0].mxu0
    %6804 = vmatprep.mubr.f32.mxu0 0.0
    %6805 = vmatmul.mubr.f32.gmra.mrb[0].mxu0 %v5714
    %v6806 = vpop.f32.mrb[0].mxu0
    %v6807 = vadd.f32 %v6422, %v6806
    %v6808 = vpop.f32.mrb[0].mxu0
    %6809 = vmatprep.mubr.f32.mxu0 0.0
    %6810 = vmatmul.mubr.f32.gmra.mrb[0].mxu0 %v5716
    %v6811 = vpop.f32.mrb[0].mxu0
    %v6812 = vadd.f32 %v6427, %v6811
    %v6813 = vpop.f32.mrb[0].mxu0
    %6814 = vmatprep.mubr.f32.mxu0 0.0
    %6815 = vmatmul.mubr.f32.gmra.mrb[0].mxu0 %v5717
    %v6816 = vpop.f32.mrb[0].mxu0
    %v6817 = vadd.f32 %v6432, %v6816
    %v6818 = vpop.f32.mrb[0].mxu0
    %6819 = vmatprep.mubr.f32.mxu0 0.0
    %6820 = vmatmul.mubr.f32.gmra.mrb[0].mxu0 %v5719
    %v6821 = vpop.f32.mrb[0].mxu0
    %v6822 = vadd.f32 %v6437, %v6821
    %v6823 = vpop.f32.mrb[0].mxu0
    %6824 = vmatprep.mubr.f32.mxu0 0.0
    %6825 = vmatmul.mubr.f32.gmra.mrb[0].mxu0 %v5720
    %v6826 = vpop.f32.mrb[0].mxu0
    %v6827 = vadd.f32 %v6442, %v6826
    %v6828 = vpop.f32.mrb[0].mxu0
    %6829 = vmatprep.mubr.f32.mxu0 0.0
    %6830 = vmatmul.mubr.f32.gmra.mrb[0].mxu0 %v5722
    %v6831 = vpop.f32.mrb[0].mxu0
    %v6832 = vadd.f32 %v6447, %v6831
    %v6833 = vpop.f32.mrb[0].mxu0
    %6834 = vmatprep.mubr.f32.mxu0 0.0
    %6835 = vmatmul.mubr.f32.gmra.mrb[0].mxu0 %v5723
    %v6836 = vpop.f32.mrb[0].mxu0
    %v6837 = vadd.f32 %v6452, %v6836
    %v6838 = vpop.f32.mrb[0].mxu0
    %6839 = vmatprep.mubr.f32.mxu0 0.0
    %6840 = vmatmul.mubr.f32.gmra.mrb[0].mxu0 %v5725
    %v6841 = vpop.f32.mrb[0].mxu0
    %v6842 = vadd.f32 %v6457, %v6841
    %v6843 = vpop.f32.mrb[0].mxu0
    %6844 = vmatprep.mubr.f32.mxu0 0.0
    %6845 = vmatmul.mubr.f32.gmra.mrb[0].mxu0 %v5726
    %v6846 = vpop.f32.mrb[0].mxu0
    %v6847 = vadd.f32 %v6462, %v6846
    %v6848 = vpop.f32.mrb[0].mxu0
    %6849 = vmatprep.mubr.f32.mxu0 0.0
    %6850 = vmatmul.mubr.f32.gmra.mrb[0].mxu0 %v5728
    %v6851 = vpop.f32.mrb[0].mxu0
    %v6852 = vadd.f32 %v6467, %v6851
    %v6853 = vpop.f32.mrb[0].mxu0
    %6854 = vmatprep.mubr.f32.mxu0 0.0
    %6855 = vmatmul.mubr.f32.gmra.mrb[0].mxu0 %v5729
    %v6856 = vpop.f32.mrb[0].mxu0
    %v6857 = vadd.f32 %v6472, %v6856
    %v6858 = vpop.f32.mrb[0].mxu0
    %6859 = vdwg.mxu0
    %v6860 = vrot.slane %v5629, 2
    %v6861 = vrot.slane %v5630, 2
    %v6862 = vsel %vm1283, %v6860, %v6861
    %v6863 = vrot.slane %v5631, 2
    %v6864 = vsel %vm1283, %v6861, %v6863
    %v6865 = vrot.slane %v5632, 2
    %v6866 = vrot.slane %v5633, 2
    %v6867 = vsel %vm1283, %v6865, %v6866
    %v6868 = vrot.slane %v5634, 2
    %v6869 = vsel %vm1283, %v6866, %v6868
    %v6870 = vrot.slane %v5635, 2
    %v6871 = vrot.slane %v5636, 2
    %v6872 = vsel %vm1283, %v6870, %v6871
    %v6873 = vrot.slane %v5637, 2
    %v6874 = vsel %vm1283, %v6871, %v6873
    %v6875 = vrot.slane %v5638, 2
    %v6876 = vrot.slane %v5639, 2
    %v6877 = vsel %vm1283, %v6875, %v6876
    %v6878 = vrot.slane %v5640, 2
    %v6879 = vsel %vm1283, %v6876, %v6878
    %v6880 = vrot.slane %v5641, 2
    %v6881 = vrot.slane %v5642, 2
    %v6882 = vsel %vm1283, %v6880, %v6881
    %v6883 = vrot.slane %v5643, 2
    %v6884 = vsel %vm1283, %v6881, %v6883
    %v6885 = vrot.slane %v5644, 2
    %v6886 = vrot.slane %v5645, 2
    %v6887 = vsel %vm1283, %v6885, %v6886
    %v6888 = vrot.slane %v5646, 2
    %v6889 = vsel %vm1283, %v6886, %v6888
    %v6890 = vrot.slane %v5647, 2
    %v6891 = vrot.slane %v5648, 2
    %v6892 = vsel %vm1283, %v6890, %v6891
    %v6893 = vrot.slane %v5649, 2
    %v6894 = vsel %vm1283, %v6891, %v6893
    %v6895 = vrot.slane %v5650, 2
    %v6896 = vrot.slane %v5651, 2
    %v6897 = vsel %vm1283, %v6895, %v6896
    %v6898 = vrot.slane %v5652, 2
    %v6899 = vsel %vm1283, %v6896, %v6898
    %v6900 = vrot.slane %v5653, 2
    %v6901 = vrot.slane %v5654, 2
    %v6902 = vsel %vm1283, %v6900, %v6901
    %v6903 = vrot.slane %v5655, 2
    %v6904 = vsel %vm1283, %v6901, %v6903
    %v6905 = vrot.slane %v5656, 2
    %v6906 = vrot.slane %v5657, 2
    %v6907 = vsel %vm1283, %v6905, %v6906
    %v6908 = vrot.slane %v5658, 2
    %v6909 = vsel %vm1283, %v6906, %v6908
    %v6910 = vrot.slane %v5659, 2
    %v6911 = vrot.slane %v5660, 2
    %v6912 = vsel %vm1283, %v6910, %v6911
    %v6913 = vrot.slane %v5661, 2
    %v6914 = vsel %vm1283, %v6911, %v6913
    %v6915 = vrot.slane %v5662, 2
    %v6916 = vrot.slane %v5663, 2
    %v6917 = vsel %vm1283, %v6915, %v6916
    %v6918 = vrot.slane %v5664, 2
    %v6919 = vsel %vm1283, %v6916, %v6918
    %v6920 = vrot.slane %v5665, 2
    %v6921 = vrot.slane %v5666, 2
    %v6922 = vsel %vm1283, %v6920, %v6921
    %v6923 = vrot.slane %v5667, 2
    %v6924 = vsel %vm1283, %v6921, %v6923
    %v6925 = vrot.slane %v5668, 2
    %v6926 = vrot.slane %v5669, 2
    %v6927 = vsel %vm1283, %v6925, %v6926
    %v6928 = vrot.slane %v5670, 2
    %v6929 = vsel %vm1283, %v6926, %v6928
    %v6930 = vrot.slane %v5671, 2
    %v6931 = vrot.slane %v5672, 2
    %v6932 = vsel %vm1283, %v6930, %v6931
    %v6933 = vrot.slane %v5673, 2
    %v6934 = vsel %vm1283, %v6931, %v6933
    %v6935 = vrot.slane %v5674, 2
    %v6936 = vrot.slane %v5675, 2
    %v6937 = vsel %vm1283, %v6935, %v6936
    %v6938 = vrot.slane %v5676, 2
    %v6939 = vsel %vm1283, %v6936, %v6938
    %v6940 = vrot.slane %v5683, 2
    %v6941 = vrot.slane %v5684, 2
    %v6942 = vsel %vm1283, %v6940, %v6941
    %v6943 = vrot.slane %v5685, 2
    %v6944 = vsel %vm1283, %v6941, %v6943
    %v6945 = vrot.slane %v5686, 2
    %v6946 = vrot.slane %v5687, 2
    %v6947 = vsel %vm1283, %v6945, %v6946
    %v6948 = vrot.slane %v5688, 2
    %v6949 = vsel %vm1283, %v6946, %v6948
    %v6950 = vrot.slane %v5689, 2
    %v6951 = vrot.slane %v5690, 2
    %v6952 = vsel %vm1283, %v6950, %v6951
    %v6953 = vrot.slane %v5691, 2
    %v6954 = vsel %vm1283, %v6951, %v6953
    %v6955 = vrot.slane %v5692, 2
    %v6956 = vrot.slane %v5693, 2
    %v6957 = vsel %vm1283, %v6955, %v6956
    %v6958 = vrot.slane %v5694, 2
    %v6959 = vsel %vm1283, %v6956, %v6958
    %v6960 = vrot.slane %v5695, 2
    %v6961 = vrot.slane %v5696, 2
    %v6962 = vsel %vm1283, %v6960, %v6961
    %v6963 = vrot.slane %v5697, 2
    %v6964 = vsel %vm1283, %v6961, %v6963
    %v6965 = vrot.slane %v5698, 2
    %v6966 = vrot.slane %v5699, 2
    %v6967 = vsel %vm1283, %v6965, %v6966
    %v6968 = vrot.slane %v5700, 2
    %v6969 = vsel %vm1283, %v6966, %v6968
    %v6970 = vrot.slane %v5701, 2
    %v6971 = vrot.slane %v5702, 2
    %v6972 = vsel %vm1283, %v6970, %v6971
    %v6973 = vrot.slane %v5703, 2
    %v6974 = vsel %vm1283, %v6971, %v6973
    %v6975 = vrot.slane %v5704, 2
    %v6976 = vrot.slane %v5705, 2
    %v6977 = vsel %vm1283, %v6975, %v6976
    %v6978 = vrot.slane %v5706, 2
    %v6979 = vsel %vm1283, %v6976, %v6978
    %v6980 = vrot.slane %v5707, 2
    %v6981 = vrot.slane %v5708, 2
    %v6982 = vsel %vm1283, %v6980, %v6981
    %v6983 = vrot.slane %v5709, 2
    %v6984 = vsel %vm1283, %v6981, %v6983
    %v6985 = vrot.slane %v5710, 2
    %v6986 = vrot.slane %v5711, 2
    %v6987 = vsel %vm1283, %v6985, %v6986
    %v6988 = vrot.slane %v5712, 2
    %v6989 = vsel %vm1283, %v6986, %v6988
    %v6990 = vrot.slane %v5713, 2
    %v6991 = vrot.slane %v5714, 2
    %v6992 = vsel %vm1283, %v6990, %v6991
    %v6993 = vrot.slane %v5715, 2
    %v6994 = vsel %vm1283, %v6991, %v6993
    %v6995 = vrot.slane %v5716, 2
    %v6996 = vrot.slane %v5717, 2
    %v6997 = vsel %vm1283, %v6995, %v6996
    %v6998 = vrot.slane %v5718, 2
    %v6999 = vsel %vm1283, %v6996, %v6998
    %v7000 = vrot.slane %v5719, 2
    %v7001 = vrot.slane %v5720, 2
    %v7002 = vsel %vm1283, %v7000, %v7001
    %v7003 = vrot.slane %v5721, 2
    %v7004 = vsel %vm1283, %v7001, %v7003
    %v7005 = vrot.slane %v5722, 2
    %v7006 = vrot.slane %v5723, 2
    %v7007 = vsel %vm1283, %v7005, %v7006
    %v7008 = vrot.slane %v5724, 2
    %v7009 = vsel %vm1283, %v7006, %v7008
    %v7010 = vrot.slane %v5725, 2
    %v7011 = vrot.slane %v5726, 2
    %v7012 = vsel %vm1283, %v7010, %v7011
    %v7013 = vrot.slane %v5727, 2
    %v7014 = vsel %vm1283, %v7011, %v7013
    %v7015 = vrot.slane %v5728, 2
    %v7016 = vrot.slane %v5729, 2
    %v7017 = vsel %vm1283, %v7015, %v7016
    %v7018 = vrot.slane %v5730, 2
    %v7019 = vsel %vm1283, %v7016, %v7018
    %s7084 = scalar_lea.vmem [#allocation4], 256
    %v7085 = vld [vmem:[%s7084] sm:$0xff]
    %v7086 = vld [vmem:[%s7084 + $0x8] sm:$0xff]
    %v7087 = vld [vmem:[%s7084 + $0x10] sm:$0xff]
    %v7088 = vld [vmem:[%s7084 + $0x18] sm:$0xff]
    %v7089 = vld [vmem:[%s7084 + $0x20] sm:$0xff]
    %v7090 = vld [vmem:[%s7084 + $0x28] sm:$0xff]
    %v7091 = vld [vmem:[%s7084 + $0x30] sm:$0xff]
    %v7092 = vld [vmem:[%s7084 + $0x38] sm:$0xff]
    %v7093 = vld [vmem:[%s7084 + $0x40] sm:$0xff]
    %v7094 = vld [vmem:[%s7084 + $0x48] sm:$0xff]
    %v7095 = vld [vmem:[%s7084 + $0x50] sm:$0xff]
    %v7096 = vld [vmem:[%s7084 + $0x58] sm:$0xff]
    %v7097 = vld [vmem:[%s7084 + $0x60] sm:$0xff]
    %v7098 = vld [vmem:[%s7084 + $0x68] sm:$0xff]
    %v7099 = vld [vmem:[%s7084 + $0x70] sm:$0xff]
    %v7100 = vld [vmem:[%s7084 + $0x78] sm:$0xff]
    %7101 = vmatprep.subr.mxu0 0.0
    %7102 = vmatpush1.msra.mxu0 %v7085
    %7103 = vmatprep.subr.mxu0 0.0
    %7104 = vmatpush1.msra.mxu0 %v7086
    %7105 = vmatprep.subr.mxu0 0.0
    %7106 = vmatpush1.msra.mxu0 %v7087
    %7107 = vmatprep.subr.mxu0 0.0
    %7108 = vmatpush1.msra.mxu0 %v7088
    %7109 = vmatprep.subr.mxu0 0.0
    %7110 = vmatpush1.msra.mxu0 %v7089
    %7111 = vmatprep.subr.mxu0 0.0
    %7112 = vmatpush1.msra.mxu0 %v7090
    %7113 = vmatprep.subr.mxu0 0.0
    %7114 = vmatpush1.msra.mxu0 %v7091
    %7115 = vmatprep.subr.mxu0 0.0
    %7116 = vmatpush1.msra.mxu0 %v7092
    %7117 = vmatprep.subr.mxu0 0.0
    %7118 = vmatpush1.msra.mxu0 %v7093
    %7119 = vmatprep.subr.mxu0 0.0
    %7120 = vmatpush1.msra.mxu0 %v7094
    %7121 = vmatprep.subr.mxu0 0.0
    %7122 = vmatpush1.msra.mxu0 %v7095
    %7123 = vmatprep.subr.mxu0 0.0
    %7124 = vmatpush1.msra.mxu0 %v7096
    %7125 = vmatprep.subr.mxu0 0.0
    %7126 = vmatpush1.msra.mxu0 %v7097
    %7127 = vmatprep.subr.mxu0 0.0
    %7128 = vmatpush1.msra.mxu0 %v7098
    %7129 = vmatprep.subr.mxu0 0.0
    %7130 = vmatpush1.msra.mxu0 %v7099
    %7131 = vmatprep.subr.mxu0 0.0
    %7132 = vmatpush1.msra.mxu0 %v7100
    %7133 = vmatprep.subr.mxu0 0.0
    %7134 = vmatpush1.msra.mxu0 0.0
    %7135 = vmatprep.subr.mxu0 0.0
    %7136 = vmatpush1.msra.mxu0 0.0
    %7137 = vmatprep.subr.mxu0 0.0
    %7138 = vmatpush1.msra.mxu0 0.0
    %7139 = vmatprep.subr.mxu0 0.0
    %7140 = vmatpush1.msra.mxu0 0.0
    %7141 = vmatprep.subr.mxu0 0.0
    %7142 = vmatpush1.msra.mxu0 0.0
    %7143 = vmatprep.subr.mxu0 0.0
    %7144 = vmatpush1.msra.mxu0 0.0
    %7145 = vmatprep.subr.mxu0 0.0
    %7146 = vmatpush1.msra.mxu0 0.0
    %7147 = vmatprep.subr.mxu0 0.0
    %7148 = vmatpush1.msra.mxu0 0.0
    %7149 = vmatprep.subr.mxu0 0.0
    %7150 = vmatpush1.msra.mxu0 0.0
    %7151 = vmatprep.subr.mxu0 0.0
    %7152 = vmatpush1.msra.mxu0 0.0
    %7153 = vmatprep.subr.mxu0 0.0
    %7154 = vmatpush1.msra.mxu0 0.0
    %7155 = vmatprep.subr.mxu0 0.0
    %7156 = vmatpush1.msra.mxu0 0.0
    %7157 = vmatprep.subr.mxu0 0.0
    %7158 = vmatpush1.msra.mxu0 0.0
    %7159 = vmatprep.subr.mxu0 0.0
    %7160 = vmatpush1.msra.mxu0 0.0
    %7161 = vmatprep.subr.mxu0 0.0
    %7162 = vmatpush1.msra.mxu0 0.0
    %7163 = vmatprep.subr.mxu0 0.0
    %7164 = vmatpush1.msra.mxu0 0.0
    %7165 = vmatprep.mubr.f32.mxu0 0.0
    %7166 = vmatmul.mubr.f32.gmra.mrb[0].mxu0 %v6862
    %v7167 = vpop.f32.mrb[0].mxu0
    %v7168 = vadd.f32 0.0, %v7167
    %v7169 = vpop.f32.mrb[0].mxu0
    %7170 = vmatprep.mubr.f32.mxu0 0.0
    %7171 = vmatmul.mubr.f32.gmra.mrb[0].mxu0 %v6864
    %v7172 = vpop.f32.mrb[0].mxu0
    %v7173 = vadd.f32 0.0, %v7172
    %v7174 = vpop.f32.mrb[0].mxu0
    %7175 = vmatprep.mubr.f32.mxu0 0.0
    %7176 = vmatmul.mubr.f32.gmra.mrb[0].mxu0 %v6867
    %v7177 = vpop.f32.mrb[0].mxu0
    %v7178 = vadd.f32 0.0, %v7177
    %v7179 = vpop.f32.mrb[0].mxu0
    %7180 = vmatprep.mubr.f32.mxu0 0.0
    %7181 = vmatmul.mubr.f32.gmra.mrb[0].mxu0 %v6869
    %v7182 = vpop.f32.mrb[0].mxu0
    %v7183 = vadd.f32 0.0, %v7182
    %v7184 = vpop.f32.mrb[0].mxu0
    %7185 = vmatprep.mubr.f32.mxu0 0.0
    %7186 = vmatmul.mubr.f32.gmra.mrb[0].mxu0 %v6872
    %v7187 = vpop.f32.mrb[0].mxu0
    %v7188 = vadd.f32 0.0, %v7187
    %v7189 = vpop.f32.mrb[0].mxu0
    %7190 = vmatprep.mubr.f32.mxu0 0.0
    %7191 = vmatmul.mubr.f32.gmra.mrb[0].mxu0 %v6874
    %v7192 = vpop.f32.mrb[0].mxu0
    %v7193 = vadd.f32 0.0, %v7192
    %v7194 = vpop.f32.mrb[0].mxu0
    %7195 = vmatprep.mubr.f32.mxu0 0.0
    %7196 = vmatmul.mubr.f32.gmra.mrb[0].mxu0 %v6877
    %v7197 = vpop.f32.mrb[0].mxu0
    %v7198 = vadd.f32 0.0, %v7197
    %v7199 = vpop.f32.mrb[0].mxu0
    %7200 = vmatprep.mubr.f32.mxu0 0.0
    %7201 = vmatmul.mubr.f32.gmra.mrb[0].mxu0 %v6879
    %v7202 = vpop.f32.mrb[0].mxu0
    %v7203 = vadd.f32 0.0, %v7202
    %v7204 = vpop.f32.mrb[0].mxu0
    %7205 = vmatprep.mubr.f32.mxu0 0.0
    %7206 = vmatmul.mubr.f32.gmra.mrb[0].mxu0 %v6882
    %v7207 = vpop.f32.mrb[0].mxu0
    %v7208 = vadd.f32 0.0, %v7207
    %v7209 = vpop.f32.mrb[0].mxu0
    %7210 = vmatprep.mubr.f32.mxu0 0.0
    %7211 = vmatmul.mubr.f32.gmra.mrb[0].mxu0 %v6884
    %v7212 = vpop.f32.mrb[0].mxu0
    %v7213 = vadd.f32 0.0, %v7212
    %v7214 = vpop.f32.mrb[0].mxu0
    %7215 = vmatprep.mubr.f32.mxu0 0.0
    %7216 = vmatmul.mubr.f32.gmra.mrb[0].mxu0 %v6887
    %v7217 = vpop.f32.mrb[0].mxu0
    %v7218 = vadd.f32 0.0, %v7217
    %v7219 = vpop.f32.mrb[0].mxu0
    %7220 = vmatprep.mubr.f32.mxu0 0.0
    %7221 = vmatmul.mubr.f32.gmra.mrb[0].mxu0 %v6889
    %v7222 = vpop.f32.mrb[0].mxu0
    %v7223 = vadd.f32 0.0, %v7222
    %v7224 = vpop.f32.mrb[0].mxu0
    %7225 = vmatprep.mubr.f32.mxu0 0.0
    %7226 = vmatmul.mubr.f32.gmra.mrb[0].mxu0 %v6892
    %v7227 = vpop.f32.mrb[0].mxu0
    %v7228 = vadd.f32 0.0, %v7227
    %v7229 = vpop.f32.mrb[0].mxu0
    %7230 = vmatprep.mubr.f32.mxu0 0.0
    %7231 = vmatmul.mubr.f32.gmra.mrb[0].mxu0 %v6894
    %v7232 = vpop.f32.mrb[0].mxu0
    %v7233 = vadd.f32 0.0, %v7232
    %v7234 = vpop.f32.mrb[0].mxu0
    %7235 = vmatprep.mubr.f32.mxu0 0.0
    %7236 = vmatmul.mubr.f32.gmra.mrb[0].mxu0 %v6897
    %v7237 = vpop.f32.mrb[0].mxu0
    %v7238 = vadd.f32 0.0, %v7237
    %v7239 = vpop.f32.mrb[0].mxu0
    %7240 = vmatprep.mubr.f32.mxu0 0.0
    %7241 = vmatmul.mubr.f32.gmra.mrb[0].mxu0 %v6899
    %v7242 = vpop.f32.mrb[0].mxu0
    %v7243 = vadd.f32 0.0, %v7242
    %v7244 = vpop.f32.mrb[0].mxu0
    %7245 = vmatprep.mubr.f32.mxu0 0.0
    %7246 = vmatmul.mubr.f32.gmra.mrb[0].mxu0 %v6902
    %v7247 = vpop.f32.mrb[0].mxu0
    %v7248 = vadd.f32 0.0, %v7247
    %v7249 = vpop.f32.mrb[0].mxu0
    %7250 = vmatprep.mubr.f32.mxu0 0.0
    %7251 = vmatmul.mubr.f32.gmra.mrb[0].mxu0 %v6904
    %v7252 = vpop.f32.mrb[0].mxu0
    %v7253 = vadd.f32 0.0, %v7252
    %v7254 = vpop.f32.mrb[0].mxu0
    %7255 = vmatprep.mubr.f32.mxu0 0.0
    %7256 = vmatmul.mubr.f32.gmra.mrb[0].mxu0 %v6907
    %v7257 = vpop.f32.mrb[0].mxu0
    %v7258 = vadd.f32 0.0, %v7257
    %v7259 = vpop.f32.mrb[0].mxu0
    %7260 = vmatprep.mubr.f32.mxu0 0.0
    %7261 = vmatmul.mubr.f32.gmra.mrb[0].mxu0 %v6909
    %v7262 = vpop.f32.mrb[0].mxu0
    %v7263 = vadd.f32 0.0, %v7262
    %v7264 = vpop.f32.mrb[0].mxu0
    %7265 = vmatprep.mubr.f32.mxu0 0.0
    %7266 = vmatmul.mubr.f32.gmra.mrb[0].mxu0 %v6912
    %v7267 = vpop.f32.mrb[0].mxu0
    %v7268 = vadd.f32 0.0, %v7267
    %v7269 = vpop.f32.mrb[0].mxu0
    %7270 = vmatprep.mubr.f32.mxu0 0.0
    %7271 = vmatmul.mubr.f32.gmra.mrb[0].mxu0 %v6914
    %v7272 = vpop.f32.mrb[0].mxu0
    %v7273 = vadd.f32 0.0, %v7272
    %v7274 = vpop.f32.mrb[0].mxu0
    %7275 = vmatprep.mubr.f32.mxu0 0.0
    %7276 = vmatmul.mubr.f32.gmra.mrb[0].mxu0 %v6917
    %v7277 = vpop.f32.mrb[0].mxu0
    %v7278 = vadd.f32 0.0, %v7277
    %v7279 = vpop.f32.mrb[0].mxu0
    %7280 = vmatprep.mubr.f32.mxu0 0.0
    %7281 = vmatmul.mubr.f32.gmra.mrb[0].mxu0 %v6919
    %v7282 = vpop.f32.mrb[0].mxu0
    %v7283 = vadd.f32 0.0, %v7282
    %v7284 = vpop.f32.mrb[0].mxu0
    %7285 = vmatprep.mubr.f32.mxu0 0.0
    %7286 = vmatmul.mubr.f32.gmra.mrb[0].mxu0 %v6922
    %v7287 = vpop.f32.mrb[0].mxu0
    %v7288 = vadd.f32 0.0, %v7287
    %v7289 = vpop.f32.mrb[0].mxu0
    %7290 = vmatprep.mubr.f32.mxu0 0.0
    %7291 = vmatmul.mubr.f32.gmra.mrb[0].mxu0 %v6924
    %v7292 = vpop.f32.mrb[0].mxu0
    %v7293 = vadd.f32 0.0, %v7292
    %v7294 = vpop.f32.mrb[0].mxu0
    %7295 = vmatprep.mubr.f32.mxu0 0.0
    %7296 = vmatmul.mubr.f32.gmra.mrb[0].mxu0 %v6927
    %v7297 = vpop.f32.mrb[0].mxu0
    %v7298 = vadd.f32 0.0, %v7297
    %v7299 = vpop.f32.mrb[0].mxu0
    %7300 = vmatprep.mubr.f32.mxu0 0.0
    %7301 = vmatmul.mubr.f32.gmra.mrb[0].mxu0 %v6929
    %v7302 = vpop.f32.mrb[0].mxu0
    %v7303 = vadd.f32 0.0, %v7302
    %v7304 = vpop.f32.mrb[0].mxu0
    %7305 = vmatprep.mubr.f32.mxu0 0.0
    %7306 = vmatmul.mubr.f32.gmra.mrb[0].mxu0 %v6932
    %v7307 = vpop.f32.mrb[0].mxu0
    %v7308 = vadd.f32 0.0, %v7307
    %v7309 = vpop.f32.mrb[0].mxu0
    %7310 = vmatprep.mubr.f32.mxu0 0.0
    %7311 = vmatmul.mubr.f32.gmra.mrb[0].mxu0 %v6934
    %v7312 = vpop.f32.mrb[0].mxu0
    %v7313 = vadd.f32 0.0, %v7312
    %v7314 = vpop.f32.mrb[0].mxu0
    %7315 = vmatprep.mubr.f32.mxu0 0.0
    %7316 = vmatmul.mubr.f32.gmra.mrb[0].mxu0 %v6937
    %v7317 = vpop.f32.mrb[0].mxu0
    %v7318 = vadd.f32 0.0, %v7317
    %v7319 = vpop.f32.mrb[0].mxu0
    %7320 = vmatprep.mubr.f32.mxu0 0.0
    %7321 = vmatmul.mubr.f32.gmra.mrb[0].mxu0 %v6939
    %v7322 = vpop.f32.mrb[0].mxu0
    %v7323 = vadd.f32 0.0, %v7322
    %v7324 = vpop.f32.mrb[0].mxu0
    %7325 = vmatprep.mubr.f32.mxu0 0.0
    %7326 = vmatmul.mubr.f32.gmra.mrb[0].mxu0 %v6942
    %v7327 = vpop.f32.mrb[0].mxu0
    %v7328 = vadd.f32 0.0, %v7327
    %v7329 = vpop.f32.mrb[0].mxu0
    %7330 = vmatprep.mubr.f32.mxu0 0.0
    %7331 = vmatmul.mubr.f32.gmra.mrb[0].mxu0 %v6944
    %v7332 = vpop.f32.mrb[0].mxu0
    %v7333 = vadd.f32 0.0, %v7332
    %v7334 = vpop.f32.mrb[0].mxu0
    %7335 = vmatprep.mubr.f32.mxu0 0.0
    %7336 = vmatmul.mubr.f32.gmra.mrb[0].mxu0 %v6947
    %v7337 = vpop.f32.mrb[0].mxu0
    %v7338 = vadd.f32 0.0, %v7337
    %v7339 = vpop.f32.mrb[0].mxu0
    %7340 = vmatprep.mubr.f32.mxu0 0.0
    %7341 = vmatmul.mubr.f32.gmra.mrb[0].mxu0 %v6949
    %v7342 = vpop.f32.mrb[0].mxu0
    %v7343 = vadd.f32 0.0, %v7342
    %v7344 = vpop.f32.mrb[0].mxu0
    %7345 = vmatprep.mubr.f32.mxu0 0.0
    %7346 = vmatmul.mubr.f32.gmra.mrb[0].mxu0 %v6952
    %v7347 = vpop.f32.mrb[0].mxu0
    %v7348 = vadd.f32 0.0, %v7347
    %v7349 = vpop.f32.mrb[0].mxu0
    %7350 = vmatprep.mubr.f32.mxu0 0.0
    %7351 = vmatmul.mubr.f32.gmra.mrb[0].mxu0 %v6954
    %v7352 = vpop.f32.mrb[0].mxu0
    %v7353 = vadd.f32 0.0, %v7352
    %v7354 = vpop.f32.mrb[0].mxu0
    %7355 = vmatprep.mubr.f32.mxu0 0.0
    %7356 = vmatmul.mubr.f32.gmra.mrb[0].mxu0 %v6957
    %v7357 = vpop.f32.mrb[0].mxu0
    %v7358 = vadd.f32 0.0, %v7357
    %v7359 = vpop.f32.mrb[0].mxu0
    %7360 = vmatprep.mubr.f32.mxu0 0.0
    %7361 = vmatmul.mubr.f32.gmra.mrb[0].mxu0 %v6959
    %v7362 = vpop.f32.mrb[0].mxu0
    %v7363 = vadd.f32 0.0, %v7362
    %v7364 = vpop.f32.mrb[0].mxu0
    %7365 = vmatprep.mubr.f32.mxu0 0.0
    %7366 = vmatmul.mubr.f32.gmra.mrb[0].mxu0 %v6962
    %v7367 = vpop.f32.mrb[0].mxu0
    %v7368 = vadd.f32 0.0, %v7367
    %v7369 = vpop.f32.mrb[0].mxu0
    %7370 = vmatprep.mubr.f32.mxu0 0.0
    %7371 = vmatmul.mubr.f32.gmra.mrb[0].mxu0 %v6964
    %v7372 = vpop.f32.mrb[0].mxu0
    %v7373 = vadd.f32 0.0, %v7372
    %v7374 = vpop.f32.mrb[0].mxu0
    %7375 = vmatprep.mubr.f32.mxu0 0.0
    %7376 = vmatmul.mubr.f32.gmra.mrb[0].mxu0 %v6967
    %v7377 = vpop.f32.mrb[0].mxu0
    %v7378 = vadd.f32 0.0, %v7377
    %v7379 = vpop.f32.mrb[0].mxu0
    %7380 = vmatprep.mubr.f32.mxu0 0.0
    %7381 = vmatmul.mubr.f32.gmra.mrb[0].mxu0 %v6969
    %v7382 = vpop.f32.mrb[0].mxu0
    %v7383 = vadd.f32 0.0, %v7382
    %v7384 = vpop.f32.mrb[0].mxu0
    %7385 = vmatprep.mubr.f32.mxu0 0.0
    %7386 = vmatmul.mubr.f32.gmra.mrb[0].mxu0 %v6972
    %v7387 = vpop.f32.mrb[0].mxu0
    %v7388 = vadd.f32 0.0, %v7387
    %v7389 = vpop.f32.mrb[0].mxu0
    %7390 = vmatprep.mubr.f32.mxu0 0.0
    %7391 = vmatmul.mubr.f32.gmra.mrb[0].mxu0 %v6974
    %v7392 = vpop.f32.mrb[0].mxu0
    %v7393 = vadd.f32 0.0, %v7392
    %v7394 = vpop.f32.mrb[0].mxu0
    %7395 = vmatprep.mubr.f32.mxu0 0.0
    %7396 = vmatmul.mubr.f32.gmra.mrb[0].mxu0 %v6977
    %v7397 = vpop.f32.mrb[0].mxu0
    %v7398 = vadd.f32 0.0, %v7397
    %v7399 = vpop.f32.mrb[0].mxu0
    %7400 = vmatprep.mubr.f32.mxu0 0.0
    %7401 = vmatmul.mubr.f32.gmra.mrb[0].mxu0 %v6979
    %v7402 = vpop.f32.mrb[0].mxu0
    %v7403 = vadd.f32 0.0, %v7402
    %v7404 = vpop.f32.mrb[0].mxu0
    %7405 = vmatprep.mubr.f32.mxu0 0.0
    %7406 = vmatmul.mubr.f32.gmra.mrb[0].mxu0 %v6982
    %v7407 = vpop.f32.mrb[0].mxu0
    %v7408 = vadd.f32 0.0, %v7407
    %v7409 = vpop.f32.mrb[0].mxu0
    %7410 = vmatprep.mubr.f32.mxu0 0.0
    %7411 = vmatmul.mubr.f32.gmra.mrb[0].mxu0 %v6984
    %v7412 = vpop.f32.mrb[0].mxu0
    %v7413 = vadd.f32 0.0, %v7412
    %v7414 = vpop.f32.mrb[0].mxu0
    %7415 = vmatprep.mubr.f32.mxu0 0.0
    %7416 = vmatmul.mubr.f32.gmra.mrb[0].mxu0 %v6987
    %v7417 = vpop.f32.mrb[0].mxu0
    %v7418 = vadd.f32 0.0, %v7417
    %v7419 = vpop.f32.mrb[0].mxu0
    %7420 = vmatprep.mubr.f32.mxu0 0.0
    %7421 = vmatmul.mubr.f32.gmra.mrb[0].mxu0 %v6989
    %v7422 = vpop.f32.mrb[0].mxu0
    %v7423 = vadd.f32 0.0, %v7422
    %v7424 = vpop.f32.mrb[0].mxu0
    %7425 = vmatprep.mubr.f32.mxu0 0.0
    %7426 = vmatmul.mubr.f32.gmra.mrb[0].mxu0 %v6992
    %v7427 = vpop.f32.mrb[0].mxu0
    %v7428 = vadd.f32 0.0, %v7427
    %v7429 = vpop.f32.mrb[0].mxu0
    %7430 = vmatprep.mubr.f32.mxu0 0.0
    %7431 = vmatmul.mubr.f32.gmra.mrb[0].mxu0 %v6994
    %v7432 = vpop.f32.mrb[0].mxu0
    %v7433 = vadd.f32 0.0, %v7432
    %v7434 = vpop.f32.mrb[0].mxu0
    %7435 = vmatprep.mubr.f32.mxu0 0.0
    %7436 = vmatmul.mubr.f32.gmra.mrb[0].mxu0 %v6997
    %v7437 = vpop.f32.mrb[0].mxu0
    %v7438 = vadd.f32 0.0, %v7437
    %v7439 = vpop.f32.mrb[0].mxu0
    %7440 = vmatprep.mubr.f32.mxu0 0.0
    %7441 = vmatmul.mubr.f32.gmra.mrb[0].mxu0 %v6999
    %v7442 = vpop.f32.mrb[0].mxu0
    %v7443 = vadd.f32 0.0, %v7442
    %v7444 = vpop.f32.mrb[0].mxu0
    %7445 = vmatprep.mubr.f32.mxu0 0.0
    %7446 = vmatmul.mubr.f32.gmra.mrb[0].mxu0 %v7002
    %v7447 = vpop.f32.mrb[0].mxu0
    %v7448 = vadd.f32 0.0, %v7447
    %v7449 = vpop.f32.mrb[0].mxu0
    %7450 = vmatprep.mubr.f32.mxu0 0.0
    %7451 = vmatmul.mubr.f32.gmra.mrb[0].mxu0 %v7004
    %v7452 = vpop.f32.mrb[0].mxu0
    %v7453 = vadd.f32 0.0, %v7452
    %v7454 = vpop.f32.mrb[0].mxu0
    %7455 = vmatprep.mubr.f32.mxu0 0.0
    %7456 = vmatmul.mubr.f32.gmra.mrb[0].mxu0 %v7007
    %v7457 = vpop.f32.mrb[0].mxu0
    %v7458 = vadd.f32 0.0, %v7457
    %v7459 = vpop.f32.mrb[0].mxu0
    %7460 = vmatprep.mubr.f32.mxu0 0.0
    %7461 = vmatmul.mubr.f32.gmra.mrb[0].mxu0 %v7009
    %v7462 = vpop.f32.mrb[0].mxu0
    %v7463 = vadd.f32 0.0, %v7462
    %v7464 = vpop.f32.mrb[0].mxu0
    %7465 = vmatprep.mubr.f32.mxu0 0.0
    %7466 = vmatmul.mubr.f32.gmra.mrb[0].mxu0 %v7012
    %v7467 = vpop.f32.mrb[0].mxu0
    %v7468 = vadd.f32 0.0, %v7467
    %v7469 = vpop.f32.mrb[0].mxu0
    %7470 = vmatprep.mubr.f32.mxu0 0.0
    %7471 = vmatmul.mubr.f32.gmra.mrb[0].mxu0 %v7014
    %v7472 = vpop.f32.mrb[0].mxu0
    %v7473 = vadd.f32 0.0, %v7472
    %v7474 = vpop.f32.mrb[0].mxu0
    %7475 = vmatprep.mubr.f32.mxu0 0.0
    %7476 = vmatmul.mubr.f32.gmra.mrb[0].mxu0 %v7017
    %v7477 = vpop.f32.mrb[0].mxu0
    %v7478 = vadd.f32 0.0, %v7477
    %v7479 = vpop.f32.mrb[0].mxu0
    %7480 = vmatprep.mubr.f32.mxu0 0.0
    %7481 = vmatmul.mubr.f32.gmra.mrb[0].mxu0 %v7019
    %v7482 = vpop.f32.mrb[0].mxu0
    %v7483 = vadd.f32 0.0, %v7482
    %v7484 = vpop.f32.mrb[0].mxu0
    %7485 = vdwg.mxu0
    %v7486 = vadd.f32 %v6542, %v7168
    %v7487 = vadd.f32 %v6547, %v7173
    %v7488 = vadd.f32 %v6552, %v7178
    %v7489 = vadd.f32 %v6557, %v7183
    %v7490 = vadd.f32 %v6562, %v7188
    %v7491 = vadd.f32 %v6567, %v7193
    %v7492 = vadd.f32 %v6572, %v7198
    %v7493 = vadd.f32 %v6577, %v7203
    %v7494 = vadd.f32 %v6582, %v7208
    %v7495 = vadd.f32 %v6587, %v7213
    %v7496 = vadd.f32 %v6592, %v7218
    %v7497 = vadd.f32 %v6597, %v7223
    %v7498 = vadd.f32 %v6602, %v7228
    %v7499 = vadd.f32 %v6607, %v7233
    %v7500 = vadd.f32 %v6612, %v7238
    %v7501 = vadd.f32 %v6617, %v7243
    %v7502 = vadd.f32 %v6622, %v7248
    %v7503 = vadd.f32 %v6627, %v7253
    %v7504 = vadd.f32 %v6632, %v7258
    %v7505 = vadd.f32 %v6637, %v7263
    %v7506 = vadd.f32 %v6642, %v7268
    %v7507 = vadd.f32 %v6647, %v7273
    %v7508 = vadd.f32 %v6652, %v7278
    %v7509 = vadd.f32 %v6657, %v7283
    %v7510 = vadd.f32 %v6662, %v7288
    %v7511 = vadd.f32 %v6667, %v7293
    %v7512 = vadd.f32 %v6672, %v7298
    %v7513 = vadd.f32 %v6677, %v7303
    %v7514 = vadd.f32 %v6682, %v7308
    %v7515 = vadd.f32 %v6687, %v7313
    %v7516 = vadd.f32 %v6692, %v7318
    %v7517 = vadd.f32 %v6697, %v7323
    %v7518 = vadd.f32 %v6702, %v7328
    %v7519 = vadd.f32 %v6707, %v7333
    %v7520 = vadd.f32 %v6712, %v7338
    %v7521 = vadd.f32 %v6717, %v7343
    %v7522 = vadd.f32 %v6722, %v7348
    %v7523 = vadd.f32 %v6727, %v7353
    %v7524 = vadd.f32 %v6732, %v7358
    %v7525 = vadd.f32 %v6737, %v7363
    %v7526 = vadd.f32 %v6742, %v7368
    %v7527 = vadd.f32 %v6747, %v7373
    %v7528 = vadd.f32 %v6752, %v7378
    %v7529 = vadd.f32 %v6757, %v7383
    %v7530 = vadd.f32 %v6762, %v7388
    %v7531 = vadd.f32 %v6767, %v7393
    %v7532 = vadd.f32 %v6772, %v7398
    %v7533 = vadd.f32 %v6777, %v7403
    %v7534 = vadd.f32 %v6782, %v7408
    %v7535 = vadd.f32 %v6787, %v7413
    %v7536 = vadd.f32 %v6792, %v7418
    %v7537 = vadd.f32 %v6797, %v7423
    %v7538 = vadd.f32 %v6802, %v7428
    %v7539 = vadd.f32 %v6807, %v7433
    %v7540 = vadd.f32 %v6812, %v7438
    %v7541 = vadd.f32 %v6817, %v7443
    %v7542 = vadd.f32 %v6822, %v7448
    %v7543 = vadd.f32 %v6827, %v7453
    %v7544 = vadd.f32 %v6832, %v7458
    %v7545 = vadd.f32 %v6837, %v7463
    %v7546 = vadd.f32 %v6842, %v7468
    %v7547 = vadd.f32 %v6847, %v7473
    %v7548 = vadd.f32 %v6852, %v7478
    %v7549 = vadd.f32 %v6857, %v7483
    %s7550 = scalar_lea.vmem [#allocation4], 384
    %v7551 = vld [vmem:[%s7550] sm:$0xff]
    %v7552 = vld [vmem:[%s7550 + $0x8] sm:$0xff]
    %v7553 = vld [vmem:[%s7550 + $0x10] sm:$0xff]
    %v7554 = vld [vmem:[%s7550 + $0x18] sm:$0xff]
    %v7555 = vld [vmem:[%s7550 + $0x20] sm:$0xff]
    %v7556 = vld [vmem:[%s7550 + $0x28] sm:$0xff]
    %v7557 = vld [vmem:[%s7550 + $0x30] sm:$0xff]
    %v7558 = vld [vmem:[%s7550 + $0x38] sm:$0xff]
    %v7559 = vld [vmem:[%s7550 + $0x40] sm:$0xff]
    %v7560 = vld [vmem:[%s7550 + $0x48] sm:$0xff]
    %v7561 = vld [vmem:[%s7550 + $0x50] sm:$0xff]
    %v7562 = vld [vmem:[%s7550 + $0x58] sm:$0xff]
    %v7563 = vld [vmem:[%s7550 + $0x60] sm:$0xff]
    %v7564 = vld [vmem:[%s7550 + $0x68] sm:$0xff]
    %v7565 = vld [vmem:[%s7550 + $0x70] sm:$0xff]
    %v7566 = vld [vmem:[%s7550 + $0x78] sm:$0xff]
    %7567 = vmatprep.subr.mxu0 0.0
    %7568 = vmatpush1.msra.mxu0 %v7551
    %7569 = vmatprep.subr.mxu0 0.0
    %7570 = vmatpush1.msra.mxu0 %v7552
    %7571 = vmatprep.subr.mxu0 0.0
    %7572 = vmatpush1.msra.mxu0 %v7553
    %7573 = vmatprep.subr.mxu0 0.0
    %7574 = vmatpush1.msra.mxu0 %v7554
    %7575 = vmatprep.subr.mxu0 0.0
    %7576 = vmatpush1.msra.mxu0 %v7555
    %7577 = vmatprep.subr.mxu0 0.0
    %7578 = vmatpush1.msra.mxu0 %v7556
    %7579 = vmatprep.subr.mxu0 0.0
    %7580 = vmatpush1.msra.mxu0 %v7557
    %7581 = vmatprep.subr.mxu0 0.0
    %7582 = vmatpush1.msra.mxu0 %v7558
    %7583 = vmatprep.subr.mxu0 0.0
    %7584 = vmatpush1.msra.mxu0 %v7559
    %7585 = vmatprep.subr.mxu0 0.0
    %7586 = vmatpush1.msra.mxu0 %v7560
    %7587 = vmatprep.subr.mxu0 0.0
    %7588 = vmatpush1.msra.mxu0 %v7561
    %7589 = vmatprep.subr.mxu0 0.0
    %7590 = vmatpush1.msra.mxu0 %v7562
    %7591 = vmatprep.subr.mxu0 0.0
    %7592 = vmatpush1.msra.mxu0 %v7563
    %7593 = vmatprep.subr.mxu0 0.0
    %7594 = vmatpush1.msra.mxu0 %v7564
    %7595 = vmatprep.subr.mxu0 0.0
    %7596 = vmatpush1.msra.mxu0 %v7565
    %7597 = vmatprep.subr.mxu0 0.0
    %7598 = vmatpush1.msra.mxu0 %v7566
    %7599 = vmatprep.subr.mxu0 0.0
    %7600 = vmatpush1.msra.mxu0 0.0
    %7601 = vmatprep.subr.mxu0 0.0
    %7602 = vmatpush1.msra.mxu0 0.0
    %7603 = vmatprep.subr.mxu0 0.0
    %7604 = vmatpush1.msra.mxu0 0.0
    %7605 = vmatprep.subr.mxu0 0.0
    %7606 = vmatpush1.msra.mxu0 0.0
    %7607 = vmatprep.subr.mxu0 0.0
    %7608 = vmatpush1.msra.mxu0 0.0
    %7609 = vmatprep.subr.mxu0 0.0
    %7610 = vmatpush1.msra.mxu0 0.0
    %7611 = vmatprep.subr.mxu0 0.0
    %7612 = vmatpush1.msra.mxu0 0.0
    %7613 = vmatprep.subr.mxu0 0.0
    %7614 = vmatpush1.msra.mxu0 0.0
    %7615 = vmatprep.subr.mxu0 0.0
    %7616 = vmatpush1.msra.mxu0 0.0
    %7617 = vmatprep.subr.mxu0 0.0
    %7618 = vmatpush1.msra.mxu0 0.0
    %7619 = vmatprep.subr.mxu0 0.0
    %7620 = vmatpush1.msra.mxu0 0.0
    %7621 = vmatprep.subr.mxu0 0.0
    %7622 = vmatpush1.msra.mxu0 0.0
    %7623 = vmatprep.subr.mxu0 0.0
    %7624 = vmatpush1.msra.mxu0 0.0
    %7625 = vmatprep.subr.mxu0 0.0
    %7626 = vmatpush1.msra.mxu0 0.0
    %7627 = vmatprep.subr.mxu0 0.0
    %7628 = vmatpush1.msra.mxu0 0.0
    %7629 = vmatprep.subr.mxu0 0.0
    %7630 = vmatpush1.msra.mxu0 0.0
    %7631 = vmatprep.mubr.f32.mxu0 0.0
    %7632 = vmatmul.mubr.f32.gmra.mrb[0].mxu0 %v5632
    %v7633 = vpop.f32.mrb[0].mxu0
    %v7634 = vadd.f32 0.0, %v7633
    %v7635 = vpop.f32.mrb[0].mxu0
    %7636 = vmatprep.mubr.f32.mxu0 0.0
    %7637 = vmatmul.mubr.f32.gmra.mrb[0].mxu0 %v5633
    %v7638 = vpop.f32.mrb[0].mxu0
    %v7639 = vadd.f32 0.0, %v7638
    %v7640 = vpop.f32.mrb[0].mxu0
    %7641 = vmatprep.mubr.f32.mxu0 0.0
    %7642 = vmatmul.mubr.f32.gmra.mrb[0].mxu0 %v5635
    %v7643 = vpop.f32.mrb[0].mxu0
    %v7644 = vadd.f32 0.0, %v7643
    %v7645 = vpop.f32.mrb[0].mxu0
    %7646 = vmatprep.mubr.f32.mxu0 0.0
    %7647 = vmatmul.mubr.f32.gmra.mrb[0].mxu0 %v5636
    %v7648 = vpop.f32.mrb[0].mxu0
    %v7649 = vadd.f32 0.0, %v7648
    %v7650 = vpop.f32.mrb[0].mxu0
    %7651 = vmatprep.mubr.f32.mxu0 0.0
    %7652 = vmatmul.mubr.f32.gmra.mrb[0].mxu0 %v5638
    %v7653 = vpop.f32.mrb[0].mxu0
    %v7654 = vadd.f32 0.0, %v7653
    %v7655 = vpop.f32.mrb[0].mxu0
    %7656 = vmatprep.mubr.f32.mxu0 0.0
    %7657 = vmatmul.mubr.f32.gmra.mrb[0].mxu0 %v5639
    %v7658 = vpop.f32.mrb[0].mxu0
    %v7659 = vadd.f32 0.0, %v7658
    %v7660 = vpop.f32.mrb[0].mxu0
    %7661 = vmatprep.mubr.f32.mxu0 0.0
    %7662 = vmatmul.mubr.f32.gmra.mrb[0].mxu0 %v5641
    %v7663 = vpop.f32.mrb[0].mxu0
    %v7664 = vadd.f32 0.0, %v7663
    %v7665 = vpop.f32.mrb[0].mxu0
    %7666 = vmatprep.mubr.f32.mxu0 0.0
    %7667 = vmatmul.mubr.f32.gmra.mrb[0].mxu0 %v5642
    %v7668 = vpop.f32.mrb[0].mxu0
    %v7669 = vadd.f32 0.0, %v7668
    %v7670 = vpop.f32.mrb[0].mxu0
    %7671 = vmatprep.mubr.f32.mxu0 0.0
    %7672 = vmatmul.mubr.f32.gmra.mrb[0].mxu0 %v5644
    %v7673 = vpop.f32.mrb[0].mxu0
    %v7674 = vadd.f32 0.0, %v7673
    %v7675 = vpop.f32.mrb[0].mxu0
    %7676 = vmatprep.mubr.f32.mxu0 0.0
    %7677 = vmatmul.mubr.f32.gmra.mrb[0].mxu0 %v5645
    %v7678 = vpop.f32.mrb[0].mxu0
    %v7679 = vadd.f32 0.0, %v7678
    %v7680 = vpop.f32.mrb[0].mxu0
    %7681 = vmatprep.mubr.f32.mxu0 0.0
    %7682 = vmatmul.mubr.f32.gmra.mrb[0].mxu0 %v5647
    %v7683 = vpop.f32.mrb[0].mxu0
    %v7684 = vadd.f32 0.0, %v7683
    %v7685 = vpop.f32.mrb[0].mxu0
    %7686 = vmatprep.mubr.f32.mxu0 0.0
    %7687 = vmatmul.mubr.f32.gmra.mrb[0].mxu0 %v5648
    %v7688 = vpop.f32.mrb[0].mxu0
    %v7689 = vadd.f32 0.0, %v7688
    %v7690 = vpop.f32.mrb[0].mxu0
    %7691 = vmatprep.mubr.f32.mxu0 0.0
    %7692 = vmatmul.mubr.f32.gmra.mrb[0].mxu0 %v5650
    %v7693 = vpop.f32.mrb[0].mxu0
    %v7694 = vadd.f32 0.0, %v7693
    %v7695 = vpop.f32.mrb[0].mxu0
    %7696 = vmatprep.mubr.f32.mxu0 0.0
    %7697 = vmatmul.mubr.f32.gmra.mrb[0].mxu0 %v5651
    %v7698 = vpop.f32.mrb[0].mxu0
    %v7699 = vadd.f32 0.0, %v7698
    %v7700 = vpop.f32.mrb[0].mxu0
    %7701 = vmatprep.mubr.f32.mxu0 0.0
    %7702 = vmatmul.mubr.f32.gmra.mrb[0].mxu0 %v5653
    %v7703 = vpop.f32.mrb[0].mxu0
    %v7704 = vadd.f32 0.0, %v7703
    %v7705 = vpop.f32.mrb[0].mxu0
    %7706 = vmatprep.mubr.f32.mxu0 0.0
    %7707 = vmatmul.mubr.f32.gmra.mrb[0].mxu0 %v5654
    %v7708 = vpop.f32.mrb[0].mxu0
    %v7709 = vadd.f32 0.0, %v7708
    %v7710 = vpop.f32.mrb[0].mxu0
    %7711 = vmatprep.mubr.f32.mxu0 0.0
    %7712 = vmatmul.mubr.f32.gmra.mrb[0].mxu0 %v5656
    %v7713 = vpop.f32.mrb[0].mxu0
    %v7714 = vadd.f32 0.0, %v7713
    %v7715 = vpop.f32.mrb[0].mxu0
    %7716 = vmatprep.mubr.f32.mxu0 0.0
    %7717 = vmatmul.mubr.f32.gmra.mrb[0].mxu0 %v5657
    %v7718 = vpop.f32.mrb[0].mxu0
    %v7719 = vadd.f32 0.0, %v7718
    %v7720 = vpop.f32.mrb[0].mxu0
    %7721 = vmatprep.mubr.f32.mxu0 0.0
    %7722 = vmatmul.mubr.f32.gmra.mrb[0].mxu0 %v5659
    %v7723 = vpop.f32.mrb[0].mxu0
    %v7724 = vadd.f32 0.0, %v7723
    %v7725 = vpop.f32.mrb[0].mxu0
    %7726 = vmatprep.mubr.f32.mxu0 0.0
    %7727 = vmatmul.mubr.f32.gmra.mrb[0].mxu0 %v5660
    %v7728 = vpop.f32.mrb[0].mxu0
    %v7729 = vadd.f32 0.0, %v7728
    %v7730 = vpop.f32.mrb[0].mxu0
    %7731 = vmatprep.mubr.f32.mxu0 0.0
    %7732 = vmatmul.mubr.f32.gmra.mrb[0].mxu0 %v5662
    %v7733 = vpop.f32.mrb[0].mxu0
    %v7734 = vadd.f32 0.0, %v7733
    %v7735 = vpop.f32.mrb[0].mxu0
    %7736 = vmatprep.mubr.f32.mxu0 0.0
    %7737 = vmatmul.mubr.f32.gmra.mrb[0].mxu0 %v5663
    %v7738 = vpop.f32.mrb[0].mxu0
    %v7739 = vadd.f32 0.0, %v7738
    %v7740 = vpop.f32.mrb[0].mxu0
    %7741 = vmatprep.mubr.f32.mxu0 0.0
    %7742 = vmatmul.mubr.f32.gmra.mrb[0].mxu0 %v5665
    %v7743 = vpop.f32.mrb[0].mxu0
    %v7744 = vadd.f32 0.0, %v7743
    %v7745 = vpop.f32.mrb[0].mxu0
    %7746 = vmatprep.mubr.f32.mxu0 0.0
    %7747 = vmatmul.mubr.f32.gmra.mrb[0].mxu0 %v5666
    %v7748 = vpop.f32.mrb[0].mxu0
    %v7749 = vadd.f32 0.0, %v7748
    %v7750 = vpop.f32.mrb[0].mxu0
    %7751 = vmatprep.mubr.f32.mxu0 0.0
    %7752 = vmatmul.mubr.f32.gmra.mrb[0].mxu0 %v5668
    %v7753 = vpop.f32.mrb[0].mxu0
    %v7754 = vadd.f32 0.0, %v7753
    %v7755 = vpop.f32.mrb[0].mxu0
    %7756 = vmatprep.mubr.f32.mxu0 0.0
    %7757 = vmatmul.mubr.f32.gmra.mrb[0].mxu0 %v5669
    %v7758 = vpop.f32.mrb[0].mxu0
    %v7759 = vadd.f32 0.0, %v7758
    %v7760 = vpop.f32.mrb[0].mxu0
    %7761 = vmatprep.mubr.f32.mxu0 0.0
    %7762 = vmatmul.mubr.f32.gmra.mrb[0].mxu0 %v5671
    %v7763 = vpop.f32.mrb[0].mxu0
    %v7764 = vadd.f32 0.0, %v7763
    %v7765 = vpop.f32.mrb[0].mxu0
    %7766 = vmatprep.mubr.f32.mxu0 0.0
    %7767 = vmatmul.mubr.f32.gmra.mrb[0].mxu0 %v5672
    %v7768 = vpop.f32.mrb[0].mxu0
    %v7769 = vadd.f32 0.0, %v7768
    %v7770 = vpop.f32.mrb[0].mxu0
    %7771 = vmatprep.mubr.f32.mxu0 0.0
    %7772 = vmatmul.mubr.f32.gmra.mrb[0].mxu0 %v5674
    %v7773 = vpop.f32.mrb[0].mxu0
    %v7774 = vadd.f32 0.0, %v7773
    %v7775 = vpop.f32.mrb[0].mxu0
    %7776 = vmatprep.mubr.f32.mxu0 0.0
    %7777 = vmatmul.mubr.f32.gmra.mrb[0].mxu0 %v5675
    %v7778 = vpop.f32.mrb[0].mxu0
    %v7779 = vadd.f32 0.0, %v7778
    %v7780 = vpop.f32.mrb[0].mxu0
    %7781 = vmatprep.mubr.f32.mxu0 0.0
    %7782 = vmatmul.mubr.f32.gmra.mrb[0].mxu0 %v5677
    %v7783 = vpop.f32.mrb[0].mxu0
    %v7784 = vadd.f32 0.0, %v7783
    %v7785 = vpop.f32.mrb[0].mxu0
    %7786 = vmatprep.mubr.f32.mxu0 0.0
    %7787 = vmatmul.mubr.f32.gmra.mrb[0].mxu0 %v5678
    %v7788 = vpop.f32.mrb[0].mxu0
    %v7789 = vadd.f32 0.0, %v7788
    %v7790 = vpop.f32.mrb[0].mxu0
    %7791 = vmatprep.mubr.f32.mxu0 0.0
    %7792 = vmatmul.mubr.f32.gmra.mrb[0].mxu0 %v5686
    %v7793 = vpop.f32.mrb[0].mxu0
    %v7794 = vadd.f32 0.0, %v7793
    %v7795 = vpop.f32.mrb[0].mxu0
    %7796 = vmatprep.mubr.f32.mxu0 0.0
    %7797 = vmatmul.mubr.f32.gmra.mrb[0].mxu0 %v5687
    %v7798 = vpop.f32.mrb[0].mxu0
    %v7799 = vadd.f32 0.0, %v7798
    %v7800 = vpop.f32.mrb[0].mxu0
    %7801 = vmatprep.mubr.f32.mxu0 0.0
    %7802 = vmatmul.mubr.f32.gmra.mrb[0].mxu0 %v5689
    %v7803 = vpop.f32.mrb[0].mxu0
    %v7804 = vadd.f32 0.0, %v7803
    %v7805 = vpop.f32.mrb[0].mxu0
    %7806 = vmatprep.mubr.f32.mxu0 0.0
    %7807 = vmatmul.mubr.f32.gmra.mrb[0].mxu0 %v5690
    %v7808 = vpop.f32.mrb[0].mxu0
    %v7809 = vadd.f32 0.0, %v7808
    %v7810 = vpop.f32.mrb[0].mxu0
    %7811 = vmatprep.mubr.f32.mxu0 0.0
    %7812 = vmatmul.mubr.f32.gmra.mrb[0].mxu0 %v5692
    %v7813 = vpop.f32.mrb[0].mxu0
    %v7814 = vadd.f32 0.0, %v7813
    %v7815 = vpop.f32.mrb[0].mxu0
    %7816 = vmatprep.mubr.f32.mxu0 0.0
    %7817 = vmatmul.mubr.f32.gmra.mrb[0].mxu0 %v5693
    %v7818 = vpop.f32.mrb[0].mxu0
    %v7819 = vadd.f32 0.0, %v7818
    %v7820 = vpop.f32.mrb[0].mxu0
    %7821 = vmatprep.mubr.f32.mxu0 0.0
    %7822 = vmatmul.mubr.f32.gmra.mrb[0].mxu0 %v5695
    %v7823 = vpop.f32.mrb[0].mxu0
    %v7824 = vadd.f32 0.0, %v7823
    %v7825 = vpop.f32.mrb[0].mxu0
    %7826 = vmatprep.mubr.f32.mxu0 0.0
    %7827 = vmatmul.mubr.f32.gmra.mrb[0].mxu0 %v5696
    %v7828 = vpop.f32.mrb[0].mxu0
    %v7829 = vadd.f32 0.0, %v7828
    %v7830 = vpop.f32.mrb[0].mxu0
    %7831 = vmatprep.mubr.f32.mxu0 0.0
    %7832 = vmatmul.mubr.f32.gmra.mrb[0].mxu0 %v5698
    %v7833 = vpop.f32.mrb[0].mxu0
    %v7834 = vadd.f32 0.0, %v7833
    %v7835 = vpop.f32.mrb[0].mxu0
    %7836 = vmatprep.mubr.f32.mxu0 0.0
    %7837 = vmatmul.mubr.f32.gmra.mrb[0].mxu0 %v5699
    %v7838 = vpop.f32.mrb[0].mxu0
    %v7839 = vadd.f32 0.0, %v7838
    %v7840 = vpop.f32.mrb[0].mxu0
    %7841 = vmatprep.mubr.f32.mxu0 0.0
    %7842 = vmatmul.mubr.f32.gmra.mrb[0].mxu0 %v5701
    %v7843 = vpop.f32.mrb[0].mxu0
    %v7844 = vadd.f32 0.0, %v7843
    %v7845 = vpop.f32.mrb[0].mxu0
    %7846 = vmatprep.mubr.f32.mxu0 0.0
    %7847 = vmatmul.mubr.f32.gmra.mrb[0].mxu0 %v5702
    %v7848 = vpop.f32.mrb[0].mxu0
    %v7849 = vadd.f32 0.0, %v7848
    %v7850 = vpop.f32.mrb[0].mxu0
    %7851 = vmatprep.mubr.f32.mxu0 0.0
    %7852 = vmatmul.mubr.f32.gmra.mrb[0].mxu0 %v5704
    %v7853 = vpop.f32.mrb[0].mxu0
    %v7854 = vadd.f32 0.0, %v7853
    %v7855 = vpop.f32.mrb[0].mxu0
    %7856 = vmatprep.mubr.f32.mxu0 0.0
    %7857 = vmatmul.mubr.f32.gmra.mrb[0].mxu0 %v5705
    %v7858 = vpop.f32.mrb[0].mxu0
    %v7859 = vadd.f32 0.0, %v7858
    %v7860 = vpop.f32.mrb[0].mxu0
    %7861 = vmatprep.mubr.f32.mxu0 0.0
    %7862 = vmatmul.mubr.f32.gmra.mrb[0].mxu0 %v5707
    %v7863 = vpop.f32.mrb[0].mxu0
    %v7864 = vadd.f32 0.0, %v7863
    %v7865 = vpop.f32.mrb[0].mxu0
    %7866 = vmatprep.mubr.f32.mxu0 0.0
    %7867 = vmatmul.mubr.f32.gmra.mrb[0].mxu0 %v5708
    %v7868 = vpop.f32.mrb[0].mxu0
    %v7869 = vadd.f32 0.0, %v7868
    %v7870 = vpop.f32.mrb[0].mxu0
    %7871 = vmatprep.mubr.f32.mxu0 0.0
    %7872 = vmatmul.mubr.f32.gmra.mrb[0].mxu0 %v5710
    %v7873 = vpop.f32.mrb[0].mxu0
    %v7874 = vadd.f32 0.0, %v7873
    %v7875 = vpop.f32.mrb[0].mxu0
    %7876 = vmatprep.mubr.f32.mxu0 0.0
    %7877 = vmatmul.mubr.f32.gmra.mrb[0].mxu0 %v5711
    %v7878 = vpop.f32.mrb[0].mxu0
    %v7879 = vadd.f32 0.0, %v7878
    %v7880 = vpop.f32.mrb[0].mxu0
    %7881 = vmatprep.mubr.f32.mxu0 0.0
    %7882 = vmatmul.mubr.f32.gmra.mrb[0].mxu0 %v5713
    %v7883 = vpop.f32.mrb[0].mxu0
    %v7884 = vadd.f32 0.0, %v7883
    %v7885 = vpop.f32.mrb[0].mxu0
    %7886 = vmatprep.mubr.f32.mxu0 0.0
    %7887 = vmatmul.mubr.f32.gmra.mrb[0].mxu0 %v5714
    %v7888 = vpop.f32.mrb[0].mxu0
    %v7889 = vadd.f32 0.0, %v7888
    %v7890 = vpop.f32.mrb[0].mxu0
    %7891 = vmatprep.mubr.f32.mxu0 0.0
    %7892 = vmatmul.mubr.f32.gmra.mrb[0].mxu0 %v5716
    %v7893 = vpop.f32.mrb[0].mxu0
    %v7894 = vadd.f32 0.0, %v7893
    %v7895 = vpop.f32.mrb[0].mxu0
    %7896 = vmatprep.mubr.f32.mxu0 0.0
    %7897 = vmatmul.mubr.f32.gmra.mrb[0].mxu0 %v5717
    %v7898 = vpop.f32.mrb[0].mxu0
    %v7899 = vadd.f32 0.0, %v7898
    %v7900 = vpop.f32.mrb[0].mxu0
    %7901 = vmatprep.mubr.f32.mxu0 0.0
    %7902 = vmatmul.mubr.f32.gmra.mrb[0].mxu0 %v5719
    %v7903 = vpop.f32.mrb[0].mxu0
    %v7904 = vadd.f32 0.0, %v7903
    %v7905 = vpop.f32.mrb[0].mxu0
    %7906 = vmatprep.mubr.f32.mxu0 0.0
    %7907 = vmatmul.mubr.f32.gmra.mrb[0].mxu0 %v5720
    %v7908 = vpop.f32.mrb[0].mxu0
    %v7909 = vadd.f32 0.0, %v7908
    %v7910 = vpop.f32.mrb[0].mxu0
    %7911 = vmatprep.mubr.f32.mxu0 0.0
    %7912 = vmatmul.mubr.f32.gmra.mrb[0].mxu0 %v5722
    %v7913 = vpop.f32.mrb[0].mxu0
    %v7914 = vadd.f32 0.0, %v7913
    %v7915 = vpop.f32.mrb[0].mxu0
    %7916 = vmatprep.mubr.f32.mxu0 0.0
    %7917 = vmatmul.mubr.f32.gmra.mrb[0].mxu0 %v5723
    %v7918 = vpop.f32.mrb[0].mxu0
    %v7919 = vadd.f32 0.0, %v7918
    %v7920 = vpop.f32.mrb[0].mxu0
    %7921 = vmatprep.mubr.f32.mxu0 0.0
    %7922 = vmatmul.mubr.f32.gmra.mrb[0].mxu0 %v5725
    %v7923 = vpop.f32.mrb[0].mxu0
    %v7924 = vadd.f32 0.0, %v7923
    %v7925 = vpop.f32.mrb[0].mxu0
    %7926 = vmatprep.mubr.f32.mxu0 0.0
    %7927 = vmatmul.mubr.f32.gmra.mrb[0].mxu0 %v5726
    %v7928 = vpop.f32.mrb[0].mxu0
    %v7929 = vadd.f32 0.0, %v7928
    %v7930 = vpop.f32.mrb[0].mxu0
    %7931 = vmatprep.mubr.f32.mxu0 0.0
    %7932 = vmatmul.mubr.f32.gmra.mrb[0].mxu0 %v5728
    %v7933 = vpop.f32.mrb[0].mxu0
    %v7934 = vadd.f32 0.0, %v7933
    %v7935 = vpop.f32.mrb[0].mxu0
    %7936 = vmatprep.mubr.f32.mxu0 0.0
    %7937 = vmatmul.mubr.f32.gmra.mrb[0].mxu0 %v5729
    %v7938 = vpop.f32.mrb[0].mxu0
    %v7939 = vadd.f32 0.0, %v7938
    %v7940 = vpop.f32.mrb[0].mxu0
    %7941 = vmatprep.mubr.f32.mxu0 0.0
    %7942 = vmatmul.mubr.f32.gmra.mrb[0].mxu0 %v5731
    %v7943 = vpop.f32.mrb[0].mxu0
    %v7944 = vadd.f32 0.0, %v7943
    %v7945 = vpop.f32.mrb[0].mxu0
    %7946 = vmatprep.mubr.f32.mxu0 0.0
    %7947 = vmatmul.mubr.f32.gmra.mrb[0].mxu0 %v5732
    %v7948 = vpop.f32.mrb[0].mxu0
    %v7949 = vadd.f32 0.0, %v7948
    %v7950 = vpop.f32.mrb[0].mxu0
    %7951 = vdwg.mxu0
    %v7952 = vadd.f32 %v7486, %v7634
    %v7953 = vadd.f32 %v7487, %v7639
    %v7954 = vadd.f32 %v7488, %v7644
    %v7955 = vadd.f32 %v7489, %v7649
    %v7956 = vadd.f32 %v7490, %v7654
    %v7957 = vadd.f32 %v7491, %v7659
    %v7958 = vadd.f32 %v7492, %v7664
    %v7959 = vadd.f32 %v7493, %v7669
    %v7960 = vadd.f32 %v7494, %v7674
    %v7961 = vadd.f32 %v7495, %v7679
    %v7962 = vadd.f32 %v7496, %v7684
    %v7963 = vadd.f32 %v7497, %v7689
    %v7964 = vadd.f32 %v7498, %v7694
    %v7965 = vadd.f32 %v7499, %v7699
    %v7966 = vadd.f32 %v7500, %v7704
    %v7967 = vadd.f32 %v7501, %v7709
    %v7968 = vadd.f32 %v7502, %v7714
    %v7969 = vadd.f32 %v7503, %v7719
    %v7970 = vadd.f32 %v7504, %v7724
    %v7971 = vadd.f32 %v7505, %v7729
    %v7972 = vadd.f32 %v7506, %v7734
    %v7973 = vadd.f32 %v7507, %v7739
    %v7974 = vadd.f32 %v7508, %v7744
    %v7975 = vadd.f32 %v7509, %v7749
    %v7976 = vadd.f32 %v7510, %v7754
    %v7977 = vadd.f32 %v7511, %v7759
    %v7978 = vadd.f32 %v7512, %v7764
    %v7979 = vadd.f32 %v7513, %v7769
    %v7980 = vadd.f32 %v7514, %v7774
    %v7981 = vadd.f32 %v7515, %v7779
    %v7982 = vadd.f32 %v7516, %v7784
    %v7983 = vadd.f32 %v7517, %v7789
    %v7984 = vadd.f32 %v7518, %v7794
    %v7985 = vadd.f32 %v7519, %v7799
    %v7986 = vadd.f32 %v7520, %v7804
    %v7987 = vadd.f32 %v7521, %v7809
    %v7988 = vadd.f32 %v7522, %v7814
    %v7989 = vadd.f32 %v7523, %v7819
    %v7990 = vadd.f32 %v7524, %v7824
    %v7991 = vadd.f32 %v7525, %v7829
    %v7992 = vadd.f32 %v7526, %v7834
    %v7993 = vadd.f32 %v7527, %v7839
    %v7994 = vadd.f32 %v7528, %v7844
    %v7995 = vadd.f32 %v7529, %v7849
    %v7996 = vadd.f32 %v7530, %v7854
    %v7997 = vadd.f32 %v7531, %v7859
    %v7998 = vadd.f32 %v7532, %v7864
    %v7999 = vadd.f32 %v7533, %v7869
    %v8000 = vadd.f32 %v7534, %v7874
    %v8001 = vadd.f32 %v7535, %v7879
    %v8002 = vadd.f32 %v7536, %v7884
    %v8003 = vadd.f32 %v7537, %v7889
    %v8004 = vadd.f32 %v7538, %v7894
    %v8005 = vadd.f32 %v7539, %v7899
    %v8006 = vadd.f32 %v7540, %v7904
    %v8007 = vadd.f32 %v7541, %v7909
    %v8008 = vadd.f32 %v7542, %v7914
    %v8009 = vadd.f32 %v7543, %v7919
    %v8010 = vadd.f32 %v7544, %v7924
    %v8011 = vadd.f32 %v7545, %v7929
    %v8012 = vadd.f32 %v7546, %v7934
    %v8013 = vadd.f32 %v7547, %v7939
    %v8014 = vadd.f32 %v7548, %v7944
    %v8015 = vadd.f32 %v7549, %v7949
    %v8022 = vrot.slane %v5677, 1
    %v8023 = vrot.slane %v5678, 1
    %v8024 = vsel %vm271, %v8022, %v8023
    %v8025 = vrot.slane %v5679, 1
    %v8026 = vsel %vm271, %v8023, %v8025
    %v8027 = vrot.slane %v5731, 1
    %v8028 = vrot.slane %v5732, 1
    %v8029 = vsel %vm271, %v8027, %v8028
    %v8030 = vrot.slane %v5733, 1
    %v8031 = vsel %vm271, %v8028, %v8030
    %s8036 = scalar_lea.vmem [#allocation4], 512
    %v8037 = vld [vmem:[%s8036] sm:$0xff]
    %v8038 = vld [vmem:[%s8036 + $0x8] sm:$0xff]
    %v8039 = vld [vmem:[%s8036 + $0x10] sm:$0xff]
    %v8040 = vld [vmem:[%s8036 + $0x18] sm:$0xff]
    %v8041 = vld [vmem:[%s8036 + $0x20] sm:$0xff]
    %v8042 = vld [vmem:[%s8036 + $0x28] sm:$0xff]
    %v8043 = vld [vmem:[%s8036 + $0x30] sm:$0xff]
    %v8044 = vld [vmem:[%s8036 + $0x38] sm:$0xff]
    %v8045 = vld [vmem:[%s8036 + $0x40] sm:$0xff]
    %v8046 = vld [vmem:[%s8036 + $0x48] sm:$0xff]
    %v8047 = vld [vmem:[%s8036 + $0x50] sm:$0xff]
    %v8048 = vld [vmem:[%s8036 + $0x58] sm:$0xff]
    %v8049 = vld [vmem:[%s8036 + $0x60] sm:$0xff]
    %v8050 = vld [vmem:[%s8036 + $0x68] sm:$0xff]
    %v8051 = vld [vmem:[%s8036 + $0x70] sm:$0xff]
    %v8052 = vld [vmem:[%s8036 + $0x78] sm:$0xff]
    %8053 = vmatprep.subr.mxu0 0.0
    %8054 = vmatpush1.msra.mxu0 %v8037
    %8055 = vmatprep.subr.mxu0 0.0
    %8056 = vmatpush1.msra.mxu0 %v8038
    %8057 = vmatprep.subr.mxu0 0.0
    %8058 = vmatpush1.msra.mxu0 %v8039
    %8059 = vmatprep.subr.mxu0 0.0
    %8060 = vmatpush1.msra.mxu0 %v8040
    %8061 = vmatprep.subr.mxu0 0.0
    %8062 = vmatpush1.msra.mxu0 %v8041
    %8063 = vmatprep.subr.mxu0 0.0
    %8064 = vmatpush1.msra.mxu0 %v8042
    %8065 = vmatprep.subr.mxu0 0.0
    %8066 = vmatpush1.msra.mxu0 %v8043
    %8067 = vmatprep.subr.mxu0 0.0
    %8068 = vmatpush1.msra.mxu0 %v8044
    %8069 = vmatprep.subr.mxu0 0.0
    %8070 = vmatpush1.msra.mxu0 %v8045
    %8071 = vmatprep.subr.mxu0 0.0
    %8072 = vmatpush1.msra.mxu0 %v8046
    %8073 = vmatprep.subr.mxu0 0.0
    %8074 = vmatpush1.msra.mxu0 %v8047
    %8075 = vmatprep.subr.mxu0 0.0
    %8076 = vmatpush1.msra.mxu0 %v8048
    %8077 = vmatprep.subr.mxu0 0.0
    %8078 = vmatpush1.msra.mxu0 %v8049
    %8079 = vmatprep.subr.mxu0 0.0
    %8080 = vmatpush1.msra.mxu0 %v8050
    %8081 = vmatprep.subr.mxu0 0.0
    %8082 = vmatpush1.msra.mxu0 %v8051
    %8083 = vmatprep.subr.mxu0 0.0
    %8084 = vmatpush1.msra.mxu0 %v8052
    %8085 = vmatprep.subr.mxu0 0.0
    %8086 = vmatpush1.msra.mxu0 0.0
    %8087 = vmatprep.subr.mxu0 0.0
    %8088 = vmatpush1.msra.mxu0 0.0
    %8089 = vmatprep.subr.mxu0 0.0
    %8090 = vmatpush1.msra.mxu0 0.0
    %8091 = vmatprep.subr.mxu0 0.0
    %8092 = vmatpush1.msra.mxu0 0.0
    %8093 = vmatprep.subr.mxu0 0.0
    %8094 = vmatpush1.msra.mxu0 0.0
    %8095 = vmatprep.subr.mxu0 0.0
    %8096 = vmatpush1.msra.mxu0 0.0
    %8097 = vmatprep.subr.mxu0 0.0
    %8098 = vmatpush1.msra.mxu0 0.0
    %8099 = vmatprep.subr.mxu0 0.0
    %8100 = vmatpush1.msra.mxu0 0.0
    %8101 = vmatprep.subr.mxu0 0.0
    %8102 = vmatpush1.msra.mxu0 0.0
    %8103 = vmatprep.subr.mxu0 0.0
    %8104 = vmatpush1.msra.mxu0 0.0
    %8105 = vmatprep.subr.mxu0 0.0
    %8106 = vmatpush1.msra.mxu0 0.0
    %8107 = vmatprep.subr.mxu0 0.0
    %8108 = vmatpush1.msra.mxu0 0.0
    %8109 = vmatprep.subr.mxu0 0.0
    %8110 = vmatpush1.msra.mxu0 0.0
    %8111 = vmatprep.subr.mxu0 0.0
    %8112 = vmatpush1.msra.mxu0 0.0
    %8113 = vmatprep.subr.mxu0 0.0
    %8114 = vmatpush1.msra.mxu0 0.0
    %8115 = vmatprep.subr.mxu0 0.0
    %8116 = vmatpush1.msra.mxu0 0.0
    %8117 = vmatprep.mubr.f32.mxu0 0.0
    %8118 = vmatmul.mubr.f32.gmra.mrb[0].mxu0 %v5856
    %v8119 = vpop.f32.mrb[0].mxu0
    %v8120 = vadd.f32 0.0, %v8119
    %v8121 = vpop.f32.mrb[0].mxu0
    %8122 = vmatprep.mubr.f32.mxu0 0.0
    %8123 = vmatmul.mubr.f32.gmra.mrb[0].mxu0 %v5858
    %v8124 = vpop.f32.mrb[0].mxu0
    %v8125 = vadd.f32 0.0, %v8124
    %v8126 = vpop.f32.mrb[0].mxu0
    %8127 = vmatprep.mubr.f32.mxu0 0.0
    %8128 = vmatmul.mubr.f32.gmra.mrb[0].mxu0 %v5861
    %v8129 = vpop.f32.mrb[0].mxu0
    %v8130 = vadd.f32 0.0, %v8129
    %v8131 = vpop.f32.mrb[0].mxu0
    %8132 = vmatprep.mubr.f32.mxu0 0.0
    %8133 = vmatmul.mubr.f32.gmra.mrb[0].mxu0 %v5863
    %v8134 = vpop.f32.mrb[0].mxu0
    %v8135 = vadd.f32 0.0, %v8134
    %v8136 = vpop.f32.mrb[0].mxu0
    %8137 = vmatprep.mubr.f32.mxu0 0.0
    %8138 = vmatmul.mubr.f32.gmra.mrb[0].mxu0 %v5866
    %v8139 = vpop.f32.mrb[0].mxu0
    %v8140 = vadd.f32 0.0, %v8139
    %v8141 = vpop.f32.mrb[0].mxu0
    %8142 = vmatprep.mubr.f32.mxu0 0.0
    %8143 = vmatmul.mubr.f32.gmra.mrb[0].mxu0 %v5868
    %v8144 = vpop.f32.mrb[0].mxu0
    %v8145 = vadd.f32 0.0, %v8144
    %v8146 = vpop.f32.mrb[0].mxu0
    %8147 = vmatprep.mubr.f32.mxu0 0.0
    %8148 = vmatmul.mubr.f32.gmra.mrb[0].mxu0 %v5871
    %v8149 = vpop.f32.mrb[0].mxu0
    %v8150 = vadd.f32 0.0, %v8149
    %v8151 = vpop.f32.mrb[0].mxu0
    %8152 = vmatprep.mubr.f32.mxu0 0.0
    %8153 = vmatmul.mubr.f32.gmra.mrb[0].mxu0 %v5873
    %v8154 = vpop.f32.mrb[0].mxu0
    %v8155 = vadd.f32 0.0, %v8154
    %v8156 = vpop.f32.mrb[0].mxu0
    %8157 = vmatprep.mubr.f32.mxu0 0.0
    %8158 = vmatmul.mubr.f32.gmra.mrb[0].mxu0 %v5876
    %v8159 = vpop.f32.mrb[0].mxu0
    %v8160 = vadd.f32 0.0, %v8159
    %v8161 = vpop.f32.mrb[0].mxu0
    %8162 = vmatprep.mubr.f32.mxu0 0.0
    %8163 = vmatmul.mubr.f32.gmra.mrb[0].mxu0 %v5878
    %v8164 = vpop.f32.mrb[0].mxu0
    %v8165 = vadd.f32 0.0, %v8164
    %v8166 = vpop.f32.mrb[0].mxu0
    %8167 = vmatprep.mubr.f32.mxu0 0.0
    %8168 = vmatmul.mubr.f32.gmra.mrb[0].mxu0 %v5881
    %v8169 = vpop.f32.mrb[0].mxu0
    %v8170 = vadd.f32 0.0, %v8169
    %v8171 = vpop.f32.mrb[0].mxu0
    %8172 = vmatprep.mubr.f32.mxu0 0.0
    %8173 = vmatmul.mubr.f32.gmra.mrb[0].mxu0 %v5883
    %v8174 = vpop.f32.mrb[0].mxu0
    %v8175 = vadd.f32 0.0, %v8174
    %v8176 = vpop.f32.mrb[0].mxu0
    %8177 = vmatprep.mubr.f32.mxu0 0.0
    %8178 = vmatmul.mubr.f32.gmra.mrb[0].mxu0 %v5886
    %v8179 = vpop.f32.mrb[0].mxu0
    %v8180 = vadd.f32 0.0, %v8179
    %v8181 = vpop.f32.mrb[0].mxu0
    %8182 = vmatprep.mubr.f32.mxu0 0.0
    %8183 = vmatmul.mubr.f32.gmra.mrb[0].mxu0 %v5888
    %v8184 = vpop.f32.mrb[0].mxu0
    %v8185 = vadd.f32 0.0, %v8184
    %v8186 = vpop.f32.mrb[0].mxu0
    %8187 = vmatprep.mubr.f32.mxu0 0.0
    %8188 = vmatmul.mubr.f32.gmra.mrb[0].mxu0 %v5891
    %v8189 = vpop.f32.mrb[0].mxu0
    %v8190 = vadd.f32 0.0, %v8189
    %v8191 = vpop.f32.mrb[0].mxu0
    %8192 = vmatprep.mubr.f32.mxu0 0.0
    %8193 = vmatmul.mubr.f32.gmra.mrb[0].mxu0 %v5893
    %v8194 = vpop.f32.mrb[0].mxu0
    %v8195 = vadd.f32 0.0, %v8194
    %v8196 = vpop.f32.mrb[0].mxu0
    %8197 = vmatprep.mubr.f32.mxu0 0.0
    %8198 = vmatmul.mubr.f32.gmra.mrb[0].mxu0 %v5896
    %v8199 = vpop.f32.mrb[0].mxu0
    %v8200 = vadd.f32 0.0, %v8199
    %v8201 = vpop.f32.mrb[0].mxu0
    %8202 = vmatprep.mubr.f32.mxu0 0.0
    %8203 = vmatmul.mubr.f32.gmra.mrb[0].mxu0 %v5898
    %v8204 = vpop.f32.mrb[0].mxu0
    %v8205 = vadd.f32 0.0, %v8204
    %v8206 = vpop.f32.mrb[0].mxu0
    %8207 = vmatprep.mubr.f32.mxu0 0.0
    %8208 = vmatmul.mubr.f32.gmra.mrb[0].mxu0 %v5901
    %v8209 = vpop.f32.mrb[0].mxu0
    %v8210 = vadd.f32 0.0, %v8209
    %v8211 = vpop.f32.mrb[0].mxu0
    %8212 = vmatprep.mubr.f32.mxu0 0.0
    %8213 = vmatmul.mubr.f32.gmra.mrb[0].mxu0 %v5903
    %v8214 = vpop.f32.mrb[0].mxu0
    %v8215 = vadd.f32 0.0, %v8214
    %v8216 = vpop.f32.mrb[0].mxu0
    %8217 = vmatprep.mubr.f32.mxu0 0.0
    %8218 = vmatmul.mubr.f32.gmra.mrb[0].mxu0 %v5906
    %v8219 = vpop.f32.mrb[0].mxu0
    %v8220 = vadd.f32 0.0, %v8219
    %v8221 = vpop.f32.mrb[0].mxu0
    %8222 = vmatprep.mubr.f32.mxu0 0.0
    %8223 = vmatmul.mubr.f32.gmra.mrb[0].mxu0 %v5908
    %v8224 = vpop.f32.mrb[0].mxu0
    %v8225 = vadd.f32 0.0, %v8224
    %v8226 = vpop.f32.mrb[0].mxu0
    %8227 = vmatprep.mubr.f32.mxu0 0.0
    %8228 = vmatmul.mubr.f32.gmra.mrb[0].mxu0 %v5911
    %v8229 = vpop.f32.mrb[0].mxu0
    %v8230 = vadd.f32 0.0, %v8229
    %v8231 = vpop.f32.mrb[0].mxu0
    %8232 = vmatprep.mubr.f32.mxu0 0.0
    %8233 = vmatmul.mubr.f32.gmra.mrb[0].mxu0 %v5913
    %v8234 = vpop.f32.mrb[0].mxu0
    %v8235 = vadd.f32 0.0, %v8234
    %v8236 = vpop.f32.mrb[0].mxu0
    %8237 = vmatprep.mubr.f32.mxu0 0.0
    %8238 = vmatmul.mubr.f32.gmra.mrb[0].mxu0 %v5916
    %v8239 = vpop.f32.mrb[0].mxu0
    %v8240 = vadd.f32 0.0, %v8239
    %v8241 = vpop.f32.mrb[0].mxu0
    %8242 = vmatprep.mubr.f32.mxu0 0.0
    %8243 = vmatmul.mubr.f32.gmra.mrb[0].mxu0 %v5918
    %v8244 = vpop.f32.mrb[0].mxu0
    %v8245 = vadd.f32 0.0, %v8244
    %v8246 = vpop.f32.mrb[0].mxu0
    %8247 = vmatprep.mubr.f32.mxu0 0.0
    %8248 = vmatmul.mubr.f32.gmra.mrb[0].mxu0 %v5921
    %v8249 = vpop.f32.mrb[0].mxu0
    %v8250 = vadd.f32 0.0, %v8249
    %v8251 = vpop.f32.mrb[0].mxu0
    %8252 = vmatprep.mubr.f32.mxu0 0.0
    %8253 = vmatmul.mubr.f32.gmra.mrb[0].mxu0 %v5923
    %v8254 = vpop.f32.mrb[0].mxu0
    %v8255 = vadd.f32 0.0, %v8254
    %v8256 = vpop.f32.mrb[0].mxu0
    %8257 = vmatprep.mubr.f32.mxu0 0.0
    %8258 = vmatmul.mubr.f32.gmra.mrb[0].mxu0 %v5926
    %v8259 = vpop.f32.mrb[0].mxu0
    %v8260 = vadd.f32 0.0, %v8259
    %v8261 = vpop.f32.mrb[0].mxu0
    %8262 = vmatprep.mubr.f32.mxu0 0.0
    %8263 = vmatmul.mubr.f32.gmra.mrb[0].mxu0 %v5928
    %v8264 = vpop.f32.mrb[0].mxu0
    %v8265 = vadd.f32 0.0, %v8264
    %v8266 = vpop.f32.mrb[0].mxu0
    %8267 = vmatprep.mubr.f32.mxu0 0.0
    %8268 = vmatmul.mubr.f32.gmra.mrb[0].mxu0 %v8024
    %v8269 = vpop.f32.mrb[0].mxu0
    %v8270 = vadd.f32 0.0, %v8269
    %v8271 = vpop.f32.mrb[0].mxu0
    %8272 = vmatprep.mubr.f32.mxu0 0.0
    %8273 = vmatmul.mubr.f32.gmra.mrb[0].mxu0 %v8026
    %v8274 = vpop.f32.mrb[0].mxu0
    %v8275 = vadd.f32 0.0, %v8274
    %v8276 = vpop.f32.mrb[0].mxu0
    %8277 = vmatprep.mubr.f32.mxu0 0.0
    %8278 = vmatmul.mubr.f32.gmra.mrb[0].mxu0 %v5936
    %v8279 = vpop.f32.mrb[0].mxu0
    %v8280 = vadd.f32 0.0, %v8279
    %v8281 = vpop.f32.mrb[0].mxu0
    %8282 = vmatprep.mubr.f32.mxu0 0.0
    %8283 = vmatmul.mubr.f32.gmra.mrb[0].mxu0 %v5938
    %v8284 = vpop.f32.mrb[0].mxu0
    %v8285 = vadd.f32 0.0, %v8284
    %v8286 = vpop.f32.mrb[0].mxu0
    %8287 = vmatprep.mubr.f32.mxu0 0.0
    %8288 = vmatmul.mubr.f32.gmra.mrb[0].mxu0 %v5941
    %v8289 = vpop.f32.mrb[0].mxu0
    %v8290 = vadd.f32 0.0, %v8289
    %v8291 = vpop.f32.mrb[0].mxu0
    %8292 = vmatprep.mubr.f32.mxu0 0.0
    %8293 = vmatmul.mubr.f32.gmra.mrb[0].mxu0 %v5943
    %v8294 = vpop.f32.mrb[0].mxu0
    %v8295 = vadd.f32 0.0, %v8294
    %v8296 = vpop.f32.mrb[0].mxu0
    %8297 = vmatprep.mubr.f32.mxu0 0.0
    %8298 = vmatmul.mubr.f32.gmra.mrb[0].mxu0 %v5946
    %v8299 = vpop.f32.mrb[0].mxu0
    %v8300 = vadd.f32 0.0, %v8299
    %v8301 = vpop.f32.mrb[0].mxu0
    %8302 = vmatprep.mubr.f32.mxu0 0.0
    %8303 = vmatmul.mubr.f32.gmra.mrb[0].mxu0 %v5948
    %v8304 = vpop.f32.mrb[0].mxu0
    %v8305 = vadd.f32 0.0, %v8304
    %v8306 = vpop.f32.mrb[0].mxu0
    %8307 = vmatprep.mubr.f32.mxu0 0.0
    %8308 = vmatmul.mubr.f32.gmra.mrb[0].mxu0 %v5951
    %v8309 = vpop.f32.mrb[0].mxu0
    %v8310 = vadd.f32 0.0, %v8309
    %v8311 = vpop.f32.mrb[0].mxu0
    %8312 = vmatprep.mubr.f32.mxu0 0.0
    %8313 = vmatmul.mubr.f32.gmra.mrb[0].mxu0 %v5953
    %v8314 = vpop.f32.mrb[0].mxu0
    %v8315 = vadd.f32 0.0, %v8314
    %v8316 = vpop.f32.mrb[0].mxu0
    %8317 = vmatprep.mubr.f32.mxu0 0.0
    %8318 = vmatmul.mubr.f32.gmra.mrb[0].mxu0 %v5956
    %v8319 = vpop.f32.mrb[0].mxu0
    %v8320 = vadd.f32 0.0, %v8319
    %v8321 = vpop.f32.mrb[0].mxu0
    %8322 = vmatprep.mubr.f32.mxu0 0.0
    %8323 = vmatmul.mubr.f32.gmra.mrb[0].mxu0 %v5958
    %v8324 = vpop.f32.mrb[0].mxu0
    %v8325 = vadd.f32 0.0, %v8324
    %v8326 = vpop.f32.mrb[0].mxu0
    %8327 = vmatprep.mubr.f32.mxu0 0.0
    %8328 = vmatmul.mubr.f32.gmra.mrb[0].mxu0 %v5961
    %v8329 = vpop.f32.mrb[0].mxu0
    %v8330 = vadd.f32 0.0, %v8329
    %v8331 = vpop.f32.mrb[0].mxu0
    %8332 = vmatprep.mubr.f32.mxu0 0.0
    %8333 = vmatmul.mubr.f32.gmra.mrb[0].mxu0 %v5963
    %v8334 = vpop.f32.mrb[0].mxu0
    %v8335 = vadd.f32 0.0, %v8334
    %v8336 = vpop.f32.mrb[0].mxu0
    %8337 = vmatprep.mubr.f32.mxu0 0.0
    %8338 = vmatmul.mubr.f32.gmra.mrb[0].mxu0 %v5966
    %v8339 = vpop.f32.mrb[0].mxu0
    %v8340 = vadd.f32 0.0, %v8339
    %v8341 = vpop.f32.mrb[0].mxu0
    %8342 = vmatprep.mubr.f32.mxu0 0.0
    %8343 = vmatmul.mubr.f32.gmra.mrb[0].mxu0 %v5968
    %v8344 = vpop.f32.mrb[0].mxu0
    %v8345 = vadd.f32 0.0, %v8344
    %v8346 = vpop.f32.mrb[0].mxu0
    %8347 = vmatprep.mubr.f32.mxu0 0.0
    %8348 = vmatmul.mubr.f32.gmra.mrb[0].mxu0 %v5971
    %v8349 = vpop.f32.mrb[0].mxu0
    %v8350 = vadd.f32 0.0, %v8349
    %v8351 = vpop.f32.mrb[0].mxu0
    %8352 = vmatprep.mubr.f32.mxu0 0.0
    %8353 = vmatmul.mubr.f32.gmra.mrb[0].mxu0 %v5973
    %v8354 = vpop.f32.mrb[0].mxu0
    %v8355 = vadd.f32 0.0, %v8354
    %v8356 = vpop.f32.mrb[0].mxu0
    %8357 = vmatprep.mubr.f32.mxu0 0.0
    %8358 = vmatmul.mubr.f32.gmra.mrb[0].mxu0 %v5976
    %v8359 = vpop.f32.mrb[0].mxu0
    %v8360 = vadd.f32 0.0, %v8359
    %v8361 = vpop.f32.mrb[0].mxu0
    %8362 = vmatprep.mubr.f32.mxu0 0.0
    %8363 = vmatmul.mubr.f32.gmra.mrb[0].mxu0 %v5978
    %v8364 = vpop.f32.mrb[0].mxu0
    %v8365 = vadd.f32 0.0, %v8364
    %v8366 = vpop.f32.mrb[0].mxu0
    %8367 = vmatprep.mubr.f32.mxu0 0.0
    %8368 = vmatmul.mubr.f32.gmra.mrb[0].mxu0 %v5981
    %v8369 = vpop.f32.mrb[0].mxu0
    %v8370 = vadd.f32 0.0, %v8369
    %v8371 = vpop.f32.mrb[0].mxu0
    %8372 = vmatprep.mubr.f32.mxu0 0.0
    %8373 = vmatmul.mubr.f32.gmra.mrb[0].mxu0 %v5983
    %v8374 = vpop.f32.mrb[0].mxu0
    %v8375 = vadd.f32 0.0, %v8374
    %v8376 = vpop.f32.mrb[0].mxu0
    %8377 = vmatprep.mubr.f32.mxu0 0.0
    %8378 = vmatmul.mubr.f32.gmra.mrb[0].mxu0 %v5986
    %v8379 = vpop.f32.mrb[0].mxu0
    %v8380 = vadd.f32 0.0, %v8379
    %v8381 = vpop.f32.mrb[0].mxu0
    %8382 = vmatprep.mubr.f32.mxu0 0.0
    %8383 = vmatmul.mubr.f32.gmra.mrb[0].mxu0 %v5988
    %v8384 = vpop.f32.mrb[0].mxu0
    %v8385 = vadd.f32 0.0, %v8384
    %v8386 = vpop.f32.mrb[0].mxu0
    %8387 = vmatprep.mubr.f32.mxu0 0.0
    %8388 = vmatmul.mubr.f32.gmra.mrb[0].mxu0 %v5991
    %v8389 = vpop.f32.mrb[0].mxu0
    %v8390 = vadd.f32 0.0, %v8389
    %v8391 = vpop.f32.mrb[0].mxu0
    %8392 = vmatprep.mubr.f32.mxu0 0.0
    %8393 = vmatmul.mubr.f32.gmra.mrb[0].mxu0 %v5993
    %v8394 = vpop.f32.mrb[0].mxu0
    %v8395 = vadd.f32 0.0, %v8394
    %v8396 = vpop.f32.mrb[0].mxu0
    %8397 = vmatprep.mubr.f32.mxu0 0.0
    %8398 = vmatmul.mubr.f32.gmra.mrb[0].mxu0 %v5996
    %v8399 = vpop.f32.mrb[0].mxu0
    %v8400 = vadd.f32 0.0, %v8399
    %v8401 = vpop.f32.mrb[0].mxu0
    %8402 = vmatprep.mubr.f32.mxu0 0.0
    %8403 = vmatmul.mubr.f32.gmra.mrb[0].mxu0 %v5998
    %v8404 = vpop.f32.mrb[0].mxu0
    %v8405 = vadd.f32 0.0, %v8404
    %v8406 = vpop.f32.mrb[0].mxu0
    %8407 = vmatprep.mubr.f32.mxu0 0.0
    %8408 = vmatmul.mubr.f32.gmra.mrb[0].mxu0 %v6001
    %v8409 = vpop.f32.mrb[0].mxu0
    %v8410 = vadd.f32 0.0, %v8409
    %v8411 = vpop.f32.mrb[0].mxu0
    %8412 = vmatprep.mubr.f32.mxu0 0.0
    %8413 = vmatmul.mubr.f32.gmra.mrb[0].mxu0 %v6003
    %v8414 = vpop.f32.mrb[0].mxu0
    %v8415 = vadd.f32 0.0, %v8414
    %v8416 = vpop.f32.mrb[0].mxu0
    %8417 = vmatprep.mubr.f32.mxu0 0.0
    %8418 = vmatmul.mubr.f32.gmra.mrb[0].mxu0 %v6006
    %v8419 = vpop.f32.mrb[0].mxu0
    %v8420 = vadd.f32 0.0, %v8419
    %v8421 = vpop.f32.mrb[0].mxu0
    %8422 = vmatprep.mubr.f32.mxu0 0.0
    %8423 = vmatmul.mubr.f32.gmra.mrb[0].mxu0 %v6008
    %v8424 = vpop.f32.mrb[0].mxu0
    %v8425 = vadd.f32 0.0, %v8424
    %v8426 = vpop.f32.mrb[0].mxu0
    %8427 = vmatprep.mubr.f32.mxu0 0.0
    %8428 = vmatmul.mubr.f32.gmra.mrb[0].mxu0 %v8029
    %v8429 = vpop.f32.mrb[0].mxu0
    %v8430 = vadd.f32 0.0, %v8429
    %v8431 = vpop.f32.mrb[0].mxu0
    %8432 = vmatprep.mubr.f32.mxu0 0.0
    %8433 = vmatmul.mubr.f32.gmra.mrb[0].mxu0 %v8031
    %v8434 = vpop.f32.mrb[0].mxu0
    %v8435 = vadd.f32 0.0, %v8434
    %v8436 = vpop.f32.mrb[0].mxu0
    %8437 = vdwg.mxu0
    %v8438 = vadd.f32 %v7952, %v8120
    %v8439 = vadd.f32 %v7953, %v8125
    %v8440 = vadd.f32 %v7954, %v8130
    %v8441 = vadd.f32 %v7955, %v8135
    %v8442 = vadd.f32 %v7956, %v8140
    %v8443 = vadd.f32 %v7957, %v8145
    %v8444 = vadd.f32 %v7958, %v8150
    %v8445 = vadd.f32 %v7959, %v8155
    %v8446 = vadd.f32 %v7960, %v8160
    %v8447 = vadd.f32 %v7961, %v8165
    %v8448 = vadd.f32 %v7962, %v8170
    %v8449 = vadd.f32 %v7963, %v8175
    %v8450 = vadd.f32 %v7964, %v8180
    %v8451 = vadd.f32 %v7965, %v8185
    %v8452 = vadd.f32 %v7966, %v8190
    %v8453 = vadd.f32 %v7967, %v8195
    %v8454 = vadd.f32 %v7968, %v8200
    %v8455 = vadd.f32 %v7969, %v8205
    %v8456 = vadd.f32 %v7970, %v8210
    %v8457 = vadd.f32 %v7971, %v8215
    %v8458 = vadd.f32 %v7972, %v8220
    %v8459 = vadd.f32 %v7973, %v8225
    %v8460 = vadd.f32 %v7974, %v8230
    %v8461 = vadd.f32 %v7975, %v8235
    %v8462 = vadd.f32 %v7976, %v8240
    %v8463 = vadd.f32 %v7977, %v8245
    %v8464 = vadd.f32 %v7978, %v8250
    %v8465 = vadd.f32 %v7979, %v8255
    %v8466 = vadd.f32 %v7980, %v8260
    %v8467 = vadd.f32 %v7981, %v8265
    %v8468 = vadd.f32 %v7982, %v8270
    %v8469 = vadd.f32 %v7983, %v8275
    %v8470 = vadd.f32 %v7984, %v8280
    %v8471 = vadd.f32 %v7985, %v8285
    %v8472 = vadd.f32 %v7986, %v8290
    %v8473 = vadd.f32 %v7987, %v8295
    %v8474 = vadd.f32 %v7988, %v8300
    %v8475 = vadd.f32 %v7989, %v8305
    %v8476 = vadd.f32 %v7990, %v8310
    %v8477 = vadd.f32 %v7991, %v8315
    %v8478 = vadd.f32 %v7992, %v8320
    %v8479 = vadd.f32 %v7993, %v8325
    %v8480 = vadd.f32 %v7994, %v8330
    %v8481 = vadd.f32 %v7995, %v8335
    %v8482 = vadd.f32 %v7996, %v8340
    %v8483 = vadd.f32 %v7997, %v8345
    %v8484 = vadd.f32 %v7998, %v8350
    %v8485 = vadd.f32 %v7999, %v8355
    %v8486 = vadd.f32 %v8000, %v8360
    %v8487 = vadd.f32 %v8001, %v8365
    %v8488 = vadd.f32 %v8002, %v8370
    %v8489 = vadd.f32 %v8003, %v8375
    %v8490 = vadd.f32 %v8004, %v8380
    %v8491 = vadd.f32 %v8005, %v8385
    %v8492 = vadd.f32 %v8006, %v8390
    %v8493 = vadd.f32 %v8007, %v8395
    %v8494 = vadd.f32 %v8008, %v8400
    %v8495 = vadd.f32 %v8009, %v8405
    %v8496 = vadd.f32 %v8010, %v8410
    %v8497 = vadd.f32 %v8011, %v8415
    %v8498 = vadd.f32 %v8012, %v8420
    %v8499 = vadd.f32 %v8013, %v8425
    %v8500 = vadd.f32 %v8014, %v8430
    %v8501 = vadd.f32 %v8015, %v8435
    %v8502 = vrot.slane %v5677, 2
    %v8503 = vrot.slane %v5678, 2
    %v8504 = vsel %vm1283, %v8502, %v8503
    %v8505 = vrot.slane %v5679, 2
    %v8506 = vsel %vm1283, %v8503, %v8505
    %v8507 = vrot.slane %v5731, 2
    %v8508 = vrot.slane %v5732, 2
    %v8509 = vsel %vm1283, %v8507, %v8508
    %v8510 = vrot.slane %v5733, 2
    %v8511 = vsel %vm1283, %v8508, %v8510
    %s8516 = scalar_lea.vmem [#allocation4], 640
    %v8517 = vld [vmem:[%s8516] sm:$0xff]
    %v8518 = vld [vmem:[%s8516 + $0x8] sm:$0xff]
    %v8519 = vld [vmem:[%s8516 + $0x10] sm:$0xff]
    %v8520 = vld [vmem:[%s8516 + $0x18] sm:$0xff]
    %v8521 = vld [vmem:[%s8516 + $0x20] sm:$0xff]
    %v8522 = vld [vmem:[%s8516 + $0x28] sm:$0xff]
    %v8523 = vld [vmem:[%s8516 + $0x30] sm:$0xff]
    %v8524 = vld [vmem:[%s8516 + $0x38] sm:$0xff]
    %v8525 = vld [vmem:[%s8516 + $0x40] sm:$0xff]
    %v8526 = vld [vmem:[%s8516 + $0x48] sm:$0xff]
    %v8527 = vld [vmem:[%s8516 + $0x50] sm:$0xff]
    %v8528 = vld [vmem:[%s8516 + $0x58] sm:$0xff]
    %v8529 = vld [vmem:[%s8516 + $0x60] sm:$0xff]
    %v8530 = vld [vmem:[%s8516 + $0x68] sm:$0xff]
    %v8531 = vld [vmem:[%s8516 + $0x70] sm:$0xff]
    %v8532 = vld [vmem:[%s8516 + $0x78] sm:$0xff]
    %8533 = vmatprep.subr.mxu0 0.0
    %8534 = vmatpush1.msra.mxu0 %v8517
    %8535 = vmatprep.subr.mxu0 0.0
    %8536 = vmatpush1.msra.mxu0 %v8518
    %8537 = vmatprep.subr.mxu0 0.0
    %8538 = vmatpush1.msra.mxu0 %v8519
    %8539 = vmatprep.subr.mxu0 0.0
    %8540 = vmatpush1.msra.mxu0 %v8520
    %8541 = vmatprep.subr.mxu0 0.0
    %8542 = vmatpush1.msra.mxu0 %v8521
    %8543 = vmatprep.subr.mxu0 0.0
    %8544 = vmatpush1.msra.mxu0 %v8522
    %8545 = vmatprep.subr.mxu0 0.0
    %8546 = vmatpush1.msra.mxu0 %v8523
    %8547 = vmatprep.subr.mxu0 0.0
    %8548 = vmatpush1.msra.mxu0 %v8524
    %8549 = vmatprep.subr.mxu0 0.0
    %8550 = vmatpush1.msra.mxu0 %v8525
    %8551 = vmatprep.subr.mxu0 0.0
    %8552 = vmatpush1.msra.mxu0 %v8526
    %8553 = vmatprep.subr.mxu0 0.0
    %8554 = vmatpush1.msra.mxu0 %v8527
    %8555 = vmatprep.subr.mxu0 0.0
    %8556 = vmatpush1.msra.mxu0 %v8528
    %8557 = vmatprep.subr.mxu0 0.0
    %8558 = vmatpush1.msra.mxu0 %v8529
    %8559 = vmatprep.subr.mxu0 0.0
    %8560 = vmatpush1.msra.mxu0 %v8530
    %8561 = vmatprep.subr.mxu0 0.0
    %8562 = vmatpush1.msra.mxu0 %v8531
    %8563 = vmatprep.subr.mxu0 0.0
    %8564 = vmatpush1.msra.mxu0 %v8532
    %8565 = vmatprep.subr.mxu0 0.0
    %8566 = vmatpush1.msra.mxu0 0.0
    %8567 = vmatprep.subr.mxu0 0.0
    %8568 = vmatpush1.msra.mxu0 0.0
    %8569 = vmatprep.subr.mxu0 0.0
    %8570 = vmatpush1.msra.mxu0 0.0
    %8571 = vmatprep.subr.mxu0 0.0
    %8572 = vmatpush1.msra.mxu0 0.0
    %8573 = vmatprep.subr.mxu0 0.0
    %8574 = vmatpush1.msra.mxu0 0.0
    %8575 = vmatprep.subr.mxu0 0.0
    %8576 = vmatpush1.msra.mxu0 0.0
    %8577 = vmatprep.subr.mxu0 0.0
    %8578 = vmatpush1.msra.mxu0 0.0
    %8579 = vmatprep.subr.mxu0 0.0
    %8580 = vmatpush1.msra.mxu0 0.0
    %8581 = vmatprep.subr.mxu0 0.0
    %8582 = vmatpush1.msra.mxu0 0.0
    %8583 = vmatprep.subr.mxu0 0.0
    %8584 = vmatpush1.msra.mxu0 0.0
    %8585 = vmatprep.subr.mxu0 0.0
    %8586 = vmatpush1.msra.mxu0 0.0
    %8587 = vmatprep.subr.mxu0 0.0
    %8588 = vmatpush1.msra.mxu0 0.0
    %8589 = vmatprep.subr.mxu0 0.0
    %8590 = vmatpush1.msra.mxu0 0.0
    %8591 = vmatprep.subr.mxu0 0.0
    %8592 = vmatpush1.msra.mxu0 0.0
    %8593 = vmatprep.subr.mxu0 0.0
    %8594 = vmatpush1.msra.mxu0 0.0
    %8595 = vmatprep.subr.mxu0 0.0
    %8596 = vmatpush1.msra.mxu0 0.0
    %8597 = vmatprep.mubr.f32.mxu0 0.0
    %8598 = vmatmul.mubr.f32.gmra.mrb[0].mxu0 %v6867
    %v8599 = vpop.f32.mrb[0].mxu0
    %v8600 = vadd.f32 0.0, %v8599
    %v8601 = vpop.f32.mrb[0].mxu0
    %8602 = vmatprep.mubr.f32.mxu0 0.0
    %8603 = vmatmul.mubr.f32.gmra.mrb[0].mxu0 %v6869
    %v8604 = vpop.f32.mrb[0].mxu0
    %v8605 = vadd.f32 0.0, %v8604
    %v8606 = vpop.f32.mrb[0].mxu0
    %8607 = vmatprep.mubr.f32.mxu0 0.0
    %8608 = vmatmul.mubr.f32.gmra.mrb[0].mxu0 %v6872
    %v8609 = vpop.f32.mrb[0].mxu0
    %v8610 = vadd.f32 0.0, %v8609
    %v8611 = vpop.f32.mrb[0].mxu0
    %8612 = vmatprep.mubr.f32.mxu0 0.0
    %8613 = vmatmul.mubr.f32.gmra.mrb[0].mxu0 %v6874
    %v8614 = vpop.f32.mrb[0].mxu0
    %v8615 = vadd.f32 0.0, %v8614
    %v8616 = vpop.f32.mrb[0].mxu0
    %8617 = vmatprep.mubr.f32.mxu0 0.0
    %8618 = vmatmul.mubr.f32.gmra.mrb[0].mxu0 %v6877
    %v8619 = vpop.f32.mrb[0].mxu0
    %v8620 = vadd.f32 0.0, %v8619
    %v8621 = vpop.f32.mrb[0].mxu0
    %8622 = vmatprep.mubr.f32.mxu0 0.0
    %8623 = vmatmul.mubr.f32.gmra.mrb[0].mxu0 %v6879
    %v8624 = vpop.f32.mrb[0].mxu0
    %v8625 = vadd.f32 0.0, %v8624
    %v8626 = vpop.f32.mrb[0].mxu0
    %8627 = vmatprep.mubr.f32.mxu0 0.0
    %8628 = vmatmul.mubr.f32.gmra.mrb[0].mxu0 %v6882
    %v8629 = vpop.f32.mrb[0].mxu0
    %v8630 = vadd.f32 0.0, %v8629
    %v8631 = vpop.f32.mrb[0].mxu0
    %8632 = vmatprep.mubr.f32.mxu0 0.0
    %8633 = vmatmul.mubr.f32.gmra.mrb[0].mxu0 %v6884
    %v8634 = vpop.f32.mrb[0].mxu0
    %v8635 = vadd.f32 0.0, %v8634
    %v8636 = vpop.f32.mrb[0].mxu0
    %8637 = vmatprep.mubr.f32.mxu0 0.0
    %8638 = vmatmul.mubr.f32.gmra.mrb[0].mxu0 %v6887
    %v8639 = vpop.f32.mrb[0].mxu0
    %v8640 = vadd.f32 0.0, %v8639
    %v8641 = vpop.f32.mrb[0].mxu0
    %8642 = vmatprep.mubr.f32.mxu0 0.0
    %8643 = vmatmul.mubr.f32.gmra.mrb[0].mxu0 %v6889
    %v8644 = vpop.f32.mrb[0].mxu0
    %v8645 = vadd.f32 0.0, %v8644
    %v8646 = vpop.f32.mrb[0].mxu0
    %8647 = vmatprep.mubr.f32.mxu0 0.0
    %8648 = vmatmul.mubr.f32.gmra.mrb[0].mxu0 %v6892
    %v8649 = vpop.f32.mrb[0].mxu0
    %v8650 = vadd.f32 0.0, %v8649
    %v8651 = vpop.f32.mrb[0].mxu0
    %8652 = vmatprep.mubr.f32.mxu0 0.0
    %8653 = vmatmul.mubr.f32.gmra.mrb[0].mxu0 %v6894
    %v8654 = vpop.f32.mrb[0].mxu0
    %v8655 = vadd.f32 0.0, %v8654
    %v8656 = vpop.f32.mrb[0].mxu0
    %8657 = vmatprep.mubr.f32.mxu0 0.0
    %8658 = vmatmul.mubr.f32.gmra.mrb[0].mxu0 %v6897
    %v8659 = vpop.f32.mrb[0].mxu0
    %v8660 = vadd.f32 0.0, %v8659
    %v8661 = vpop.f32.mrb[0].mxu0
    %8662 = vmatprep.mubr.f32.mxu0 0.0
    %8663 = vmatmul.mubr.f32.gmra.mrb[0].mxu0 %v6899
    %v8664 = vpop.f32.mrb[0].mxu0
    %v8665 = vadd.f32 0.0, %v8664
    %v8666 = vpop.f32.mrb[0].mxu0
    %8667 = vmatprep.mubr.f32.mxu0 0.0
    %8668 = vmatmul.mubr.f32.gmra.mrb[0].mxu0 %v6902
    %v8669 = vpop.f32.mrb[0].mxu0
    %v8670 = vadd.f32 0.0, %v8669
    %v8671 = vpop.f32.mrb[0].mxu0
    %8672 = vmatprep.mubr.f32.mxu0 0.0
    %8673 = vmatmul.mubr.f32.gmra.mrb[0].mxu0 %v6904
    %v8674 = vpop.f32.mrb[0].mxu0
    %v8675 = vadd.f32 0.0, %v8674
    %v8676 = vpop.f32.mrb[0].mxu0
    %8677 = vmatprep.mubr.f32.mxu0 0.0
    %8678 = vmatmul.mubr.f32.gmra.mrb[0].mxu0 %v6907
    %v8679 = vpop.f32.mrb[0].mxu0
    %v8680 = vadd.f32 0.0, %v8679
    %v8681 = vpop.f32.mrb[0].mxu0
    %8682 = vmatprep.mubr.f32.mxu0 0.0
    %8683 = vmatmul.mubr.f32.gmra.mrb[0].mxu0 %v6909
    %v8684 = vpop.f32.mrb[0].mxu0
    %v8685 = vadd.f32 0.0, %v8684
    %v8686 = vpop.f32.mrb[0].mxu0
    %8687 = vmatprep.mubr.f32.mxu0 0.0
    %8688 = vmatmul.mubr.f32.gmra.mrb[0].mxu0 %v6912
    %v8689 = vpop.f32.mrb[0].mxu0
    %v8690 = vadd.f32 0.0, %v8689
    %v8691 = vpop.f32.mrb[0].mxu0
    %8692 = vmatprep.mubr.f32.mxu0 0.0
    %8693 = vmatmul.mubr.f32.gmra.mrb[0].mxu0 %v6914
    %v8694 = vpop.f32.mrb[0].mxu0
    %v8695 = vadd.f32 0.0, %v8694
    %v8696 = vpop.f32.mrb[0].mxu0
    %8697 = vmatprep.mubr.f32.mxu0 0.0
    %8698 = vmatmul.mubr.f32.gmra.mrb[0].mxu0 %v6917
    %v8699 = vpop.f32.mrb[0].mxu0
    %v8700 = vadd.f32 0.0, %v8699
    %v8701 = vpop.f32.mrb[0].mxu0
    %8702 = vmatprep.mubr.f32.mxu0 0.0
    %8703 = vmatmul.mubr.f32.gmra.mrb[0].mxu0 %v6919
    %v8704 = vpop.f32.mrb[0].mxu0
    %v8705 = vadd.f32 0.0, %v8704
    %v8706 = vpop.f32.mrb[0].mxu0
    %8707 = vmatprep.mubr.f32.mxu0 0.0
    %8708 = vmatmul.mubr.f32.gmra.mrb[0].mxu0 %v6922
    %v8709 = vpop.f32.mrb[0].mxu0
    %v8710 = vadd.f32 0.0, %v8709
    %v8711 = vpop.f32.mrb[0].mxu0
    %8712 = vmatprep.mubr.f32.mxu0 0.0
    %8713 = vmatmul.mubr.f32.gmra.mrb[0].mxu0 %v6924
    %v8714 = vpop.f32.mrb[0].mxu0
    %v8715 = vadd.f32 0.0, %v8714
    %v8716 = vpop.f32.mrb[0].mxu0
    %8717 = vmatprep.mubr.f32.mxu0 0.0
    %8718 = vmatmul.mubr.f32.gmra.mrb[0].mxu0 %v6927
    %v8719 = vpop.f32.mrb[0].mxu0
    %v8720 = vadd.f32 0.0, %v8719
    %v8721 = vpop.f32.mrb[0].mxu0
    %8722 = vmatprep.mubr.f32.mxu0 0.0
    %8723 = vmatmul.mubr.f32.gmra.mrb[0].mxu0 %v6929
    %v8724 = vpop.f32.mrb[0].mxu0
    %v8725 = vadd.f32 0.0, %v8724
    %v8726 = vpop.f32.mrb[0].mxu0
    %8727 = vmatprep.mubr.f32.mxu0 0.0
    %8728 = vmatmul.mubr.f32.gmra.mrb[0].mxu0 %v6932
    %v8729 = vpop.f32.mrb[0].mxu0
    %v8730 = vadd.f32 0.0, %v8729
    %v8731 = vpop.f32.mrb[0].mxu0
    %8732 = vmatprep.mubr.f32.mxu0 0.0
    %8733 = vmatmul.mubr.f32.gmra.mrb[0].mxu0 %v6934
    %v8734 = vpop.f32.mrb[0].mxu0
    %v8735 = vadd.f32 0.0, %v8734
    %v8736 = vpop.f32.mrb[0].mxu0
    %8737 = vmatprep.mubr.f32.mxu0 0.0
    %8738 = vmatmul.mubr.f32.gmra.mrb[0].mxu0 %v6937
    %v8739 = vpop.f32.mrb[0].mxu0
    %v8740 = vadd.f32 0.0, %v8739
    %v8741 = vpop.f32.mrb[0].mxu0
    %8742 = vmatprep.mubr.f32.mxu0 0.0
    %8743 = vmatmul.mubr.f32.gmra.mrb[0].mxu0 %v6939
    %v8744 = vpop.f32.mrb[0].mxu0
    %v8745 = vadd.f32 0.0, %v8744
    %v8746 = vpop.f32.mrb[0].mxu0
    %8747 = vmatprep.mubr.f32.mxu0 0.0
    %8748 = vmatmul.mubr.f32.gmra.mrb[0].mxu0 %v8504
    %v8749 = vpop.f32.mrb[0].mxu0
    %v8750 = vadd.f32 0.0, %v8749
    %v8751 = vpop.f32.mrb[0].mxu0
    %8752 = vmatprep.mubr.f32.mxu0 0.0
    %8753 = vmatmul.mubr.f32.gmra.mrb[0].mxu0 %v8506
    %v8754 = vpop.f32.mrb[0].mxu0
    %v8755 = vadd.f32 0.0, %v8754
    %v8756 = vpop.f32.mrb[0].mxu0
    %8757 = vmatprep.mubr.f32.mxu0 0.0
    %8758 = vmatmul.mubr.f32.gmra.mrb[0].mxu0 %v6947
    %v8759 = vpop.f32.mrb[0].mxu0
    %v8760 = vadd.f32 0.0, %v8759
    %v8761 = vpop.f32.mrb[0].mxu0
    %8762 = vmatprep.mubr.f32.mxu0 0.0
    %8763 = vmatmul.mubr.f32.gmra.mrb[0].mxu0 %v6949
    %v8764 = vpop.f32.mrb[0].mxu0
    %v8765 = vadd.f32 0.0, %v8764
    %v8766 = vpop.f32.mrb[0].mxu0
    %8767 = vmatprep.mubr.f32.mxu0 0.0
    %8768 = vmatmul.mubr.f32.gmra.mrb[0].mxu0 %v6952
    %v8769 = vpop.f32.mrb[0].mxu0
    %v8770 = vadd.f32 0.0, %v8769
    %v8771 = vpop.f32.mrb[0].mxu0
    %8772 = vmatprep.mubr.f32.mxu0 0.0
    %8773 = vmatmul.mubr.f32.gmra.mrb[0].mxu0 %v6954
    %v8774 = vpop.f32.mrb[0].mxu0
    %v8775 = vadd.f32 0.0, %v8774
    %v8776 = vpop.f32.mrb[0].mxu0
    %8777 = vmatprep.mubr.f32.mxu0 0.0
    %8778 = vmatmul.mubr.f32.gmra.mrb[0].mxu0 %v6957
    %v8779 = vpop.f32.mrb[0].mxu0
    %v8780 = vadd.f32 0.0, %v8779
    %v8781 = vpop.f32.mrb[0].mxu0
    %8782 = vmatprep.mubr.f32.mxu0 0.0
    %8783 = vmatmul.mubr.f32.gmra.mrb[0].mxu0 %v6959
    %v8784 = vpop.f32.mrb[0].mxu0
    %v8785 = vadd.f32 0.0, %v8784
    %v8786 = vpop.f32.mrb[0].mxu0
    %8787 = vmatprep.mubr.f32.mxu0 0.0
    %8788 = vmatmul.mubr.f32.gmra.mrb[0].mxu0 %v6962
    %v8789 = vpop.f32.mrb[0].mxu0
    %v8790 = vadd.f32 0.0, %v8789
    %v8791 = vpop.f32.mrb[0].mxu0
    %8792 = vmatprep.mubr.f32.mxu0 0.0
    %8793 = vmatmul.mubr.f32.gmra.mrb[0].mxu0 %v6964
    %v8794 = vpop.f32.mrb[0].mxu0
    %v8795 = vadd.f32 0.0, %v8794
    %v8796 = vpop.f32.mrb[0].mxu0
    %8797 = vmatprep.mubr.f32.mxu0 0.0
    %8798 = vmatmul.mubr.f32.gmra.mrb[0].mxu0 %v6967
    %v8799 = vpop.f32.mrb[0].mxu0
    %v8800 = vadd.f32 0.0, %v8799
    %v8801 = vpop.f32.mrb[0].mxu0
    %8802 = vmatprep.mubr.f32.mxu0 0.0
    %8803 = vmatmul.mubr.f32.gmra.mrb[0].mxu0 %v6969
    %v8804 = vpop.f32.mrb[0].mxu0
    %v8805 = vadd.f32 0.0, %v8804
    %v8806 = vpop.f32.mrb[0].mxu0
    %8807 = vmatprep.mubr.f32.mxu0 0.0
    %8808 = vmatmul.mubr.f32.gmra.mrb[0].mxu0 %v6972
    %v8809 = vpop.f32.mrb[0].mxu0
    %v8810 = vadd.f32 0.0, %v8809
    %v8811 = vpop.f32.mrb[0].mxu0
    %8812 = vmatprep.mubr.f32.mxu0 0.0
    %8813 = vmatmul.mubr.f32.gmra.mrb[0].mxu0 %v6974
    %v8814 = vpop.f32.mrb[0].mxu0
    %v8815 = vadd.f32 0.0, %v8814
    %v8816 = vpop.f32.mrb[0].mxu0
    %8817 = vmatprep.mubr.f32.mxu0 0.0
    %8818 = vmatmul.mubr.f32.gmra.mrb[0].mxu0 %v6977
    %v8819 = vpop.f32.mrb[0].mxu0
    %v8820 = vadd.f32 0.0, %v8819
    %v8821 = vpop.f32.mrb[0].mxu0
    %8822 = vmatprep.mubr.f32.mxu0 0.0
    %8823 = vmatmul.mubr.f32.gmra.mrb[0].mxu0 %v6979
    %v8824 = vpop.f32.mrb[0].mxu0
    %v8825 = vadd.f32 0.0, %v8824
    %v8826 = vpop.f32.mrb[0].mxu0
    %8827 = vmatprep.mubr.f32.mxu0 0.0
    %8828 = vmatmul.mubr.f32.gmra.mrb[0].mxu0 %v6982
    %v8829 = vpop.f32.mrb[0].mxu0
    %v8830 = vadd.f32 0.0, %v8829
    %v8831 = vpop.f32.mrb[0].mxu0
    %8832 = vmatprep.mubr.f32.mxu0 0.0
    %8833 = vmatmul.mubr.f32.gmra.mrb[0].mxu0 %v6984
    %v8834 = vpop.f32.mrb[0].mxu0
    %v8835 = vadd.f32 0.0, %v8834
    %v8836 = vpop.f32.mrb[0].mxu0
    %8837 = vmatprep.mubr.f32.mxu0 0.0
    %8838 = vmatmul.mubr.f32.gmra.mrb[0].mxu0 %v6987
    %v8839 = vpop.f32.mrb[0].mxu0
    %v8840 = vadd.f32 0.0, %v8839
    %v8841 = vpop.f32.mrb[0].mxu0
    %8842 = vmatprep.mubr.f32.mxu0 0.0
    %8843 = vmatmul.mubr.f32.gmra.mrb[0].mxu0 %v6989
    %v8844 = vpop.f32.mrb[0].mxu0
    %v8845 = vadd.f32 0.0, %v8844
    %v8846 = vpop.f32.mrb[0].mxu0
    %8847 = vmatprep.mubr.f32.mxu0 0.0
    %8848 = vmatmul.mubr.f32.gmra.mrb[0].mxu0 %v6992
    %v8849 = vpop.f32.mrb[0].mxu0
    %v8850 = vadd.f32 0.0, %v8849
    %v8851 = vpop.f32.mrb[0].mxu0
    %8852 = vmatprep.mubr.f32.mxu0 0.0
    %8853 = vmatmul.mubr.f32.gmra.mrb[0].mxu0 %v6994
    %v8854 = vpop.f32.mrb[0].mxu0
    %v8855 = vadd.f32 0.0, %v8854
    %v8856 = vpop.f32.mrb[0].mxu0
    %8857 = vmatprep.mubr.f32.mxu0 0.0
    %8858 = vmatmul.mubr.f32.gmra.mrb[0].mxu0 %v6997
    %v8859 = vpop.f32.mrb[0].mxu0
    %v8860 = vadd.f32 0.0, %v8859
    %v8861 = vpop.f32.mrb[0].mxu0
    %8862 = vmatprep.mubr.f32.mxu0 0.0
    %8863 = vmatmul.mubr.f32.gmra.mrb[0].mxu0 %v6999
    %v8864 = vpop.f32.mrb[0].mxu0
    %v8865 = vadd.f32 0.0, %v8864
    %v8866 = vpop.f32.mrb[0].mxu0
    %8867 = vmatprep.mubr.f32.mxu0 0.0
    %8868 = vmatmul.mubr.f32.gmra.mrb[0].mxu0 %v7002
    %v8869 = vpop.f32.mrb[0].mxu0
    %v8870 = vadd.f32 0.0, %v8869
    %v8871 = vpop.f32.mrb[0].mxu0
    %8872 = vmatprep.mubr.f32.mxu0 0.0
    %8873 = vmatmul.mubr.f32.gmra.mrb[0].mxu0 %v7004
    %v8874 = vpop.f32.mrb[0].mxu0
    %v8875 = vadd.f32 0.0, %v8874
    %v8876 = vpop.f32.mrb[0].mxu0
    %8877 = vmatprep.mubr.f32.mxu0 0.0
    %8878 = vmatmul.mubr.f32.gmra.mrb[0].mxu0 %v7007
    %v8879 = vpop.f32.mrb[0].mxu0
    %v8880 = vadd.f32 0.0, %v8879
    %v8881 = vpop.f32.mrb[0].mxu0
    %8882 = vmatprep.mubr.f32.mxu0 0.0
    %8883 = vmatmul.mubr.f32.gmra.mrb[0].mxu0 %v7009
    %v8884 = vpop.f32.mrb[0].mxu0
    %v8885 = vadd.f32 0.0, %v8884
    %v8886 = vpop.f32.mrb[0].mxu0
    %8887 = vmatprep.mubr.f32.mxu0 0.0
    %8888 = vmatmul.mubr.f32.gmra.mrb[0].mxu0 %v7012
    %v8889 = vpop.f32.mrb[0].mxu0
    %v8890 = vadd.f32 0.0, %v8889
    %v8891 = vpop.f32.mrb[0].mxu0
    %8892 = vmatprep.mubr.f32.mxu0 0.0
    %8893 = vmatmul.mubr.f32.gmra.mrb[0].mxu0 %v7014
    %v8894 = vpop.f32.mrb[0].mxu0
    %v8895 = vadd.f32 0.0, %v8894
    %v8896 = vpop.f32.mrb[0].mxu0
    %8897 = vmatprep.mubr.f32.mxu0 0.0
    %8898 = vmatmul.mubr.f32.gmra.mrb[0].mxu0 %v7017
    %v8899 = vpop.f32.mrb[0].mxu0
    %v8900 = vadd.f32 0.0, %v8899
    %v8901 = vpop.f32.mrb[0].mxu0
    %8902 = vmatprep.mubr.f32.mxu0 0.0
    %8903 = vmatmul.mubr.f32.gmra.mrb[0].mxu0 %v7019
    %v8904 = vpop.f32.mrb[0].mxu0
    %v8905 = vadd.f32 0.0, %v8904
    %v8906 = vpop.f32.mrb[0].mxu0
    %8907 = vmatprep.mubr.f32.mxu0 0.0
    %8908 = vmatmul.mubr.f32.gmra.mrb[0].mxu0 %v8509
    %v8909 = vpop.f32.mrb[0].mxu0
    %v8910 = vadd.f32 0.0, %v8909
    %v8911 = vpop.f32.mrb[0].mxu0
    %8912 = vmatprep.mubr.f32.mxu0 0.0
    %8913 = vmatmul.mubr.f32.gmra.mrb[0].mxu0 %v8511
    %v8914 = vpop.f32.mrb[0].mxu0
    %v8915 = vadd.f32 0.0, %v8914
    %v8916 = vpop.f32.mrb[0].mxu0
    %8917 = vdwg.mxu0
    %v8918 = vadd.f32 %v8438, %v8600
    %v8919 = vadd.f32 %v8439, %v8605
    %v8920 = vadd.f32 %v8440, %v8610
    %v8921 = vadd.f32 %v8441, %v8615
    %v8922 = vadd.f32 %v8442, %v8620
    %v8923 = vadd.f32 %v8443, %v8625
    %v8924 = vadd.f32 %v8444, %v8630
    %v8925 = vadd.f32 %v8445, %v8635
    %v8926 = vadd.f32 %v8446, %v8640
    %v8927 = vadd.f32 %v8447, %v8645
    %v8928 = vadd.f32 %v8448, %v8650
    %v8929 = vadd.f32 %v8449, %v8655
    %v8930 = vadd.f32 %v8450, %v8660
    %v8931 = vadd.f32 %v8451, %v8665
    %v8932 = vadd.f32 %v8452, %v8670
    %v8933 = vadd.f32 %v8453, %v8675
    %v8934 = vadd.f32 %v8454, %v8680
    %v8935 = vadd.f32 %v8455, %v8685
    %v8936 = vadd.f32 %v8456, %v8690
    %v8937 = vadd.f32 %v8457, %v8695
    %v8938 = vadd.f32 %v8458, %v8700
    %v8939 = vadd.f32 %v8459, %v8705
    %v8940 = vadd.f32 %v8460, %v8710
    %v8941 = vadd.f32 %v8461, %v8715
    %v8942 = vadd.f32 %v8462, %v8720
    %v8943 = vadd.f32 %v8463, %v8725
    %v8944 = vadd.f32 %v8464, %v8730
    %v8945 = vadd.f32 %v8465, %v8735
    %v8946 = vadd.f32 %v8466, %v8740
    %v8947 = vadd.f32 %v8467, %v8745
    %v8948 = vadd.f32 %v8468, %v8750
    %v8949 = vadd.f32 %v8469, %v8755
    %v8950 = vadd.f32 %v8470, %v8760
    %v8951 = vadd.f32 %v8471, %v8765
    %v8952 = vadd.f32 %v8472, %v8770
    %v8953 = vadd.f32 %v8473, %v8775
    %v8954 = vadd.f32 %v8474, %v8780
    %v8955 = vadd.f32 %v8475, %v8785
    %v8956 = vadd.f32 %v8476, %v8790
    %v8957 = vadd.f32 %v8477, %v8795
    %v8958 = vadd.f32 %v8478, %v8800
    %v8959 = vadd.f32 %v8479, %v8805
    %v8960 = vadd.f32 %v8480, %v8810
    %v8961 = vadd.f32 %v8481, %v8815
    %v8962 = vadd.f32 %v8482, %v8820
    %v8963 = vadd.f32 %v8483, %v8825
    %v8964 = vadd.f32 %v8484, %v8830
    %v8965 = vadd.f32 %v8485, %v8835
    %v8966 = vadd.f32 %v8486, %v8840
    %v8967 = vadd.f32 %v8487, %v8845
    %v8968 = vadd.f32 %v8488, %v8850
    %v8969 = vadd.f32 %v8489, %v8855
    %v8970 = vadd.f32 %v8490, %v8860
    %v8971 = vadd.f32 %v8491, %v8865
    %v8972 = vadd.f32 %v8492, %v8870
    %v8973 = vadd.f32 %v8493, %v8875
    %v8974 = vadd.f32 %v8494, %v8880
    %v8975 = vadd.f32 %v8495, %v8885
    %v8976 = vadd.f32 %v8496, %v8890
    %v8977 = vadd.f32 %v8497, %v8895
    %v8978 = vadd.f32 %v8498, %v8900
    %v8979 = vadd.f32 %v8499, %v8905
    %v8980 = vadd.f32 %v8500, %v8910
    %v8981 = vadd.f32 %v8501, %v8915
    %s8982 = scalar_lea.vmem [#allocation4], 768
    %v8983 = vld [vmem:[%s8982] sm:$0xff]
    %v8984 = vld [vmem:[%s8982 + $0x8] sm:$0xff]
    %v8985 = vld [vmem:[%s8982 + $0x10] sm:$0xff]
    %v8986 = vld [vmem:[%s8982 + $0x18] sm:$0xff]
    %v8987 = vld [vmem:[%s8982 + $0x20] sm:$0xff]
    %v8988 = vld [vmem:[%s8982 + $0x28] sm:$0xff]
    %v8989 = vld [vmem:[%s8982 + $0x30] sm:$0xff]
    %v8990 = vld [vmem:[%s8982 + $0x38] sm:$0xff]
    %v8991 = vld [vmem:[%s8982 + $0x40] sm:$0xff]
    %v8992 = vld [vmem:[%s8982 + $0x48] sm:$0xff]
    %v8993 = vld [vmem:[%s8982 + $0x50] sm:$0xff]
    %v8994 = vld [vmem:[%s8982 + $0x58] sm:$0xff]
    %v8995 = vld [vmem:[%s8982 + $0x60] sm:$0xff]
    %v8996 = vld [vmem:[%s8982 + $0x68] sm:$0xff]
    %v8997 = vld [vmem:[%s8982 + $0x70] sm:$0xff]
    %v8998 = vld [vmem:[%s8982 + $0x78] sm:$0xff]
    %8999 = vmatprep.subr.mxu0 0.0
    %9000 = vmatpush1.msra.mxu0 %v8983
    %9001 = vmatprep.subr.mxu0 0.0
    %9002 = vmatpush1.msra.mxu0 %v8984
    %9003 = vmatprep.subr.mxu0 0.0
    %9004 = vmatpush1.msra.mxu0 %v8985
    %9005 = vmatprep.subr.mxu0 0.0
    %9006 = vmatpush1.msra.mxu0 %v8986
    %9007 = vmatprep.subr.mxu0 0.0
    %9008 = vmatpush1.msra.mxu0 %v8987
    %9009 = vmatprep.subr.mxu0 0.0
    %9010 = vmatpush1.msra.mxu0 %v8988
    %9011 = vmatprep.subr.mxu0 0.0
    %9012 = vmatpush1.msra.mxu0 %v8989
    %9013 = vmatprep.subr.mxu0 0.0
    %9014 = vmatpush1.msra.mxu0 %v8990
    %9015 = vmatprep.subr.mxu0 0.0
    %9016 = vmatpush1.msra.mxu0 %v8991
    %9017 = vmatprep.subr.mxu0 0.0
    %9018 = vmatpush1.msra.mxu0 %v8992
    %9019 = vmatprep.subr.mxu0 0.0
    %9020 = vmatpush1.msra.mxu0 %v8993
    %9021 = vmatprep.subr.mxu0 0.0
    %9022 = vmatpush1.msra.mxu0 %v8994
    %9023 = vmatprep.subr.mxu0 0.0
    %9024 = vmatpush1.msra.mxu0 %v8995
    %9025 = vmatprep.subr.mxu0 0.0
    %9026 = vmatpush1.msra.mxu0 %v8996
    %9027 = vmatprep.subr.mxu0 0.0
    %9028 = vmatpush1.msra.mxu0 %v8997
    %9029 = vmatprep.subr.mxu0 0.0
    %9030 = vmatpush1.msra.mxu0 %v8998
    %9031 = vmatprep.subr.mxu0 0.0
    %9032 = vmatpush1.msra.mxu0 0.0
    %9033 = vmatprep.subr.mxu0 0.0
    %9034 = vmatpush1.msra.mxu0 0.0
    %9035 = vmatprep.subr.mxu0 0.0
    %9036 = vmatpush1.msra.mxu0 0.0
    %9037 = vmatprep.subr.mxu0 0.0
    %9038 = vmatpush1.msra.mxu0 0.0
    %9039 = vmatprep.subr.mxu0 0.0
    %9040 = vmatpush1.msra.mxu0 0.0
    %9041 = vmatprep.subr.mxu0 0.0
    %9042 = vmatpush1.msra.mxu0 0.0
    %9043 = vmatprep.subr.mxu0 0.0
    %9044 = vmatpush1.msra.mxu0 0.0
    %9045 = vmatprep.subr.mxu0 0.0
    %9046 = vmatpush1.msra.mxu0 0.0
    %9047 = vmatprep.subr.mxu0 0.0
    %9048 = vmatpush1.msra.mxu0 0.0
    %9049 = vmatprep.subr.mxu0 0.0
    %9050 = vmatpush1.msra.mxu0 0.0
    %9051 = vmatprep.subr.mxu0 0.0
    %9052 = vmatpush1.msra.mxu0 0.0
    %9053 = vmatprep.subr.mxu0 0.0
    %9054 = vmatpush1.msra.mxu0 0.0
    %9055 = vmatprep.subr.mxu0 0.0
    %9056 = vmatpush1.msra.mxu0 0.0
    %9057 = vmatprep.subr.mxu0 0.0
    %9058 = vmatpush1.msra.mxu0 0.0
    %9059 = vmatprep.subr.mxu0 0.0
    %9060 = vmatpush1.msra.mxu0 0.0
    %9061 = vmatprep.subr.mxu0 0.0
    %9062 = vmatpush1.msra.mxu0 0.0
    %9063 = vmatprep.mubr.f32.mxu0 0.0
    %9064 = vmatmul.mubr.f32.gmra.mrb[0].mxu0 %v5635
    %v9065 = vpop.f32.mrb[0].mxu0
    %v9066 = vadd.f32 0.0, %v9065
    %v9067 = vpop.f32.mrb[0].mxu0
    %9068 = vmatprep.mubr.f32.mxu0 0.0
    %9069 = vmatmul.mubr.f32.gmra.mrb[0].mxu0 %v5636
    %v9070 = vpop.f32.mrb[0].mxu0
    %v9071 = vadd.f32 0.0, %v9070
    %v9072 = vpop.f32.mrb[0].mxu0
    %9073 = vmatprep.mubr.f32.mxu0 0.0
    %9074 = vmatmul.mubr.f32.gmra.mrb[0].mxu0 %v5638
    %v9075 = vpop.f32.mrb[0].mxu0
    %v9076 = vadd.f32 0.0, %v9075
    %v9077 = vpop.f32.mrb[0].mxu0
    %9078 = vmatprep.mubr.f32.mxu0 0.0
    %9079 = vmatmul.mubr.f32.gmra.mrb[0].mxu0 %v5639
    %v9080 = vpop.f32.mrb[0].mxu0
    %v9081 = vadd.f32 0.0, %v9080
    %v9082 = vpop.f32.mrb[0].mxu0
    %9083 = vmatprep.mubr.f32.mxu0 0.0
    %9084 = vmatmul.mubr.f32.gmra.mrb[0].mxu0 %v5641
    %v9085 = vpop.f32.mrb[0].mxu0
    %v9086 = vadd.f32 0.0, %v9085
    %v9087 = vpop.f32.mrb[0].mxu0
    %9088 = vmatprep.mubr.f32.mxu0 0.0
    %9089 = vmatmul.mubr.f32.gmra.mrb[0].mxu0 %v5642
    %v9090 = vpop.f32.mrb[0].mxu0
    %v9091 = vadd.f32 0.0, %v9090
    %v9092 = vpop.f32.mrb[0].mxu0
    %9093 = vmatprep.mubr.f32.mxu0 0.0
    %9094 = vmatmul.mubr.f32.gmra.mrb[0].mxu0 %v5644
    %v9095 = vpop.f32.mrb[0].mxu0
    %v9096 = vadd.f32 0.0, %v9095
    %v9097 = vpop.f32.mrb[0].mxu0
    %9098 = vmatprep.mubr.f32.mxu0 0.0
    %9099 = vmatmul.mubr.f32.gmra.mrb[0].mxu0 %v5645
    %v9100 = vpop.f32.mrb[0].mxu0
    %v9101 = vadd.f32 0.0, %v9100
    %v9102 = vpop.f32.mrb[0].mxu0
    %9103 = vmatprep.mubr.f32.mxu0 0.0
    %9104 = vmatmul.mubr.f32.gmra.mrb[0].mxu0 %v5647
    %v9105 = vpop.f32.mrb[0].mxu0
    %v9106 = vadd.f32 0.0, %v9105
    %v9107 = vpop.f32.mrb[0].mxu0
    %9108 = vmatprep.mubr.f32.mxu0 0.0
    %9109 = vmatmul.mubr.f32.gmra.mrb[0].mxu0 %v5648
    %v9110 = vpop.f32.mrb[0].mxu0
    %v9111 = vadd.f32 0.0, %v9110
    %v9112 = vpop.f32.mrb[0].mxu0
    %9113 = vmatprep.mubr.f32.mxu0 0.0
    %9114 = vmatmul.mubr.f32.gmra.mrb[0].mxu0 %v5650
    %v9115 = vpop.f32.mrb[0].mxu0
    %v9116 = vadd.f32 0.0, %v9115
    %v9117 = vpop.f32.mrb[0].mxu0
    %9118 = vmatprep.mubr.f32.mxu0 0.0
    %9119 = vmatmul.mubr.f32.gmra.mrb[0].mxu0 %v5651
    %v9120 = vpop.f32.mrb[0].mxu0
    %v9121 = vadd.f32 0.0, %v9120
    %v9122 = vpop.f32.mrb[0].mxu0
    %9123 = vmatprep.mubr.f32.mxu0 0.0
    %9124 = vmatmul.mubr.f32.gmra.mrb[0].mxu0 %v5653
    %v9125 = vpop.f32.mrb[0].mxu0
    %v9126 = vadd.f32 0.0, %v9125
    %v9127 = vpop.f32.mrb[0].mxu0
    %9128 = vmatprep.mubr.f32.mxu0 0.0
    %9129 = vmatmul.mubr.f32.gmra.mrb[0].mxu0 %v5654
    %v9130 = vpop.f32.mrb[0].mxu0
    %v9131 = vadd.f32 0.0, %v9130
    %v9132 = vpop.f32.mrb[0].mxu0
    %9133 = vmatprep.mubr.f32.mxu0 0.0
    %9134 = vmatmul.mubr.f32.gmra.mrb[0].mxu0 %v5656
    %v9135 = vpop.f32.mrb[0].mxu0
    %v9136 = vadd.f32 0.0, %v9135
    %v9137 = vpop.f32.mrb[0].mxu0
    %9138 = vmatprep.mubr.f32.mxu0 0.0
    %9139 = vmatmul.mubr.f32.gmra.mrb[0].mxu0 %v5657
    %v9140 = vpop.f32.mrb[0].mxu0
    %v9141 = vadd.f32 0.0, %v9140
    %v9142 = vpop.f32.mrb[0].mxu0
    %9143 = vmatprep.mubr.f32.mxu0 0.0
    %9144 = vmatmul.mubr.f32.gmra.mrb[0].mxu0 %v5659
    %v9145 = vpop.f32.mrb[0].mxu0
    %v9146 = vadd.f32 0.0, %v9145
    %v9147 = vpop.f32.mrb[0].mxu0
    %9148 = vmatprep.mubr.f32.mxu0 0.0
    %9149 = vmatmul.mubr.f32.gmra.mrb[0].mxu0 %v5660
    %v9150 = vpop.f32.mrb[0].mxu0
    %v9151 = vadd.f32 0.0, %v9150
    %v9152 = vpop.f32.mrb[0].mxu0
    %9153 = vmatprep.mubr.f32.mxu0 0.0
    %9154 = vmatmul.mubr.f32.gmra.mrb[0].mxu0 %v5662
    %v9155 = vpop.f32.mrb[0].mxu0
    %v9156 = vadd.f32 0.0, %v9155
    %v9157 = vpop.f32.mrb[0].mxu0
    %9158 = vmatprep.mubr.f32.mxu0 0.0
    %9159 = vmatmul.mubr.f32.gmra.mrb[0].mxu0 %v5663
    %v9160 = vpop.f32.mrb[0].mxu0
    %v9161 = vadd.f32 0.0, %v9160
    %v9162 = vpop.f32.mrb[0].mxu0
    %9163 = vmatprep.mubr.f32.mxu0 0.0
    %9164 = vmatmul.mubr.f32.gmra.mrb[0].mxu0 %v5665
    %v9165 = vpop.f32.mrb[0].mxu0
    %v9166 = vadd.f32 0.0, %v9165
    %v9167 = vpop.f32.mrb[0].mxu0
    %9168 = vmatprep.mubr.f32.mxu0 0.0
    %9169 = vmatmul.mubr.f32.gmra.mrb[0].mxu0 %v5666
    %v9170 = vpop.f32.mrb[0].mxu0
    %v9171 = vadd.f32 0.0, %v9170
    %v9172 = vpop.f32.mrb[0].mxu0
    %9173 = vmatprep.mubr.f32.mxu0 0.0
    %9174 = vmatmul.mubr.f32.gmra.mrb[0].mxu0 %v5668
    %v9175 = vpop.f32.mrb[0].mxu0
    %v9176 = vadd.f32 0.0, %v9175
    %v9177 = vpop.f32.mrb[0].mxu0
    %9178 = vmatprep.mubr.f32.mxu0 0.0
    %9179 = vmatmul.mubr.f32.gmra.mrb[0].mxu0 %v5669
    %v9180 = vpop.f32.mrb[0].mxu0
    %v9181 = vadd.f32 0.0, %v9180
    %v9182 = vpop.f32.mrb[0].mxu0
    %9183 = vmatprep.mubr.f32.mxu0 0.0
    %9184 = vmatmul.mubr.f32.gmra.mrb[0].mxu0 %v5671
    %v9185 = vpop.f32.mrb[0].mxu0
    %v9186 = vadd.f32 0.0, %v9185
    %v9187 = vpop.f32.mrb[0].mxu0
    %9188 = vmatprep.mubr.f32.mxu0 0.0
    %9189 = vmatmul.mubr.f32.gmra.mrb[0].mxu0 %v5672
    %v9190 = vpop.f32.mrb[0].mxu0
    %v9191 = vadd.f32 0.0, %v9190
    %v9192 = vpop.f32.mrb[0].mxu0
    %9193 = vmatprep.mubr.f32.mxu0 0.0
    %9194 = vmatmul.mubr.f32.gmra.mrb[0].mxu0 %v5674
    %v9195 = vpop.f32.mrb[0].mxu0
    %v9196 = vadd.f32 0.0, %v9195
    %v9197 = vpop.f32.mrb[0].mxu0
    %9198 = vmatprep.mubr.f32.mxu0 0.0
    %9199 = vmatmul.mubr.f32.gmra.mrb[0].mxu0 %v5675
    %v9200 = vpop.f32.mrb[0].mxu0
    %v9201 = vadd.f32 0.0, %v9200
    %v9202 = vpop.f32.mrb[0].mxu0
    %9203 = vmatprep.mubr.f32.mxu0 0.0
    %9204 = vmatmul.mubr.f32.gmra.mrb[0].mxu0 %v5677
    %v9205 = vpop.f32.mrb[0].mxu0
    %v9206 = vadd.f32 0.0, %v9205
    %v9207 = vpop.f32.mrb[0].mxu0
    %9208 = vmatprep.mubr.f32.mxu0 0.0
    %9209 = vmatmul.mubr.f32.gmra.mrb[0].mxu0 %v5678
    %v9210 = vpop.f32.mrb[0].mxu0
    %v9211 = vadd.f32 0.0, %v9210
    %v9212 = vpop.f32.mrb[0].mxu0
    %9213 = vmatprep.mubr.f32.mxu0 0.0
    %9214 = vmatmul.mubr.f32.gmra.mrb[0].mxu0 %v5680
    %v9215 = vpop.f32.mrb[0].mxu0
    %v9216 = vadd.f32 0.0, %v9215
    %v9217 = vpop.f32.mrb[0].mxu0
    %9218 = vmatprep.mubr.f32.mxu0 0.0
    %9219 = vmatmul.mubr.f32.gmra.mrb[0].mxu0 %v5681
    %v9220 = vpop.f32.mrb[0].mxu0
    %v9221 = vadd.f32 0.0, %v9220
    %v9222 = vpop.f32.mrb[0].mxu0
    %9223 = vmatprep.mubr.f32.mxu0 0.0
    %9224 = vmatmul.mubr.f32.gmra.mrb[0].mxu0 %v5689
    %v9225 = vpop.f32.mrb[0].mxu0
    %v9226 = vadd.f32 0.0, %v9225
    %v9227 = vpop.f32.mrb[0].mxu0
    %9228 = vmatprep.mubr.f32.mxu0 0.0
    %9229 = vmatmul.mubr.f32.gmra.mrb[0].mxu0 %v5690
    %v9230 = vpop.f32.mrb[0].mxu0
    %v9231 = vadd.f32 0.0, %v9230
    %v9232 = vpop.f32.mrb[0].mxu0
    %9233 = vmatprep.mubr.f32.mxu0 0.0
    %9234 = vmatmul.mubr.f32.gmra.mrb[0].mxu0 %v5692
    %v9235 = vpop.f32.mrb[0].mxu0
    %v9236 = vadd.f32 0.0, %v9235
    %v9237 = vpop.f32.mrb[0].mxu0
    %9238 = vmatprep.mubr.f32.mxu0 0.0
    %9239 = vmatmul.mubr.f32.gmra.mrb[0].mxu0 %v5693
    %v9240 = vpop.f32.mrb[0].mxu0
    %v9241 = vadd.f32 0.0, %v9240
    %v9242 = vpop.f32.mrb[0].mxu0
    %9243 = vmatprep.mubr.f32.mxu0 0.0
    %9244 = vmatmul.mubr.f32.gmra.mrb[0].mxu0 %v5695
    %v9245 = vpop.f32.mrb[0].mxu0
    %v9246 = vadd.f32 0.0, %v9245
    %v9247 = vpop.f32.mrb[0].mxu0
    %9248 = vmatprep.mubr.f32.mxu0 0.0
    %9249 = vmatmul.mubr.f32.gmra.mrb[0].mxu0 %v5696
    %v9250 = vpop.f32.mrb[0].mxu0
    %v9251 = vadd.f32 0.0, %v9250
    %v9252 = vpop.f32.mrb[0].mxu0
    %9253 = vmatprep.mubr.f32.mxu0 0.0
    %9254 = vmatmul.mubr.f32.gmra.mrb[0].mxu0 %v5698
    %v9255 = vpop.f32.mrb[0].mxu0
    %v9256 = vadd.f32 0.0, %v9255
    %v9257 = vpop.f32.mrb[0].mxu0
    %9258 = vmatprep.mubr.f32.mxu0 0.0
    %9259 = vmatmul.mubr.f32.gmra.mrb[0].mxu0 %v5699
    %v9260 = vpop.f32.mrb[0].mxu0
    %v9261 = vadd.f32 0.0, %v9260
    %v9262 = vpop.f32.mrb[0].mxu0
    %9263 = vmatprep.mubr.f32.mxu0 0.0
    %9264 = vmatmul.mubr.f32.gmra.mrb[0].mxu0 %v5701
    %v9265 = vpop.f32.mrb[0].mxu0
    %v9266 = vadd.f32 0.0, %v9265
    %v9267 = vpop.f32.mrb[0].mxu0
    %9268 = vmatprep.mubr.f32.mxu0 0.0
    %9269 = vmatmul.mubr.f32.gmra.mrb[0].mxu0 %v5702
    %v9270 = vpop.f32.mrb[0].mxu0
    %v9271 = vadd.f32 0.0, %v9270
    %v9272 = vpop.f32.mrb[0].mxu0
    %9273 = vmatprep.mubr.f32.mxu0 0.0
    %9274 = vmatmul.mubr.f32.gmra.mrb[0].mxu0 %v5704
    %v9275 = vpop.f32.mrb[0].mxu0
    %v9276 = vadd.f32 0.0, %v9275
    %v9277 = vpop.f32.mrb[0].mxu0
    %9278 = vmatprep.mubr.f32.mxu0 0.0
    %9279 = vmatmul.mubr.f32.gmra.mrb[0].mxu0 %v5705
    %v9280 = vpop.f32.mrb[0].mxu0
    %v9281 = vadd.f32 0.0, %v9280
    %v9282 = vpop.f32.mrb[0].mxu0
    %9283 = vmatprep.mubr.f32.mxu0 0.0
    %9284 = vmatmul.mubr.f32.gmra.mrb[0].mxu0 %v5707
    %v9285 = vpop.f32.mrb[0].mxu0
    %v9286 = vadd.f32 0.0, %v9285
    %v9287 = vpop.f32.mrb[0].mxu0
    %9288 = vmatprep.mubr.f32.mxu0 0.0
    %9289 = vmatmul.mubr.f32.gmra.mrb[0].mxu0 %v5708
    %v9290 = vpop.f32.mrb[0].mxu0
    %v9291 = vadd.f32 0.0, %v9290
    %v9292 = vpop.f32.mrb[0].mxu0
    %9293 = vmatprep.mubr.f32.mxu0 0.0
    %9294 = vmatmul.mubr.f32.gmra.mrb[0].mxu0 %v5710
    %v9295 = vpop.f32.mrb[0].mxu0
    %v9296 = vadd.f32 0.0, %v9295
    %v9297 = vpop.f32.mrb[0].mxu0
    %9298 = vmatprep.mubr.f32.mxu0 0.0
    %9299 = vmatmul.mubr.f32.gmra.mrb[0].mxu0 %v5711
    %v9300 = vpop.f32.mrb[0].mxu0
    %v9301 = vadd.f32 0.0, %v9300
    %v9302 = vpop.f32.mrb[0].mxu0
    %9303 = vmatprep.mubr.f32.mxu0 0.0
    %9304 = vmatmul.mubr.f32.gmra.mrb[0].mxu0 %v5713
    %v9305 = vpop.f32.mrb[0].mxu0
    %v9306 = vadd.f32 0.0, %v9305
    %v9307 = vpop.f32.mrb[0].mxu0
    %9308 = vmatprep.mubr.f32.mxu0 0.0
    %9309 = vmatmul.mubr.f32.gmra.mrb[0].mxu0 %v5714
    %v9310 = vpop.f32.mrb[0].mxu0
    %v9311 = vadd.f32 0.0, %v9310
    %v9312 = vpop.f32.mrb[0].mxu0
    %9313 = vmatprep.mubr.f32.mxu0 0.0
    %9314 = vmatmul.mubr.f32.gmra.mrb[0].mxu0 %v5716
    %v9315 = vpop.f32.mrb[0].mxu0
    %v9316 = vadd.f32 0.0, %v9315
    %v9317 = vpop.f32.mrb[0].mxu0
    %9318 = vmatprep.mubr.f32.mxu0 0.0
    %9319 = vmatmul.mubr.f32.gmra.mrb[0].mxu0 %v5717
    %v9320 = vpop.f32.mrb[0].mxu0
    %v9321 = vadd.f32 0.0, %v9320
    %v9322 = vpop.f32.mrb[0].mxu0
    %9323 = vmatprep.mubr.f32.mxu0 0.0
    %9324 = vmatmul.mubr.f32.gmra.mrb[0].mxu0 %v5719
    %v9325 = vpop.f32.mrb[0].mxu0
    %v9326 = vadd.f32 0.0, %v9325
    %v9327 = vpop.f32.mrb[0].mxu0
    %9328 = vmatprep.mubr.f32.mxu0 0.0
    %9329 = vmatmul.mubr.f32.gmra.mrb[0].mxu0 %v5720
    %v9330 = vpop.f32.mrb[0].mxu0
    %v9331 = vadd.f32 0.0, %v9330
    %v9332 = vpop.f32.mrb[0].mxu0
    %9333 = vmatprep.mubr.f32.mxu0 0.0
    %9334 = vmatmul.mubr.f32.gmra.mrb[0].mxu0 %v5722
    %v9335 = vpop.f32.mrb[0].mxu0
    %v9336 = vadd.f32 0.0, %v9335
    %v9337 = vpop.f32.mrb[0].mxu0
    %9338 = vmatprep.mubr.f32.mxu0 0.0
    %9339 = vmatmul.mubr.f32.gmra.mrb[0].mxu0 %v5723
    %v9340 = vpop.f32.mrb[0].mxu0
    %v9341 = vadd.f32 0.0, %v9340
    %v9342 = vpop.f32.mrb[0].mxu0
    %9343 = vmatprep.mubr.f32.mxu0 0.0
    %9344 = vmatmul.mubr.f32.gmra.mrb[0].mxu0 %v5725
    %v9345 = vpop.f32.mrb[0].mxu0
    %v9346 = vadd.f32 0.0, %v9345
    %v9347 = vpop.f32.mrb[0].mxu0
    %9348 = vmatprep.mubr.f32.mxu0 0.0
    %9349 = vmatmul.mubr.f32.gmra.mrb[0].mxu0 %v5726
    %v9350 = vpop.f32.mrb[0].mxu0
    %v9351 = vadd.f32 0.0, %v9350
    %v9352 = vpop.f32.mrb[0].mxu0
    %9353 = vmatprep.mubr.f32.mxu0 0.0
    %9354 = vmatmul.mubr.f32.gmra.mrb[0].mxu0 %v5728
    %v9355 = vpop.f32.mrb[0].mxu0
    %v9356 = vadd.f32 0.0, %v9355
    %v9357 = vpop.f32.mrb[0].mxu0
    %9358 = vmatprep.mubr.f32.mxu0 0.0
    %9359 = vmatmul.mubr.f32.gmra.mrb[0].mxu0 %v5729
    %v9360 = vpop.f32.mrb[0].mxu0
    %v9361 = vadd.f32 0.0, %v9360
    %v9362 = vpop.f32.mrb[0].mxu0
    %9363 = vmatprep.mubr.f32.mxu0 0.0
    %9364 = vmatmul.mubr.f32.gmra.mrb[0].mxu0 %v5731
    %v9365 = vpop.f32.mrb[0].mxu0
    %v9366 = vadd.f32 0.0, %v9365
    %v9367 = vpop.f32.mrb[0].mxu0
    %9368 = vmatprep.mubr.f32.mxu0 0.0
    %9369 = vmatmul.mubr.f32.gmra.mrb[0].mxu0 %v5732
    %v9370 = vpop.f32.mrb[0].mxu0
    %v9371 = vadd.f32 0.0, %v9370
    %v9372 = vpop.f32.mrb[0].mxu0
    %9373 = vmatprep.mubr.f32.mxu0 0.0
    %9374 = vmatmul.mubr.f32.gmra.mrb[0].mxu0 %v5734
    %v9375 = vpop.f32.mrb[0].mxu0
    %v9376 = vadd.f32 0.0, %v9375
    %v9377 = vpop.f32.mrb[0].mxu0
    %9378 = vmatprep.mubr.f32.mxu0 0.0
    %9379 = vmatmul.mubr.f32.gmra.mrb[0].mxu0 %v5735
    %v9380 = vpop.f32.mrb[0].mxu0
    %v9381 = vadd.f32 0.0, %v9380
    %v9382 = vpop.f32.mrb[0].mxu0
    %9383 = vdwg.mxu0
    %v9384 = vadd.f32 %v8918, %v9066
    %v9385 = vadd.f32 %v8919, %v9071
    %v9386 = vadd.f32 %v8920, %v9076
    %v9387 = vadd.f32 %v8921, %v9081
    %v9388 = vadd.f32 %v8922, %v9086
    %v9389 = vadd.f32 %v8923, %v9091
    %v9390 = vadd.f32 %v8924, %v9096
    %v9391 = vadd.f32 %v8925, %v9101
    %v9392 = vadd.f32 %v8926, %v9106
    %v9393 = vadd.f32 %v8927, %v9111
    %v9394 = vadd.f32 %v8928, %v9116
    %v9395 = vadd.f32 %v8929, %v9121
    %v9396 = vadd.f32 %v8930, %v9126
    %v9397 = vadd.f32 %v8931, %v9131
    %v9398 = vadd.f32 %v8932, %v9136
    %v9399 = vadd.f32 %v8933, %v9141
    %v9400 = vadd.f32 %v8934, %v9146
    %v9401 = vadd.f32 %v8935, %v9151
    %v9402 = vadd.f32 %v8936, %v9156
    %v9403 = vadd.f32 %v8937, %v9161
    %v9404 = vadd.f32 %v8938, %v9166
    %v9405 = vadd.f32 %v8939, %v9171
    %v9406 = vadd.f32 %v8940, %v9176
    %v9407 = vadd.f32 %v8941, %v9181
    %v9408 = vadd.f32 %v8942, %v9186
    %v9409 = vadd.f32 %v8943, %v9191
    %v9410 = vadd.f32 %v8944, %v9196
    %v9411 = vadd.f32 %v8945, %v9201
    %v9412 = vadd.f32 %v8946, %v9206
    %v9413 = vadd.f32 %v8947, %v9211
    %v9414 = vadd.f32 %v8948, %v9216
    %v9415 = vadd.f32 %v8949, %v9221
    %v9416 = vadd.f32 %v8950, %v9226
    %v9417 = vadd.f32 %v8951, %v9231
    %v9418 = vadd.f32 %v8952, %v9236
    %v9419 = vadd.f32 %v8953, %v9241
    %v9420 = vadd.f32 %v8954, %v9246
    %v9421 = vadd.f32 %v8955, %v9251
    %v9422 = vadd.f32 %v8956, %v9256
    %v9423 = vadd.f32 %v8957, %v9261
    %v9424 = vadd.f32 %v8958, %v9266
    %v9425 = vadd.f32 %v8959, %v9271
    %v9426 = vadd.f32 %v8960, %v9276
    %v9427 = vadd.f32 %v8961, %v9281
    %v9428 = vadd.f32 %v8962, %v9286
    %v9429 = vadd.f32 %v8963, %v9291
    %v9430 = vadd.f32 %v8964, %v9296
    %v9431 = vadd.f32 %v8965, %v9301
    %v9432 = vadd.f32 %v8966, %v9306
    %v9433 = vadd.f32 %v8967, %v9311
    %v9434 = vadd.f32 %v8968, %v9316
    %v9435 = vadd.f32 %v8969, %v9321
    %v9436 = vadd.f32 %v8970, %v9326
    %v9437 = vadd.f32 %v8971, %v9331
    %v9438 = vadd.f32 %v8972, %v9336
    %v9439 = vadd.f32 %v8973, %v9341
    %v9440 = vadd.f32 %v8974, %v9346
    %v9441 = vadd.f32 %v8975, %v9351
    %v9442 = vadd.f32 %v8976, %v9356
    %v9443 = vadd.f32 %v8977, %v9361
    %v9444 = vadd.f32 %v8978, %v9366
    %v9445 = vadd.f32 %v8979, %v9371
    %v9446 = vadd.f32 %v8980, %v9376
    %v9447 = vadd.f32 %v8981, %v9381
    %v9454 = vrot.slane %v5680, 1
    %v9455 = vrot.slane %v5681, 1
    %v9456 = vsel %vm271, %v9454, %v9455
    %v9457 = vrot.slane %v5682, 1
    %v9458 = vsel %vm271, %v9455, %v9457
    %v9459 = vrot.slane %v5734, 1
    %v9460 = vrot.slane %v5735, 1
    %v9461 = vsel %vm271, %v9459, %v9460
    %v9462 = vrot.slane %v5736, 1
    %v9463 = vsel %vm271, %v9460, %v9462
    %s9468 = scalar_lea.vmem [#allocation4], 896
    %v9469 = vld [vmem:[%s9468] sm:$0xff]
    %v9470 = vld [vmem:[%s9468 + $0x8] sm:$0xff]
    %v9471 = vld [vmem:[%s9468 + $0x10] sm:$0xff]
    %v9472 = vld [vmem:[%s9468 + $0x18] sm:$0xff]
    %v9473 = vld [vmem:[%s9468 + $0x20] sm:$0xff]
    %v9474 = vld [vmem:[%s9468 + $0x28] sm:$0xff]
    %v9475 = vld [vmem:[%s9468 + $0x30] sm:$0xff]
    %v9476 = vld [vmem:[%s9468 + $0x38] sm:$0xff]
    %v9477 = vld [vmem:[%s9468 + $0x40] sm:$0xff]
    %v9478 = vld [vmem:[%s9468 + $0x48] sm:$0xff]
    %v9479 = vld [vmem:[%s9468 + $0x50] sm:$0xff]
    %v9480 = vld [vmem:[%s9468 + $0x58] sm:$0xff]
    %v9481 = vld [vmem:[%s9468 + $0x60] sm:$0xff]
    %v9482 = vld [vmem:[%s9468 + $0x68] sm:$0xff]
    %v9483 = vld [vmem:[%s9468 + $0x70] sm:$0xff]
    %v9484 = vld [vmem:[%s9468 + $0x78] sm:$0xff]
    %9485 = vmatprep.subr.mxu0 0.0
    %9486 = vmatpush1.msra.mxu0 %v9469
    %9487 = vmatprep.subr.mxu0 0.0
    %9488 = vmatpush1.msra.mxu0 %v9470
    %9489 = vmatprep.subr.mxu0 0.0
    %9490 = vmatpush1.msra.mxu0 %v9471
    %9491 = vmatprep.subr.mxu0 0.0
    %9492 = vmatpush1.msra.mxu0 %v9472
    %9493 = vmatprep.subr.mxu0 0.0
    %9494 = vmatpush1.msra.mxu0 %v9473
    %9495 = vmatprep.subr.mxu0 0.0
    %9496 = vmatpush1.msra.mxu0 %v9474
    %9497 = vmatprep.subr.mxu0 0.0
    %9498 = vmatpush1.msra.mxu0 %v9475
    %9499 = vmatprep.subr.mxu0 0.0
    %9500 = vmatpush1.msra.mxu0 %v9476
    %9501 = vmatprep.subr.mxu0 0.0
    %9502 = vmatpush1.msra.mxu0 %v9477
    %9503 = vmatprep.subr.mxu0 0.0
    %9504 = vmatpush1.msra.mxu0 %v9478
    %9505 = vmatprep.subr.mxu0 0.0
    %9506 = vmatpush1.msra.mxu0 %v9479
    %9507 = vmatprep.subr.mxu0 0.0
    %9508 = vmatpush1.msra.mxu0 %v9480
    %9509 = vmatprep.subr.mxu0 0.0
    %9510 = vmatpush1.msra.mxu0 %v9481
    %9511 = vmatprep.subr.mxu0 0.0
    %9512 = vmatpush1.msra.mxu0 %v9482
    %9513 = vmatprep.subr.mxu0 0.0
    %9514 = vmatpush1.msra.mxu0 %v9483
    %9515 = vmatprep.subr.mxu0 0.0
    %9516 = vmatpush1.msra.mxu0 %v9484
    %9517 = vmatprep.subr.mxu0 0.0
    %9518 = vmatpush1.msra.mxu0 0.0
    %9519 = vmatprep.subr.mxu0 0.0
    %9520 = vmatpush1.msra.mxu0 0.0
    %9521 = vmatprep.subr.mxu0 0.0
    %9522 = vmatpush1.msra.mxu0 0.0
    %9523 = vmatprep.subr.mxu0 0.0
    %9524 = vmatpush1.msra.mxu0 0.0
    %9525 = vmatprep.subr.mxu0 0.0
    %9526 = vmatpush1.msra.mxu0 0.0
    %9527 = vmatprep.subr.mxu0 0.0
    %9528 = vmatpush1.msra.mxu0 0.0
    %9529 = vmatprep.subr.mxu0 0.0
    %9530 = vmatpush1.msra.mxu0 0.0
    %9531 = vmatprep.subr.mxu0 0.0
    %9532 = vmatpush1.msra.mxu0 0.0
    %9533 = vmatprep.subr.mxu0 0.0
    %9534 = vmatpush1.msra.mxu0 0.0
    %9535 = vmatprep.subr.mxu0 0.0
    %9536 = vmatpush1.msra.mxu0 0.0
    %9537 = vmatprep.subr.mxu0 0.0
    %9538 = vmatpush1.msra.mxu0 0.0
    %9539 = vmatprep.subr.mxu0 0.0
    %9540 = vmatpush1.msra.mxu0 0.0
    %9541 = vmatprep.subr.mxu0 0.0
    %9542 = vmatpush1.msra.mxu0 0.0
    %9543 = vmatprep.subr.mxu0 0.0
    %9544 = vmatpush1.msra.mxu0 0.0
    %9545 = vmatprep.subr.mxu0 0.0
    %9546 = vmatpush1.msra.mxu0 0.0
    %9547 = vmatprep.subr.mxu0 0.0
    %9548 = vmatpush1.msra.mxu0 0.0
    %9549 = vmatprep.mubr.f32.mxu0 0.0
    %9550 = vmatmul.mubr.f32.gmra.mrb[0].mxu0 %v5861
    %v9551 = vpop.f32.mrb[0].mxu0
    %v9552 = vadd.f32 0.0, %v9551
    %v9553 = vpop.f32.mrb[0].mxu0
    %9554 = vmatprep.mubr.f32.mxu0 0.0
    %9555 = vmatmul.mubr.f32.gmra.mrb[0].mxu0 %v5863
    %v9556 = vpop.f32.mrb[0].mxu0
    %v9557 = vadd.f32 0.0, %v9556
    %v9558 = vpop.f32.mrb[0].mxu0
    %9559 = vmatprep.mubr.f32.mxu0 0.0
    %9560 = vmatmul.mubr.f32.gmra.mrb[0].mxu0 %v5866
    %v9561 = vpop.f32.mrb[0].mxu0
    %v9562 = vadd.f32 0.0, %v9561
    %v9563 = vpop.f32.mrb[0].mxu0
    %9564 = vmatprep.mubr.f32.mxu0 0.0
    %9565 = vmatmul.mubr.f32.gmra.mrb[0].mxu0 %v5868
    %v9566 = vpop.f32.mrb[0].mxu0
    %v9567 = vadd.f32 0.0, %v9566
    %v9568 = vpop.f32.mrb[0].mxu0
    %9569 = vmatprep.mubr.f32.mxu0 0.0
    %9570 = vmatmul.mubr.f32.gmra.mrb[0].mxu0 %v5871
    %v9571 = vpop.f32.mrb[0].mxu0
    %v9572 = vadd.f32 0.0, %v9571
    %v9573 = vpop.f32.mrb[0].mxu0
    %9574 = vmatprep.mubr.f32.mxu0 0.0
    %9575 = vmatmul.mubr.f32.gmra.mrb[0].mxu0 %v5873
    %v9576 = vpop.f32.mrb[0].mxu0
    %v9577 = vadd.f32 0.0, %v9576
    %v9578 = vpop.f32.mrb[0].mxu0
    %9579 = vmatprep.mubr.f32.mxu0 0.0
    %9580 = vmatmul.mubr.f32.gmra.mrb[0].mxu0 %v5876
    %v9581 = vpop.f32.mrb[0].mxu0
    %v9582 = vadd.f32 0.0, %v9581
    %v9583 = vpop.f32.mrb[0].mxu0
    %9584 = vmatprep.mubr.f32.mxu0 0.0
    %9585 = vmatmul.mubr.f32.gmra.mrb[0].mxu0 %v5878
    %v9586 = vpop.f32.mrb[0].mxu0
    %v9587 = vadd.f32 0.0, %v9586
    %v9588 = vpop.f32.mrb[0].mxu0
    %9589 = vmatprep.mubr.f32.mxu0 0.0
    %9590 = vmatmul.mubr.f32.gmra.mrb[0].mxu0 %v5881
    %v9591 = vpop.f32.mrb[0].mxu0
    %v9592 = vadd.f32 0.0, %v9591
    %v9593 = vpop.f32.mrb[0].mxu0
    %9594 = vmatprep.mubr.f32.mxu0 0.0
    %9595 = vmatmul.mubr.f32.gmra.mrb[0].mxu0 %v5883
    %v9596 = vpop.f32.mrb[0].mxu0
    %v9597 = vadd.f32 0.0, %v9596
    %v9598 = vpop.f32.mrb[0].mxu0
    %9599 = vmatprep.mubr.f32.mxu0 0.0
    %9600 = vmatmul.mubr.f32.gmra.mrb[0].mxu0 %v5886
    %v9601 = vpop.f32.mrb[0].mxu0
    %v9602 = vadd.f32 0.0, %v9601
    %v9603 = vpop.f32.mrb[0].mxu0
    %9604 = vmatprep.mubr.f32.mxu0 0.0
    %9605 = vmatmul.mubr.f32.gmra.mrb[0].mxu0 %v5888
    %v9606 = vpop.f32.mrb[0].mxu0
    %v9607 = vadd.f32 0.0, %v9606
    %v9608 = vpop.f32.mrb[0].mxu0
    %9609 = vmatprep.mubr.f32.mxu0 0.0
    %9610 = vmatmul.mubr.f32.gmra.mrb[0].mxu0 %v5891
    %v9611 = vpop.f32.mrb[0].mxu0
    %v9612 = vadd.f32 0.0, %v9611
    %v9613 = vpop.f32.mrb[0].mxu0
    %9614 = vmatprep.mubr.f32.mxu0 0.0
    %9615 = vmatmul.mubr.f32.gmra.mrb[0].mxu0 %v5893
    %v9616 = vpop.f32.mrb[0].mxu0
    %v9617 = vadd.f32 0.0, %v9616
    %v9618 = vpop.f32.mrb[0].mxu0
    %9619 = vmatprep.mubr.f32.mxu0 0.0
    %9620 = vmatmul.mubr.f32.gmra.mrb[0].mxu0 %v5896
    %v9621 = vpop.f32.mrb[0].mxu0
    %v9622 = vadd.f32 0.0, %v9621
    %v9623 = vpop.f32.mrb[0].mxu0
    %9624 = vmatprep.mubr.f32.mxu0 0.0
    %9625 = vmatmul.mubr.f32.gmra.mrb[0].mxu0 %v5898
    %v9626 = vpop.f32.mrb[0].mxu0
    %v9627 = vadd.f32 0.0, %v9626
    %v9628 = vpop.f32.mrb[0].mxu0
    %9629 = vmatprep.mubr.f32.mxu0 0.0
    %9630 = vmatmul.mubr.f32.gmra.mrb[0].mxu0 %v5901
    %v9631 = vpop.f32.mrb[0].mxu0
    %v9632 = vadd.f32 0.0, %v9631
    %v9633 = vpop.f32.mrb[0].mxu0
    %9634 = vmatprep.mubr.f32.mxu0 0.0
    %9635 = vmatmul.mubr.f32.gmra.mrb[0].mxu0 %v5903
    %v9636 = vpop.f32.mrb[0].mxu0
    %v9637 = vadd.f32 0.0, %v9636
    %v9638 = vpop.f32.mrb[0].mxu0
    %9639 = vmatprep.mubr.f32.mxu0 0.0
    %9640 = vmatmul.mubr.f32.gmra.mrb[0].mxu0 %v5906
    %v9641 = vpop.f32.mrb[0].mxu0
    %v9642 = vadd.f32 0.0, %v9641
    %v9643 = vpop.f32.mrb[0].mxu0
    %9644 = vmatprep.mubr.f32.mxu0 0.0
    %9645 = vmatmul.mubr.f32.gmra.mrb[0].mxu0 %v5908
    %v9646 = vpop.f32.mrb[0].mxu0
    %v9647 = vadd.f32 0.0, %v9646
    %v9648 = vpop.f32.mrb[0].mxu0
    %9649 = vmatprep.mubr.f32.mxu0 0.0
    %9650 = vmatmul.mubr.f32.gmra.mrb[0].mxu0 %v5911
    %v9651 = vpop.f32.mrb[0].mxu0
    %v9652 = vadd.f32 0.0, %v9651
    %v9653 = vpop.f32.mrb[0].mxu0
    %9654 = vmatprep.mubr.f32.mxu0 0.0
    %9655 = vmatmul.mubr.f32.gmra.mrb[0].mxu0 %v5913
    %v9656 = vpop.f32.mrb[0].mxu0
    %v9657 = vadd.f32 0.0, %v9656
    %v9658 = vpop.f32.mrb[0].mxu0
    %9659 = vmatprep.mubr.f32.mxu0 0.0
    %9660 = vmatmul.mubr.f32.gmra.mrb[0].mxu0 %v5916
    %v9661 = vpop.f32.mrb[0].mxu0
    %v9662 = vadd.f32 0.0, %v9661
    %v9663 = vpop.f32.mrb[0].mxu0
    %9664 = vmatprep.mubr.f32.mxu0 0.0
    %9665 = vmatmul.mubr.f32.gmra.mrb[0].mxu0 %v5918
    %v9666 = vpop.f32.mrb[0].mxu0
    %v9667 = vadd.f32 0.0, %v9666
    %v9668 = vpop.f32.mrb[0].mxu0
    %9669 = vmatprep.mubr.f32.mxu0 0.0
    %9670 = vmatmul.mubr.f32.gmra.mrb[0].mxu0 %v5921
    %v9671 = vpop.f32.mrb[0].mxu0
    %v9672 = vadd.f32 0.0, %v9671
    %v9673 = vpop.f32.mrb[0].mxu0
    %9674 = vmatprep.mubr.f32.mxu0 0.0
    %9675 = vmatmul.mubr.f32.gmra.mrb[0].mxu0 %v5923
    %v9676 = vpop.f32.mrb[0].mxu0
    %v9677 = vadd.f32 0.0, %v9676
    %v9678 = vpop.f32.mrb[0].mxu0
    %9679 = vmatprep.mubr.f32.mxu0 0.0
    %9680 = vmatmul.mubr.f32.gmra.mrb[0].mxu0 %v5926
    %v9681 = vpop.f32.mrb[0].mxu0
    %v9682 = vadd.f32 0.0, %v9681
    %v9683 = vpop.f32.mrb[0].mxu0
    %9684 = vmatprep.mubr.f32.mxu0 0.0
    %9685 = vmatmul.mubr.f32.gmra.mrb[0].mxu0 %v5928
    %v9686 = vpop.f32.mrb[0].mxu0
    %v9687 = vadd.f32 0.0, %v9686
    %v9688 = vpop.f32.mrb[0].mxu0
    %9689 = vmatprep.mubr.f32.mxu0 0.0
    %9690 = vmatmul.mubr.f32.gmra.mrb[0].mxu0 %v8024
    %v9691 = vpop.f32.mrb[0].mxu0
    %v9692 = vadd.f32 0.0, %v9691
    %v9693 = vpop.f32.mrb[0].mxu0
    %9694 = vmatprep.mubr.f32.mxu0 0.0
    %9695 = vmatmul.mubr.f32.gmra.mrb[0].mxu0 %v8026
    %v9696 = vpop.f32.mrb[0].mxu0
    %v9697 = vadd.f32 0.0, %v9696
    %v9698 = vpop.f32.mrb[0].mxu0
    %9699 = vmatprep.mubr.f32.mxu0 0.0
    %9700 = vmatmul.mubr.f32.gmra.mrb[0].mxu0 %v9456
    %v9701 = vpop.f32.mrb[0].mxu0
    %v9702 = vadd.f32 0.0, %v9701
    %v9703 = vpop.f32.mrb[0].mxu0
    %9704 = vmatprep.mubr.f32.mxu0 0.0
    %9705 = vmatmul.mubr.f32.gmra.mrb[0].mxu0 %v9458
    %v9706 = vpop.f32.mrb[0].mxu0
    %v9707 = vadd.f32 0.0, %v9706
    %v9708 = vpop.f32.mrb[0].mxu0
    %9709 = vmatprep.mubr.f32.mxu0 0.0
    %9710 = vmatmul.mubr.f32.gmra.mrb[0].mxu0 %v5941
    %v9711 = vpop.f32.mrb[0].mxu0
    %v9712 = vadd.f32 0.0, %v9711
    %v9713 = vpop.f32.mrb[0].mxu0
    %9714 = vmatprep.mubr.f32.mxu0 0.0
    %9715 = vmatmul.mubr.f32.gmra.mrb[0].mxu0 %v5943
    %v9716 = vpop.f32.mrb[0].mxu0
    %v9717 = vadd.f32 0.0, %v9716
    %v9718 = vpop.f32.mrb[0].mxu0
    %9719 = vmatprep.mubr.f32.mxu0 0.0
    %9720 = vmatmul.mubr.f32.gmra.mrb[0].mxu0 %v5946
    %v9721 = vpop.f32.mrb[0].mxu0
    %v9722 = vadd.f32 0.0, %v9721
    %v9723 = vpop.f32.mrb[0].mxu0
    %9724 = vmatprep.mubr.f32.mxu0 0.0
    %9725 = vmatmul.mubr.f32.gmra.mrb[0].mxu0 %v5948
    %v9726 = vpop.f32.mrb[0].mxu0
    %v9727 = vadd.f32 0.0, %v9726
    %v9728 = vpop.f32.mrb[0].mxu0
    %9729 = vmatprep.mubr.f32.mxu0 0.0
    %9730 = vmatmul.mubr.f32.gmra.mrb[0].mxu0 %v5951
    %v9731 = vpop.f32.mrb[0].mxu0
    %v9732 = vadd.f32 0.0, %v9731
    %v9733 = vpop.f32.mrb[0].mxu0
    %9734 = vmatprep.mubr.f32.mxu0 0.0
    %9735 = vmatmul.mubr.f32.gmra.mrb[0].mxu0 %v5953
    %v9736 = vpop.f32.mrb[0].mxu0
    %v9737 = vadd.f32 0.0, %v9736
    %v9738 = vpop.f32.mrb[0].mxu0
    %9739 = vmatprep.mubr.f32.mxu0 0.0
    %9740 = vmatmul.mubr.f32.gmra.mrb[0].mxu0 %v5956
    %v9741 = vpop.f32.mrb[0].mxu0
    %v9742 = vadd.f32 0.0, %v9741
    %v9743 = vpop.f32.mrb[0].mxu0
    %9744 = vmatprep.mubr.f32.mxu0 0.0
    %9745 = vmatmul.mubr.f32.gmra.mrb[0].mxu0 %v5958
    %v9746 = vpop.f32.mrb[0].mxu0
    %v9747 = vadd.f32 0.0, %v9746
    %v9748 = vpop.f32.mrb[0].mxu0
    %9749 = vmatprep.mubr.f32.mxu0 0.0
    %9750 = vmatmul.mubr.f32.gmra.mrb[0].mxu0 %v5961
    %v9751 = vpop.f32.mrb[0].mxu0
    %v9752 = vadd.f32 0.0, %v9751
    %v9753 = vpop.f32.mrb[0].mxu0
    %9754 = vmatprep.mubr.f32.mxu0 0.0
    %9755 = vmatmul.mubr.f32.gmra.mrb[0].mxu0 %v5963
    %v9756 = vpop.f32.mrb[0].mxu0
    %v9757 = vadd.f32 0.0, %v9756
    %v9758 = vpop.f32.mrb[0].mxu0
    %9759 = vmatprep.mubr.f32.mxu0 0.0
    %9760 = vmatmul.mubr.f32.gmra.mrb[0].mxu0 %v5966
    %v9761 = vpop.f32.mrb[0].mxu0
    %v9762 = vadd.f32 0.0, %v9761
    %v9763 = vpop.f32.mrb[0].mxu0
    %9764 = vmatprep.mubr.f32.mxu0 0.0
    %9765 = vmatmul.mubr.f32.gmra.mrb[0].mxu0 %v5968
    %v9766 = vpop.f32.mrb[0].mxu0
    %v9767 = vadd.f32 0.0, %v9766
    %v9768 = vpop.f32.mrb[0].mxu0
    %9769 = vmatprep.mubr.f32.mxu0 0.0
    %9770 = vmatmul.mubr.f32.gmra.mrb[0].mxu0 %v5971
    %v9771 = vpop.f32.mrb[0].mxu0
    %v9772 = vadd.f32 0.0, %v9771
    %v9773 = vpop.f32.mrb[0].mxu0
    %9774 = vmatprep.mubr.f32.mxu0 0.0
    %9775 = vmatmul.mubr.f32.gmra.mrb[0].mxu0 %v5973
    %v9776 = vpop.f32.mrb[0].mxu0
    %v9777 = vadd.f32 0.0, %v9776
    %v9778 = vpop.f32.mrb[0].mxu0
    %9779 = vmatprep.mubr.f32.mxu0 0.0
    %9780 = vmatmul.mubr.f32.gmra.mrb[0].mxu0 %v5976
    %v9781 = vpop.f32.mrb[0].mxu0
    %v9782 = vadd.f32 0.0, %v9781
    %v9783 = vpop.f32.mrb[0].mxu0
    %9784 = vmatprep.mubr.f32.mxu0 0.0
    %9785 = vmatmul.mubr.f32.gmra.mrb[0].mxu0 %v5978
    %v9786 = vpop.f32.mrb[0].mxu0
    %v9787 = vadd.f32 0.0, %v9786
    %v9788 = vpop.f32.mrb[0].mxu0
    %9789 = vmatprep.mubr.f32.mxu0 0.0
    %9790 = vmatmul.mubr.f32.gmra.mrb[0].mxu0 %v5981
    %v9791 = vpop.f32.mrb[0].mxu0
    %v9792 = vadd.f32 0.0, %v9791
    %v9793 = vpop.f32.mrb[0].mxu0
    %9794 = vmatprep.mubr.f32.mxu0 0.0
    %9795 = vmatmul.mubr.f32.gmra.mrb[0].mxu0 %v5983
    %v9796 = vpop.f32.mrb[0].mxu0
    %v9797 = vadd.f32 0.0, %v9796
    %v9798 = vpop.f32.mrb[0].mxu0
    %9799 = vmatprep.mubr.f32.mxu0 0.0
    %9800 = vmatmul.mubr.f32.gmra.mrb[0].mxu0 %v5986
    %v9801 = vpop.f32.mrb[0].mxu0
    %v9802 = vadd.f32 0.0, %v9801
    %v9803 = vpop.f32.mrb[0].mxu0
    %9804 = vmatprep.mubr.f32.mxu0 0.0
    %9805 = vmatmul.mubr.f32.gmra.mrb[0].mxu0 %v5988
    %v9806 = vpop.f32.mrb[0].mxu0
    %v9807 = vadd.f32 0.0, %v9806
    %v9808 = vpop.f32.mrb[0].mxu0
    %9809 = vmatprep.mubr.f32.mxu0 0.0
    %9810 = vmatmul.mubr.f32.gmra.mrb[0].mxu0 %v5991
    %v9811 = vpop.f32.mrb[0].mxu0
    %v9812 = vadd.f32 0.0, %v9811
    %v9813 = vpop.f32.mrb[0].mxu0
    %9814 = vmatprep.mubr.f32.mxu0 0.0
    %9815 = vmatmul.mubr.f32.gmra.mrb[0].mxu0 %v5993
    %v9816 = vpop.f32.mrb[0].mxu0
    %v9817 = vadd.f32 0.0, %v9816
    %v9818 = vpop.f32.mrb[0].mxu0
    %9819 = vmatprep.mubr.f32.mxu0 0.0
    %9820 = vmatmul.mubr.f32.gmra.mrb[0].mxu0 %v5996
    %v9821 = vpop.f32.mrb[0].mxu0
    %v9822 = vadd.f32 0.0, %v9821
    %v9823 = vpop.f32.mrb[0].mxu0
    %9824 = vmatprep.mubr.f32.mxu0 0.0
    %9825 = vmatmul.mubr.f32.gmra.mrb[0].mxu0 %v5998
    %v9826 = vpop.f32.mrb[0].mxu0
    %v9827 = vadd.f32 0.0, %v9826
    %v9828 = vpop.f32.mrb[0].mxu0
    %9829 = vmatprep.mubr.f32.mxu0 0.0
    %9830 = vmatmul.mubr.f32.gmra.mrb[0].mxu0 %v6001
    %v9831 = vpop.f32.mrb[0].mxu0
    %v9832 = vadd.f32 0.0, %v9831
    %v9833 = vpop.f32.mrb[0].mxu0
    %9834 = vmatprep.mubr.f32.mxu0 0.0
    %9835 = vmatmul.mubr.f32.gmra.mrb[0].mxu0 %v6003
    %v9836 = vpop.f32.mrb[0].mxu0
    %v9837 = vadd.f32 0.0, %v9836
    %v9838 = vpop.f32.mrb[0].mxu0
    %9839 = vmatprep.mubr.f32.mxu0 0.0
    %9840 = vmatmul.mubr.f32.gmra.mrb[0].mxu0 %v6006
    %v9841 = vpop.f32.mrb[0].mxu0
    %v9842 = vadd.f32 0.0, %v9841
    %v9843 = vpop.f32.mrb[0].mxu0
    %9844 = vmatprep.mubr.f32.mxu0 0.0
    %9845 = vmatmul.mubr.f32.gmra.mrb[0].mxu0 %v6008
    %v9846 = vpop.f32.mrb[0].mxu0
    %v9847 = vadd.f32 0.0, %v9846
    %v9848 = vpop.f32.mrb[0].mxu0
    %9849 = vmatprep.mubr.f32.mxu0 0.0
    %9850 = vmatmul.mubr.f32.gmra.mrb[0].mxu0 %v8029
    %v9851 = vpop.f32.mrb[0].mxu0
    %v9852 = vadd.f32 0.0, %v9851
    %v9853 = vpop.f32.mrb[0].mxu0
    %9854 = vmatprep.mubr.f32.mxu0 0.0
    %9855 = vmatmul.mubr.f32.gmra.mrb[0].mxu0 %v8031
    %v9856 = vpop.f32.mrb[0].mxu0
    %v9857 = vadd.f32 0.0, %v9856
    %v9858 = vpop.f32.mrb[0].mxu0
    %9859 = vmatprep.mubr.f32.mxu0 0.0
    %9860 = vmatmul.mubr.f32.gmra.mrb[0].mxu0 %v9461
    %v9861 = vpop.f32.mrb[0].mxu0
    %v9862 = vadd.f32 0.0, %v9861
    %v9863 = vpop.f32.mrb[0].mxu0
    %9864 = vmatprep.mubr.f32.mxu0 0.0
    %9865 = vmatmul.mubr.f32.gmra.mrb[0].mxu0 %v9463
    %v9866 = vpop.f32.mrb[0].mxu0
    %v9867 = vadd.f32 0.0, %v9866
    %v9868 = vpop.f32.mrb[0].mxu0
    %9869 = vdwg.mxu0
    %v9870 = vadd.f32 %v9384, %v9552
    %v9871 = vadd.f32 %v9385, %v9557
    %v9872 = vadd.f32 %v9386, %v9562
    %v9873 = vadd.f32 %v9387, %v9567
    %v9874 = vadd.f32 %v9388, %v9572
    %v9875 = vadd.f32 %v9389, %v9577
    %v9876 = vadd.f32 %v9390, %v9582
    %v9877 = vadd.f32 %v9391, %v9587
    %v9878 = vadd.f32 %v9392, %v9592
    %v9879 = vadd.f32 %v9393, %v9597
    %v9880 = vadd.f32 %v9394, %v9602
    %v9881 = vadd.f32 %v9395, %v9607
    %v9882 = vadd.f32 %v9396, %v9612
    %v9883 = vadd.f32 %v9397, %v9617
    %v9884 = vadd.f32 %v9398, %v9622
    %v9885 = vadd.f32 %v9399, %v9627
    %v9886 = vadd.f32 %v9400, %v9632
    %v9887 = vadd.f32 %v9401, %v9637
    %v9888 = vadd.f32 %v9402, %v9642
    %v9889 = vadd.f32 %v9403, %v9647
    %v9890 = vadd.f32 %v9404, %v9652
    %v9891 = vadd.f32 %v9405, %v9657
    %v9892 = vadd.f32 %v9406, %v9662
    %v9893 = vadd.f32 %v9407, %v9667
    %v9894 = vadd.f32 %v9408, %v9672
    %v9895 = vadd.f32 %v9409, %v9677
    %v9896 = vadd.f32 %v9410, %v9682
    %v9897 = vadd.f32 %v9411, %v9687
    %v9898 = vadd.f32 %v9412, %v9692
    %v9899 = vadd.f32 %v9413, %v9697
    %v9900 = vadd.f32 %v9414, %v9702
    %v9901 = vadd.f32 %v9415, %v9707
    %v9902 = vadd.f32 %v9416, %v9712
    %v9903 = vadd.f32 %v9417, %v9717
    %v9904 = vadd.f32 %v9418, %v9722
    %v9905 = vadd.f32 %v9419, %v9727
    %v9906 = vadd.f32 %v9420, %v9732
    %v9907 = vadd.f32 %v9421, %v9737
    %v9908 = vadd.f32 %v9422, %v9742
    %v9909 = vadd.f32 %v9423, %v9747
    %v9910 = vadd.f32 %v9424, %v9752
    %v9911 = vadd.f32 %v9425, %v9757
    %v9912 = vadd.f32 %v9426, %v9762
    %v9913 = vadd.f32 %v9427, %v9767
    %v9914 = vadd.f32 %v9428, %v9772
    %v9915 = vadd.f32 %v9429, %v9777
    %v9916 = vadd.f32 %v9430, %v9782
    %v9917 = vadd.f32 %v9431, %v9787
    %v9918 = vadd.f32 %v9432, %v9792
    %v9919 = vadd.f32 %v9433, %v9797
    %v9920 = vadd.f32 %v9434, %v9802
    %v9921 = vadd.f32 %v9435, %v9807
    %v9922 = vadd.f32 %v9436, %v9812
    %v9923 = vadd.f32 %v9437, %v9817
    %v9924 = vadd.f32 %v9438, %v9822
    %v9925 = vadd.f32 %v9439, %v9827
    %v9926 = vadd.f32 %v9440, %v9832
    %v9927 = vadd.f32 %v9441, %v9837
    %v9928 = vadd.f32 %v9442, %v9842
    %v9929 = vadd.f32 %v9443, %v9847
    %v9930 = vadd.f32 %v9444, %v9852
    %v9931 = vadd.f32 %v9445, %v9857
    %v9932 = vadd.f32 %v9446, %v9862
    %v9933 = vadd.f32 %v9447, %v9867
    %v9934 = vrot.slane %v5680, 2
    %v9935 = vrot.slane %v5681, 2
    %v9936 = vsel %vm1283, %v9934, %v9935
    %v9937 = vrot.slane %v5682, 2
    %v9938 = vsel %vm1283, %v9935, %v9937
    %v9939 = vrot.slane %v5734, 2
    %v9940 = vrot.slane %v5735, 2
    %v9941 = vsel %vm1283, %v9939, %v9940
    %v9942 = vrot.slane %v5736, 2
    %v9943 = vsel %vm1283, %v9940, %v9942
    %s9948 = scalar_lea.vmem [#allocation4], 1024
    %v9949 = vld [vmem:[%s9948] sm:$0xff]
    %v9950 = vld [vmem:[%s9948 + $0x8] sm:$0xff]
    %v9951 = vld [vmem:[%s9948 + $0x10] sm:$0xff]
    %v9952 = vld [vmem:[%s9948 + $0x18] sm:$0xff]
    %v9953 = vld [vmem:[%s9948 + $0x20] sm:$0xff]
    %v9954 = vld [vmem:[%s9948 + $0x28] sm:$0xff]
    %v9955 = vld [vmem:[%s9948 + $0x30] sm:$0xff]
    %v9956 = vld [vmem:[%s9948 + $0x38] sm:$0xff]
    %v9957 = vld [vmem:[%s9948 + $0x40] sm:$0xff]
    %v9958 = vld [vmem:[%s9948 + $0x48] sm:$0xff]
    %v9959 = vld [vmem:[%s9948 + $0x50] sm:$0xff]
    %v9960 = vld [vmem:[%s9948 + $0x58] sm:$0xff]
    %v9961 = vld [vmem:[%s9948 + $0x60] sm:$0xff]
    %v9962 = vld [vmem:[%s9948 + $0x68] sm:$0xff]
    %v9963 = vld [vmem:[%s9948 + $0x70] sm:$0xff]
    %v9964 = vld [vmem:[%s9948 + $0x78] sm:$0xff]
    %9965 = vmatprep.subr.mxu0 0.0
    %9966 = vmatpush1.msra.mxu0 %v9949
    %9967 = vmatprep.subr.mxu0 0.0
    %9968 = vmatpush1.msra.mxu0 %v9950
    %9969 = vmatprep.subr.mxu0 0.0
    %9970 = vmatpush1.msra.mxu0 %v9951
    %9971 = vmatprep.subr.mxu0 0.0
    %9972 = vmatpush1.msra.mxu0 %v9952
    %9973 = vmatprep.subr.mxu0 0.0
    %9974 = vmatpush1.msra.mxu0 %v9953
    %9975 = vmatprep.subr.mxu0 0.0
    %9976 = vmatpush1.msra.mxu0 %v9954
    %9977 = vmatprep.subr.mxu0 0.0
    %9978 = vmatpush1.msra.mxu0 %v9955
    %9979 = vmatprep.subr.mxu0 0.0
    %9980 = vmatpush1.msra.mxu0 %v9956
    %9981 = vmatprep.subr.mxu0 0.0
    %9982 = vmatpush1.msra.mxu0 %v9957
    %9983 = vmatprep.subr.mxu0 0.0
    %9984 = vmatpush1.msra.mxu0 %v9958
    %9985 = vmatprep.subr.mxu0 0.0
    %9986 = vmatpush1.msra.mxu0 %v9959
    %9987 = vmatprep.subr.mxu0 0.0
    %9988 = vmatpush1.msra.mxu0 %v9960
    %9989 = vmatprep.subr.mxu0 0.0
    %9990 = vmatpush1.msra.mxu0 %v9961
    %9991 = vmatprep.subr.mxu0 0.0
    %9992 = vmatpush1.msra.mxu0 %v9962
    %9993 = vmatprep.subr.mxu0 0.0
    %9994 = vmatpush1.msra.mxu0 %v9963
    %9995 = vmatprep.subr.mxu0 0.0
    %9996 = vmatpush1.msra.mxu0 %v9964
    %9997 = vmatprep.subr.mxu0 0.0
    %9998 = vmatpush1.msra.mxu0 0.0
    %9999 = vmatprep.subr.mxu0 0.0
    %10000 = vmatpush1.msra.mxu0 0.0
    %10001 = vmatprep.subr.mxu0 0.0
    %10002 = vmatpush1.msra.mxu0 0.0
    %10003 = vmatprep.subr.mxu0 0.0
    %10004 = vmatpush1.msra.mxu0 0.0
    %10005 = vmatprep.subr.mxu0 0.0
    %10006 = vmatpush1.msra.mxu0 0.0
    %10007 = vmatprep.subr.mxu0 0.0
    %10008 = vmatpush1.msra.mxu0 0.0
    %10009 = vmatprep.subr.mxu0 0.0
    %10010 = vmatpush1.msra.mxu0 0.0
    %10011 = vmatprep.subr.mxu0 0.0
    %10012 = vmatpush1.msra.mxu0 0.0
    %10013 = vmatprep.subr.mxu0 0.0
    %10014 = vmatpush1.msra.mxu0 0.0
    %10015 = vmatprep.subr.mxu0 0.0
    %10016 = vmatpush1.msra.mxu0 0.0
    %10017 = vmatprep.subr.mxu0 0.0
    %10018 = vmatpush1.msra.mxu0 0.0
    %10019 = vmatprep.subr.mxu0 0.0
    %10020 = vmatpush1.msra.mxu0 0.0
    %10021 = vmatprep.subr.mxu0 0.0
    %10022 = vmatpush1.msra.mxu0 0.0
    %10023 = vmatprep.subr.mxu0 0.0
    %10024 = vmatpush1.msra.mxu0 0.0
    %10025 = vmatprep.subr.mxu0 0.0
    %10026 = vmatpush1.msra.mxu0 0.0
    %10027 = vmatprep.subr.mxu0 0.0
    %10028 = vmatpush1.msra.mxu0 0.0
    %10029 = vmatprep.mubr.f32.mxu0 0.0
    %10030 = vmatmul.mubr.f32.gmra.mrb[0].mxu0 %v6872
    %v10031 = vpop.f32.mrb[0].mxu0
    %v10032 = vadd.f32 0.0, %v10031
    %v10033 = vpop.f32.mrb[0].mxu0
    %10034 = vmatprep.mubr.f32.mxu0 0.0
    %10035 = vmatmul.mubr.f32.gmra.mrb[0].mxu0 %v6874
    %v10036 = vpop.f32.mrb[0].mxu0
    %v10037 = vadd.f32 0.0, %v10036
    %v10038 = vpop.f32.mrb[0].mxu0
    %10039 = vmatprep.mubr.f32.mxu0 0.0
    %10040 = vmatmul.mubr.f32.gmra.mrb[0].mxu0 %v6877
    %v10041 = vpop.f32.mrb[0].mxu0
    %v10042 = vadd.f32 0.0, %v10041
    %v10043 = vpop.f32.mrb[0].mxu0
    %10044 = vmatprep.mubr.f32.mxu0 0.0
    %10045 = vmatmul.mubr.f32.gmra.mrb[0].mxu0 %v6879
    %v10046 = vpop.f32.mrb[0].mxu0
    %v10047 = vadd.f32 0.0, %v10046
    %v10048 = vpop.f32.mrb[0].mxu0
    %10049 = vmatprep.mubr.f32.mxu0 0.0
    %10050 = vmatmul.mubr.f32.gmra.mrb[0].mxu0 %v6882
    %v10051 = vpop.f32.mrb[0].mxu0
    %v10052 = vadd.f32 0.0, %v10051
    %v10053 = vpop.f32.mrb[0].mxu0
    %10054 = vmatprep.mubr.f32.mxu0 0.0
    %10055 = vmatmul.mubr.f32.gmra.mrb[0].mxu0 %v6884
    %v10056 = vpop.f32.mrb[0].mxu0
    %v10057 = vadd.f32 0.0, %v10056
    %v10058 = vpop.f32.mrb[0].mxu0
    %10059 = vmatprep.mubr.f32.mxu0 0.0
    %10060 = vmatmul.mubr.f32.gmra.mrb[0].mxu0 %v6887
    %v10061 = vpop.f32.mrb[0].mxu0
    %v10062 = vadd.f32 0.0, %v10061
    %v10063 = vpop.f32.mrb[0].mxu0
    %10064 = vmatprep.mubr.f32.mxu0 0.0
    %10065 = vmatmul.mubr.f32.gmra.mrb[0].mxu0 %v6889
    %v10066 = vpop.f32.mrb[0].mxu0
    %v10067 = vadd.f32 0.0, %v10066
    %v10068 = vpop.f32.mrb[0].mxu0
    %10069 = vmatprep.mubr.f32.mxu0 0.0
    %10070 = vmatmul.mubr.f32.gmra.mrb[0].mxu0 %v6892
    %v10071 = vpop.f32.mrb[0].mxu0
    %v10072 = vadd.f32 0.0, %v10071
    %v10073 = vpop.f32.mrb[0].mxu0
    %10074 = vmatprep.mubr.f32.mxu0 0.0
    %10075 = vmatmul.mubr.f32.gmra.mrb[0].mxu0 %v6894
    %v10076 = vpop.f32.mrb[0].mxu0
    %v10077 = vadd.f32 0.0, %v10076
    %v10078 = vpop.f32.mrb[0].mxu0
    %10079 = vmatprep.mubr.f32.mxu0 0.0
    %10080 = vmatmul.mubr.f32.gmra.mrb[0].mxu0 %v6897
    %v10081 = vpop.f32.mrb[0].mxu0
    %v10082 = vadd.f32 0.0, %v10081
    %v10083 = vpop.f32.mrb[0].mxu0
    %10084 = vmatprep.mubr.f32.mxu0 0.0
    %10085 = vmatmul.mubr.f32.gmra.mrb[0].mxu0 %v6899
    %v10086 = vpop.f32.mrb[0].mxu0
    %v10087 = vadd.f32 0.0, %v10086
    %v10088 = vpop.f32.mrb[0].mxu0
    %10089 = vmatprep.mubr.f32.mxu0 0.0
    %10090 = vmatmul.mubr.f32.gmra.mrb[0].mxu0 %v6902
    %v10091 = vpop.f32.mrb[0].mxu0
    %v10092 = vadd.f32 0.0, %v10091
    %v10093 = vpop.f32.mrb[0].mxu0
    %10094 = vmatprep.mubr.f32.mxu0 0.0
    %10095 = vmatmul.mubr.f32.gmra.mrb[0].mxu0 %v6904
    %v10096 = vpop.f32.mrb[0].mxu0
    %v10097 = vadd.f32 0.0, %v10096
    %v10098 = vpop.f32.mrb[0].mxu0
    %10099 = vmatprep.mubr.f32.mxu0 0.0
    %10100 = vmatmul.mubr.f32.gmra.mrb[0].mxu0 %v6907
    %v10101 = vpop.f32.mrb[0].mxu0
    %v10102 = vadd.f32 0.0, %v10101
    %v10103 = vpop.f32.mrb[0].mxu0
    %10104 = vmatprep.mubr.f32.mxu0 0.0
    %10105 = vmatmul.mubr.f32.gmra.mrb[0].mxu0 %v6909
    %v10106 = vpop.f32.mrb[0].mxu0
    %v10107 = vadd.f32 0.0, %v10106
    %v10108 = vpop.f32.mrb[0].mxu0
    %10109 = vmatprep.mubr.f32.mxu0 0.0
    %10110 = vmatmul.mubr.f32.gmra.mrb[0].mxu0 %v6912
    %v10111 = vpop.f32.mrb[0].mxu0
    %v10112 = vadd.f32 0.0, %v10111
    %v10113 = vpop.f32.mrb[0].mxu0
    %10114 = vmatprep.mubr.f32.mxu0 0.0
    %10115 = vmatmul.mubr.f32.gmra.mrb[0].mxu0 %v6914
    %v10116 = vpop.f32.mrb[0].mxu0
    %v10117 = vadd.f32 0.0, %v10116
    %v10118 = vpop.f32.mrb[0].mxu0
    %10119 = vmatprep.mubr.f32.mxu0 0.0
    %10120 = vmatmul.mubr.f32.gmra.mrb[0].mxu0 %v6917
    %v10121 = vpop.f32.mrb[0].mxu0
    %v10122 = vadd.f32 0.0, %v10121
    %v10123 = vpop.f32.mrb[0].mxu0
    %10124 = vmatprep.mubr.f32.mxu0 0.0
    %10125 = vmatmul.mubr.f32.gmra.mrb[0].mxu0 %v6919
    %v10126 = vpop.f32.mrb[0].mxu0
    %v10127 = vadd.f32 0.0, %v10126
    %v10128 = vpop.f32.mrb[0].mxu0
    %10129 = vmatprep.mubr.f32.mxu0 0.0
    %10130 = vmatmul.mubr.f32.gmra.mrb[0].mxu0 %v6922
    %v10131 = vpop.f32.mrb[0].mxu0
    %v10132 = vadd.f32 0.0, %v10131
    %v10133 = vpop.f32.mrb[0].mxu0
    %10134 = vmatprep.mubr.f32.mxu0 0.0
    %10135 = vmatmul.mubr.f32.gmra.mrb[0].mxu0 %v6924
    %v10136 = vpop.f32.mrb[0].mxu0
    %v10137 = vadd.f32 0.0, %v10136
    %v10138 = vpop.f32.mrb[0].mxu0
    %10139 = vmatprep.mubr.f32.mxu0 0.0
    %10140 = vmatmul.mubr.f32.gmra.mrb[0].mxu0 %v6927
    %v10141 = vpop.f32.mrb[0].mxu0
    %v10142 = vadd.f32 0.0, %v10141
    %v10143 = vpop.f32.mrb[0].mxu0
    %10144 = vmatprep.mubr.f32.mxu0 0.0
    %10145 = vmatmul.mubr.f32.gmra.mrb[0].mxu0 %v6929
    %v10146 = vpop.f32.mrb[0].mxu0
    %v10147 = vadd.f32 0.0, %v10146
    %v10148 = vpop.f32.mrb[0].mxu0
    %10149 = vmatprep.mubr.f32.mxu0 0.0
    %10150 = vmatmul.mubr.f32.gmra.mrb[0].mxu0 %v6932
    %v10151 = vpop.f32.mrb[0].mxu0
    %v10152 = vadd.f32 0.0, %v10151
    %v10153 = vpop.f32.mrb[0].mxu0
    %10154 = vmatprep.mubr.f32.mxu0 0.0
    %10155 = vmatmul.mubr.f32.gmra.mrb[0].mxu0 %v6934
    %v10156 = vpop.f32.mrb[0].mxu0
    %v10157 = vadd.f32 0.0, %v10156
    %v10158 = vpop.f32.mrb[0].mxu0
    %10159 = vmatprep.mubr.f32.mxu0 0.0
    %10160 = vmatmul.mubr.f32.gmra.mrb[0].mxu0 %v6937
    %v10161 = vpop.f32.mrb[0].mxu0
    %v10162 = vadd.f32 0.0, %v10161
    %v10163 = vpop.f32.mrb[0].mxu0
    %10164 = vmatprep.mubr.f32.mxu0 0.0
    %10165 = vmatmul.mubr.f32.gmra.mrb[0].mxu0 %v6939
    %v10166 = vpop.f32.mrb[0].mxu0
    %v10167 = vadd.f32 0.0, %v10166
    %v10168 = vpop.f32.mrb[0].mxu0
    %10169 = vmatprep.mubr.f32.mxu0 0.0
    %10170 = vmatmul.mubr.f32.gmra.mrb[0].mxu0 %v8504
    %v10171 = vpop.f32.mrb[0].mxu0
    %v10172 = vadd.f32 0.0, %v10171
    %v10173 = vpop.f32.mrb[0].mxu0
    %10174 = vmatprep.mubr.f32.mxu0 0.0
    %10175 = vmatmul.mubr.f32.gmra.mrb[0].mxu0 %v8506
    %v10176 = vpop.f32.mrb[0].mxu0
    %v10177 = vadd.f32 0.0, %v10176
    %v10178 = vpop.f32.mrb[0].mxu0
    %10179 = vmatprep.mubr.f32.mxu0 0.0
    %10180 = vmatmul.mubr.f32.gmra.mrb[0].mxu0 %v9936
    %v10181 = vpop.f32.mrb[0].mxu0
    %v10182 = vadd.f32 0.0, %v10181
    %v10183 = vpop.f32.mrb[0].mxu0
    %10184 = vmatprep.mubr.f32.mxu0 0.0
    %10185 = vmatmul.mubr.f32.gmra.mrb[0].mxu0 %v9938
    %v10186 = vpop.f32.mrb[0].mxu0
    %v10187 = vadd.f32 0.0, %v10186
    %v10188 = vpop.f32.mrb[0].mxu0
    %10189 = vmatprep.mubr.f32.mxu0 0.0
    %10190 = vmatmul.mubr.f32.gmra.mrb[0].mxu0 %v6952
    %v10191 = vpop.f32.mrb[0].mxu0
    %v10192 = vadd.f32 0.0, %v10191
    %v10193 = vpop.f32.mrb[0].mxu0
    %10194 = vmatprep.mubr.f32.mxu0 0.0
    %10195 = vmatmul.mubr.f32.gmra.mrb[0].mxu0 %v6954
    %v10196 = vpop.f32.mrb[0].mxu0
    %v10197 = vadd.f32 0.0, %v10196
    %v10198 = vpop.f32.mrb[0].mxu0
    %10199 = vmatprep.mubr.f32.mxu0 0.0
    %10200 = vmatmul.mubr.f32.gmra.mrb[0].mxu0 %v6957
    %v10201 = vpop.f32.mrb[0].mxu0
    %v10202 = vadd.f32 0.0, %v10201
    %v10203 = vpop.f32.mrb[0].mxu0
    %10204 = vmatprep.mubr.f32.mxu0 0.0
    %10205 = vmatmul.mubr.f32.gmra.mrb[0].mxu0 %v6959
    %v10206 = vpop.f32.mrb[0].mxu0
    %v10207 = vadd.f32 0.0, %v10206
    %v10208 = vpop.f32.mrb[0].mxu0
    %10209 = vmatprep.mubr.f32.mxu0 0.0
    %10210 = vmatmul.mubr.f32.gmra.mrb[0].mxu0 %v6962
    %v10211 = vpop.f32.mrb[0].mxu0
    %v10212 = vadd.f32 0.0, %v10211
    %v10213 = vpop.f32.mrb[0].mxu0
    %10214 = vmatprep.mubr.f32.mxu0 0.0
    %10215 = vmatmul.mubr.f32.gmra.mrb[0].mxu0 %v6964
    %v10216 = vpop.f32.mrb[0].mxu0
    %v10217 = vadd.f32 0.0, %v10216
    %v10218 = vpop.f32.mrb[0].mxu0
    %10219 = vmatprep.mubr.f32.mxu0 0.0
    %10220 = vmatmul.mubr.f32.gmra.mrb[0].mxu0 %v6967
    %v10221 = vpop.f32.mrb[0].mxu0
    %v10222 = vadd.f32 0.0, %v10221
    %v10223 = vpop.f32.mrb[0].mxu0
    %10224 = vmatprep.mubr.f32.mxu0 0.0
    %10225 = vmatmul.mubr.f32.gmra.mrb[0].mxu0 %v6969
    %v10226 = vpop.f32.mrb[0].mxu0
    %v10227 = vadd.f32 0.0, %v10226
    %v10228 = vpop.f32.mrb[0].mxu0
    %10229 = vmatprep.mubr.f32.mxu0 0.0
    %10230 = vmatmul.mubr.f32.gmra.mrb[0].mxu0 %v6972
    %v10231 = vpop.f32.mrb[0].mxu0
    %v10232 = vadd.f32 0.0, %v10231
    %v10233 = vpop.f32.mrb[0].mxu0
    %10234 = vmatprep.mubr.f32.mxu0 0.0
    %10235 = vmatmul.mubr.f32.gmra.mrb[0].mxu0 %v6974
    %v10236 = vpop.f32.mrb[0].mxu0
    %v10237 = vadd.f32 0.0, %v10236
    %v10238 = vpop.f32.mrb[0].mxu0
    %10239 = vmatprep.mubr.f32.mxu0 0.0
    %10240 = vmatmul.mubr.f32.gmra.mrb[0].mxu0 %v6977
    %v10241 = vpop.f32.mrb[0].mxu0
    %v10242 = vadd.f32 0.0, %v10241
    %v10243 = vpop.f32.mrb[0].mxu0
    %10244 = vmatprep.mubr.f32.mxu0 0.0
    %10245 = vmatmul.mubr.f32.gmra.mrb[0].mxu0 %v6979
    %v10246 = vpop.f32.mrb[0].mxu0
    %v10247 = vadd.f32 0.0, %v10246
    %v10248 = vpop.f32.mrb[0].mxu0
    %10249 = vmatprep.mubr.f32.mxu0 0.0
    %10250 = vmatmul.mubr.f32.gmra.mrb[0].mxu0 %v6982
    %v10251 = vpop.f32.mrb[0].mxu0
    %v10252 = vadd.f32 0.0, %v10251
    %v10253 = vpop.f32.mrb[0].mxu0
    %10254 = vmatprep.mubr.f32.mxu0 0.0
    %10255 = vmatmul.mubr.f32.gmra.mrb[0].mxu0 %v6984
    %v10256 = vpop.f32.mrb[0].mxu0
    %v10257 = vadd.f32 0.0, %v10256
    %v10258 = vpop.f32.mrb[0].mxu0
    %10259 = vmatprep.mubr.f32.mxu0 0.0
    %10260 = vmatmul.mubr.f32.gmra.mrb[0].mxu0 %v6987
    %v10261 = vpop.f32.mrb[0].mxu0
    %v10262 = vadd.f32 0.0, %v10261
    %v10263 = vpop.f32.mrb[0].mxu0
    %10264 = vmatprep.mubr.f32.mxu0 0.0
    %10265 = vmatmul.mubr.f32.gmra.mrb[0].mxu0 %v6989
    %v10266 = vpop.f32.mrb[0].mxu0
    %v10267 = vadd.f32 0.0, %v10266
    %v10268 = vpop.f32.mrb[0].mxu0
    %10269 = vmatprep.mubr.f32.mxu0 0.0
    %10270 = vmatmul.mubr.f32.gmra.mrb[0].mxu0 %v6992
    %v10271 = vpop.f32.mrb[0].mxu0
    %v10272 = vadd.f32 0.0, %v10271
    %v10273 = vpop.f32.mrb[0].mxu0
    %10274 = vmatprep.mubr.f32.mxu0 0.0
    %10275 = vmatmul.mubr.f32.gmra.mrb[0].mxu0 %v6994
    %v10276 = vpop.f32.mrb[0].mxu0
    %v10277 = vadd.f32 0.0, %v10276
    %v10278 = vpop.f32.mrb[0].mxu0
    %10279 = vmatprep.mubr.f32.mxu0 0.0
    %10280 = vmatmul.mubr.f32.gmra.mrb[0].mxu0 %v6997
    %v10281 = vpop.f32.mrb[0].mxu0
    %v10282 = vadd.f32 0.0, %v10281
    %v10283 = vpop.f32.mrb[0].mxu0
    %10284 = vmatprep.mubr.f32.mxu0 0.0
    %10285 = vmatmul.mubr.f32.gmra.mrb[0].mxu0 %v6999
    %v10286 = vpop.f32.mrb[0].mxu0
    %v10287 = vadd.f32 0.0, %v10286
    %v10288 = vpop.f32.mrb[0].mxu0
    %10289 = vmatprep.mubr.f32.mxu0 0.0
    %10290 = vmatmul.mubr.f32.gmra.mrb[0].mxu0 %v7002
    %v10291 = vpop.f32.mrb[0].mxu0
    %v10292 = vadd.f32 0.0, %v10291
    %v10293 = vpop.f32.mrb[0].mxu0
    %10294 = vmatprep.mubr.f32.mxu0 0.0
    %10295 = vmatmul.mubr.f32.gmra.mrb[0].mxu0 %v7004
    %v10296 = vpop.f32.mrb[0].mxu0
    %v10297 = vadd.f32 0.0, %v10296
    %v10298 = vpop.f32.mrb[0].mxu0
    %10299 = vmatprep.mubr.f32.mxu0 0.0
    %10300 = vmatmul.mubr.f32.gmra.mrb[0].mxu0 %v7007
    %v10301 = vpop.f32.mrb[0].mxu0
    %v10302 = vadd.f32 0.0, %v10301
    %v10303 = vpop.f32.mrb[0].mxu0
    %10304 = vmatprep.mubr.f32.mxu0 0.0
    %10305 = vmatmul.mubr.f32.gmra.mrb[0].mxu0 %v7009
    %v10306 = vpop.f32.mrb[0].mxu0
    %v10307 = vadd.f32 0.0, %v10306
    %v10308 = vpop.f32.mrb[0].mxu0
    %10309 = vmatprep.mubr.f32.mxu0 0.0
    %10310 = vmatmul.mubr.f32.gmra.mrb[0].mxu0 %v7012
    %v10311 = vpop.f32.mrb[0].mxu0
    %v10312 = vadd.f32 0.0, %v10311
    %v10313 = vpop.f32.mrb[0].mxu0
    %10314 = vmatprep.mubr.f32.mxu0 0.0
    %10315 = vmatmul.mubr.f32.gmra.mrb[0].mxu0 %v7014
    %v10316 = vpop.f32.mrb[0].mxu0
    %v10317 = vadd.f32 0.0, %v10316
    %v10318 = vpop.f32.mrb[0].mxu0
    %10319 = vmatprep.mubr.f32.mxu0 0.0
    %10320 = vmatmul.mubr.f32.gmra.mrb[0].mxu0 %v7017
    %v10321 = vpop.f32.mrb[0].mxu0
    %v10322 = vadd.f32 0.0, %v10321
    %v10323 = vpop.f32.mrb[0].mxu0
    %10324 = vmatprep.mubr.f32.mxu0 0.0
    %10325 = vmatmul.mubr.f32.gmra.mrb[0].mxu0 %v7019
    %v10326 = vpop.f32.mrb[0].mxu0
    %v10327 = vadd.f32 0.0, %v10326
    %v10328 = vpop.f32.mrb[0].mxu0
    %10329 = vmatprep.mubr.f32.mxu0 0.0
    %10330 = vmatmul.mubr.f32.gmra.mrb[0].mxu0 %v8509
    %v10331 = vpop.f32.mrb[0].mxu0
    %v10332 = vadd.f32 0.0, %v10331
    %v10333 = vpop.f32.mrb[0].mxu0
    %10334 = vmatprep.mubr.f32.mxu0 0.0
    %10335 = vmatmul.mubr.f32.gmra.mrb[0].mxu0 %v8511
    %v10336 = vpop.f32.mrb[0].mxu0
    %v10337 = vadd.f32 0.0, %v10336
    %v10338 = vpop.f32.mrb[0].mxu0
    %10339 = vmatprep.mubr.f32.mxu0 0.0
    %10340 = vmatmul.mubr.f32.gmra.mrb[0].mxu0 %v9941
    %v10341 = vpop.f32.mrb[0].mxu0
    %v10342 = vadd.f32 0.0, %v10341
    %v10343 = vpop.f32.mrb[0].mxu0
    %10344 = vmatprep.mubr.f32.mxu0 0.0
    %10345 = vmatmul.mubr.f32.gmra.mrb[0].mxu0 %v9943
    %v10346 = vpop.f32.mrb[0].mxu0
    %v10347 = vadd.f32 0.0, %v10346
    %v10348 = vpop.f32.mrb[0].mxu0
    %10349 = vdwg.mxu0
    %v10350 = vadd.f32 %v9870, %v10032
    %v10351 = vadd.f32 %v9871, %v10037
    %v10352 = vadd.f32 %v9872, %v10042
    %v10353 = vadd.f32 %v9873, %v10047
    %v10354 = vadd.f32 %v9874, %v10052
    %v10355 = vadd.f32 %v9875, %v10057
    %v10356 = vadd.f32 %v9876, %v10062
    %v10357 = vadd.f32 %v9877, %v10067
    %v10358 = vadd.f32 %v9878, %v10072
    %v10359 = vadd.f32 %v9879, %v10077
    %v10360 = vadd.f32 %v9880, %v10082
    %v10361 = vadd.f32 %v9881, %v10087
    %v10362 = vadd.f32 %v9882, %v10092
    %v10363 = vadd.f32 %v9883, %v10097
    %v10364 = vadd.f32 %v9884, %v10102
    %v10365 = vadd.f32 %v9885, %v10107
    %v10366 = vadd.f32 %v9886, %v10112
    %v10367 = vadd.f32 %v9887, %v10117
    %v10368 = vadd.f32 %v9888, %v10122
    %v10369 = vadd.f32 %v9889, %v10127
    %v10370 = vadd.f32 %v9890, %v10132
    %v10371 = vadd.f32 %v9891, %v10137
    %v10372 = vadd.f32 %v9892, %v10142
    %v10373 = vadd.f32 %v9893, %v10147
    %v10374 = vadd.f32 %v9894, %v10152
    %v10375 = vadd.f32 %v9895, %v10157
    %v10376 = vadd.f32 %v9896, %v10162
    %v10377 = vadd.f32 %v9897, %v10167
    %v10378 = vadd.f32 %v9898, %v10172
    %v10379 = vadd.f32 %v9899, %v10177
    %v10380 = vadd.f32 %v9900, %v10182
    %v10381 = vadd.f32 %v9901, %v10187
    %v10382 = vadd.f32 %v9902, %v10192
    %v10383 = vadd.f32 %v9903, %v10197
    %v10384 = vadd.f32 %v9904, %v10202
    %v10385 = vadd.f32 %v9905, %v10207
    %v10386 = vadd.f32 %v9906, %v10212
    %v10387 = vadd.f32 %v9907, %v10217
    %v10388 = vadd.f32 %v9908, %v10222
    %v10389 = vadd.f32 %v9909, %v10227
    %v10390 = vadd.f32 %v9910, %v10232
    %v10391 = vadd.f32 %v9911, %v10237
    %v10392 = vadd.f32 %v9912, %v10242
    %v10393 = vadd.f32 %v9913, %v10247
    %v10394 = vadd.f32 %v9914, %v10252
    %v10395 = vadd.f32 %v9915, %v10257
    %v10396 = vadd.f32 %v9916, %v10262
    %v10397 = vadd.f32 %v9917, %v10267
    %v10398 = vadd.f32 %v9918, %v10272
    %v10399 = vadd.f32 %v9919, %v10277
    %v10400 = vadd.f32 %v9920, %v10282
    %v10401 = vadd.f32 %v9921, %v10287
    %v10402 = vadd.f32 %v9922, %v10292
    %v10403 = vadd.f32 %v9923, %v10297
    %v10404 = vadd.f32 %v9924, %v10302
    %v10405 = vadd.f32 %v9925, %v10307
    %v10406 = vadd.f32 %v9926, %v10312
    %v10407 = vadd.f32 %v9927, %v10317
    %v10408 = vadd.f32 %v9928, %v10322
    %v10409 = vadd.f32 %v9929, %v10327
    %v10410 = vadd.f32 %v9930, %v10332
    %v10411 = vadd.f32 %v9931, %v10337
    %v10412 = vadd.f32 %v9932, %v10342
    %v10413 = vadd.f32 %v9933, %v10347
    %v10414 = vld [vmem:[%s6] sm:$0x1]
    %v10416 = vlaneseq
    %v10417 = vshrl.u32 %v10416, 7
    %v10418 = vsub.s32 0, %v10417
    %v10419 = vrot.slane %v10414, %v10418
    %v10421 = vadd.f32 %v10350, %v10419
    %v10422 = vadd.f32 %v10351, %v10419
    %v10423 = vadd.f32 %v10352, %v10419
    %v10424 = vadd.f32 %v10353, %v10419
    %v10425 = vadd.f32 %v10354, %v10419
    %v10426 = vadd.f32 %v10355, %v10419
    %v10427 = vadd.f32 %v10356, %v10419
    %v10428 = vadd.f32 %v10357, %v10419
    %v10429 = vadd.f32 %v10358, %v10419
    %v10430 = vadd.f32 %v10359, %v10419
    %v10431 = vadd.f32 %v10360, %v10419
    %v10432 = vadd.f32 %v10361, %v10419
    %v10433 = vadd.f32 %v10362, %v10419
    %v10434 = vadd.f32 %v10363, %v10419
    %v10435 = vadd.f32 %v10364, %v10419
    %v10436 = vadd.f32 %v10365, %v10419
    %v10437 = vadd.f32 %v10366, %v10419
    %v10438 = vadd.f32 %v10367, %v10419
    %v10439 = vadd.f32 %v10368, %v10419
    %v10440 = vadd.f32 %v10369, %v10419
    %v10441 = vadd.f32 %v10370, %v10419
    %v10442 = vadd.f32 %v10371, %v10419
    %v10443 = vadd.f32 %v10372, %v10419
    %v10444 = vadd.f32 %v10373, %v10419
    %v10445 = vadd.f32 %v10374, %v10419
    %v10446 = vadd.f32 %v10375, %v10419
    %v10447 = vadd.f32 %v10376, %v10419
    %v10448 = vadd.f32 %v10377, %v10419
    %v10449 = vadd.f32 %v10378, %v10419
    %v10450 = vadd.f32 %v10379, %v10419
    %v10451 = vadd.f32 %v10380, %v10419
    %v10452 = vadd.f32 %v10381, %v10419
    %v10453 = vadd.f32 %v10382, %v10419
    %v10454 = vadd.f32 %v10383, %v10419
    %v10455 = vadd.f32 %v10384, %v10419
    %v10456 = vadd.f32 %v10385, %v10419
    %v10457 = vadd.f32 %v10386, %v10419
    %v10458 = vadd.f32 %v10387, %v10419
    %v10459 = vadd.f32 %v10388, %v10419
    %v10460 = vadd.f32 %v10389, %v10419
    %v10461 = vadd.f32 %v10390, %v10419
    %v10462 = vadd.f32 %v10391, %v10419
    %v10463 = vadd.f32 %v10392, %v10419
    %v10464 = vadd.f32 %v10393, %v10419
    %v10465 = vadd.f32 %v10394, %v10419
    %v10466 = vadd.f32 %v10395, %v10419
    %v10467 = vadd.f32 %v10396, %v10419
    %v10468 = vadd.f32 %v10397, %v10419
    %v10469 = vadd.f32 %v10398, %v10419
    %v10470 = vadd.f32 %v10399, %v10419
    %v10471 = vadd.f32 %v10400, %v10419
    %v10472 = vadd.f32 %v10401, %v10419
    %v10473 = vadd.f32 %v10402, %v10419
    %v10474 = vadd.f32 %v10403, %v10419
    %v10475 = vadd.f32 %v10404, %v10419
    %v10476 = vadd.f32 %v10405, %v10419
    %v10477 = vadd.f32 %v10406, %v10419
    %v10478 = vadd.f32 %v10407, %v10419
    %v10479 = vadd.f32 %v10408, %v10419
    %v10480 = vadd.f32 %v10409, %v10419
    %v10481 = vadd.f32 %v10410, %v10419
    %v10482 = vadd.f32 %v10411, %v10419
    %v10483 = vadd.f32 %v10412, %v10419
    %v10484 = vadd.f32 %v10413, %v10419
    %v10485 = vadd.f32 %v10421, %v10422
    %v10486 = vadd.f32 %v10485, %v10423
    %v10487 = vadd.f32 %v10486, %v10424
    %v10488 = vadd.f32 %v10487, %v10425
    %v10489 = vadd.f32 %v10488, %v10426
    %v10490 = vadd.f32 %v10489, %v10427
    %v10491 = vadd.f32 %v10490, %v10428
    %v10492 = vadd.f32 %v10491, %v10429
    %v10493 = vadd.f32 %v10492, %v10430
    %v10494 = vadd.f32 %v10493, %v10431
    %v10495 = vadd.f32 %v10494, %v10432
    %v10496 = vadd.f32 %v10495, %v10433
    %v10497 = vadd.f32 %v10496, %v10434
    %v10498 = vadd.f32 %v10497, %v10435
    %v10499 = vadd.f32 %v10498, %v10436
    %v10500 = vadd.f32 %v10499, %v10437
    %v10501 = vadd.f32 %v10500, %v10438
    %v10502 = vadd.f32 %v10501, %v10439
    %v10503 = vadd.f32 %v10502, %v10440
    %v10504 = vadd.f32 %v10503, %v10441
    %v10505 = vadd.f32 %v10504, %v10442
    %v10506 = vadd.f32 %v10505, %v10443
    %v10507 = vadd.f32 %v10506, %v10444
    %v10508 = vadd.f32 %v10507, %v10445
    %v10509 = vadd.f32 %v10508, %v10446
    %v10510 = vadd.f32 %v10509, %v10447
    %v10511 = vadd.f32 %v10510, %v10448
    %v10512 = vadd.f32 %v10511, %v10449
    %v10513 = vadd.f32 %v10512, %v10450
    %v10514 = vadd.f32 %v10513, %v10451
    %v10515 = vadd.f32 %v10514, %v10452
    %v10516 = vadd.f32 %v10515, %v10453
    %v10517 = vadd.f32 %v10516, %v10454
    %v10518 = vadd.f32 %v10517, %v10455
    %v10519 = vadd.f32 %v10518, %v10456
    %v10520 = vadd.f32 %v10519, %v10457
    %v10521 = vadd.f32 %v10520, %v10458
    %v10522 = vadd.f32 %v10521, %v10459
    %v10523 = vadd.f32 %v10522, %v10460
    %v10524 = vadd.f32 %v10523, %v10461
    %v10525 = vadd.f32 %v10524, %v10462
    %v10526 = vadd.f32 %v10525, %v10463
    %v10527 = vadd.f32 %v10526, %v10464
    %v10528 = vadd.f32 %v10527, %v10465
    %v10529 = vadd.f32 %v10528, %v10466
    %v10530 = vadd.f32 %v10529, %v10467
    %v10531 = vadd.f32 %v10530, %v10468
    %v10532 = vadd.f32 %v10531, %v10469
    %v10533 = vadd.f32 %v10532, %v10470
    %v10534 = vadd.f32 %v10533, %v10471
    %v10535 = vadd.f32 %v10534, %v10472
    %v10536 = vadd.f32 %v10535, %v10473
    %v10537 = vadd.f32 %v10536, %v10474
    %v10538 = vadd.f32 %v10537, %v10475
    %v10539 = vadd.f32 %v10538, %v10476
    %v10540 = vadd.f32 %v10539, %v10477
    %v10541 = vadd.f32 %v10540, %v10478
    %v10542 = vadd.f32 %v10541, %v10479
    %v10543 = vadd.f32 %v10542, %v10480
    %v10544 = vadd.f32 %v10543, %v10481
    %v10545 = vadd.f32 %v10544, %v10482
    %v10546 = vadd.f32 %v10545, %v10483
    %v10547 = vadd.f32 %v10546, %v10484
    %v10548 = vrot.slane %v10547, 4
    %v10549 = vadd.f32 %v10547, %v10548
    %v10550 = vrot.slane %v10549, 2
    %v10551 = vadd.f32 %v10549, %v10550
    %v10552 = vrot.slane %v10551, 1
    %v10553 = vadd.f32 %v10551, %v10552
    %v10554 = vmul.f32 %v10421, %v10421
    %v10555 = vmul.f32 %v10422, %v10422
    %v10556 = vmul.f32 %v10423, %v10423
    %v10557 = vmul.f32 %v10424, %v10424
    %v10558 = vmul.f32 %v10425, %v10425
    %v10559 = vmul.f32 %v10426, %v10426
    %v10560 = vmul.f32 %v10427, %v10427
    %v10561 = vmul.f32 %v10428, %v10428
    %v10562 = vmul.f32 %v10429, %v10429
    %v10563 = vmul.f32 %v10430, %v10430
    %v10564 = vmul.f32 %v10431, %v10431
    %v10565 = vmul.f32 %v10432, %v10432
    %v10566 = vmul.f32 %v10433, %v10433
    %v10567 = vmul.f32 %v10434, %v10434
    %v10568 = vmul.f32 %v10435, %v10435
    %v10569 = vmul.f32 %v10436, %v10436
    %v10570 = vmul.f32 %v10437, %v10437
    %v10571 = vmul.f32 %v10438, %v10438
    %v10572 = vmul.f32 %v10439, %v10439
    %v10573 = vmul.f32 %v10440, %v10440
    %v10574 = vmul.f32 %v10441, %v10441
    %v10575 = vmul.f32 %v10442, %v10442
    %v10576 = vmul.f32 %v10443, %v10443
    %v10577 = vmul.f32 %v10444, %v10444
    %v10578 = vmul.f32 %v10445, %v10445
    %v10579 = vmul.f32 %v10446, %v10446
    %v10580 = vmul.f32 %v10447, %v10447
    %v10581 = vmul.f32 %v10448, %v10448
    %v10582 = vmul.f32 %v10449, %v10449
    %v10583 = vmul.f32 %v10450, %v10450
    %v10584 = vmul.f32 %v10451, %v10451
    %v10585 = vmul.f32 %v10452, %v10452
    %v10586 = vmul.f32 %v10453, %v10453
    %v10587 = vmul.f32 %v10454, %v10454
    %v10588 = vmul.f32 %v10455, %v10455
    %v10589 = vmul.f32 %v10456, %v10456
    %v10590 = vmul.f32 %v10457, %v10457
    %v10591 = vmul.f32 %v10458, %v10458
    %v10592 = vmul.f32 %v10459, %v10459
    %v10593 = vmul.f32 %v10460, %v10460
    %v10594 = vmul.f32 %v10461, %v10461
    %v10595 = vmul.f32 %v10462, %v10462
    %v10596 = vmul.f32 %v10463, %v10463
    %v10597 = vmul.f32 %v10464, %v10464
    %v10598 = vmul.f32 %v10465, %v10465
    %v10599 = vmul.f32 %v10466, %v10466
    %v10600 = vmul.f32 %v10467, %v10467
    %v10601 = vmul.f32 %v10468, %v10468
    %v10602 = vmul.f32 %v10469, %v10469
    %v10603 = vmul.f32 %v10470, %v10470
    %v10604 = vmul.f32 %v10471, %v10471
    %v10605 = vmul.f32 %v10472, %v10472
    %v10606 = vmul.f32 %v10473, %v10473
    %v10607 = vmul.f32 %v10474, %v10474
    %v10608 = vmul.f32 %v10475, %v10475
    %v10609 = vmul.f32 %v10476, %v10476
    %v10610 = vmul.f32 %v10477, %v10477
    %v10611 = vmul.f32 %v10478, %v10478
    %v10612 = vmul.f32 %v10479, %v10479
    %v10613 = vmul.f32 %v10480, %v10480
    %v10614 = vmul.f32 %v10481, %v10481
    %v10615 = vmul.f32 %v10482, %v10482
    %v10616 = vmul.f32 %v10483, %v10483
    %v10617 = vmul.f32 %v10484, %v10484
    %v10618 = vadd.f32 %v10554, %v10555
    %v10619 = vadd.f32 %v10618, %v10556
    %v10620 = vadd.f32 %v10619, %v10557
    %v10621 = vadd.f32 %v10620, %v10558
    %v10622 = vadd.f32 %v10621, %v10559
    %v10623 = vadd.f32 %v10622, %v10560
    %v10624 = vadd.f32 %v10623, %v10561
    %v10625 = vadd.f32 %v10624, %v10562
    %v10626 = vadd.f32 %v10625, %v10563
    %v10627 = vadd.f32 %v10626, %v10564
    %v10628 = vadd.f32 %v10627, %v10565
    %v10629 = vadd.f32 %v10628, %v10566
    %v10630 = vadd.f32 %v10629, %v10567
    %v10631 = vadd.f32 %v10630, %v10568
    %v10632 = vadd.f32 %v10631, %v10569
    %v10633 = vadd.f32 %v10632, %v10570
    %v10634 = vadd.f32 %v10633, %v10571
    %v10635 = vadd.f32 %v10634, %v10572
    %v10636 = vadd.f32 %v10635, %v10573
    %v10637 = vadd.f32 %v10636, %v10574
    %v10638 = vadd.f32 %v10637, %v10575
    %v10639 = vadd.f32 %v10638, %v10576
    %v10640 = vadd.f32 %v10639, %v10577
    %v10641 = vadd.f32 %v10640, %v10578
    %v10642 = vadd.f32 %v10641, %v10579
    %v10643 = vadd.f32 %v10642, %v10580
    %v10644 = vadd.f32 %v10643, %v10581
    %v10645 = vadd.f32 %v10644, %v10582
    %v10646 = vadd.f32 %v10645, %v10583
    %v10647 = vadd.f32 %v10646, %v10584
    %v10648 = vadd.f32 %v10647, %v10585
    %v10649 = vadd.f32 %v10648, %v10586
    %v10650 = vadd.f32 %v10649, %v10587
    %v10651 = vadd.f32 %v10650, %v10588
    %v10652 = vadd.f32 %v10651, %v10589
    %v10653 = vadd.f32 %v10652, %v10590
    %v10654 = vadd.f32 %v10653, %v10591
    %v10655 = vadd.f32 %v10654, %v10592
    %v10656 = vadd.f32 %v10655, %v10593
    %v10657 = vadd.f32 %v10656, %v10594
    %v10658 = vadd.f32 %v10657, %v10595
    %v10659 = vadd.f32 %v10658, %v10596
    %v10660 = vadd.f32 %v10659, %v10597
    %v10661 = vadd.f32 %v10660, %v10598
    %v10662 = vadd.f32 %v10661, %v10599
    %v10663 = vadd.f32 %v10662, %v10600
    %v10664 = vadd.f32 %v10663, %v10601
    %v10665 = vadd.f32 %v10664, %v10602
    %v10666 = vadd.f32 %v10665, %v10603
    %v10667 = vadd.f32 %v10666, %v10604
    %v10668 = vadd.f32 %v10667, %v10605
    %v10669 = vadd.f32 %v10668, %v10606
    %v10670 = vadd.f32 %v10669, %v10607
    %v10671 = vadd.f32 %v10670, %v10608
    %v10672 = vadd.f32 %v10671, %v10609
    %v10673 = vadd.f32 %v10672, %v10610
    %v10674 = vadd.f32 %v10673, %v10611
    %v10675 = vadd.f32 %v10674, %v10612
    %v10676 = vadd.f32 %v10675, %v10613
    %v10677 = vadd.f32 %v10676, %v10614
    %v10678 = vadd.f32 %v10677, %v10615
    %v10679 = vadd.f32 %v10678, %v10616
    %v10680 = vadd.f32 %v10679, %v10617
    %v10681 = vrot.slane %v10680, 4
    %v10682 = vadd.f32 %v10680, %v10681
    %v10683 = vrot.slane %v10682, 2
    %v10684 = vadd.f32 %v10682, %v10683
    %v10685 = vrot.slane %v10684, 1
    %v10686 = vadd.f32 %v10684, %v10685
    %v10687 = vmul.f32 %v10553, 0.001953125
    %v10688 = vmul.f32 %v10686, 0.001953125
    %v10689 = vmul.f32 %v10687, %v10687
    %v10690 = vsub.f32 %v10688, %v10689
    %v10691 = vld [vmem:[%s7] sm:$0x1]
    %v10692 = vadd.f32 %v10690, 1e-05
    %v10693 = vrsqrt.pop %v10692
    %v10694 = vmul.f32 %v10691, %v10693
    %v10695 = vld [vmem:[%s8] sm:$0x1]
    %v10696 = vmul.f32 %v10687, %v10694
    %v10697 = vsub.f32 %v10695, %v10696
    %v10699 = vlaneseq
    %v10700 = vshrl.u32 %v10699, 7
    %v10701 = vsub.s32 0, %v10700
    %v10702 = vrot.slane %v10694, %v10701
    %v10704 = vmul.f32 %v10421, %v10702
    %v10705 = vmul.f32 %v10422, %v10702
    %v10706 = vmul.f32 %v10423, %v10702
    %v10707 = vmul.f32 %v10424, %v10702
    %v10708 = vmul.f32 %v10425, %v10702
    %v10709 = vmul.f32 %v10426, %v10702
    %v10710 = vmul.f32 %v10427, %v10702
    %v10711 = vmul.f32 %v10428, %v10702
    %v10712 = vmul.f32 %v10429, %v10702
    %v10713 = vmul.f32 %v10430, %v10702
    %v10714 = vmul.f32 %v10431, %v10702
    %v10715 = vmul.f32 %v10432, %v10702
    %v10716 = vmul.f32 %v10433, %v10702
    %v10717 = vmul.f32 %v10434, %v10702
    %v10718 = vmul.f32 %v10435, %v10702
    %v10719 = vmul.f32 %v10436, %v10702
    %v10720 = vmul.f32 %v10437, %v10702
    %v10721 = vmul.f32 %v10438, %v10702
    %v10722 = vmul.f32 %v10439, %v10702
    %v10723 = vmul.f32 %v10440, %v10702
    %v10724 = vmul.f32 %v10441, %v10702
    %v10725 = vmul.f32 %v10442, %v10702
    %v10726 = vmul.f32 %v10443, %v10702
    %v10727 = vmul.f32 %v10444, %v10702
    %v10728 = vmul.f32 %v10445, %v10702
    %v10729 = vmul.f32 %v10446, %v10702
    %v10730 = vmul.f32 %v10447, %v10702
    %v10731 = vmul.f32 %v10448, %v10702
    %v10732 = vmul.f32 %v10449, %v10702
    %v10733 = vmul.f32 %v10450, %v10702
    %v10734 = vmul.f32 %v10451, %v10702
    %v10735 = vmul.f32 %v10452, %v10702
    %v10736 = vmul.f32 %v10453, %v10702
    %v10737 = vmul.f32 %v10454, %v10702
    %v10738 = vmul.f32 %v10455, %v10702
    %v10739 = vmul.f32 %v10456, %v10702
    %v10740 = vmul.f32 %v10457, %v10702
    %v10741 = vmul.f32 %v10458, %v10702
    %v10742 = vmul.f32 %v10459, %v10702
    %v10743 = vmul.f32 %v10460, %v10702
    %v10744 = vmul.f32 %v10461, %v10702
    %v10745 = vmul.f32 %v10462, %v10702
    %v10746 = vmul.f32 %v10463, %v10702
    %v10747 = vmul.f32 %v10464, %v10702
    %v10748 = vmul.f32 %v10465, %v10702
    %v10749 = vmul.f32 %v10466, %v10702
    %v10750 = vmul.f32 %v10467, %v10702
    %v10751 = vmul.f32 %v10468, %v10702
    %v10752 = vmul.f32 %v10469, %v10702
    %v10753 = vmul.f32 %v10470, %v10702
    %v10754 = vmul.f32 %v10471, %v10702
    %v10755 = vmul.f32 %v10472, %v10702
    %v10756 = vmul.f32 %v10473, %v10702
    %v10757 = vmul.f32 %v10474, %v10702
    %v10758 = vmul.f32 %v10475, %v10702
    %v10759 = vmul.f32 %v10476, %v10702
    %v10760 = vmul.f32 %v10477, %v10702
    %v10761 = vmul.f32 %v10478, %v10702
    %v10762 = vmul.f32 %v10479, %v10702
    %v10763 = vmul.f32 %v10480, %v10702
    %v10764 = vmul.f32 %v10481, %v10702
    %v10765 = vmul.f32 %v10482, %v10702
    %v10766 = vmul.f32 %v10483, %v10702
    %v10767 = vmul.f32 %v10484, %v10702
    %v10769 = vlaneseq
    %v10770 = vshrl.u32 %v10769, 7
    %v10771 = vsub.s32 0, %v10770
    %v10772 = vrot.slane %v10697, %v10771
    %v10774 = vadd.f32 %v10704, %v10772
    %v10775 = vadd.f32 %v10705, %v10772
    %v10776 = vadd.f32 %v10706, %v10772
    %v10777 = vadd.f32 %v10707, %v10772
    %v10778 = vadd.f32 %v10708, %v10772
    %v10779 = vadd.f32 %v10709, %v10772
    %v10780 = vadd.f32 %v10710, %v10772
    %v10781 = vadd.f32 %v10711, %v10772
    %v10782 = vadd.f32 %v10712, %v10772
    %v10783 = vadd.f32 %v10713, %v10772
    %v10784 = vadd.f32 %v10714, %v10772
    %v10785 = vadd.f32 %v10715, %v10772
    %v10786 = vadd.f32 %v10716, %v10772
    %v10787 = vadd.f32 %v10717, %v10772
    %v10788 = vadd.f32 %v10718, %v10772
    %v10789 = vadd.f32 %v10719, %v10772
    %v10790 = vadd.f32 %v10720, %v10772
    %v10791 = vadd.f32 %v10721, %v10772
    %v10792 = vadd.f32 %v10722, %v10772
    %v10793 = vadd.f32 %v10723, %v10772
    %v10794 = vadd.f32 %v10724, %v10772
    %v10795 = vadd.f32 %v10725, %v10772
    %v10796 = vadd.f32 %v10726, %v10772
    %v10797 = vadd.f32 %v10727, %v10772
    %v10798 = vadd.f32 %v10728, %v10772
    %v10799 = vadd.f32 %v10729, %v10772
    %v10800 = vadd.f32 %v10730, %v10772
    %v10801 = vadd.f32 %v10731, %v10772
    %v10802 = vadd.f32 %v10732, %v10772
    %v10803 = vadd.f32 %v10733, %v10772
    %v10804 = vadd.f32 %v10734, %v10772
    %v10805 = vadd.f32 %v10735, %v10772
    %v10806 = vadd.f32 %v10736, %v10772
    %v10807 = vadd.f32 %v10737, %v10772
    %v10808 = vadd.f32 %v10738, %v10772
    %v10809 = vadd.f32 %v10739, %v10772
    %v10810 = vadd.f32 %v10740, %v10772
    %v10811 = vadd.f32 %v10741, %v10772
    %v10812 = vadd.f32 %v10742, %v10772
    %v10813 = vadd.f32 %v10743, %v10772
    %v10814 = vadd.f32 %v10744, %v10772
    %v10815 = vadd.f32 %v10745, %v10772
    %v10816 = vadd.f32 %v10746, %v10772
    %v10817 = vadd.f32 %v10747, %v10772
    %v10818 = vadd.f32 %v10748, %v10772
    %v10819 = vadd.f32 %v10749, %v10772
    %v10820 = vadd.f32 %v10750, %v10772
    %v10821 = vadd.f32 %v10751, %v10772
    %v10822 = vadd.f32 %v10752, %v10772
    %v10823 = vadd.f32 %v10753, %v10772
    %v10824 = vadd.f32 %v10754, %v10772
    %v10825 = vadd.f32 %v10755, %v10772
    %v10826 = vadd.f32 %v10756, %v10772
    %v10827 = vadd.f32 %v10757, %v10772
    %v10828 = vadd.f32 %v10758, %v10772
    %v10829 = vadd.f32 %v10759, %v10772
    %v10830 = vadd.f32 %v10760, %v10772
    %v10831 = vadd.f32 %v10761, %v10772
    %v10832 = vadd.f32 %v10762, %v10772
    %v10833 = vadd.f32 %v10763, %v10772
    %v10834 = vadd.f32 %v10764, %v10772
    %v10835 = vadd.f32 %v10765, %v10772
    %v10836 = vadd.f32 %v10766, %v10772
    %v10837 = vadd.f32 %v10767, %v10772
    %s10838 = scalar_lea.vmem %s0, 24
    %v10839 = vld [vmem:[%s10838 + $0x1] sm:$0xff]
    %v10840 = vld [vmem:[%s10838 + $0x9] sm:$0xff]
    %v10841 = vld [vmem:[%s10838 + $0x19] sm:$0xff]
    %v10842 = vld [vmem:[%s10838 + $0x21] sm:$0xff]
    %v10843 = vld [vmem:[%s10838 + $0x31] sm:$0xff]
    %v10844 = vld [vmem:[%s10838 + $0x39] sm:$0xff]
    %v10845 = vld [vmem:[%s10838 + $0x49] sm:$0xff]
    %v10846 = vld [vmem:[%s10838 + $0x51] sm:$0xff]
    %v10847 = vld [vmem:[%s10838 + $0x61] sm:$0xff]
    %v10848 = vld [vmem:[%s10838 + $0x69] sm:$0xff]
    %v10849 = vld [vmem:[%s10838 + $0x79] sm:$0xff]
    %v10850 = vld [vmem:[%s10838 + $0x81] sm:$0xff]
    %v10851 = vld [vmem:[%s10838 + $0x91] sm:$0xff]
    %v10852 = vld [vmem:[%s10838 + $0x99] sm:$0xff]
    %v10853 = vld [vmem:[%s10838 + $0xa9] sm:$0xff]
    %v10854 = vld [vmem:[%s10838 + $0xb1] sm:$0xff]
    %v10855 = vld [vmem:[%s10838 + $0xc1] sm:$0xff]
    %v10856 = vld [vmem:[%s10838 + $0xc9] sm:$0xff]
    %v10857 = vld [vmem:[%s10838 + $0xd9] sm:$0xff]
    %v10858 = vld [vmem:[%s10838 + $0xe1] sm:$0xff]
    %v10859 = vld [vmem:[%s10838 + $0xf1] sm:$0xff]
    %v10860 = vld [vmem:[%s10838 + $0xf9] sm:$0xff]
    %v10861 = vld [vmem:[%s10838 + $0x109] sm:$0xff]
    %v10862 = vld [vmem:[%s10838 + $0x111] sm:$0xff]
    %v10863 = vld [vmem:[%s10838 + $0x121] sm:$0xff]
    %v10864 = vld [vmem:[%s10838 + $0x129] sm:$0xff]
    %v10865 = vld [vmem:[%s10838 + $0x139] sm:$0xff]
    %v10866 = vld [vmem:[%s10838 + $0x141] sm:$0xff]
    %v10867 = vld [vmem:[%s10838 + $0x151] sm:$0xff]
    %v10868 = vld [vmem:[%s10838 + $0x159] sm:$0xff]
    %v10869 = vld [vmem:[%s10838 + $0x169] sm:$0xff]
    %v10870 = vld [vmem:[%s10838 + $0x171] sm:$0xff]
    %v10871 = vld [vmem:[%s10838 + $0x1b1] sm:$0xff]
    %v10872 = vld [vmem:[%s10838 + $0x1b9] sm:$0xff]
    %v10873 = vld [vmem:[%s10838 + $0x1c9] sm:$0xff]
    %v10874 = vld [vmem:[%s10838 + $0x1d1] sm:$0xff]
    %v10875 = vld [vmem:[%s10838 + $0x1e1] sm:$0xff]
    %v10876 = vld [vmem:[%s10838 + $0x1e9] sm:$0xff]
    %v10877 = vld [vmem:[%s10838 + $0x1f9] sm:$0xff]
    %v10878 = vld [vmem:[%s10838 + $0x201] sm:$0xff]
    %v10879 = vld [vmem:[%s10838 + $0x211] sm:$0xff]
    %v10880 = vld [vmem:[%s10838 + $0x219] sm:$0xff]
    %v10881 = vld [vmem:[%s10838 + $0x229] sm:$0xff]
    %v10882 = vld [vmem:[%s10838 + $0x231] sm:$0xff]
    %v10883 = vld [vmem:[%s10838 + $0x241] sm:$0xff]
    %v10884 = vld [vmem:[%s10838 + $0x249] sm:$0xff]
    %v10885 = vld [vmem:[%s10838 + $0x259] sm:$0xff]
    %v10886 = vld [vmem:[%s10838 + $0x261] sm:$0xff]
    %v10887 = vld [vmem:[%s10838 + $0x271] sm:$0xff]
    %v10888 = vld [vmem:[%s10838 + $0x279] sm:$0xff]
    %v10889 = vld [vmem:[%s10838 + $0x289] sm:$0xff]
    %v10890 = vld [vmem:[%s10838 + $0x291] sm:$0xff]
    %v10891 = vld [vmem:[%s10838 + $0x2a1] sm:$0xff]
    %v10892 = vld [vmem:[%s10838 + $0x2a9] sm:$0xff]
    %v10893 = vld [vmem:[%s10838 + $0x2b9] sm:$0xff]
    %v10894 = vld [vmem:[%s10838 + $0x2c1] sm:$0xff]
    %v10895 = vld [vmem:[%s10838 + $0x2d1] sm:$0xff]
    %v10896 = vld [vmem:[%s10838 + $0x2d9] sm:$0xff]
    %v10897 = vld [vmem:[%s10838 + $0x2e9] sm:$0xff]
    %v10898 = vld [vmem:[%s10838 + $0x2f1] sm:$0xff]
    %v10899 = vld [vmem:[%s10838 + $0x301] sm:$0xff]
    %v10900 = vld [vmem:[%s10838 + $0x309] sm:$0xff]
    %v10901 = vld [vmem:[%s10838 + $0x319] sm:$0xff]
    %v10902 = vld [vmem:[%s10838 + $0x321] sm:$0xff]
    %v10903 = vadd.f32 %v10839, %v10774
    %v10904 = vadd.f32 %v10840, %v10775
    %v10905 = vadd.f32 %v10841, %v10776
    %v10906 = vadd.f32 %v10842, %v10777
    %v10907 = vadd.f32 %v10843, %v10778
    %v10908 = vadd.f32 %v10844, %v10779
    %v10909 = vadd.f32 %v10845, %v10780
    %v10910 = vadd.f32 %v10846, %v10781
    %v10911 = vadd.f32 %v10847, %v10782
    %v10912 = vadd.f32 %v10848, %v10783
    %v10913 = vadd.f32 %v10849, %v10784
    %v10914 = vadd.f32 %v10850, %v10785
    %v10915 = vadd.f32 %v10851, %v10786
    %v10916 = vadd.f32 %v10852, %v10787
    %v10917 = vadd.f32 %v10853, %v10788
    %v10918 = vadd.f32 %v10854, %v10789
    %v10919 = vadd.f32 %v10855, %v10790
    %v10920 = vadd.f32 %v10856, %v10791
    %v10921 = vadd.f32 %v10857, %v10792
    %v10922 = vadd.f32 %v10858, %v10793
    %v10923 = vadd.f32 %v10859, %v10794
    %v10924 = vadd.f32 %v10860, %v10795
    %v10925 = vadd.f32 %v10861, %v10796
    %v10926 = vadd.f32 %v10862, %v10797
    %v10927 = vadd.f32 %v10863, %v10798
    %v10928 = vadd.f32 %v10864, %v10799
    %v10929 = vadd.f32 %v10865, %v10800
    %v10930 = vadd.f32 %v10866, %v10801
    %v10931 = vadd.f32 %v10867, %v10802
    %v10932 = vadd.f32 %v10868, %v10803
    %v10933 = vadd.f32 %v10869, %v10804
    %v10934 = vadd.f32 %v10870, %v10805
    %v10935 = vadd.f32 %v10871, %v10806
    %v10936 = vadd.f32 %v10872, %v10807
    %v10937 = vadd.f32 %v10873, %v10808
    %v10938 = vadd.f32 %v10874, %v10809
    %v10939 = vadd.f32 %v10875, %v10810
    %v10940 = vadd.f32 %v10876, %v10811
    %v10941 = vadd.f32 %v10877, %v10812
    %v10942 = vadd.f32 %v10878, %v10813
    %v10943 = vadd.f32 %v10879, %v10814
    %v10944 = vadd.f32 %v10880, %v10815
    %v10945 = vadd.f32 %v10881, %v10816
    %v10946 = vadd.f32 %v10882, %v10817
    %v10947 = vadd.f32 %v10883, %v10818
    %v10948 = vadd.f32 %v10884, %v10819
    %v10949 = vadd.f32 %v10885, %v10820
    %v10950 = vadd.f32 %v10886, %v10821
    %v10951 = vadd.f32 %v10887, %v10822
    %v10952 = vadd.f32 %v10888, %v10823
    %v10953 = vadd.f32 %v10889, %v10824
    %v10954 = vadd.f32 %v10890, %v10825
    %v10955 = vadd.f32 %v10891, %v10826
    %v10956 = vadd.f32 %v10892, %v10827
    %v10957 = vadd.f32 %v10893, %v10828
    %v10958 = vadd.f32 %v10894, %v10829
    %v10959 = vadd.f32 %v10895, %v10830
    %v10960 = vadd.f32 %v10896, %v10831
    %v10961 = vadd.f32 %v10897, %v10832
    %v10962 = vadd.f32 %v10898, %v10833
    %v10963 = vadd.f32 %v10899, %v10834
    %v10964 = vadd.f32 %v10900, %v10835
    %v10965 = vadd.f32 %v10901, %v10836
    %v10966 = vadd.f32 %v10902, %v10837
    %10967 = vst [vmem:[#allocation7] sm:$0xff] %v10903
    %10968 = vst [vmem:[#allocation7 + $0x8] sm:$0xff] %v10904
    %10969 = vst [vmem:[#allocation7 + $0x10] sm:$0xff] %v10905
    %10970 = vst [vmem:[#allocation7 + $0x18] sm:$0xff] %v10906
    %10971 = vst [vmem:[#allocation7 + $0x20] sm:$0xff] %v10907
    %10972 = vst [vmem:[#allocation7 + $0x28] sm:$0xff] %v10908
    %10973 = vst [vmem:[#allocation7 + $0x30] sm:$0xff] %v10909
    %10974 = vst [vmem:[#allocation7 + $0x38] sm:$0xff] %v10910
    %10975 = vst [vmem:[#allocation7 + $0x40] sm:$0xff] %v10911
    %10976 = vst [vmem:[#allocation7 + $0x48] sm:$0xff] %v10912
    %10977 = vst [vmem:[#allocation7 + $0x50] sm:$0xff] %v10913
    %10978 = vst [vmem:[#allocation7 + $0x58] sm:$0xff] %v10914
    %10979 = vst [vmem:[#allocation7 + $0x60] sm:$0xff] %v10915
    %10980 = vst [vmem:[#allocation7 + $0x68] sm:$0xff] %v10916
    %10981 = vst [vmem:[#allocation7 + $0x70] sm:$0xff] %v10917
    %10982 = vst [vmem:[#allocation7 + $0x78] sm:$0xff] %v10918
    %10983 = vst [vmem:[#allocation7 + $0x80] sm:$0xff] %v10919
    %10984 = vst [vmem:[#allocation7 + $0x88] sm:$0xff] %v10920
    %10985 = vst [vmem:[#allocation7 + $0x90] sm:$0xff] %v10921
    %10986 = vst [vmem:[#allocation7 + $0x98] sm:$0xff] %v10922
    %10987 = vst [vmem:[#allocation7 + $0xa0] sm:$0xff] %v10923
    %10988 = vst [vmem:[#allocation7 + $0xa8] sm:$0xff] %v10924
    %10989 = vst [vmem:[#allocation7 + $0xb0] sm:$0xff] %v10925
    %10990 = vst [vmem:[#allocation7 + $0xb8] sm:$0xff] %v10926
    %10991 = vst [vmem:[#allocation7 + $0xc0] sm:$0xff] %v10927
    %10992 = vst [vmem:[#allocation7 + $0xc8] sm:$0xff] %v10928
    %10993 = vst [vmem:[#allocation7 + $0xd0] sm:$0xff] %v10929
    %10994 = vst [vmem:[#allocation7 + $0xd8] sm:$0xff] %v10930
    %10995 = vst [vmem:[#allocation7 + $0xe0] sm:$0xff] %v10931
    %10996 = vst [vmem:[#allocation7 + $0xe8] sm:$0xff] %v10932
    %10997 = vst [vmem:[#allocation7 + $0xf0] sm:$0xff] %v10933
    %10998 = vst [vmem:[#allocation7 + $0xf8] sm:$0xff] %v10934
    %10999 = vst [vmem:[#allocation7 + $0x100] sm:$0xff] %v10935
    %11000 = vst [vmem:[#allocation7 + $0x108] sm:$0xff] %v10936
    %11001 = vst [vmem:[#allocation7 + $0x110] sm:$0xff] %v10937
    %11002 = vst [vmem:[#allocation7 + $0x118] sm:$0xff] %v10938
    %11003 = vst [vmem:[#allocation7 + $0x120] sm:$0xff] %v10939
    %11004 = vst [vmem:[#allocation7 + $0x128] sm:$0xff] %v10940
    %11005 = vst [vmem:[#allocation7 + $0x130] sm:$0xff] %v10941
    %11006 = vst [vmem:[#allocation7 + $0x138] sm:$0xff] %v10942
    %11007 = vst [vmem:[#allocation7 + $0x140] sm:$0xff] %v10943
    %11008 = vst [vmem:[#allocation7 + $0x148] sm:$0xff] %v10944
    %11009 = vst [vmem:[#allocation7 + $0x150] sm:$0xff] %v10945
    %11010 = vst [vmem:[#allocation7 + $0x158] sm:$0xff] %v10946
    %11011 = vst [vmem:[#allocation7 + $0x160] sm:$0xff] %v10947
    %11012 = vst [vmem:[#allocation7 + $0x168] sm:$0xff] %v10948
    %11013 = vst [vmem:[#allocation7 + $0x170] sm:$0xff] %v10949
    %11014 = vst [vmem:[#allocation7 + $0x178] sm:$0xff] %v10950
    %11015 = vst [vmem:[#allocation7 + $0x180] sm:$0xff] %v10951
    %11016 = vst [vmem:[#allocation7 + $0x188] sm:$0xff] %v10952
    %11017 = vst [vmem:[#allocation7 + $0x190] sm:$0xff] %v10953
    %11018 = vst [vmem:[#allocation7 + $0x198] sm:$0xff] %v10954
    %11019 = vst [vmem:[#allocation7 + $0x1a0] sm:$0xff] %v10955
    %11020 = vst [vmem:[#allocation7 + $0x1a8] sm:$0xff] %v10956
    %11021 = vst [vmem:[#allocation7 + $0x1b0] sm:$0xff] %v10957
    %11022 = vst [vmem:[#allocation7 + $0x1b8] sm:$0xff] %v10958
    %11023 = vst [vmem:[#allocation7 + $0x1c0] sm:$0xff] %v10959
    %11024 = vst [vmem:[#allocation7 + $0x1c8] sm:$0xff] %v10960
    %11025 = vst [vmem:[#allocation7 + $0x1d0] sm:$0xff] %v10961
    %11026 = vst [vmem:[#allocation7 + $0x1d8] sm:$0xff] %v10962
    %11027 = vst [vmem:[#allocation7 + $0x1e0] sm:$0xff] %v10963
    %11028 = vst [vmem:[#allocation7 + $0x1e8] sm:$0xff] %v10964
    %11029 = vst [vmem:[#allocation7 + $0x1f0] sm:$0xff] %v10965
    %11030 = vst [vmem:[#allocation7 + $0x1f8] sm:$0xff] %v10966
    // Predicated region
    $region46: #{tpu_custom_call.1} parent=1 // pred_check
      _
    $region47: #{tpu_custom_call.1} parent=1 // pred_check_branch
      %11032 = sbr.rel (0) target = $region49
    $region48: #{tpu_custom_call.1} parent=1 // pred_region
      %s11034 = ssub.s32 8192, 8192
      %11035 = vsyncadd [#allocation6], %s11034
      %s11036 = sshll.u32 [#allocation7], 4
      %s11037 = int_to_ptr.vmem [resolvable:$true] %s11036
      %11042 = dma.vmem_to_hbm [thread:$0]  %s11037, 8192, %s10, [#allocation6], 128, 128, 8
    $region49: #{tpu_custom_call.1} parent=1 // pred_fallthru
      _
    // Predicated region
    $region50: #{tpu_custom_call.1} parent=1 // pred_check
      _
    $region51: #{tpu_custom_call.1} parent=1 // pred_check_branch
      %11044 = sbr.rel (0) target = $region53
    $region52: #{tpu_custom_call.1} parent=1 // pred_region
      %11045 = dma.done [#allocation6], 8192
    $region53: #{tpu_custom_call.1} parent=1 // pred_fallthru
      _
    %11046 = vsyncpa [#allocation5], 1
    %11047 = vsyncpa [#allocation6], 1

</llo_original>
